<compile_context>
chip_gen: v5e
topology: v5e:2x2
jax: 0.10.0
libtpu: 0.0.40
codegen_flags: <defaults>
</compile_context>

<pallas_src>
import jax
import jax.numpy as jnp
from jax import lax
from jax.experimental import pallas as pl
from jax.experimental.pallas import tpu as pltpu

LANE = 128


def fused_basic_block_kernel(x_ref, w1_ref, b1_ref, w2_ref, b2_ref,
                             out_ref, xpad_ref, y1pad_ref):
    # x_ref:    (1, H, W, CP)  activations (bf16), channels padded to CP
    # w1_ref:   (3, 3, CP, CP) conv1 weights with bn1 scale folded in (bf16)
    # b1_ref:   (1, CP)        bn1 shift (f32)
    # w2_ref:   (3, 3, CP, CP) conv2 weights with bn2 scale folded in (bf16)
    # b2_ref:   (1, CP)        bn2 shift (f32)
    # out_ref:  (1, H, W, CP)  output block (bf16)
    # xpad_ref / y1pad_ref: VMEM scratch (H+2, W+2, CP) -- padded input and the
    #                        VMEM-resident conv1 activation (never hits HBM).
    _, H, W, CP = out_ref.shape

    # Zero the padded scratches every step (cheap; keeps the halo at zero and
    # is correct regardless of how the grid is sharded across cores).
    xpad_ref[...] = jnp.zeros_like(xpad_ref)
    y1pad_ref[...] = jnp.zeros_like(y1pad_ref)

    # Stage the input block into the padded scratch (in-kernel 'SAME' halo).
    xpad_ref[1:H + 1, 1:W + 1, :] = x_ref[0]

    def conv3x3(src_ref, w_ref):
        """3x3 stride-1 'SAME' conv of the padded scratch via 9 K=CP matmuls."""
        acc = jnp.zeros((H * W, CP), jnp.float32)
        for dy in range(3):
            for dx in range(3):
                patch = src_ref[dy:dy + H, dx:dx + W, :].reshape(H * W, CP)
                acc = acc + jnp.dot(patch, w_ref[dy, dx],
                                    preferred_element_type=jnp.float32)
        return acc  # (H*W, CP) f32

    # conv1 -> (folded) bn1 -> relu ; result stays in VMEM.
    y1 = conv3x3(xpad_ref, w1_ref) + b1_ref[...]
    y1 = jnp.maximum(y1, 0.0)
    y1pad_ref[1:H + 1, 1:W + 1, :] = y1.reshape(H, W, CP).astype(y1pad_ref.dtype)

    # conv2 -> (folded) bn2 -> + residual -> relu
    y2 = conv3x3(y1pad_ref, w2_ref) + b2_ref[...]
    y2 = y2 + x_ref[0].reshape(H * W, CP).astype(jnp.float32)
    y2 = jnp.maximum(y2, 0.0)
    out_ref[0] = y2.reshape(H, W, CP).astype(out_ref.dtype)


def _fold_and_pad(w, scale, shift, cp, compute_dtype):
    """Fold BN scale into conv weights (exact: conv is linear); zero-pad to CP."""
    cin, cout = w.shape[2], w.shape[3]
    wf = w.astype(jnp.float32) * scale.astype(jnp.float32)[None, None, None, :]
    wf = jnp.pad(wf, ((0, 0), (0, 0), (0, cp - cin), (0, cp - cout)))
    bf = jnp.pad(shift.astype(jnp.float32), (0, cp - cout)).reshape(1, cp)
    return wf.astype(compute_dtype), bf


def basic_block_forward(x_nchw, w1, w2, scale1, shift1, scale2, shift2,
                        compute_dtype=jnp.bfloat16):
    """Fused Pallas BasicBlock forward. x_nchw: (N,C,H,W); weights HWIO (3,3,Cin,Cout)."""
    N, C, H, W = x_nchw.shape
    Cout = w1.shape[-1]
    assert C == Cout, "default BasicBlock (stride=1, no downsample) needs Cin==Cout"
    CP = ((Cout + LANE - 1) // LANE) * LANE  # lane-dense channel padding

    # NCHW -> NHWC (channels on the lane axis), zero-pad channels to CP, bf16.
    x = jnp.transpose(x_nchw, (0, 2, 3, 1))
    x = jnp.pad(x, ((0, 0), (0, 0), (0, 0), (0, CP - C))).astype(compute_dtype)

    w1f, b1 = _fold_and_pad(w1, scale1, shift1, CP, compute_dtype)
    w2f, b2 = _fold_and_pad(w2, scale2, shift2, CP, compute_dtype)

    out = pl.pallas_call(
        fused_basic_block_kernel,
        out_shape=jax.ShapeDtypeStruct((N, H, W, CP), compute_dtype),
        grid=(N,),
        in_specs=[
            pl.BlockSpec((1, H, W, CP), lambda n: (n, 0, 0, 0)),
            pl.BlockSpec((3, 3, CP, CP), lambda n: (0, 0, 0, 0)),
            pl.BlockSpec((1, CP), lambda n: (0, 0)),
            pl.BlockSpec((3, 3, CP, CP), lambda n: (0, 0, 0, 0)),
            pl.BlockSpec((1, CP), lambda n: (0, 0)),
        ],
        out_specs=pl.BlockSpec((1, H, W, CP), lambda n: (n, 0, 0, 0)),
        scratch_shapes=[
            pltpu.VMEM((H + 2, W + 2, CP), compute_dtype),  # padded input
            pltpu.VMEM((H + 2, W + 2, CP), compute_dtype),  # padded conv1 out
        ],
        compiler_params=pltpu.CompilerParams(
            dimension_semantics=("parallel",),
            vmem_limit_bytes=32 * 1024 * 1024,
        ),
    )(x, w1f, b1, w2f, b2)

    out = out[:, :, :, :C].astype(x_nchw.dtype)      # strip padded channels
    return jnp.transpose(out, (0, 3, 1, 2))          # back to NCHW


def ref_forward(x_nchw, w1, w2, scale1, shift1, scale2, shift2,
                compute_dtype=jnp.bfloat16):
    """Pure-JAX reference applying the SAME precision choices as the kernel
    (bf16 inputs/weights, folded BN scale, f32 accumulation, bf16 intermediate),
    so the comparison isolates kernel/structural bugs."""
    x = jnp.transpose(x_nchw, (0, 2, 3, 1))
    xc = x.astype(compute_dtype).astype(jnp.float32)
    w1c = (w1.astype(jnp.float32) * scale1[None, None, None, :]
           ).astype(compute_dtype).astype(jnp.float32)
    w2c = (w2.astype(jnp.float32) * scale2[None, None, None, :]
           ).astype(compute_dtype).astype(jnp.float32)
    dn = ("NHWC", "HWIO", "NHWC")
    y1 = lax.conv_general_dilated(xc, w1c, (1, 1), "SAME", dimension_numbers=dn,
                                  precision=lax.Precision.HIGHEST)
    y1 = jnp.maximum(y1 + shift1, 0.0)
    y1 = y1.astype(compute_dtype).astype(jnp.float32)
    y2 = lax.conv_general_dilated(y1, w2c, (1, 1), "SAME", dimension_numbers=dn,
                                  precision=lax.Precision.HIGHEST)
    y2 = jnp.maximum(y2 + shift2 + xc, 0.0)
    y2 = y2.astype(compute_dtype).astype(jnp.float32)
    return jnp.transpose(y2, (0, 3, 1, 2)).astype(x_nchw.dtype)


if __name__ == "__main__":
    # BasicBlock(inplanes=4, planes=4, stride=1, normalization='batchnorm'), eval mode.
    N, C, H, W = 2, 4, 16, 16
    key = jax.random.PRNGKey(0)
    k_x, k_w1, k_w2, k_bn = jax.random.split(key, 4)

    x_nchw = jax.random.normal(k_x, (N, C, H, W), jnp.float32)
    # conv weights in HWIO layout (3, 3, Cin, Cout), bias=False
    w1 = 0.1 * jax.random.normal(k_w1, (3, 3, C, C), jnp.float32)
    w2 = 0.1 * jax.random.normal(k_w2, (3, 3, C, C), jnp.float32)

    bnk = jax.random.split(k_bn, 8)
    eps = 1e-5
    gamma1 = 1.0 + 0.1 * jax.random.normal(bnk[0], (C,), jnp.float32)
    beta1 = 0.1 * jax.random.normal(bnk[1], (C,), jnp.float32)
    mean1 = 0.1 * jax.random.normal(bnk[2], (C,), jnp.float32)
    var1 = jnp.abs(jax.random.normal(bnk[3], (C,), jnp.float32)) + 0.5
    gamma2 = 1.0 + 0.1 * jax.random.normal(bnk[4], (C,), jnp.float32)
    beta2 = 0.1 * jax.random.normal(bnk[5], (C,), jnp.float32)
    mean2 = 0.1 * jax.random.normal(bnk[6], (C,), jnp.float32)
    var2 = jnp.abs(jax.random.normal(bnk[7], (C,), jnp.float32)) + 0.5

    # Fold BatchNorm (eval mode, running stats) into per-channel scale/shift.
    scale1 = gamma1 / jnp.sqrt(var1 + eps)
    shift1 = beta1 - mean1 * scale1
    scale2 = gamma2 / jnp.sqrt(var2 + eps)
    shift2 = beta2 - mean2 * scale2

    out = basic_block_forward(x_nchw, w1, w2, scale1, shift1, scale2, shift2)
    out = jax.block_until_ready(out)

    ref = ref_forward(x_nchw, w1, w2, scale1, shift1, scale2, shift2)
    max_err = float(jnp.max(jnp.abs(out - ref)))
    assert out.shape == (N, C, H, W), out.shape
    assert max_err < 1e-2, f"mismatch vs reference: {max_err}"
    print("KERNEL_OK")
</pallas_src>

<mosaic_0001>
module attributes {stable_mosaic.version = 11 : i64} {
  func.func @fused_basic_block_kernel(%arg0: i32, %arg1: memref<1x16x16x128xbf16, #tpu.memory_space<vmem>>, %arg2: memref<3x3x128x128xbf16, #tpu.memory_space<vmem>>, %arg3: memref<1x128xf32, #tpu.memory_space<vmem>>, %arg4: memref<3x3x128x128xbf16, #tpu.memory_space<vmem>>, %arg5: memref<1x128xf32, #tpu.memory_space<vmem>>, %arg6: memref<1x16x16x128xbf16, #tpu.memory_space<vmem>>, %arg7: memref<18x18x128xbf16, #tpu.memory_space<vmem>>, %arg8: memref<18x18x128xbf16, #tpu.memory_space<vmem>>) attributes {dimension_semantics = [#tpu.dimension_semantics<parallel>], iteration_bounds = array<i64: 2>, scalar_prefetch = 0 : i64, scratch_operands = 2 : i64, tpu.core_type = #tpu.core_type<tc>, window_params = [{transform_indices = @transform_0, window_bounds = array<i64: 1, 16, 16, 128>}, {pipeline_mode = #tpu.pipeline_mode<synchronous>, transform_indices = @transform_1, window_bounds = array<i64: 3, 3, 128, 128>}, {pipeline_mode = #tpu.pipeline_mode<synchronous>, transform_indices = @transform_2, window_bounds = array<i64: 1, 128>}, {pipeline_mode = #tpu.pipeline_mode<synchronous>, transform_indices = @transform_3, window_bounds = array<i64: 3, 3, 128, 128>}, {pipeline_mode = #tpu.pipeline_mode<synchronous>, transform_indices = @transform_4, window_bounds = array<i64: 1, 128>}, {transform_indices = @transform_5, window_bounds = array<i64: 1, 16, 16, 128>}]} {
    %cst = arith.constant 0.000000e+00 : bf16
    %0 = vector.broadcast %cst : bf16 to vector<18x18x128xbf16>
    %c0 = arith.constant 0 : index
    %c0_0 = arith.constant 0 : index
    %c0_1 = arith.constant 0 : index
    %1 = vector.load %arg7[%c0, %c0_0, %c0_1] : memref<18x18x128xbf16, #tpu.memory_space<vmem>>, vector<18x18x128xbf16>
    tpu.vector_store %arg7[%c0, %c0_0, %c0_1], %0 {strides = array<i32>} : memref<18x18x128xbf16, #tpu.memory_space<vmem>>, vector<18x18x128xbf16>,
    %cst_2 = arith.constant 0.000000e+00 : bf16
    %2 = vector.broadcast %cst_2 : bf16 to vector<18x18x128xbf16>
    %c0_3 = arith.constant 0 : index
    %c0_4 = arith.constant 0 : index
    %c0_5 = arith.constant 0 : index
    %3 = vector.load %arg8[%c0_3, %c0_4, %c0_5] : memref<18x18x128xbf16, #tpu.memory_space<vmem>>, vector<18x18x128xbf16>
    tpu.vector_store %arg8[%c0_3, %c0_4, %c0_5], %2 {strides = array<i32>} : memref<18x18x128xbf16, #tpu.memory_space<vmem>>, vector<18x18x128xbf16>,
    %c0_6 = arith.constant 0 : index
    %c0_7 = arith.constant 0 : index
    %c0_8 = arith.constant 0 : index
    %c0_9 = arith.constant 0 : index
    %4 = vector.load %arg1[%c0_6, %c0_7, %c0_8, %c0_9] : memref<1x16x16x128xbf16, #tpu.memory_space<vmem>>, vector<1x16x16x128xbf16>
    %5 = vector.shape_cast %4 : vector<1x16x16x128xbf16> to vector<16x16x128xbf16>
    %c1 = arith.constant 1 : index
    %c1_10 = arith.constant 1 : index
    %c0_11 = arith.constant 0 : index
    %6 = vector.load %arg7[%c1, %c1_10, %c0_11] : memref<18x18x128xbf16, #tpu.memory_space<vmem>>, vector<16x16x128xbf16>
    tpu.vector_store %arg7[%c1, %c1_10, %c0_11], %5 {strides = array<i32>} : memref<18x18x128xbf16, #tpu.memory_space<vmem>>, vector<16x16x128xbf16>,
    %cst_12 = arith.constant 0.000000e+00 : f32
    %7 = vector.broadcast %cst_12 : f32 to vector<256x128xf32>
    %c0_13 = arith.constant 0 : index
    %c0_14 = arith.constant 0 : index
    %c0_15 = arith.constant 0 : index
    %8 = vector.load %arg7[%c0_13, %c0_14, %c0_15] : memref<18x18x128xbf16, #tpu.memory_space<vmem>>, vector<16x16x128xbf16>
    %9 = vector.shape_cast %8 : vector<16x16x128xbf16> to vector<256x128xbf16>
    %c0_16 = arith.constant 0 : index
    %c0_17 = arith.constant 0 : index
    %c0_18 = arith.constant 0 : index
    %c0_19 = arith.constant 0 : index
    %10 = vector.load %arg2[%c0_16, %c0_17, %c0_18, %c0_19] : memref<3x3x128x128xbf16, #tpu.memory_space<vmem>>, vector<1x1x128x128xbf16>
    %11 = vector.shape_cast %10 : vector<1x1x128x128xbf16> to vector<128x128xbf16>
    %cst_20 = arith.constant dense<0.000000e+00> : vector<256x128xf32>
    %12 = tpu.matmul %9, %11, %cst_20 {dimension_numbers = #tpu.dot_dimension_numbers<[1], [0], [0], [1], [0, 0, 1, 1], [], []>} : vector<256x128xbf16>, vector<128x128xbf16>, vector<256x128xf32> -> vector<256x128xf32>
    %13 = arith.addf %7, %12 : vector<256x128xf32>
    %c0_21 = arith.constant 0 : index
    %c1_22 = arith.constant 1 : index
    %c0_23 = arith.constant 0 : index
    %14 = vector.load %arg7[%c0_21, %c1_22, %c0_23] : memref<18x18x128xbf16, #tpu.memory_space<vmem>>, vector<16x16x128xbf16>
    %15 = vector.shape_cast %14 : vector<16x16x128xbf16> to vector<256x128xbf16>
    %c0_24 = arith.constant 0 : index
    %c1_25 = arith.constant 1 : index
    %c0_26 = arith.constant 0 : index
    %c0_27 = arith.constant 0 : index
    %16 = vector.load %arg2[%c0_24, %c1_25, %c0_26, %c0_27] : memref<3x3x128x128xbf16, #tpu.memory_space<vmem>>, vector<1x1x128x128xbf16>
    %17 = vector.shape_cast %16 : vector<1x1x128x128xbf16> to vector<128x128xbf16>
    %cst_28 = arith.constant dense<0.000000e+00> : vector<256x128xf32>
    %18 = tpu.matmul %15, %17, %cst_28 {dimension_numbers = #tpu.dot_dimension_numbers<[1], [0], [0], [1], [0, 0, 1, 1], [], []>} : vector<256x128xbf16>, vector<128x128xbf16>, vector<256x128xf32> -> vector<256x128xf32>
    %19 = arith.addf %13, %18 : vector<256x128xf32>
    %c0_29 = arith.constant 0 : index
    %c2 = arith.constant 2 : index
    %c0_30 = arith.constant 0 : index
    %20 = vector.load %arg7[%c0_29, %c2, %c0_30] : memref<18x18x128xbf16, #tpu.memory_space<vmem>>, vector<16x16x128xbf16>
    %21 = vector.shape_cast %20 : vector<16x16x128xbf16> to vector<256x128xbf16>
    %c0_31 = arith.constant 0 : index
    %c2_32 = arith.constant 2 : index
    %c0_33 = arith.constant 0 : index
    %c0_34 = arith.constant 0 : index
    %22 = vector.load %arg2[%c0_31, %c2_32, %c0_33, %c0_34] : memref<3x3x128x128xbf16, #tpu.memory_space<vmem>>, vector<1x1x128x128xbf16>
    %23 = vector.shape_cast %22 : vector<1x1x128x128xbf16> to vector<128x128xbf16>
    %cst_35 = arith.constant dense<0.000000e+00> : vector<256x128xf32>
    %24 = tpu.matmul %21, %23, %cst_35 {dimension_numbers = #tpu.dot_dimension_numbers<[1], [0], [0], [1], [0, 0, 1, 1], [], []>} : vector<256x128xbf16>, vector<128x128xbf16>, vector<256x128xf32> -> vector<256x128xf32>
    %25 = arith.addf %19, %24 : vector<256x128xf32>
    %c1_36 = arith.constant 1 : index
    %c0_37 = arith.constant 0 : index
    %c0_38 = arith.constant 0 : index
    %26 = vector.load %arg7[%c1_36, %c0_37, %c0_38] : memref<18x18x128xbf16, #tpu.memory_space<vmem>>, vector<16x16x128xbf16>
    %27 = vector.shape_cast %26 : vector<16x16x128xbf16> to vector<256x128xbf16>
    %c1_39 = arith.constant 1 : index
    %c0_40 = arith.constant 0 : index
    %c0_41 = arith.constant 0 : index
    %c0_42 = arith.constant 0 : index
    %28 = vector.load %arg2[%c1_39, %c0_40, %c0_41, %c0_42] : memref<3x3x128x128xbf16, #tpu.memory_space<vmem>>, vector<1x1x128x128xbf16>
    %29 = vector.shape_cast %28 : vector<1x1x128x128xbf16> to vector<128x128xbf16>
    %cst_43 = arith.constant dense<0.000000e+00> : vector<256x128xf32>
    %30 = tpu.matmul %27, %29, %cst_43 {dimension_numbers = #tpu.dot_dimension_numbers<[1], [0], [0], [1], [0, 0, 1, 1], [], []>} : vector<256x128xbf16>, vector<128x128xbf16>, vector<256x128xf32> -> vector<256x128xf32>
    %31 = arith.addf %25, %30 : vector<256x128xf32>
    %c1_44 = arith.constant 1 : index
    %c1_45 = arith.constant 1 : index
    %c0_46 = arith.constant 0 : index
    %32 = vector.load %arg7[%c1_44, %c1_45, %c0_46] : memref<18x18x128xbf16, #tpu.memory_space<vmem>>, vector<16x16x128xbf16>
    %33 = vector.shape_cast %32 : vector<16x16x128xbf16> to vector<256x128xbf16>
    %c1_47 = arith.constant 1 : index
    %c1_48 = arith.constant 1 : index
    %c0_49 = arith.constant 0 : index
    %c0_50 = arith.constant 0 : index
    %34 = vector.load %arg2[%c1_47, %c1_48, %c0_49, %c0_50] : memref<3x3x128x128xbf16, #tpu.memory_space<vmem>>, vector<1x1x128x128xbf16>
    %35 = vector.shape_cast %34 : vector<1x1x128x128xbf16> to vector<128x128xbf16>
    %cst_51 = arith.constant dense<0.000000e+00> : vector<256x128xf32>
    %36 = tpu.matmul %33, %35, %cst_51 {dimension_numbers = #tpu.dot_dimension_numbers<[1], [0], [0], [1], [0, 0, 1, 1], [], []>} : vector<256x128xbf16>, vector<128x128xbf16>, vector<256x128xf32> -> vector<256x128xf32>
    %37 = arith.addf %31, %36 : vector<256x128xf32>
    %c1_52 = arith.constant 1 : index
    %c2_53 = arith.constant 2 : index
    %c0_54 = arith.constant 0 : index
    %38 = vector.load %arg7[%c1_52, %c2_53, %c0_54] : memref<18x18x128xbf16, #tpu.memory_space<vmem>>, vector<16x16x128xbf16>
    %39 = vector.shape_cast %38 : vector<16x16x128xbf16> to vector<256x128xbf16>
    %c1_55 = arith.constant 1 : index
    %c2_56 = arith.constant 2 : index
    %c0_57 = arith.constant 0 : index
    %c0_58 = arith.constant 0 : index
    %40 = vector.load %arg2[%c1_55, %c2_56, %c0_57, %c0_58] : memref<3x3x128x128xbf16, #tpu.memory_space<vmem>>, vector<1x1x128x128xbf16>
    %41 = vector.shape_cast %40 : vector<1x1x128x128xbf16> to vector<128x128xbf16>
    %cst_59 = arith.constant dense<0.000000e+00> : vector<256x128xf32>
    %42 = tpu.matmul %39, %41, %cst_59 {dimension_numbers = #tpu.dot_dimension_numbers<[1], [0], [0], [1], [0, 0, 1, 1], [], []>} : vector<256x128xbf16>, vector<128x128xbf16>, vector<256x128xf32> -> vector<256x128xf32>
    %43 = arith.addf %37, %42 : vector<256x128xf32>
    %c2_60 = arith.constant 2 : index
    %c0_61 = arith.constant 0 : index
    %c0_62 = arith.constant 0 : index
    %44 = vector.load %arg7[%c2_60, %c0_61, %c0_62] : memref<18x18x128xbf16, #tpu.memory_space<vmem>>, vector<16x16x128xbf16>
    %45 = vector.shape_cast %44 : vector<16x16x128xbf16> to vector<256x128xbf16>
    %c2_63 = arith.constant 2 : index
    %c0_64 = arith.constant 0 : index
    %c0_65 = arith.constant 0 : index
    %c0_66 = arith.constant 0 : index
    %46 = vector.load %arg2[%c2_63, %c0_64, %c0_65, %c0_66] : memref<3x3x128x128xbf16, #tpu.memory_space<vmem>>, vector<1x1x128x128xbf16>
    %47 = vector.shape_cast %46 : vector<1x1x128x128xbf16> to vector<128x128xbf16>
    %cst_67 = arith.constant dense<0.000000e+00> : vector<256x128xf32>
    %48 = tpu.matmul %45, %47, %cst_67 {dimension_numbers = #tpu.dot_dimension_numbers<[1], [0], [0], [1], [0, 0, 1, 1], [], []>} : vector<256x128xbf16>, vector<128x128xbf16>, vector<256x128xf32> -> vector<256x128xf32>
    %49 = arith.addf %43, %48 : vector<256x128xf32>
    %c2_68 = arith.constant 2 : index
    %c1_69 = arith.constant 1 : index
    %c0_70 = arith.constant 0 : index
    %50 = vector.load %arg7[%c2_68, %c1_69, %c0_70] : memref<18x18x128xbf16, #tpu.memory_space<vmem>>, vector<16x16x128xbf16>
    %51 = vector.shape_cast %50 : vector<16x16x128xbf16> to vector<256x128xbf16>
    %c2_71 = arith.constant 2 : index
    %c1_72 = arith.constant 1 : index
    %c0_73 = arith.constant 0 : index
    %c0_74 = arith.constant 0 : index
    %52 = vector.load %arg2[%c2_71, %c1_72, %c0_73, %c0_74] : memref<3x3x128x128xbf16, #tpu.memory_space<vmem>>, vector<1x1x128x128xbf16>
    %53 = vector.shape_cast %52 : vector<1x1x128x128xbf16> to vector<128x128xbf16>
    %cst_75 = arith.constant dense<0.000000e+00> : vector<256x128xf32>
    %54 = tpu.matmul %51, %53, %cst_75 {dimension_numbers = #tpu.dot_dimension_numbers<[1], [0], [0], [1], [0, 0, 1, 1], [], []>} : vector<256x128xbf16>, vector<128x128xbf16>, vector<256x128xf32> -> vector<256x128xf32>
    %55 = arith.addf %49, %54 : vector<256x128xf32>
    %c2_76 = arith.constant 2 : index
    %c2_77 = arith.constant 2 : index
    %c0_78 = arith.constant 0 : index
    %56 = vector.load %arg7[%c2_76, %c2_77, %c0_78] : memref<18x18x128xbf16, #tpu.memory_space<vmem>>, vector<16x16x128xbf16>
    %57 = vector.shape_cast %56 : vector<16x16x128xbf16> to vector<256x128xbf16>
    %c2_79 = arith.constant 2 : index
    %c2_80 = arith.constant 2 : index
    %c0_81 = arith.constant 0 : index
    %c0_82 = arith.constant 0 : index
    %58 = vector.load %arg2[%c2_79, %c2_80, %c0_81, %c0_82] : memref<3x3x128x128xbf16, #tpu.memory_space<vmem>>, vector<1x1x128x128xbf16>
    %59 = vector.shape_cast %58 : vector<1x1x128x128xbf16> to vector<128x128xbf16>
    %cst_83 = arith.constant dense<0.000000e+00> : vector<256x128xf32>
    %60 = tpu.matmul %57, %59, %cst_83 {dimension_numbers = #tpu.dot_dimension_numbers<[1], [0], [0], [1], [0, 0, 1, 1], [], []>} : vector<256x128xbf16>, vector<128x128xbf16>, vector<256x128xf32> -> vector<256x128xf32>
    %61 = arith.addf %55, %60 : vector<256x128xf32>
    %c0_84 = arith.constant 0 : index
    %c0_85 = arith.constant 0 : index
    %62 = vector.load %arg3[%c0_84, %c0_85] : memref<1x128xf32, #tpu.memory_space<vmem>>, vector<1x128xf32>
    %63 = vector.broadcast %62 : vector<1x128xf32> to vector<256x128xf32>
    %64 = arith.addf %61, %63 : vector<256x128xf32>
    %cst_86 = arith.constant 0.000000e+00 : f32
    %65 = vector.broadcast %cst_86 : f32 to vector<256x128xf32>
    %66 = arith.maximumf %64, %65 : vector<256x128xf32>
    %67 = vector.shape_cast %66 : vector<256x128xf32> to vector<16x16x128xf32>
    %68 = arith.truncf %67 : vector<16x16x128xf32> to vector<16x16x128xbf16>
    %c1_87 = arith.constant 1 : index
    %c1_88 = arith.constant 1 : index
    %c0_89 = arith.constant 0 : index
    %69 = vector.load %arg8[%c1_87, %c1_88, %c0_89] : memref<18x18x128xbf16, #tpu.memory_space<vmem>>, vector<16x16x128xbf16>
    tpu.vector_store %arg8[%c1_87, %c1_88, %c0_89], %68 {strides = array<i32>} : memref<18x18x128xbf16, #tpu.memory_space<vmem>>, vector<16x16x128xbf16>,
    %cst_90 = arith.constant 0.000000e+00 : f32
    %70 = vector.broadcast %cst_90 : f32 to vector<256x128xf32>
    %c0_91 = arith.constant 0 : index
    %c0_92 = arith.constant 0 : index
    %c0_93 = arith.constant 0 : index
    %71 = vector.load %arg8[%c0_91, %c0_92, %c0_93] : memref<18x18x128xbf16, #tpu.memory_space<vmem>>, vector<16x16x128xbf16>
    %72 = vector.shape_cast %71 : vector<16x16x128xbf16> to vector<256x128xbf16>
    %c0_94 = arith.constant 0 : index
    %c0_95 = arith.constant 0 : index
    %c0_96 = arith.constant 0 : index
    %c0_97 = arith.constant 0 : index
    %73 = vector.load %arg4[%c0_94, %c0_95, %c0_96, %c0_97] : memref<3x3x128x128xbf16, #tpu.memory_space<vmem>>, vector<1x1x128x128xbf16>
    %74 = vector.shape_cast %73 : vector<1x1x128x128xbf16> to vector<128x128xbf16>
    %cst_98 = arith.constant dense<0.000000e+00> : vector<256x128xf32>
    %75 = tpu.matmul %72, %74, %cst_98 {dimension_numbers = #tpu.dot_dimension_numbers<[1], [0], [0], [1], [0, 0, 1, 1], [], []>} : vector<256x128xbf16>, vector<128x128xbf16>, vector<256x128xf32> -> vector<256x128xf32>
    %76 = arith.addf %70, %75 : vector<256x128xf32>
    %c0_99 = arith.constant 0 : index
    %c1_100 = arith.constant 1 : index
    %c0_101 = arith.constant 0 : index
    %77 = vector.load %arg8[%c0_99, %c1_100, %c0_101] : memref<18x18x128xbf16, #tpu.memory_space<vmem>>, vector<16x16x128xbf16>
    %78 = vector.shape_cast %77 : vector<16x16x128xbf16> to vector<256x128xbf16>
    %c0_102 = arith.constant 0 : index
    %c1_103 = arith.constant 1 : index
    %c0_104 = arith.constant 0 : index
    %c0_105 = arith.constant 0 : index
    %79 = vector.load %arg4[%c0_102, %c1_103, %c0_104, %c0_105] : memref<3x3x128x128xbf16, #tpu.memory_space<vmem>>, vector<1x1x128x128xbf16>
    %80 = vector.shape_cast %79 : vector<1x1x128x128xbf16> to vector<128x128xbf16>
    %cst_106 = arith.constant dense<0.000000e+00> : vector<256x128xf32>
    %81 = tpu.matmul %78, %80, %cst_106 {dimension_numbers = #tpu.dot_dimension_numbers<[1], [0], [0], [1], [0, 0, 1, 1], [], []>} : vector<256x128xbf16>, vector<128x128xbf16>, vector<256x128xf32> -> vector<256x128xf32>
    %82 = arith.addf %76, %81 : vector<256x128xf32>
    %c0_107 = arith.constant 0 : index
    %c2_108 = arith.constant 2 : index
    %c0_109 = arith.constant 0 : index
    %83 = vector.load %arg8[%c0_107, %c2_108, %c0_109] : memref<18x18x128xbf16, #tpu.memory_space<vmem>>, vector<16x16x128xbf16>
    %84 = vector.shape_cast %83 : vector<16x16x128xbf16> to vector<256x128xbf16>
    %c0_110 = arith.constant 0 : index
    %c2_111 = arith.constant 2 : index
    %c0_112 = arith.constant 0 : index
    %c0_113 = arith.constant 0 : index
    %85 = vector.load %arg4[%c0_110, %c2_111, %c0_112, %c0_113] : memref<3x3x128x128xbf16, #tpu.memory_space<vmem>>, vector<1x1x128x128xbf16>
    %86 = vector.shape_cast %85 : vector<1x1x128x128xbf16> to vector<128x128xbf16>
    %cst_114 = arith.constant dense<0.000000e+00> : vector<256x128xf32>
    %87 = tpu.matmul %84, %86, %cst_114 {dimension_numbers = #tpu.dot_dimension_numbers<[1], [0], [0], [1], [0, 0, 1, 1], [], []>} : vector<256x128xbf16>, vector<128x128xbf16>, vector<256x128xf32> -> vector<256x128xf32>
    %88 = arith.addf %82, %87 : vector<256x128xf32>
    %c1_115 = arith.constant 1 : index
    %c0_116 = arith.constant 0 : index
    %c0_117 = arith.constant 0 : index
    %89 = vector.load %arg8[%c1_115, %c0_116, %c0_117] : memref<18x18x128xbf16, #tpu.memory_space<vmem>>, vector<16x16x128xbf16>
    %90 = vector.shape_cast %89 : vector<16x16x128xbf16> to vector<256x128xbf16>
    %c1_118 = arith.constant 1 : index
    %c0_119 = arith.constant 0 : index
    %c0_120 = arith.constant 0 : index
    %c0_121 = arith.constant 0 : index
    %91 = vector.load %arg4[%c1_118, %c0_119, %c0_120, %c0_121] : memref<3x3x128x128xbf16, #tpu.memory_space<vmem>>, vector<1x1x128x128xbf16>
    %92 = vector.shape_cast %91 : vector<1x1x128x128xbf16> to vector<128x128xbf16>
    %cst_122 = arith.constant dense<0.000000e+00> : vector<256x128xf32>
    %93 = tpu.matmul %90, %92, %cst_122 {dimension_numbers = #tpu.dot_dimension_numbers<[1], [0], [0], [1], [0, 0, 1, 1], [], []>} : vector<256x128xbf16>, vector<128x128xbf16>, vector<256x128xf32> -> vector<256x128xf32>
    %94 = arith.addf %88, %93 : vector<256x128xf32>
    %c1_123 = arith.constant 1 : index
    %c1_124 = arith.constant 1 : index
    %c0_125 = arith.constant 0 : index
    %95 = vector.load %arg8[%c1_123, %c1_124, %c0_125] : memref<18x18x128xbf16, #tpu.memory_space<vmem>>, vector<16x16x128xbf16>
    %96 = vector.shape_cast %95 : vector<16x16x128xbf16> to vector<256x128xbf16>
    %c1_126 = arith.constant 1 : index
    %c1_127 = arith.constant 1 : index
    %c0_128 = arith.constant 0 : index
    %c0_129 = arith.constant 0 : index
    %97 = vector.load %arg4[%c1_126, %c1_127, %c0_128, %c0_129] : memref<3x3x128x128xbf16, #tpu.memory_space<vmem>>, vector<1x1x128x128xbf16>
    %98 = vector.shape_cast %97 : vector<1x1x128x128xbf16> to vector<128x128xbf16>
    %cst_130 = arith.constant dense<0.000000e+00> : vector<256x128xf32>
    %99 = tpu.matmul %96, %98, %cst_130 {dimension_numbers = #tpu.dot_dimension_numbers<[1], [0], [0], [1], [0, 0, 1, 1], [], []>} : vector<256x128xbf16>, vector<128x128xbf16>, vector<256x128xf32> -> vector<256x128xf32>
    %100 = arith.addf %94, %99 : vector<256x128xf32>
    %c1_131 = arith.constant 1 : index
    %c2_132 = arith.constant 2 : index
    %c0_133 = arith.constant 0 : index
    %101 = vector.load %arg8[%c1_131, %c2_132, %c0_133] : memref<18x18x128xbf16, #tpu.memory_space<vmem>>, vector<16x16x128xbf16>
    %102 = vector.shape_cast %101 : vector<16x16x128xbf16> to vector<256x128xbf16>
    %c1_134 = arith.constant 1 : index
    %c2_135 = arith.constant 2 : index
    %c0_136 = arith.constant 0 : index
    %c0_137 = arith.constant 0 : index
    %103 = vector.load %arg4[%c1_134, %c2_135, %c0_136, %c0_137] : memref<3x3x128x128xbf16, #tpu.memory_space<vmem>>, vector<1x1x128x128xbf16>
    %104 = vector.shape_cast %103 : vector<1x1x128x128xbf16> to vector<128x128xbf16>
    %cst_138 = arith.constant dense<0.000000e+00> : vector<256x128xf32>
    %105 = tpu.matmul %102, %104, %cst_138 {dimension_numbers = #tpu.dot_dimension_numbers<[1], [0], [0], [1], [0, 0, 1, 1], [], []>} : vector<256x128xbf16>, vector<128x128xbf16>, vector<256x128xf32> -> vector<256x128xf32>
    %106 = arith.addf %100, %105 : vector<256x128xf32>
    %c2_139 = arith.constant 2 : index
    %c0_140 = arith.constant 0 : index
    %c0_141 = arith.constant 0 : index
    %107 = vector.load %arg8[%c2_139, %c0_140, %c0_141] : memref<18x18x128xbf16, #tpu.memory_space<vmem>>, vector<16x16x128xbf16>
    %108 = vector.shape_cast %107 : vector<16x16x128xbf16> to vector<256x128xbf16>
    %c2_142 = arith.constant 2 : index
    %c0_143 = arith.constant 0 : index
    %c0_144 = arith.constant 0 : index
    %c0_145 = arith.constant 0 : index
    %109 = vector.load %arg4[%c2_142, %c0_143, %c0_144, %c0_145] : memref<3x3x128x128xbf16, #tpu.memory_space<vmem>>, vector<1x1x128x128xbf16>
    %110 = vector.shape_cast %109 : vector<1x1x128x128xbf16> to vector<128x128xbf16>
    %cst_146 = arith.constant dense<0.000000e+00> : vector<256x128xf32>
    %111 = tpu.matmul %108, %110, %cst_146 {dimension_numbers = #tpu.dot_dimension_numbers<[1], [0], [0], [1], [0, 0, 1, 1], [], []>} : vector<256x128xbf16>, vector<128x128xbf16>, vector<256x128xf32> -> vector<256x128xf32>
    %112 = arith.addf %106, %111 : vector<256x128xf32>
    %c2_147 = arith.constant 2 : index
    %c1_148 = arith.constant 1 : index
    %c0_149 = arith.constant 0 : index
    %113 = vector.load %arg8[%c2_147, %c1_148, %c0_149] : memref<18x18x128xbf16, #tpu.memory_space<vmem>>, vector<16x16x128xbf16>
    %114 = vector.shape_cast %113 : vector<16x16x128xbf16> to vector<256x128xbf16>
    %c2_150 = arith.constant 2 : index
    %c1_151 = arith.constant 1 : index
    %c0_152 = arith.constant 0 : index
    %c0_153 = arith.constant 0 : index
    %115 = vector.load %arg4[%c2_150, %c1_151, %c0_152, %c0_153] : memref<3x3x128x128xbf16, #tpu.memory_space<vmem>>, vector<1x1x128x128xbf16>
    %116 = vector.shape_cast %115 : vector<1x1x128x128xbf16> to vector<128x128xbf16>
    %cst_154 = arith.constant dense<0.000000e+00> : vector<256x128xf32>
    %117 = tpu.matmul %114, %116, %cst_154 {dimension_numbers = #tpu.dot_dimension_numbers<[1], [0], [0], [1], [0, 0, 1, 1], [], []>} : vector<256x128xbf16>, vector<128x128xbf16>, vector<256x128xf32> -> vector<256x128xf32>
    %118 = arith.addf %112, %117 : vector<256x128xf32>
    %c2_155 = arith.constant 2 : index
    %c2_156 = arith.constant 2 : index
    %c0_157 = arith.constant 0 : index
    %119 = vector.load %arg8[%c2_155, %c2_156, %c0_157] : memref<18x18x128xbf16, #tpu.memory_space<vmem>>, vector<16x16x128xbf16>
    %120 = vector.shape_cast %119 : vector<16x16x128xbf16> to vector<256x128xbf16>
    %c2_158 = arith.constant 2 : index
    %c2_159 = arith.constant 2 : index
    %c0_160 = arith.constant 0 : index
    %c0_161 = arith.constant 0 : index
    %121 = vector.load %arg4[%c2_158, %c2_159, %c0_160, %c0_161] : memref<3x3x128x128xbf16, #tpu.memory_space<vmem>>, vector<1x1x128x128xbf16>
    %122 = vector.shape_cast %121 : vector<1x1x128x128xbf16> to vector<128x128xbf16>
    %cst_162 = arith.constant dense<0.000000e+00> : vector<256x128xf32>
    %123 = tpu.matmul %120, %122, %cst_162 {dimension_numbers = #tpu.dot_dimension_numbers<[1], [0], [0], [1], [0, 0, 1, 1], [], []>} : vector<256x128xbf16>, vector<128x128xbf16>, vector<256x128xf32> -> vector<256x128xf32>
    %124 = arith.addf %118, %123 : vector<256x128xf32>
    %c0_163 = arith.constant 0 : index
    %c0_164 = arith.constant 0 : index
    %125 = vector.load %arg5[%c0_163, %c0_164] : memref<1x128xf32, #tpu.memory_space<vmem>>, vector<1x128xf32>
    %126 = vector.broadcast %125 : vector<1x128xf32> to vector<256x128xf32>
    %127 = arith.addf %124, %126 : vector<256x128xf32>
    %c0_165 = arith.constant 0 : index
    %c0_166 = arith.constant 0 : index
    %c0_167 = arith.constant 0 : index
    %c0_168 = arith.constant 0 : index
    %128 = vector.load %arg1[%c0_165, %c0_166, %c0_167, %c0_168] : memref<1x16x16x128xbf16, #tpu.memory_space<vmem>>, vector<1x16x16x128xbf16>
    %129 = vector.shape_cast %128 : vector<1x16x16x128xbf16> to vector<16x16x128xbf16>
    %130 = vector.shape_cast %129 : vector<16x16x128xbf16> to vector<256x128xbf16>
    %131 = arith.extf %130 : vector<256x128xbf16> to vector<256x128xf32>
    %132 = arith.addf %127, %131 : vector<256x128xf32>
    %cst_169 = arith.constant 0.000000e+00 : f32
    %133 = vector.broadcast %cst_169 : f32 to vector<256x128xf32>
    %134 = arith.maximumf %132, %133 : vector<256x128xf32>
    %135 = vector.shape_cast %134 : vector<256x128xf32> to vector<16x16x128xf32>
    %136 = arith.truncf %135 : vector<16x16x128xf32> to vector<16x16x128xbf16>
    %c0_170 = arith.constant 0 : index
    %c0_171 = arith.constant 0 : index
    %c0_172 = arith.constant 0 : index
    %c0_173 = arith.constant 0 : index
    %137 = vector.load %arg6[%c0_170, %c0_171, %c0_172, %c0_173] : memref<1x16x16x128xbf16, #tpu.memory_space<vmem>>, vector<1x16x16x128xbf16>
    %138 = vector.shape_cast %137 : vector<1x16x16x128xbf16> to vector<16x16x128xbf16>
    %139 = vector.shape_cast %136 : vector<16x16x128xbf16> to vector<1x16x16x128xbf16>
    tpu.vector_store %arg6[%c0_170, %c0_171, %c0_172, %c0_173], %139 {strides = array<i32>} : memref<1x16x16x128xbf16, #tpu.memory_space<vmem>>, vector<1x16x16x128xbf16>,
    return
  }
  func.func @transform_0(%arg0: i32) -> (i32, i32, i32, i32) {
    %c0_i32 = arith.constant 0 : i32
    %c0_i32_0 = arith.constant 0 : i32
    %c0_i32_1 = arith.constant 0 : i32
    %c0_i32_2 = arith.constant 0 : i32
    return %arg0, %c0_i32, %c0_i32_0, %c0_i32_1 : i32, i32, i32, i32
  }
  func.func @transform_1(%arg0: i32) -> (i32, i32, i32, i32) {
    %c0_i32 = arith.constant 0 : i32
    %c0_i32_0 = arith.constant 0 : i32
    %c0_i32_1 = arith.constant 0 : i32
    %c0_i32_2 = arith.constant 0 : i32
    %c0_i32_3 = arith.constant 0 : i32
    return %c0_i32, %c0_i32_0, %c0_i32_1, %c0_i32_2 : i32, i32, i32, i32
  }
  func.func @transform_2(%arg0: i32) -> (i32, i32) {
    %c0_i32 = arith.constant 0 : i32
    %c0_i32_0 = arith.constant 0 : i32
    %c0_i32_1 = arith.constant 0 : i32
    return %c0_i32, %c0_i32_0 : i32, i32
  }
  func.func @transform_3(%arg0: i32) -> (i32, i32, i32, i32) {
    %c0_i32 = arith.constant 0 : i32
    %c0_i32_0 = arith.constant 0 : i32
    %c0_i32_1 = arith.constant 0 : i32
    %c0_i32_2 = arith.constant 0 : i32
    %c0_i32_3 = arith.constant 0 : i32
    return %c0_i32, %c0_i32_0, %c0_i32_1, %c0_i32_2 : i32, i32, i32, i32
  }
  func.func @transform_4(%arg0: i32) -> (i32, i32) {
    %c0_i32 = arith.constant 0 : i32
    %c0_i32_0 = arith.constant 0 : i32
    %c0_i32_1 = arith.constant 0 : i32
    return %c0_i32, %c0_i32_0 : i32, i32
  }
  func.func @transform_5(%arg0: i32) -> (i32, i32, i32, i32) {
    %c0_i32 = arith.constant 0 : i32
    %c0_i32_0 = arith.constant 0 : i32
    %c0_i32_1 = arith.constant 0 : i32
    %c0_i32_2 = arith.constant 0 : i32
    return %arg0, %c0_i32, %c0_i32_0, %c0_i32_1 : i32, i32, i32, i32
  }
}

</mosaic_0001>

<llo_original>
// kernel: tpu_custom_call.1
$region0: #{tpu_custom_call.1}
  #allocation0 [shape = 'u32[]', space=smem, size = 0x4, offset = 0x4, fixed_abs, tag = 'smem constant byte address 0x4 - core index']
  #allocation1 [shape = 'u32[72,128]{1,0:T(1,128)}', space=vmem, size = 0x9000, scoped, tag = 'internal scratch']
  #allocation2 [shape = 'bf16[18,18,128]{2,1,0:T(8,128)(2,1)}', space=vmem, size = 0x1b000, scoped, tag = 'scratch operand']
  #allocation3 [shape = 'bf16[18,18,128]{2,1,0:T(8,128)(2,1)}', space=vmem, size = 0x1b000, scoped, tag = 'scratch operand']
  %s0 = inlined_call_operand.hbm [shape: bf16[2,16,16,128], index: 0, kind: input, shape index: {}]
  %s1 = inlined_call_operand.hbm [shape: bf16[3,3,128,128], index: 1, kind: input, shape index: {}]
  %s2 = inlined_call_operand.vmem [shape: f32[1,128], index: 2, kind: input, shape index: {}]
  %s3 = inlined_call_operand.hbm [shape: bf16[3,3,128,128], index: 3, kind: input, shape index: {}]
  %s4 = inlined_call_operand.vmem [shape: f32[1,128], index: 4, kind: input, shape index: {}]
  %s5 = inlined_call_operand.hbm [shape: bf16[2,16,16,128], index: 5, kind: output, shape index: {}]
  %s6 = sld [smem:[#allocation0]]
  $region65: #{tpu_custom_call.1} parent=0
    _
  %s8 = ssub.s32 1, %s6
  %s9 = scalar_select 0, %s8, %s6
  $region1: #{tpu_custom_call.1} parent=0
    #allocation4 [shape = 'u8[131072]{0}', space=vmem, size = 0x20000, scoped, tag = 'input window, operand 0']
    #allocation5 [shape = 's32[2]{0}', space=sflag, size = 0x8, scoped, tag = 'scoped memory for tpu_custom_call.1']
    #allocation6 [shape = 's32[2]{0}', space=sflag, size = 0x8, scoped, tag = 'scoped memory for tpu_custom_call.1']
    #allocation7 [shape = 'u8[294912]{0}', space=vmem, size = 0x48000, scoped, tag = 'input window, operand 1, single buffered']
    #allocation8 [shape = 's32[1]{0}', space=sflag, size = 0x4, scoped, tag = 'scoped memory for tpu_custom_call.1']
    #allocation9 [shape = 'u8[294912]{0}', space=vmem, size = 0x48000, scoped, tag = 'input window, operand 3, single buffered']
    #allocation10 [shape = 'u8[131072]{0}', space=vmem, size = 0x20000, scoped, tag = 'output window, operand 0']
    %10 = vsyncpa [#allocation5], 0
    %s11 = scalar_lea.sflag [#allocation5], 1
    %12 = vsyncpa %s11, 0
    %13 = vsyncpa [#allocation8], 0
    %14 = vsyncpa [#allocation6], 0
    %s15 = scalar_lea.sflag [#allocation6], 1
    %16 = vsyncpa %s15, 0
    loop: start=0, step=1, limit=4
    $region2: #{tpu_custom_call.1} parent=1 // loop_pre_header
      _
    $region3: #{tpu_custom_call.1} parent=1 // loop_header
      %s18 = sphi 0, %s22
      %p19 = scmp.ge.s32.totalorder %s18, 4
      %s28 = sphi 0, %s30
      %s31 = sphi 0, %s28
      %s32 = sphi 0, %s31
      %s48 = sphi 0, %s32
      %s52 = sphi 0, %s52
      %s54 = sphi 0, %s52
      %s55 = sphi 0, %s54
      %s69 = sphi 0, %s55
      %s73 = sphi 0, %s73
      %s75 = sphi 0, %s73
      %s76 = sphi 0, %s75
      %s90 = sphi 0, %s76
      %s94 = sphi 0, %s94
      %s96 = sphi 0, %s94
      %s97 = sphi 0, %s96
      %s111 = sphi 0, %s97
      %s115 = sphi 0, %s115
      %s117 = sphi 0, %s115
      %s118 = sphi 0, %s117
      %s132 = sphi 0, %s118
      %s138 = sphi 0, %s140
      %s141 = sphi 0, %s138
      %s142 = sphi 0, %s141
      %s158 = sphi 0, %s142
    $region4: #{tpu_custom_call.1} parent=1 // loop_header_branch
      %21 = sbr.rel (%p19) target = $region8
    $region5: #{tpu_custom_call.1} parent=1 // loop_body
      %s23 = ssub.s32 %s18, 1
      %s24 = ssub.s32 %s18, 2
      %s25 = sadd.s32 %s18, 1
      %s26 = ssub.s32 %s18, %s25
      %p27 = scmp.eq.s32.totalorder %s26, 0
      %s29 = sadd.s32 %s28, 1
      %s30 = scalar_select %p27, %s28, %s29
      %p33 = pneg %p27
      %p34 = scmp.eq.s32.totalorder %s18, 1
      %p35 = por %p33, %p34
      %p36 = scmp.ne.s32.totalorder %s28, %s31
      %p37 = scmp.eq.s32.totalorder %s18, 0
      %p38 = por %p36, %p37
      %p39 = scmp.ne.s32.totalorder %s28, %s31
      %p40 = scmp.eq.s32.totalorder %s23, 1
      %p41 = por %p39, %p40
      %p42 = scmp.ne.s32.totalorder %s31, %s32
      %p43 = scmp.eq.s32.totalorder %s23, 0
      %p44 = por %p42, %p43
      %p45 = scmp.ne.s32.totalorder %s31, %s32
      %p46 = scmp.eq.s32.totalorder %s24, 1
      %p47 = por %p45, %p46
      %p49 = scmp.ne.s32.totalorder %s32, %s48
      %p50 = scmp.eq.s32.totalorder %s24, 0
      %p51 = por %p49, %p50
      %s53 = sadd.s32 %s52, 1
      %p56 = scmp.eq.s32.totalorder %s18, 1
      %p57 = scmp.ne.s32.totalorder %s52, %s54
      %p58 = scmp.eq.s32.totalorder %s18, 0
      %p59 = por %p57, %p58
      %p60 = scmp.ne.s32.totalorder %s52, %s54
      %p61 = scmp.eq.s32.totalorder %s23, 1
      %p62 = por %p60, %p61
      %p63 = scmp.ne.s32.totalorder %s54, %s55
      %p64 = scmp.eq.s32.totalorder %s23, 0
      %p65 = por %p63, %p64
      %p66 = scmp.ne.s32.totalorder %s54, %s55
      %p67 = scmp.eq.s32.totalorder %s24, 1
      %p68 = por %p66, %p67
      %p70 = scmp.ne.s32.totalorder %s55, %s69
      %p71 = scmp.eq.s32.totalorder %s24, 0
      %p72 = por %p70, %p71
      %s74 = sadd.s32 %s73, 1
      %p77 = scmp.eq.s32.totalorder %s18, 1
      %p78 = scmp.ne.s32.totalorder %s73, %s75
      %p79 = scmp.eq.s32.totalorder %s18, 0
      %p80 = por %p78, %p79
      %p81 = scmp.ne.s32.totalorder %s73, %s75
      %p82 = scmp.eq.s32.totalorder %s23, 1
      %p83 = por %p81, %p82
      %p84 = scmp.ne.s32.totalorder %s75, %s76
      %p85 = scmp.eq.s32.totalorder %s23, 0
      %p86 = por %p84, %p85
      %p87 = scmp.ne.s32.totalorder %s75, %s76
      %p88 = scmp.eq.s32.totalorder %s24, 1
      %p89 = por %p87, %p88
      %p91 = scmp.ne.s32.totalorder %s76, %s90
      %p92 = scmp.eq.s32.totalorder %s24, 0
      %p93 = por %p91, %p92
      %s95 = sadd.s32 %s94, 1
      %p98 = scmp.eq.s32.totalorder %s18, 1
      %p99 = scmp.ne.s32.totalorder %s94, %s96
      %p100 = scmp.eq.s32.totalorder %s18, 0
      %p101 = por %p99, %p100
      %p102 = scmp.ne.s32.totalorder %s94, %s96
      %p103 = scmp.eq.s32.totalorder %s23, 1
      %p104 = por %p102, %p103
      %p105 = scmp.ne.s32.totalorder %s96, %s97
      %p106 = scmp.eq.s32.totalorder %s23, 0
      %p107 = por %p105, %p106
      %p108 = scmp.ne.s32.totalorder %s96, %s97
      %p109 = scmp.eq.s32.totalorder %s24, 1
      %p110 = por %p108, %p109
      %p112 = scmp.ne.s32.totalorder %s97, %s111
      %p113 = scmp.eq.s32.totalorder %s24, 0
      %p114 = por %p112, %p113
      %s116 = sadd.s32 %s115, 1
      %p119 = scmp.eq.s32.totalorder %s18, 1
      %p120 = scmp.ne.s32.totalorder %s115, %s117
      %p121 = scmp.eq.s32.totalorder %s18, 0
      %p122 = por %p120, %p121
      %p123 = scmp.ne.s32.totalorder %s115, %s117
      %p124 = scmp.eq.s32.totalorder %s23, 1
      %p125 = por %p123, %p124
      %p126 = scmp.ne.s32.totalorder %s117, %s118
      %p127 = scmp.eq.s32.totalorder %s23, 0
      %p128 = por %p126, %p127
      %p129 = scmp.ne.s32.totalorder %s117, %s118
      %p130 = scmp.eq.s32.totalorder %s24, 1
      %p131 = por %p129, %p130
      %p133 = scmp.ne.s32.totalorder %s118, %s132
      %p134 = scmp.eq.s32.totalorder %s24, 0
      %p135 = por %p133, %p134
      %s136 = ssub.s32 %s18, %s25
      %p137 = scmp.eq.s32.totalorder %s136, 0
      %s139 = sadd.s32 %s138, 1
      %s140 = scalar_select %p137, %s138, %s139
      %p143 = pneg %p137
      %p144 = scmp.eq.s32.totalorder %s18, 1
      %p145 = por %p143, %p144
      %p146 = scmp.ne.s32.totalorder %s138, %s141
      %p147 = scmp.eq.s32.totalorder %s18, 0
      %p148 = por %p146, %p147
      %p149 = scmp.ne.s32.totalorder %s138, %s141
      %p150 = scmp.eq.s32.totalorder %s23, 1
      %p151 = por %p149, %p150
      %p152 = scmp.ne.s32.totalorder %s141, %s142
      %p153 = scmp.eq.s32.totalorder %s23, 0
      %p154 = por %p152, %p153
      %p155 = scmp.ne.s32.totalorder %s141, %s142
      %p156 = scmp.eq.s32.totalorder %s24, 1
      %p157 = por %p155, %p156
      %p159 = scmp.ne.s32.totalorder %s142, %s158
      %p160 = scmp.eq.s32.totalorder %s24, 0
      %p161 = por %p159, %p160
      %p162 = scmp.le.s32.totalorder 1, %s18
      %p163 = scmp.lt.s32.totalorder %s18, 3
      %p164 = pnand %p162, %p163
      %p165 = pneg %p164
      // Predicated region
      $region9: #{tpu_custom_call.1} parent=5 // pred_check
        _
      $region10: #{tpu_custom_call.1} parent=5 // pred_check_branch
        %167 = sbr.rel (%p164) target = $region12
      $region11: #{tpu_custom_call.1} parent=5 // pred_region
        %s168 = ssub.s32 %s18, 1
        // Predicated region
        $region13: #{tpu_custom_call.1} parent=11 // pred_check
          %p169 = pneg %p65
        $region14: #{tpu_custom_call.1} parent=11 // pred_check_branch
          %171 = sbr.rel (%p169) target = $region16
        $region15: #{tpu_custom_call.1} parent=11 // pred_region
          %173 = vsyncadd [#allocation8], 0
          %s174 = sshll.u32 %s1, 4
          %s175 = int_to_ptr.hbm [resolvable:$true] %s174
          %s176 = sshll.u32 [#allocation7], 4
          %s177 = int_to_ptr.vmem [resolvable:$true] %s176
          %182 = dma.hbm_to_vmem [thread:$0]  %s175, 9216, %s177, [#allocation8], 64, 64, 4
        $region16: #{tpu_custom_call.1} parent=11 // pred_fallthru
          _
        // Predicated region
        $region17: #{tpu_custom_call.1} parent=11 // pred_check
          %p183 = pneg %p86
        $region18: #{tpu_custom_call.1} parent=11 // pred_check_branch
          %185 = sbr.rel (%p183) target = $region20
        $region19: #{tpu_custom_call.1} parent=11 // pred_region
          _
        $region20: #{tpu_custom_call.1} parent=11 // pred_fallthru
          _
        // Predicated region
        $region21: #{tpu_custom_call.1} parent=11 // pred_check
          %p186 = pneg %p107
        $region22: #{tpu_custom_call.1} parent=11 // pred_check_branch
          %188 = sbr.rel (%p186) target = $region24
        $region23: #{tpu_custom_call.1} parent=11 // pred_region
          %190 = vsyncadd [#allocation8], 0
          %s191 = sshll.u32 %s3, 4
          %s192 = int_to_ptr.hbm [resolvable:$true] %s191
          %s193 = sshll.u32 [#allocation9], 4
          %s194 = int_to_ptr.vmem [resolvable:$true] %s193
          %199 = dma.hbm_to_vmem [thread:$0]  %s192, 9216, %s194, [#allocation8], 64, 64, 4
        $region24: #{tpu_custom_call.1} parent=11 // pred_fallthru
          _
        // Predicated region
        $region25: #{tpu_custom_call.1} parent=11 // pred_check
          %p200 = pneg %p128
        $region26: #{tpu_custom_call.1} parent=11 // pred_check_branch
          %202 = sbr.rel (%p200) target = $region28
        $region27: #{tpu_custom_call.1} parent=11 // pred_region
          _
        $region28: #{tpu_custom_call.1} parent=11 // pred_fallthru
          _
      $region12: #{tpu_custom_call.1} parent=5 // pred_fallthru
        _
      %p203 = scmp.lt.s32.totalorder %s18, 2
      // Predicated region
      $region29: #{tpu_custom_call.1} parent=5 // pred_check
        %p204 = pneg %p203
      $region30: #{tpu_custom_call.1} parent=5 // pred_check_branch
        %206 = sbr.rel (%p204) target = $region32
      $region31: #{tpu_custom_call.1} parent=5 // pred_region
        // Predicated region
        $region33: #{tpu_custom_call.1} parent=31 // pred_check
          %p207 = pneg %p38
        $region34: #{tpu_custom_call.1} parent=31 // pred_check_branch
          %209 = sbr.rel (%p207) target = $region36
        $region35: #{tpu_custom_call.1} parent=31 // pred_region
          %s210 = sand.u32 %s28, 1
          %s211 = scalar_lea.sflag [#allocation5], %s210
          %s212 = sand.u32 %s28, 1
          %s213 = smul.addr %s212, 128
          %s214 = scalar_lea.vmem [#allocation4], %s213
          %216 = vsyncadd %s211, 0
          %s217 = smul.addr %s18, 32
          %s218 = smul.addr %s217, 4
          %s219 = scalar_lea.hbm %s0, %s218
          %s220 = sshll.u32 %s219, 4
          %s221 = int_to_ptr.hbm [resolvable:$true] %s220
          %s222 = sshll.u32 %s214, 4
          %s223 = int_to_ptr.vmem [resolvable:$true] %s222
          %228 = dma.hbm_to_vmem [thread:$0]  %s221, 2048, %s223, %s211, 64, 64, 4
        $region36: #{tpu_custom_call.1} parent=31 // pred_fallthru
          _
      $region32: #{tpu_custom_call.1} parent=5 // pred_fallthru
        _
      %p229 = scmp.le.s32.totalorder 1, %s18
      %p230 = scmp.lt.s32.totalorder %s18, 3
      %p231 = pnand %p229, %p230
      %p232 = pneg %p231
      // Predicated region
      $region37: #{tpu_custom_call.1} parent=5 // pred_check
        _
      $region38: #{tpu_custom_call.1} parent=5 // pred_check_branch
        %234 = sbr.rel (%p231) target = $region40
      $region39: #{tpu_custom_call.1} parent=5 // pred_region
        %s235 = ssub.s32 %s18, 1
        %s236 = sand.u32 %s31, 1
        %s237 = scalar_lea.sflag [#allocation5], %s236
        %s238 = sand.u32 %s31, 1
        %s239 = smul.addr %s238, 128
        %s240 = scalar_lea.vmem [#allocation4], %s239
        // Predicated region
        $region41: #{tpu_custom_call.1} parent=39 // pred_check
          %p241 = pneg %p44
        $region42: #{tpu_custom_call.1} parent=39 // pred_check_branch
          %243 = sbr.rel (%p241) target = $region44
        $region43: #{tpu_custom_call.1} parent=39 // pred_region
          %245 = dma.done %s237, 2048
        $region44: #{tpu_custom_call.1} parent=39 // pred_fallthru
          _
        // Predicated region
        $region45: #{tpu_custom_call.1} parent=39 // pred_check
          %p246 = pneg %p65
        $region46: #{tpu_custom_call.1} parent=39 // pred_check_branch
          %248 = sbr.rel (%p246) target = $region48
        $region47: #{tpu_custom_call.1} parent=39 // pred_region
          %250 = dma.done [#allocation8], 9216
        $region48: #{tpu_custom_call.1} parent=39 // pred_fallthru
          _
        // Predicated region
        $region49: #{tpu_custom_call.1} parent=39 // pred_check
          %p251 = pneg %p107
        $region50: #{tpu_custom_call.1} parent=39 // pred_check_branch
          %253 = sbr.rel (%p251) target = $region52
        $region51: #{tpu_custom_call.1} parent=39 // pred_region
          %255 = dma.done [#allocation8], 9216
        $region52: #{tpu_custom_call.1} parent=39 // pred_fallthru
          _
        %s256 = sand.u32 %s31, 1
        %s257 = scalar_lea.sflag [#allocation5], %s256
        %s258 = sand.u32 %s31, 1
        %s259 = smul.addr %s258, 128
        %s260 = scalar_lea.vmem [#allocation4], %s259
        %p261 = pneg %p44
        %p262 = pneg %p41
        %p263 = pneg %p65
        %p264 = pneg %p62
        %p265 = pneg %p86
        %p266 = pneg %p83
        %p267 = pneg %p107
        %p268 = pneg %p104
        %p269 = pneg %p128
        %p270 = pneg %p125
        %p271 = pneg %p154
        %p272 = pneg %p151
        %s273 = sand.u32 %s141, 1
        %s274 = scalar_lea.sflag [#allocation6], %s273
        %s275 = sand.u32 %s141, 1
        %s276 = smul.addr %s275, 128
        %s277 = scalar_lea.vmem [#allocation10], %s276
        %279 = vst [vmem:[#allocation2] sm:$0xf] 0
        %280 = vst [vmem:[#allocation2 + $0x4] sm:$0xf] 0
        %281 = vst [vmem:[#allocation2 + $0x8] sm:$0x1] 0
        %282 = vst [vmem:[#allocation2 + $0xc] sm:$0xf] 0
        %283 = vst [vmem:[#allocation2 + $0x10] sm:$0xf] 0
        %284 = vst [vmem:[#allocation2 + $0x14] sm:$0x1] 0
        %285 = vst [vmem:[#allocation2 + $0x18] sm:$0xf] 0
        %286 = vst [vmem:[#allocation2 + $0x1c] sm:$0xf] 0
        %287 = vst [vmem:[#allocation2 + $0x20] sm:$0x1] 0
        %288 = vst [vmem:[#allocation2 + $0x24] sm:$0xf] 0
        %289 = vst [vmem:[#allocation2 + $0x28] sm:$0xf] 0
        %290 = vst [vmem:[#allocation2 + $0x2c] sm:$0x1] 0
        %291 = vst [vmem:[#allocation2 + $0x30] sm:$0xf] 0
        %292 = vst [vmem:[#allocation2 + $0x34] sm:$0xf] 0
        %293 = vst [vmem:[#allocation2 + $0x38] sm:$0x1] 0
        %294 = vst [vmem:[#allocation2 + $0x3c] sm:$0xf] 0
        %295 = vst [vmem:[#allocation2 + $0x40] sm:$0xf] 0
        %296 = vst [vmem:[#allocation2 + $0x44] sm:$0x1] 0
        %297 = vst [vmem:[#allocation2 + $0x48] sm:$0xf] 0
        %298 = vst [vmem:[#allocation2 + $0x4c] sm:$0xf] 0
        %299 = vst [vmem:[#allocation2 + $0x50] sm:$0x1] 0
        %300 = vst [vmem:[#allocation2 + $0x54] sm:$0xf] 0
        %301 = vst [vmem:[#allocation2 + $0x58] sm:$0xf] 0
        %302 = vst [vmem:[#allocation2 + $0x5c] sm:$0x1] 0
        %303 = vst [vmem:[#allocation2 + $0x60] sm:$0xf] 0
        %304 = vst [vmem:[#allocation2 + $0x64] sm:$0xf] 0
        %305 = vst [vmem:[#allocation2 + $0x68] sm:$0x1] 0
        %306 = vst [vmem:[#allocation2 + $0x6c] sm:$0xf] 0
        %307 = vst [vmem:[#allocation2 + $0x70] sm:$0xf] 0
        %308 = vst [vmem:[#allocation2 + $0x74] sm:$0x1] 0
        %309 = vst [vmem:[#allocation2 + $0x78] sm:$0xf] 0
        %310 = vst [vmem:[#allocation2 + $0x7c] sm:$0xf] 0
        %311 = vst [vmem:[#allocation2 + $0x80] sm:$0x1] 0
        %312 = vst [vmem:[#allocation2 + $0x84] sm:$0xf] 0
        %313 = vst [vmem:[#allocation2 + $0x88] sm:$0xf] 0
        %314 = vst [vmem:[#allocation2 + $0x8c] sm:$0x1] 0
        %315 = vst [vmem:[#allocation2 + $0x90] sm:$0xf] 0
        %316 = vst [vmem:[#allocation2 + $0x94] sm:$0xf] 0
        %317 = vst [vmem:[#allocation2 + $0x98] sm:$0x1] 0
        %318 = vst [vmem:[#allocation2 + $0x9c] sm:$0xf] 0
        %319 = vst [vmem:[#allocation2 + $0xa0] sm:$0xf] 0
        %320 = vst [vmem:[#allocation2 + $0xa4] sm:$0x1] 0
        %321 = vst [vmem:[#allocation2 + $0xa8] sm:$0xf] 0
        %322 = vst [vmem:[#allocation2 + $0xac] sm:$0xf] 0
        %323 = vst [vmem:[#allocation2 + $0xb0] sm:$0x1] 0
        %324 = vst [vmem:[#allocation2 + $0xb4] sm:$0xf] 0
        %325 = vst [vmem:[#allocation2 + $0xb8] sm:$0xf] 0
        %326 = vst [vmem:[#allocation2 + $0xbc] sm:$0x1] 0
        %327 = vst [vmem:[#allocation2 + $0xc0] sm:$0xf] 0
        %328 = vst [vmem:[#allocation2 + $0xc4] sm:$0xf] 0
        %329 = vst [vmem:[#allocation2 + $0xc8] sm:$0x1] 0
        %330 = vst [vmem:[#allocation2 + $0xcc] sm:$0xf] 0
        %331 = vst [vmem:[#allocation2 + $0xd0] sm:$0xf] 0
        %332 = vst [vmem:[#allocation2 + $0xd4] sm:$0x1] 0
        %333 = vst [vmem:[#allocation3] sm:$0xf] 0
        %334 = vst [vmem:[#allocation3 + $0x4] sm:$0xf] 0
        %335 = vst [vmem:[#allocation3 + $0x8] sm:$0x1] 0
        %336 = vst [vmem:[#allocation3 + $0xc] sm:$0xf] 0
        %337 = vst [vmem:[#allocation3 + $0x10] sm:$0xf] 0
        %338 = vst [vmem:[#allocation3 + $0x14] sm:$0x1] 0
        %339 = vst [vmem:[#allocation3 + $0x18] sm:$0xf] 0
        %340 = vst [vmem:[#allocation3 + $0x1c] sm:$0xf] 0
        %341 = vst [vmem:[#allocation3 + $0x20] sm:$0x1] 0
        %342 = vst [vmem:[#allocation3 + $0x24] sm:$0xf] 0
        %343 = vst [vmem:[#allocation3 + $0x28] sm:$0xf] 0
        %344 = vst [vmem:[#allocation3 + $0x2c] sm:$0x1] 0
        %345 = vst [vmem:[#allocation3 + $0x30] sm:$0xf] 0
        %346 = vst [vmem:[#allocation3 + $0x34] sm:$0xf] 0
        %347 = vst [vmem:[#allocation3 + $0x38] sm:$0x1] 0
        %348 = vst [vmem:[#allocation3 + $0x3c] sm:$0xf] 0
        %349 = vst [vmem:[#allocation3 + $0x40] sm:$0xf] 0
        %350 = vst [vmem:[#allocation3 + $0x44] sm:$0x1] 0
        %351 = vst [vmem:[#allocation3 + $0x48] sm:$0xf] 0
        %352 = vst [vmem:[#allocation3 + $0x4c] sm:$0xf] 0
        %353 = vst [vmem:[#allocation3 + $0x50] sm:$0x1] 0
        %354 = vst [vmem:[#allocation3 + $0x54] sm:$0xf] 0
        %355 = vst [vmem:[#allocation3 + $0x58] sm:$0xf] 0
        %356 = vst [vmem:[#allocation3 + $0x5c] sm:$0x1] 0
        %357 = vst [vmem:[#allocation3 + $0x60] sm:$0xf] 0
        %358 = vst [vmem:[#allocation3 + $0x64] sm:$0xf] 0
        %359 = vst [vmem:[#allocation3 + $0x68] sm:$0x1] 0
        %360 = vst [vmem:[#allocation3 + $0x6c] sm:$0xf] 0
        %361 = vst [vmem:[#allocation3 + $0x70] sm:$0xf] 0
        %362 = vst [vmem:[#allocation3 + $0x74] sm:$0x1] 0
        %363 = vst [vmem:[#allocation3 + $0x78] sm:$0xf] 0
        %364 = vst [vmem:[#allocation3 + $0x7c] sm:$0xf] 0
        %365 = vst [vmem:[#allocation3 + $0x80] sm:$0x1] 0
        %366 = vst [vmem:[#allocation3 + $0x84] sm:$0xf] 0
        %367 = vst [vmem:[#allocation3 + $0x88] sm:$0xf] 0
        %368 = vst [vmem:[#allocation3 + $0x8c] sm:$0x1] 0
        %369 = vst [vmem:[#allocation3 + $0x90] sm:$0xf] 0
        %370 = vst [vmem:[#allocation3 + $0x94] sm:$0xf] 0
        %371 = vst [vmem:[#allocation3 + $0x98] sm:$0x1] 0
        %372 = vst [vmem:[#allocation3 + $0x9c] sm:$0xf] 0
        %373 = vst [vmem:[#allocation3 + $0xa0] sm:$0xf] 0
        %374 = vst [vmem:[#allocation3 + $0xa4] sm:$0x1] 0
        %375 = vst [vmem:[#allocation3 + $0xa8] sm:$0xf] 0
        %376 = vst [vmem:[#allocation3 + $0xac] sm:$0xf] 0
        %377 = vst [vmem:[#allocation3 + $0xb0] sm:$0x1] 0
        %378 = vst [vmem:[#allocation3 + $0xb4] sm:$0xf] 0
        %379 = vst [vmem:[#allocation3 + $0xb8] sm:$0xf] 0
        %380 = vst [vmem:[#allocation3 + $0xbc] sm:$0x1] 0
        %381 = vst [vmem:[#allocation3 + $0xc0] sm:$0xf] 0
        %382 = vst [vmem:[#allocation3 + $0xc4] sm:$0xf] 0
        %383 = vst [vmem:[#allocation3 + $0xc8] sm:$0x1] 0
        %384 = vst [vmem:[#allocation3 + $0xcc] sm:$0xf] 0
        %385 = vst [vmem:[#allocation3 + $0xd0] sm:$0xf] 0
        %386 = vst [vmem:[#allocation3 + $0xd4] sm:$0x1] 0
        %v387 = vld [vmem:[%s240] sm:$0xf]
        %v388 = vld [vmem:[%s240 + $0x4] sm:$0xf]
        %v389 = vld [vmem:[%s240 + $0x8] sm:$0xf]
        %v390 = vld [vmem:[%s240 + $0xc] sm:$0xf]
        %v391 = vld [vmem:[%s240 + $0x10] sm:$0xf]
        %v392 = vld [vmem:[%s240 + $0x14] sm:$0xf]
        %v393 = vld [vmem:[%s240 + $0x18] sm:$0xf]
        %v394 = vld [vmem:[%s240 + $0x1c] sm:$0xf]
        %v395 = vld [vmem:[%s240 + $0x20] sm:$0xf]
        %v396 = vld [vmem:[%s240 + $0x24] sm:$0xf]
        %v397 = vld [vmem:[%s240 + $0x28] sm:$0xf]
        %v398 = vld [vmem:[%s240 + $0x2c] sm:$0xf]
        %v399 = vld [vmem:[%s240 + $0x30] sm:$0xf]
        %v400 = vld [vmem:[%s240 + $0x34] sm:$0xf]
        %v401 = vld [vmem:[%s240 + $0x38] sm:$0xf]
        %v402 = vld [vmem:[%s240 + $0x3c] sm:$0xf]
        %v403 = vld [vmem:[%s240 + $0x40] sm:$0xf]
        %v404 = vld [vmem:[%s240 + $0x44] sm:$0xf]
        %v405 = vld [vmem:[%s240 + $0x48] sm:$0xf]
        %v406 = vld [vmem:[%s240 + $0x4c] sm:$0xf]
        %v407 = vld [vmem:[%s240 + $0x50] sm:$0xf]
        %v408 = vld [vmem:[%s240 + $0x54] sm:$0xf]
        %v409 = vld [vmem:[%s240 + $0x58] sm:$0xf]
        %v410 = vld [vmem:[%s240 + $0x5c] sm:$0xf]
        %v411 = vld [vmem:[%s240 + $0x60] sm:$0xf]
        %v412 = vld [vmem:[%s240 + $0x64] sm:$0xf]
        %v413 = vld [vmem:[%s240 + $0x68] sm:$0xf]
        %v414 = vld [vmem:[%s240 + $0x6c] sm:$0xf]
        %v415 = vld [vmem:[%s240 + $0x70] sm:$0xf]
        %v416 = vld [vmem:[%s240 + $0x74] sm:$0xf]
        %v417 = vld [vmem:[%s240 + $0x78] sm:$0xf]
        %v418 = vld [vmem:[%s240 + $0x7c] sm:$0xf]
        %vm419 = vsmask.f32 256
        %vm420 = vsmask.f32 4368
        %vm421 = vmor %vm419, %vm420
        %v423 = vshrl.u32 %v387, 16
        %v425 = vrot.slane %v423, 7
        %v426 = vshll.u32 %v387, 16
        %v428 = vor.u32 %v425, %v426
        %v429 = vrot.slane %v425, 4
        %v431 = vshrl.u32 %v388, 16
        %v433 = vrot.slane %v431, 7
        %v434 = vshll.u32 %v388, 16
        %v436 = vor.u32 %v433, %v434
        %v437 = vsel %vm421, %v429, %v436
        %v438 = vrot.slane %v433, 4
        %v440 = vshrl.u32 %v389, 16
        %v442 = vrot.slane %v440, 7
        %v443 = vshll.u32 %v389, 16
        %v445 = vor.u32 %v442, %v443
        %v446 = vrot.slane %v442, 4
        %v448 = vshrl.u32 %v390, 16
        %v450 = vrot.slane %v448, 7
        %v451 = vshll.u32 %v390, 16
        %v453 = vor.u32 %v450, %v451
        %v454 = vsel %vm421, %v446, %v453
        %v455 = vrot.slane %v450, 4
        %v457 = vshrl.u32 %v391, 16
        %v459 = vrot.slane %v457, 7
        %v460 = vshll.u32 %v391, 16
        %v462 = vor.u32 %v459, %v460
        %v463 = vrot.slane %v459, 4
        %v465 = vshrl.u32 %v392, 16
        %v467 = vrot.slane %v465, 7
        %v468 = vshll.u32 %v392, 16
        %v470 = vor.u32 %v467, %v468
        %v471 = vsel %vm421, %v463, %v470
        %v472 = vrot.slane %v467, 4
        %v474 = vshrl.u32 %v393, 16
        %v476 = vrot.slane %v474, 7
        %v477 = vshll.u32 %v393, 16
        %v479 = vor.u32 %v476, %v477
        %v480 = vrot.slane %v476, 4
        %v482 = vshrl.u32 %v394, 16
        %v484 = vrot.slane %v482, 7
        %v485 = vshll.u32 %v394, 16
        %v487 = vor.u32 %v484, %v485
        %v488 = vsel %vm421, %v480, %v487
        %v489 = vrot.slane %v484, 4
        %v491 = vshrl.u32 %v395, 16
        %v493 = vrot.slane %v491, 7
        %v494 = vshll.u32 %v395, 16
        %v496 = vor.u32 %v493, %v494
        %v497 = vrot.slane %v493, 4
        %v499 = vshrl.u32 %v396, 16
        %v501 = vrot.slane %v499, 7
        %v502 = vshll.u32 %v396, 16
        %v504 = vor.u32 %v501, %v502
        %v505 = vsel %vm421, %v497, %v504
        %v506 = vrot.slane %v501, 4
        %v508 = vshrl.u32 %v397, 16
        %v510 = vrot.slane %v508, 7
        %v511 = vshll.u32 %v397, 16
        %v513 = vor.u32 %v510, %v511
        %v514 = vrot.slane %v510, 4
        %v516 = vshrl.u32 %v398, 16
        %v518 = vrot.slane %v516, 7
        %v519 = vshll.u32 %v398, 16
        %v521 = vor.u32 %v518, %v519
        %v522 = vsel %vm421, %v514, %v521
        %v523 = vrot.slane %v518, 4
        %v525 = vshrl.u32 %v399, 16
        %v527 = vrot.slane %v525, 7
        %v528 = vshll.u32 %v399, 16
        %v530 = vor.u32 %v527, %v528
        %v531 = vrot.slane %v527, 4
        %v533 = vshrl.u32 %v400, 16
        %v535 = vrot.slane %v533, 7
        %v536 = vshll.u32 %v400, 16
        %v538 = vor.u32 %v535, %v536
        %v539 = vsel %vm421, %v531, %v538
        %v540 = vrot.slane %v535, 4
        %v542 = vshrl.u32 %v401, 16
        %v544 = vrot.slane %v542, 7
        %v545 = vshll.u32 %v401, 16
        %v547 = vor.u32 %v544, %v545
        %v548 = vrot.slane %v544, 4
        %v550 = vshrl.u32 %v402, 16
        %v552 = vrot.slane %v550, 7
        %v553 = vshll.u32 %v402, 16
        %v555 = vor.u32 %v552, %v553
        %v556 = vsel %vm421, %v548, %v555
        %v557 = vrot.slane %v552, 4
        %v559 = vshrl.u32 %v403, 16
        %v561 = vrot.slane %v559, 7
        %v562 = vshll.u32 %v403, 16
        %v564 = vor.u32 %v561, %v562
        %v565 = vrot.slane %v561, 4
        %v567 = vshrl.u32 %v404, 16
        %v569 = vrot.slane %v567, 7
        %v570 = vshll.u32 %v404, 16
        %v572 = vor.u32 %v569, %v570
        %v573 = vsel %vm421, %v565, %v572
        %v574 = vrot.slane %v569, 4
        %v576 = vshrl.u32 %v405, 16
        %v578 = vrot.slane %v576, 7
        %v579 = vshll.u32 %v405, 16
        %v581 = vor.u32 %v578, %v579
        %v582 = vrot.slane %v578, 4
        %v584 = vshrl.u32 %v406, 16
        %v586 = vrot.slane %v584, 7
        %v587 = vshll.u32 %v406, 16
        %v589 = vor.u32 %v586, %v587
        %v590 = vsel %vm421, %v582, %v589
        %v591 = vrot.slane %v586, 4
        %v593 = vshrl.u32 %v407, 16
        %v595 = vrot.slane %v593, 7
        %v596 = vshll.u32 %v407, 16
        %v598 = vor.u32 %v595, %v596
        %v599 = vrot.slane %v595, 4
        %v601 = vshrl.u32 %v408, 16
        %v603 = vrot.slane %v601, 7
        %v604 = vshll.u32 %v408, 16
        %v606 = vor.u32 %v603, %v604
        %v607 = vsel %vm421, %v599, %v606
        %v608 = vrot.slane %v603, 4
        %v610 = vshrl.u32 %v409, 16
        %v612 = vrot.slane %v610, 7
        %v613 = vshll.u32 %v409, 16
        %v615 = vor.u32 %v612, %v613
        %v616 = vrot.slane %v612, 4
        %v618 = vshrl.u32 %v410, 16
        %v620 = vrot.slane %v618, 7
        %v621 = vshll.u32 %v410, 16
        %v623 = vor.u32 %v620, %v621
        %v624 = vsel %vm421, %v616, %v623
        %v625 = vrot.slane %v620, 4
        %v627 = vshrl.u32 %v411, 16
        %v629 = vrot.slane %v627, 7
        %v630 = vshll.u32 %v411, 16
        %v632 = vor.u32 %v629, %v630
        %v633 = vrot.slane %v629, 4
        %v635 = vshrl.u32 %v412, 16
        %v637 = vrot.slane %v635, 7
        %v638 = vshll.u32 %v412, 16
        %v640 = vor.u32 %v637, %v638
        %v641 = vsel %vm421, %v633, %v640
        %v642 = vrot.slane %v637, 4
        %v644 = vshrl.u32 %v413, 16
        %v646 = vrot.slane %v644, 7
        %v647 = vshll.u32 %v413, 16
        %v649 = vor.u32 %v646, %v647
        %v650 = vrot.slane %v646, 4
        %v652 = vshrl.u32 %v414, 16
        %v654 = vrot.slane %v652, 7
        %v655 = vshll.u32 %v414, 16
        %v657 = vor.u32 %v654, %v655
        %v658 = vsel %vm421, %v650, %v657
        %v659 = vrot.slane %v654, 4
        %v661 = vshrl.u32 %v415, 16
        %v663 = vrot.slane %v661, 7
        %v664 = vshll.u32 %v415, 16
        %v666 = vor.u32 %v663, %v664
        %v667 = vrot.slane %v663, 4
        %v669 = vshrl.u32 %v416, 16
        %v671 = vrot.slane %v669, 7
        %v672 = vshll.u32 %v416, 16
        %v674 = vor.u32 %v671, %v672
        %v675 = vsel %vm421, %v667, %v674
        %v676 = vrot.slane %v671, 4
        %v678 = vshrl.u32 %v417, 16
        %v680 = vrot.slane %v678, 7
        %v681 = vshll.u32 %v417, 16
        %v683 = vor.u32 %v680, %v681
        %v684 = vrot.slane %v680, 4
        %v686 = vshrl.u32 %v418, 16
        %v688 = vrot.slane %v686, 7
        %v689 = vshll.u32 %v418, 16
        %v691 = vor.u32 %v688, %v689
        %v692 = vsel %vm421, %v684, %v691
        %v693 = vrot.slane %v688, 4
        %s742 = scalar_lea.vmem [#allocation2], 12
        %vm743 = vcmask 1043456
        %vm744 = vsmask.f32 7938
        %vm745 = vmand %vm743, %vm744
        %v746 = vld [vmem:[%s742] sm:$0xf]
        %v747 = vsel %vm745, %v428, %v746
        %748 = vst [vmem:[%s742] sm:$0xf] %v747
        %749 = vst [vmem:[%s742 + $0x4] sm:$0xf] %v437
        %vm750 = vcmask 1040384
        %vm751 = vmand %vm750, %vm419
        %v752 = vld [vmem:[%s742 + $0x8] sm:$0x1]
        %v753 = vsel %vm751, %v438, %v752
        %754 = vst [vmem:[%s742 + $0x8] sm:$0x1] %v753
        %v755 = vld [vmem:[%s742 + $0xc] sm:$0xf]
        %v756 = vsel %vm745, %v445, %v755
        %757 = vst [vmem:[%s742 + $0xc] sm:$0xf] %v756
        %758 = vst [vmem:[%s742 + $0x10] sm:$0xf] %v454
        %v759 = vld [vmem:[%s742 + $0x14] sm:$0x1]
        %v760 = vsel %vm751, %v455, %v759
        %761 = vst [vmem:[%s742 + $0x14] sm:$0x1] %v760
        %v762 = vld [vmem:[%s742 + $0x18] sm:$0xf]
        %v763 = vsel %vm745, %v462, %v762
        %764 = vst [vmem:[%s742 + $0x18] sm:$0xf] %v763
        %765 = vst [vmem:[%s742 + $0x1c] sm:$0xf] %v471
        %v766 = vld [vmem:[%s742 + $0x20] sm:$0x1]
        %v767 = vsel %vm751, %v472, %v766
        %768 = vst [vmem:[%s742 + $0x20] sm:$0x1] %v767
        %v769 = vld [vmem:[%s742 + $0x24] sm:$0xf]
        %v770 = vsel %vm745, %v479, %v769
        %771 = vst [vmem:[%s742 + $0x24] sm:$0xf] %v770
        %772 = vst [vmem:[%s742 + $0x28] sm:$0xf] %v488
        %v773 = vld [vmem:[%s742 + $0x2c] sm:$0x1]
        %v774 = vsel %vm751, %v489, %v773
        %775 = vst [vmem:[%s742 + $0x2c] sm:$0x1] %v774
        %v776 = vld [vmem:[%s742 + $0x30] sm:$0xf]
        %v777 = vsel %vm745, %v496, %v776
        %778 = vst [vmem:[%s742 + $0x30] sm:$0xf] %v777
        %779 = vst [vmem:[%s742 + $0x34] sm:$0xf] %v505
        %v780 = vld [vmem:[%s742 + $0x38] sm:$0x1]
        %v781 = vsel %vm751, %v506, %v780
        %782 = vst [vmem:[%s742 + $0x38] sm:$0x1] %v781
        %v783 = vld [vmem:[%s742 + $0x3c] sm:$0xf]
        %v784 = vsel %vm745, %v513, %v783
        %785 = vst [vmem:[%s742 + $0x3c] sm:$0xf] %v784
        %786 = vst [vmem:[%s742 + $0x40] sm:$0xf] %v522
        %v787 = vld [vmem:[%s742 + $0x44] sm:$0x1]
        %v788 = vsel %vm751, %v523, %v787
        %789 = vst [vmem:[%s742 + $0x44] sm:$0x1] %v788
        %v790 = vld [vmem:[%s742 + $0x48] sm:$0xf]
        %v791 = vsel %vm745, %v530, %v790
        %792 = vst [vmem:[%s742 + $0x48] sm:$0xf] %v791
        %793 = vst [vmem:[%s742 + $0x4c] sm:$0xf] %v539
        %v794 = vld [vmem:[%s742 + $0x50] sm:$0x1]
        %v795 = vsel %vm751, %v540, %v794
        %796 = vst [vmem:[%s742 + $0x50] sm:$0x1] %v795
        %v797 = vld [vmem:[%s742 + $0x54] sm:$0xf]
        %v798 = vsel %vm745, %v547, %v797
        %799 = vst [vmem:[%s742 + $0x54] sm:$0xf] %v798
        %800 = vst [vmem:[%s742 + $0x58] sm:$0xf] %v556
        %v801 = vld [vmem:[%s742 + $0x5c] sm:$0x1]
        %v802 = vsel %vm751, %v557, %v801
        %803 = vst [vmem:[%s742 + $0x5c] sm:$0x1] %v802
        %v804 = vld [vmem:[%s742 + $0x60] sm:$0xf]
        %v805 = vsel %vm745, %v564, %v804
        %806 = vst [vmem:[%s742 + $0x60] sm:$0xf] %v805
        %807 = vst [vmem:[%s742 + $0x64] sm:$0xf] %v573
        %v808 = vld [vmem:[%s742 + $0x68] sm:$0x1]
        %v809 = vsel %vm751, %v574, %v808
        %810 = vst [vmem:[%s742 + $0x68] sm:$0x1] %v809
        %v811 = vld [vmem:[%s742 + $0x6c] sm:$0xf]
        %v812 = vsel %vm745, %v581, %v811
        %813 = vst [vmem:[%s742 + $0x6c] sm:$0xf] %v812
        %814 = vst [vmem:[%s742 + $0x70] sm:$0xf] %v590
        %v815 = vld [vmem:[%s742 + $0x74] sm:$0x1]
        %v816 = vsel %vm751, %v591, %v815
        %817 = vst [vmem:[%s742 + $0x74] sm:$0x1] %v816
        %v818 = vld [vmem:[%s742 + $0x78] sm:$0xf]
        %v819 = vsel %vm745, %v598, %v818
        %820 = vst [vmem:[%s742 + $0x78] sm:$0xf] %v819
        %821 = vst [vmem:[%s742 + $0x7c] sm:$0xf] %v607
        %v822 = vld [vmem:[%s742 + $0x80] sm:$0x1]
        %v823 = vsel %vm751, %v608, %v822
        %824 = vst [vmem:[%s742 + $0x80] sm:$0x1] %v823
        %v825 = vld [vmem:[%s742 + $0x84] sm:$0xf]
        %v826 = vsel %vm745, %v615, %v825
        %827 = vst [vmem:[%s742 + $0x84] sm:$0xf] %v826
        %828 = vst [vmem:[%s742 + $0x88] sm:$0xf] %v624
        %v829 = vld [vmem:[%s742 + $0x8c] sm:$0x1]
        %v830 = vsel %vm751, %v625, %v829
        %831 = vst [vmem:[%s742 + $0x8c] sm:$0x1] %v830
        %v832 = vld [vmem:[%s742 + $0x90] sm:$0xf]
        %v833 = vsel %vm745, %v632, %v832
        %834 = vst [vmem:[%s742 + $0x90] sm:$0xf] %v833
        %835 = vst [vmem:[%s742 + $0x94] sm:$0xf] %v641
        %v836 = vld [vmem:[%s742 + $0x98] sm:$0x1]
        %v837 = vsel %vm751, %v642, %v836
        %838 = vst [vmem:[%s742 + $0x98] sm:$0x1] %v837
        %v839 = vld [vmem:[%s742 + $0x9c] sm:$0xf]
        %v840 = vsel %vm745, %v649, %v839
        %841 = vst [vmem:[%s742 + $0x9c] sm:$0xf] %v840
        %842 = vst [vmem:[%s742 + $0xa0] sm:$0xf] %v658
        %v843 = vld [vmem:[%s742 + $0xa4] sm:$0x1]
        %v844 = vsel %vm751, %v659, %v843
        %845 = vst [vmem:[%s742 + $0xa4] sm:$0x1] %v844
        %v846 = vld [vmem:[%s742 + $0xa8] sm:$0xf]
        %v847 = vsel %vm745, %v666, %v846
        %848 = vst [vmem:[%s742 + $0xa8] sm:$0xf] %v847
        %849 = vst [vmem:[%s742 + $0xac] sm:$0xf] %v675
        %v850 = vld [vmem:[%s742 + $0xb0] sm:$0x1]
        %v851 = vsel %vm751, %v676, %v850
        %852 = vst [vmem:[%s742 + $0xb0] sm:$0x1] %v851
        %v853 = vld [vmem:[%s742 + $0xb4] sm:$0xf]
        %v854 = vsel %vm745, %v683, %v853
        %855 = vst [vmem:[%s742 + $0xb4] sm:$0xf] %v854
        %856 = vst [vmem:[%s742 + $0xb8] sm:$0xf] %v692
        %v857 = vld [vmem:[%s742 + $0xbc] sm:$0x1]
        %v858 = vsel %vm751, %v693, %v857
        %859 = vst [vmem:[%s742 + $0xbc] sm:$0x1] %v858
        %v860 = vld [vmem:[#allocation2] sm:$0xf]
        %v861 = vld [vmem:[#allocation2 + $0x4] sm:$0xf]
        %v862 = vld [vmem:[#allocation2 + $0xc] sm:$0xf]
        %v863 = vld [vmem:[#allocation2 + $0x10] sm:$0xf]
        %v864 = vld [vmem:[#allocation2 + $0x18] sm:$0xf]
        %v865 = vld [vmem:[#allocation2 + $0x1c] sm:$0xf]
        %v866 = vld [vmem:[#allocation2 + $0x24] sm:$0xf]
        %v867 = vld [vmem:[#allocation2 + $0x28] sm:$0xf]
        %v868 = vld [vmem:[#allocation2 + $0x30] sm:$0xf]
        %v869 = vld [vmem:[#allocation2 + $0x34] sm:$0xf]
        %v870 = vld [vmem:[#allocation2 + $0x3c] sm:$0xf]
        %v871 = vld [vmem:[#allocation2 + $0x40] sm:$0xf]
        %v872 = vld [vmem:[#allocation2 + $0x48] sm:$0xf]
        %v873 = vld [vmem:[#allocation2 + $0x4c] sm:$0xf]
        %v874 = vld [vmem:[#allocation2 + $0x54] sm:$0xf]
        %v875 = vld [vmem:[#allocation2 + $0x58] sm:$0xf]
        %v876 = vld [vmem:[#allocation2 + $0x60] sm:$0xf]
        %v877 = vld [vmem:[#allocation2 + $0x64] sm:$0xf]
        %v878 = vld [vmem:[#allocation2 + $0x6c] sm:$0xf]
        %v879 = vld [vmem:[#allocation2 + $0x70] sm:$0xf]
        %v880 = vld [vmem:[#allocation2 + $0x78] sm:$0xf]
        %v881 = vld [vmem:[#allocation2 + $0x7c] sm:$0xf]
        %v882 = vld [vmem:[#allocation2 + $0x84] sm:$0xf]
        %v883 = vld [vmem:[#allocation2 + $0x88] sm:$0xf]
        %v884 = vld [vmem:[#allocation2 + $0x90] sm:$0xf]
        %v885 = vld [vmem:[#allocation2 + $0x94] sm:$0xf]
        %v886 = vld [vmem:[#allocation2 + $0x9c] sm:$0xf]
        %v887 = vld [vmem:[#allocation2 + $0xa0] sm:$0xf]
        %v888 = vld [vmem:[#allocation2 + $0xa8] sm:$0xf]
        %v889 = vld [vmem:[#allocation2 + $0xac] sm:$0xf]
        %v890 = vld [vmem:[#allocation2 + $0xb4] sm:$0xf]
        %v891 = vld [vmem:[#allocation2 + $0xb8] sm:$0xf]
        %v892 = vld [vmem:[#allocation7] sm:$0xf]
        %v893 = vld [vmem:[#allocation7 + $0x4] sm:$0xf]
        %v894 = vld [vmem:[#allocation7 + $0x8] sm:$0xf]
        %v895 = vld [vmem:[#allocation7 + $0xc] sm:$0xf]
        %v896 = vld [vmem:[#allocation7 + $0x10] sm:$0xf]
        %v897 = vld [vmem:[#allocation7 + $0x14] sm:$0xf]
        %v898 = vld [vmem:[#allocation7 + $0x18] sm:$0xf]
        %v899 = vld [vmem:[#allocation7 + $0x1c] sm:$0xf]
        %v900 = vld [vmem:[#allocation7 + $0x20] sm:$0xf]
        %v901 = vld [vmem:[#allocation7 + $0x24] sm:$0xf]
        %v902 = vld [vmem:[#allocation7 + $0x28] sm:$0xf]
        %v903 = vld [vmem:[#allocation7 + $0x2c] sm:$0xf]
        %v904 = vld [vmem:[#allocation7 + $0x30] sm:$0xf]
        %v905 = vld [vmem:[#allocation7 + $0x34] sm:$0xf]
        %v906 = vld [vmem:[#allocation7 + $0x38] sm:$0xf]
        %v907 = vld [vmem:[#allocation7 + $0x3c] sm:$0xf]
        %v908 = vld [vmem:[#allocation2 + $0x8] sm:$0x1]
        %v909 = vld [vmem:[#allocation2 + $0x14] sm:$0x1]
        %v910 = vld [vmem:[#allocation2 + $0x20] sm:$0x1]
        %v911 = vld [vmem:[#allocation2 + $0x2c] sm:$0x1]
        %v912 = vld [vmem:[#allocation2 + $0x38] sm:$0x1]
        %v913 = vld [vmem:[#allocation2 + $0x44] sm:$0x1]
        %v914 = vld [vmem:[#allocation2 + $0x50] sm:$0x1]
        %v915 = vld [vmem:[#allocation2 + $0x5c] sm:$0x1]
        %v916 = vld [vmem:[#allocation2 + $0x68] sm:$0x1]
        %v917 = vld [vmem:[#allocation2 + $0x74] sm:$0x1]
        %v918 = vld [vmem:[#allocation2 + $0x80] sm:$0x1]
        %v919 = vld [vmem:[#allocation2 + $0x8c] sm:$0x1]
        %v920 = vld [vmem:[#allocation2 + $0x98] sm:$0x1]
        %v921 = vld [vmem:[#allocation2 + $0xa4] sm:$0x1]
        %v922 = vld [vmem:[#allocation2 + $0xb0] sm:$0x1]
        %v923 = vld [vmem:[#allocation2 + $0xbc] sm:$0x1]
        %vm924 = vsmask.f32 3328
        %vm925 = vsmask.f32 7440
        %vm926 = vmor %vm924, %vm925
        %v928 = vshrl.u32 %v860, 16
        %v930 = vrot.slane %v928, 4
        %v931 = vshll.u32 %v860, 16
        %v933 = vrot.slane %v931, 5
        %v934 = vor.u32 %v930, %v933
        %v935 = vrot.slane %v934, 4
        %v937 = vshll.u32 %v861, 16
        %v939 = vrot.slane %v937, 5
        %v940 = vsel %vm926, %v935, %v939
        %v941 = vshrl.u32 %v861, 16
        %v943 = vrot.slane %v941, 4
        %v944 = vor.u32 %v943, %v939
        %v945 = vrot.slane %v944, 4
        %v947 = vshll.u32 %v908, 16
        %v949 = vrot.slane %v947, 5
        %v950 = vsel %vm926, %v945, %v949
        %v952 = vshrl.u32 %v862, 16
        %v954 = vrot.slane %v952, 4
        %v955 = vshll.u32 %v862, 16
        %v957 = vrot.slane %v955, 5
        %v958 = vor.u32 %v954, %v957
        %v959 = vrot.slane %v958, 4
        %v961 = vshll.u32 %v863, 16
        %v963 = vrot.slane %v961, 5
        %v964 = vsel %vm926, %v959, %v963
        %v965 = vshrl.u32 %v863, 16
        %v967 = vrot.slane %v965, 4
        %v968 = vor.u32 %v967, %v963
        %v969 = vrot.slane %v968, 4
        %v971 = vshll.u32 %v909, 16
        %v973 = vrot.slane %v971, 5
        %v974 = vsel %vm926, %v969, %v973
        %v976 = vshrl.u32 %v864, 16
        %v978 = vrot.slane %v976, 4
        %v979 = vshll.u32 %v864, 16
        %v981 = vrot.slane %v979, 5
        %v982 = vor.u32 %v978, %v981
        %v983 = vrot.slane %v982, 4
        %v985 = vshll.u32 %v865, 16
        %v987 = vrot.slane %v985, 5
        %v988 = vsel %vm926, %v983, %v987
        %v989 = vshrl.u32 %v865, 16
        %v991 = vrot.slane %v989, 4
        %v992 = vor.u32 %v991, %v987
        %v993 = vrot.slane %v992, 4
        %v995 = vshll.u32 %v910, 16
        %v997 = vrot.slane %v995, 5
        %v998 = vsel %vm926, %v993, %v997
        %v1000 = vshrl.u32 %v866, 16
        %v1002 = vrot.slane %v1000, 4
        %v1003 = vshll.u32 %v866, 16
        %v1005 = vrot.slane %v1003, 5
        %v1006 = vor.u32 %v1002, %v1005
        %v1007 = vrot.slane %v1006, 4
        %v1009 = vshll.u32 %v867, 16
        %v1011 = vrot.slane %v1009, 5
        %v1012 = vsel %vm926, %v1007, %v1011
        %v1013 = vshrl.u32 %v867, 16
        %v1015 = vrot.slane %v1013, 4
        %v1016 = vor.u32 %v1015, %v1011
        %v1017 = vrot.slane %v1016, 4
        %v1019 = vshll.u32 %v911, 16
        %v1021 = vrot.slane %v1019, 5
        %v1022 = vsel %vm926, %v1017, %v1021
        %v1024 = vshrl.u32 %v868, 16
        %v1026 = vrot.slane %v1024, 4
        %v1027 = vshll.u32 %v868, 16
        %v1029 = vrot.slane %v1027, 5
        %v1030 = vor.u32 %v1026, %v1029
        %v1031 = vrot.slane %v1030, 4
        %v1033 = vshll.u32 %v869, 16
        %v1035 = vrot.slane %v1033, 5
        %v1036 = vsel %vm926, %v1031, %v1035
        %v1037 = vshrl.u32 %v869, 16
        %v1039 = vrot.slane %v1037, 4
        %v1040 = vor.u32 %v1039, %v1035
        %v1041 = vrot.slane %v1040, 4
        %v1043 = vshll.u32 %v912, 16
        %v1045 = vrot.slane %v1043, 5
        %v1046 = vsel %vm926, %v1041, %v1045
        %v1048 = vshrl.u32 %v870, 16
        %v1050 = vrot.slane %v1048, 4
        %v1051 = vshll.u32 %v870, 16
        %v1053 = vrot.slane %v1051, 5
        %v1054 = vor.u32 %v1050, %v1053
        %v1055 = vrot.slane %v1054, 4
        %v1057 = vshll.u32 %v871, 16
        %v1059 = vrot.slane %v1057, 5
        %v1060 = vsel %vm926, %v1055, %v1059
        %v1061 = vshrl.u32 %v871, 16
        %v1063 = vrot.slane %v1061, 4
        %v1064 = vor.u32 %v1063, %v1059
        %v1065 = vrot.slane %v1064, 4
        %v1067 = vshll.u32 %v913, 16
        %v1069 = vrot.slane %v1067, 5
        %v1070 = vsel %vm926, %v1065, %v1069
        %v1072 = vshrl.u32 %v872, 16
        %v1074 = vrot.slane %v1072, 4
        %v1075 = vshll.u32 %v872, 16
        %v1077 = vrot.slane %v1075, 5
        %v1078 = vor.u32 %v1074, %v1077
        %v1079 = vrot.slane %v1078, 4
        %v1081 = vshll.u32 %v873, 16
        %v1083 = vrot.slane %v1081, 5
        %v1084 = vsel %vm926, %v1079, %v1083
        %v1085 = vshrl.u32 %v873, 16
        %v1087 = vrot.slane %v1085, 4
        %v1088 = vor.u32 %v1087, %v1083
        %v1089 = vrot.slane %v1088, 4
        %v1091 = vshll.u32 %v914, 16
        %v1093 = vrot.slane %v1091, 5
        %v1094 = vsel %vm926, %v1089, %v1093
        %v1096 = vshrl.u32 %v874, 16
        %v1098 = vrot.slane %v1096, 4
        %v1099 = vshll.u32 %v874, 16
        %v1101 = vrot.slane %v1099, 5
        %v1102 = vor.u32 %v1098, %v1101
        %v1103 = vrot.slane %v1102, 4
        %v1105 = vshll.u32 %v875, 16
        %v1107 = vrot.slane %v1105, 5
        %v1108 = vsel %vm926, %v1103, %v1107
        %v1109 = vshrl.u32 %v875, 16
        %v1111 = vrot.slane %v1109, 4
        %v1112 = vor.u32 %v1111, %v1107
        %v1113 = vrot.slane %v1112, 4
        %v1115 = vshll.u32 %v915, 16
        %v1117 = vrot.slane %v1115, 5
        %v1118 = vsel %vm926, %v1113, %v1117
        %v1120 = vshrl.u32 %v876, 16
        %v1122 = vrot.slane %v1120, 4
        %v1123 = vshll.u32 %v876, 16
        %v1125 = vrot.slane %v1123, 5
        %v1126 = vor.u32 %v1122, %v1125
        %v1127 = vrot.slane %v1126, 4
        %v1129 = vshll.u32 %v877, 16
        %v1131 = vrot.slane %v1129, 5
        %v1132 = vsel %vm926, %v1127, %v1131
        %v1133 = vshrl.u32 %v877, 16
        %v1135 = vrot.slane %v1133, 4
        %v1136 = vor.u32 %v1135, %v1131
        %v1137 = vrot.slane %v1136, 4
        %v1139 = vshll.u32 %v916, 16
        %v1141 = vrot.slane %v1139, 5
        %v1142 = vsel %vm926, %v1137, %v1141
        %v1144 = vshrl.u32 %v878, 16
        %v1146 = vrot.slane %v1144, 4
        %v1147 = vshll.u32 %v878, 16
        %v1149 = vrot.slane %v1147, 5
        %v1150 = vor.u32 %v1146, %v1149
        %v1151 = vrot.slane %v1150, 4
        %v1153 = vshll.u32 %v879, 16
        %v1155 = vrot.slane %v1153, 5
        %v1156 = vsel %vm926, %v1151, %v1155
        %v1157 = vshrl.u32 %v879, 16
        %v1159 = vrot.slane %v1157, 4
        %v1160 = vor.u32 %v1159, %v1155
        %v1161 = vrot.slane %v1160, 4
        %v1163 = vshll.u32 %v917, 16
        %v1165 = vrot.slane %v1163, 5
        %v1166 = vsel %vm926, %v1161, %v1165
        %v1168 = vshrl.u32 %v880, 16
        %v1170 = vrot.slane %v1168, 4
        %v1171 = vshll.u32 %v880, 16
        %v1173 = vrot.slane %v1171, 5
        %v1174 = vor.u32 %v1170, %v1173
        %v1175 = vrot.slane %v1174, 4
        %v1177 = vshll.u32 %v881, 16
        %v1179 = vrot.slane %v1177, 5
        %v1180 = vsel %vm926, %v1175, %v1179
        %v1181 = vshrl.u32 %v881, 16
        %v1183 = vrot.slane %v1181, 4
        %v1184 = vor.u32 %v1183, %v1179
        %v1185 = vrot.slane %v1184, 4
        %v1187 = vshll.u32 %v918, 16
        %v1189 = vrot.slane %v1187, 5
        %v1190 = vsel %vm926, %v1185, %v1189
        %v1192 = vshrl.u32 %v882, 16
        %v1194 = vrot.slane %v1192, 4
        %v1195 = vshll.u32 %v882, 16
        %v1197 = vrot.slane %v1195, 5
        %v1198 = vor.u32 %v1194, %v1197
        %v1199 = vrot.slane %v1198, 4
        %v1201 = vshll.u32 %v883, 16
        %v1203 = vrot.slane %v1201, 5
        %v1204 = vsel %vm926, %v1199, %v1203
        %v1205 = vshrl.u32 %v883, 16
        %v1207 = vrot.slane %v1205, 4
        %v1208 = vor.u32 %v1207, %v1203
        %v1209 = vrot.slane %v1208, 4
        %v1211 = vshll.u32 %v919, 16
        %v1213 = vrot.slane %v1211, 5
        %v1214 = vsel %vm926, %v1209, %v1213
        %v1216 = vshrl.u32 %v884, 16
        %v1218 = vrot.slane %v1216, 4
        %v1219 = vshll.u32 %v884, 16
        %v1221 = vrot.slane %v1219, 5
        %v1222 = vor.u32 %v1218, %v1221
        %v1223 = vrot.slane %v1222, 4
        %v1225 = vshll.u32 %v885, 16
        %v1227 = vrot.slane %v1225, 5
        %v1228 = vsel %vm926, %v1223, %v1227
        %v1229 = vshrl.u32 %v885, 16
        %v1231 = vrot.slane %v1229, 4
        %v1232 = vor.u32 %v1231, %v1227
        %v1233 = vrot.slane %v1232, 4
        %v1235 = vshll.u32 %v920, 16
        %v1237 = vrot.slane %v1235, 5
        %v1238 = vsel %vm926, %v1233, %v1237
        %v1240 = vshrl.u32 %v886, 16
        %v1242 = vrot.slane %v1240, 4
        %v1243 = vshll.u32 %v886, 16
        %v1245 = vrot.slane %v1243, 5
        %v1246 = vor.u32 %v1242, %v1245
        %v1247 = vrot.slane %v1246, 4
        %v1249 = vshll.u32 %v887, 16
        %v1251 = vrot.slane %v1249, 5
        %v1252 = vsel %vm926, %v1247, %v1251
        %v1253 = vshrl.u32 %v887, 16
        %v1255 = vrot.slane %v1253, 4
        %v1256 = vor.u32 %v1255, %v1251
        %v1257 = vrot.slane %v1256, 4
        %v1259 = vshll.u32 %v921, 16
        %v1261 = vrot.slane %v1259, 5
        %v1262 = vsel %vm926, %v1257, %v1261
        %v1264 = vshrl.u32 %v888, 16
        %v1266 = vrot.slane %v1264, 4
        %v1267 = vshll.u32 %v888, 16
        %v1269 = vrot.slane %v1267, 5
        %v1270 = vor.u32 %v1266, %v1269
        %v1271 = vrot.slane %v1270, 4
        %v1273 = vshll.u32 %v889, 16
        %v1275 = vrot.slane %v1273, 5
        %v1276 = vsel %vm926, %v1271, %v1275
        %v1277 = vshrl.u32 %v889, 16
        %v1279 = vrot.slane %v1277, 4
        %v1280 = vor.u32 %v1279, %v1275
        %v1281 = vrot.slane %v1280, 4
        %v1283 = vshll.u32 %v922, 16
        %v1285 = vrot.slane %v1283, 5
        %v1286 = vsel %vm926, %v1281, %v1285
        %v1288 = vshrl.u32 %v890, 16
        %v1290 = vrot.slane %v1288, 4
        %v1291 = vshll.u32 %v890, 16
        %v1293 = vrot.slane %v1291, 5
        %v1294 = vor.u32 %v1290, %v1293
        %v1295 = vrot.slane %v1294, 4
        %v1297 = vshll.u32 %v891, 16
        %v1299 = vrot.slane %v1297, 5
        %v1300 = vsel %vm926, %v1295, %v1299
        %v1301 = vshrl.u32 %v891, 16
        %v1303 = vrot.slane %v1301, 4
        %v1304 = vor.u32 %v1303, %v1299
        %v1305 = vrot.slane %v1304, 4
        %v1307 = vshll.u32 %v923, 16
        %v1309 = vrot.slane %v1307, 5
        %v1310 = vsel %vm926, %v1305, %v1309
        %s1311 = scalar_lea.vmem [#allocation7], 64
        %v1312 = vld [vmem:[%s1311] sm:$0xf]
        %v1313 = vld [vmem:[%s1311 + $0x4] sm:$0xf]
        %v1314 = vld [vmem:[%s1311 + $0x8] sm:$0xf]
        %v1315 = vld [vmem:[%s1311 + $0xc] sm:$0xf]
        %v1316 = vld [vmem:[%s1311 + $0x10] sm:$0xf]
        %v1317 = vld [vmem:[%s1311 + $0x14] sm:$0xf]
        %v1318 = vld [vmem:[%s1311 + $0x18] sm:$0xf]
        %v1319 = vld [vmem:[%s1311 + $0x1c] sm:$0xf]
        %v1320 = vld [vmem:[%s1311 + $0x20] sm:$0xf]
        %v1321 = vld [vmem:[%s1311 + $0x24] sm:$0xf]
        %v1322 = vld [vmem:[%s1311 + $0x28] sm:$0xf]
        %v1323 = vld [vmem:[%s1311 + $0x2c] sm:$0xf]
        %v1324 = vld [vmem:[%s1311 + $0x30] sm:$0xf]
        %v1325 = vld [vmem:[%s1311 + $0x34] sm:$0xf]
        %v1326 = vld [vmem:[%s1311 + $0x38] sm:$0xf]
        %v1327 = vld [vmem:[%s1311 + $0x3c] sm:$0xf]
        %v1328 = vunpack.c.l.b16 %v940
        %v1329 = vunpack.c.l.b16 %v950
        %v1330 = vunpack.c.l.b16 %v964
        %v1331 = vunpack.c.l.b16 %v974
        %v1332 = vunpack.c.l.b16 %v988
        %v1333 = vunpack.c.l.b16 %v998
        %v1334 = vunpack.c.l.b16 %v1012
        %v1335 = vunpack.c.l.b16 %v1022
        %v1336 = vunpack.c.l.b16 %v1036
        %v1337 = vunpack.c.l.b16 %v1046
        %v1338 = vunpack.c.l.b16 %v1060
        %v1339 = vunpack.c.l.b16 %v1070
        %v1340 = vunpack.c.l.b16 %v1084
        %v1341 = vunpack.c.l.b16 %v1094
        %v1342 = vunpack.c.l.b16 %v1108
        %v1343 = vunpack.c.l.b16 %v1118
        %v1344 = vunpack.c.l.b16 %v1132
        %v1345 = vunpack.c.l.b16 %v1142
        %v1346 = vunpack.c.l.b16 %v1156
        %v1347 = vunpack.c.l.b16 %v1166
        %v1348 = vunpack.c.l.b16 %v1180
        %v1349 = vunpack.c.l.b16 %v1190
        %v1350 = vunpack.c.l.b16 %v1204
        %v1351 = vunpack.c.l.b16 %v1214
        %v1352 = vunpack.c.l.b16 %v1228
        %v1353 = vunpack.c.l.b16 %v1238
        %v1354 = vunpack.c.l.b16 %v1252
        %v1355 = vunpack.c.l.b16 %v1262
        %v1356 = vunpack.c.l.b16 %v1276
        %v1357 = vunpack.c.l.b16 %v1286
        %v1358 = vunpack.c.l.b16 %v1300
        %v1359 = vunpack.c.l.b16 %v1310
        %v1360 = vpack.c.b16 %v1329, %v1328
        %v1361 = vpack.c.b16 %v1331, %v1330
        %v1362 = vpack.c.b16 %v1333, %v1332
        %v1363 = vpack.c.b16 %v1335, %v1334
        %v1364 = vpack.c.b16 %v1337, %v1336
        %v1365 = vpack.c.b16 %v1339, %v1338
        %v1366 = vpack.c.b16 %v1341, %v1340
        %v1367 = vpack.c.b16 %v1343, %v1342
        %v1368 = vpack.c.b16 %v1345, %v1344
        %v1369 = vpack.c.b16 %v1347, %v1346
        %v1370 = vpack.c.b16 %v1349, %v1348
        %v1371 = vpack.c.b16 %v1351, %v1350
        %v1372 = vpack.c.b16 %v1353, %v1352
        %v1373 = vpack.c.b16 %v1355, %v1354
        %v1374 = vpack.c.b16 %v1357, %v1356
        %v1375 = vpack.c.b16 %v1359, %v1358
        %v1408 = vunpack.c.l.b16 %v1312
        %v1409 = vunpack.c.l.b16 %v1313
        %v1410 = vunpack.c.l.b16 %v1314
        %v1411 = vunpack.c.l.b16 %v1315
        %v1412 = vunpack.c.l.b16 %v1316
        %v1413 = vunpack.c.l.b16 %v1317
        %v1414 = vunpack.c.l.b16 %v1318
        %v1415 = vunpack.c.l.b16 %v1319
        %v1416 = vunpack.c.l.b16 %v1320
        %v1417 = vunpack.c.l.b16 %v1321
        %v1418 = vunpack.c.l.b16 %v1322
        %v1419 = vunpack.c.l.b16 %v1323
        %v1420 = vunpack.c.l.b16 %v1324
        %v1421 = vunpack.c.l.b16 %v1325
        %v1422 = vunpack.c.l.b16 %v1326
        %v1423 = vunpack.c.l.b16 %v1327
        %v1424 = vpack.c.b16 %v1409, %v1408
        %v1425 = vpack.c.b16 %v1411, %v1410
        %v1426 = vpack.c.b16 %v1413, %v1412
        %v1427 = vpack.c.b16 %v1415, %v1414
        %v1428 = vpack.c.b16 %v1417, %v1416
        %v1429 = vpack.c.b16 %v1419, %v1418
        %v1430 = vpack.c.b16 %v1421, %v1420
        %v1431 = vpack.c.b16 %v1423, %v1422
        %1440 = vmatpush.bf16.msra.mxu0 %v1431
        %1441 = vmatpush.bf16.msra.mxu0 %v1430
        %1442 = vmatpush.bf16.msra.mxu0 %v1429
        %1443 = vmatpush.bf16.msra.mxu0 %v1428
        %1444 = vmatpush.bf16.msra.mxu0 %v1427
        %1445 = vmatpush.bf16.msra.mxu0 %v1426
        %1446 = vmatpush.bf16.msra.mxu0 %v1425
        %1447 = vmatpush.bf16.msra.mxu0 %v1424
        %1448 = vmatmul.bf16.gmra.mxu0 %v1360
        %v1449 = vpop.f32.mrf.mxu0
        %v1450 = vadd.f32 0.0, %v1449
        %v1451 = vpop.f32.mrf.mxu0
        %v1452 = vadd.f32 0.0, %v1451
        %1453 = vmatmul.bf16.gmra.mxu0 %v1361
        %v1454 = vpop.f32.mrf.mxu0
        %v1455 = vadd.f32 0.0, %v1454
        %v1456 = vpop.f32.mrf.mxu0
        %v1457 = vadd.f32 0.0, %v1456
        %1458 = vmatmul.bf16.gmra.mxu0 %v1362
        %v1459 = vpop.f32.mrf.mxu0
        %v1460 = vadd.f32 0.0, %v1459
        %v1461 = vpop.f32.mrf.mxu0
        %v1462 = vadd.f32 0.0, %v1461
        %1463 = vmatmul.bf16.gmra.mxu0 %v1363
        %v1464 = vpop.f32.mrf.mxu0
        %v1465 = vadd.f32 0.0, %v1464
        %v1466 = vpop.f32.mrf.mxu0
        %v1467 = vadd.f32 0.0, %v1466
        %1468 = vmatmul.bf16.gmra.mxu0 %v1364
        %v1469 = vpop.f32.mrf.mxu0
        %v1470 = vadd.f32 0.0, %v1469
        %v1471 = vpop.f32.mrf.mxu0
        %v1472 = vadd.f32 0.0, %v1471
        %1473 = vmatmul.bf16.gmra.mxu0 %v1365
        %v1474 = vpop.f32.mrf.mxu0
        %v1475 = vadd.f32 0.0, %v1474
        %v1476 = vpop.f32.mrf.mxu0
        %v1477 = vadd.f32 0.0, %v1476
        %1478 = vmatmul.bf16.gmra.mxu0 %v1366
        %v1479 = vpop.f32.mrf.mxu0
        %v1480 = vadd.f32 0.0, %v1479
        %v1481 = vpop.f32.mrf.mxu0
        %v1482 = vadd.f32 0.0, %v1481
        %1483 = vmatmul.bf16.gmra.mxu0 %v1367
        %v1484 = vpop.f32.mrf.mxu0
        %v1485 = vadd.f32 0.0, %v1484
        %v1486 = vpop.f32.mrf.mxu0
        %v1487 = vadd.f32 0.0, %v1486
        %1488 = vmatmul.bf16.gmra.mxu0 %v1368
        %v1489 = vpop.f32.mrf.mxu0
        %v1490 = vadd.f32 0.0, %v1489
        %v1491 = vpop.f32.mrf.mxu0
        %v1492 = vadd.f32 0.0, %v1491
        %1493 = vmatmul.bf16.gmra.mxu0 %v1369
        %v1494 = vpop.f32.mrf.mxu0
        %v1495 = vadd.f32 0.0, %v1494
        %v1496 = vpop.f32.mrf.mxu0
        %v1497 = vadd.f32 0.0, %v1496
        %1498 = vmatmul.bf16.gmra.mxu0 %v1370
        %v1499 = vpop.f32.mrf.mxu0
        %v1500 = vadd.f32 0.0, %v1499
        %v1501 = vpop.f32.mrf.mxu0
        %v1502 = vadd.f32 0.0, %v1501
        %1503 = vmatmul.bf16.gmra.mxu0 %v1371
        %v1504 = vpop.f32.mrf.mxu0
        %v1505 = vadd.f32 0.0, %v1504
        %v1506 = vpop.f32.mrf.mxu0
        %v1507 = vadd.f32 0.0, %v1506
        %1508 = vmatmul.bf16.gmra.mxu0 %v1372
        %v1509 = vpop.f32.mrf.mxu0
        %v1510 = vadd.f32 0.0, %v1509
        %v1511 = vpop.f32.mrf.mxu0
        %v1512 = vadd.f32 0.0, %v1511
        %1513 = vmatmul.bf16.gmra.mxu0 %v1373
        %v1514 = vpop.f32.mrf.mxu0
        %v1515 = vadd.f32 0.0, %v1514
        %v1516 = vpop.f32.mrf.mxu0
        %v1517 = vadd.f32 0.0, %v1516
        %1518 = vmatmul.bf16.gmra.mxu0 %v1374
        %v1519 = vpop.f32.mrf.mxu0
        %v1520 = vadd.f32 0.0, %v1519
        %v1521 = vpop.f32.mrf.mxu0
        %v1522 = vadd.f32 0.0, %v1521
        %1523 = vmatmul.bf16.gmra.mxu0 %v1375
        %v1524 = vpop.f32.mrf.mxu0
        %v1525 = vadd.f32 0.0, %v1524
        %v1526 = vpop.f32.mrf.mxu0
        %v1527 = vadd.f32 0.0, %v1526
        %1528 = vdwg.mxu0
        %v1561 = vunpack.c.l.b16 %v860
        %v1562 = vunpack.c.l.b16 %v861
        %v1563 = vunpack.c.l.b16 %v862
        %v1564 = vunpack.c.l.b16 %v863
        %v1565 = vunpack.c.l.b16 %v864
        %v1566 = vunpack.c.l.b16 %v865
        %v1567 = vunpack.c.l.b16 %v866
        %v1568 = vunpack.c.l.b16 %v867
        %v1569 = vunpack.c.l.b16 %v868
        %v1570 = vunpack.c.l.b16 %v869
        %v1571 = vunpack.c.l.b16 %v870
        %v1572 = vunpack.c.l.b16 %v871
        %v1573 = vunpack.c.l.b16 %v872
        %v1574 = vunpack.c.l.b16 %v873
        %v1575 = vunpack.c.l.b16 %v874
        %v1576 = vunpack.c.l.b16 %v875
        %v1577 = vunpack.c.l.b16 %v876
        %v1578 = vunpack.c.l.b16 %v877
        %v1579 = vunpack.c.l.b16 %v878
        %v1580 = vunpack.c.l.b16 %v879
        %v1581 = vunpack.c.l.b16 %v880
        %v1582 = vunpack.c.l.b16 %v881
        %v1583 = vunpack.c.l.b16 %v882
        %v1584 = vunpack.c.l.b16 %v883
        %v1585 = vunpack.c.l.b16 %v884
        %v1586 = vunpack.c.l.b16 %v885
        %v1587 = vunpack.c.l.b16 %v886
        %v1588 = vunpack.c.l.b16 %v887
        %v1589 = vunpack.c.l.b16 %v888
        %v1590 = vunpack.c.l.b16 %v889
        %v1591 = vunpack.c.l.b16 %v890
        %v1592 = vunpack.c.l.b16 %v891
        %v1593 = vpack.c.b16 %v1562, %v1561
        %v1594 = vpack.c.b16 %v1564, %v1563
        %v1595 = vpack.c.b16 %v1566, %v1565
        %v1596 = vpack.c.b16 %v1568, %v1567
        %v1597 = vpack.c.b16 %v1570, %v1569
        %v1598 = vpack.c.b16 %v1572, %v1571
        %v1599 = vpack.c.b16 %v1574, %v1573
        %v1600 = vpack.c.b16 %v1576, %v1575
        %v1601 = vpack.c.b16 %v1578, %v1577
        %v1602 = vpack.c.b16 %v1580, %v1579
        %v1603 = vpack.c.b16 %v1582, %v1581
        %v1604 = vpack.c.b16 %v1584, %v1583
        %v1605 = vpack.c.b16 %v1586, %v1585
        %v1606 = vpack.c.b16 %v1588, %v1587
        %v1607 = vpack.c.b16 %v1590, %v1589
        %v1608 = vpack.c.b16 %v1592, %v1591
        %v1641 = vunpack.c.l.b16 %v892
        %v1642 = vunpack.c.l.b16 %v893
        %v1643 = vunpack.c.l.b16 %v894
        %v1644 = vunpack.c.l.b16 %v895
        %v1645 = vunpack.c.l.b16 %v896
        %v1646 = vunpack.c.l.b16 %v897
        %v1647 = vunpack.c.l.b16 %v898
        %v1648 = vunpack.c.l.b16 %v899
        %v1649 = vunpack.c.l.b16 %v900
        %v1650 = vunpack.c.l.b16 %v901
        %v1651 = vunpack.c.l.b16 %v902
        %v1652 = vunpack.c.l.b16 %v903
        %v1653 = vunpack.c.l.b16 %v904
        %v1654 = vunpack.c.l.b16 %v905
        %v1655 = vunpack.c.l.b16 %v906
        %v1656 = vunpack.c.l.b16 %v907
        %v1657 = vpack.c.b16 %v1642, %v1641
        %v1658 = vpack.c.b16 %v1644, %v1643
        %v1659 = vpack.c.b16 %v1646, %v1645
        %v1660 = vpack.c.b16 %v1648, %v1647
        %v1661 = vpack.c.b16 %v1650, %v1649
        %v1662 = vpack.c.b16 %v1652, %v1651
        %v1663 = vpack.c.b16 %v1654, %v1653
        %v1664 = vpack.c.b16 %v1656, %v1655
        %1673 = vmatpush.bf16.msra.mxu0 %v1664
        %1674 = vmatpush.bf16.msra.mxu0 %v1663
        %1675 = vmatpush.bf16.msra.mxu0 %v1662
        %1676 = vmatpush.bf16.msra.mxu0 %v1661
        %1677 = vmatpush.bf16.msra.mxu0 %v1660
        %1678 = vmatpush.bf16.msra.mxu0 %v1659
        %1679 = vmatpush.bf16.msra.mxu0 %v1658
        %1680 = vmatpush.bf16.msra.mxu0 %v1657
        %1681 = vmatmul.bf16.gmra.mxu0 %v1593
        %v1682 = vpop.f32.mrf.mxu0
        %v1683 = vadd.f32 %v1450, %v1682
        %v1684 = vpop.f32.mrf.mxu0
        %v1685 = vadd.f32 %v1452, %v1684
        %1686 = vmatmul.bf16.gmra.mxu0 %v1594
        %v1687 = vpop.f32.mrf.mxu0
        %v1688 = vadd.f32 %v1455, %v1687
        %v1689 = vpop.f32.mrf.mxu0
        %v1690 = vadd.f32 %v1457, %v1689
        %1691 = vmatmul.bf16.gmra.mxu0 %v1595
        %v1692 = vpop.f32.mrf.mxu0
        %v1693 = vadd.f32 %v1460, %v1692
        %v1694 = vpop.f32.mrf.mxu0
        %v1695 = vadd.f32 %v1462, %v1694
        %1696 = vmatmul.bf16.gmra.mxu0 %v1596
        %v1697 = vpop.f32.mrf.mxu0
        %v1698 = vadd.f32 %v1465, %v1697
        %v1699 = vpop.f32.mrf.mxu0
        %v1700 = vadd.f32 %v1467, %v1699
        %1701 = vmatmul.bf16.gmra.mxu0 %v1597
        %v1702 = vpop.f32.mrf.mxu0
        %v1703 = vadd.f32 %v1470, %v1702
        %v1704 = vpop.f32.mrf.mxu0
        %v1705 = vadd.f32 %v1472, %v1704
        %1706 = vmatmul.bf16.gmra.mxu0 %v1598
        %v1707 = vpop.f32.mrf.mxu0
        %v1708 = vadd.f32 %v1475, %v1707
        %v1709 = vpop.f32.mrf.mxu0
        %v1710 = vadd.f32 %v1477, %v1709
        %1711 = vmatmul.bf16.gmra.mxu0 %v1599
        %v1712 = vpop.f32.mrf.mxu0
        %v1713 = vadd.f32 %v1480, %v1712
        %v1714 = vpop.f32.mrf.mxu0
        %v1715 = vadd.f32 %v1482, %v1714
        %1716 = vmatmul.bf16.gmra.mxu0 %v1600
        %v1717 = vpop.f32.mrf.mxu0
        %v1718 = vadd.f32 %v1485, %v1717
        %v1719 = vpop.f32.mrf.mxu0
        %v1720 = vadd.f32 %v1487, %v1719
        %1721 = vmatmul.bf16.gmra.mxu0 %v1601
        %v1722 = vpop.f32.mrf.mxu0
        %v1723 = vadd.f32 %v1490, %v1722
        %v1724 = vpop.f32.mrf.mxu0
        %v1725 = vadd.f32 %v1492, %v1724
        %1726 = vmatmul.bf16.gmra.mxu0 %v1602
        %v1727 = vpop.f32.mrf.mxu0
        %v1728 = vadd.f32 %v1495, %v1727
        %v1729 = vpop.f32.mrf.mxu0
        %v1730 = vadd.f32 %v1497, %v1729
        %1731 = vmatmul.bf16.gmra.mxu0 %v1603
        %v1732 = vpop.f32.mrf.mxu0
        %v1733 = vadd.f32 %v1500, %v1732
        %v1734 = vpop.f32.mrf.mxu0
        %v1735 = vadd.f32 %v1502, %v1734
        %1736 = vmatmul.bf16.gmra.mxu0 %v1604
        %v1737 = vpop.f32.mrf.mxu0
        %v1738 = vadd.f32 %v1505, %v1737
        %v1739 = vpop.f32.mrf.mxu0
        %v1740 = vadd.f32 %v1507, %v1739
        %1741 = vmatmul.bf16.gmra.mxu0 %v1605
        %v1742 = vpop.f32.mrf.mxu0
        %v1743 = vadd.f32 %v1510, %v1742
        %v1744 = vpop.f32.mrf.mxu0
        %v1745 = vadd.f32 %v1512, %v1744
        %1746 = vmatmul.bf16.gmra.mxu0 %v1606
        %v1747 = vpop.f32.mrf.mxu0
        %v1748 = vadd.f32 %v1515, %v1747
        %v1749 = vpop.f32.mrf.mxu0
        %v1750 = vadd.f32 %v1517, %v1749
        %1751 = vmatmul.bf16.gmra.mxu0 %v1607
        %v1752 = vpop.f32.mrf.mxu0
        %v1753 = vadd.f32 %v1520, %v1752
        %v1754 = vpop.f32.mrf.mxu0
        %v1755 = vadd.f32 %v1522, %v1754
        %1756 = vmatmul.bf16.gmra.mxu0 %v1608
        %v1757 = vpop.f32.mrf.mxu0
        %v1758 = vadd.f32 %v1525, %v1757
        %v1759 = vpop.f32.mrf.mxu0
        %v1760 = vadd.f32 %v1527, %v1759
        %1761 = vdwg.mxu0
        %v1762 = vld [vmem:[#allocation2] sm:$0xe]
        %v1763 = vld [vmem:[#allocation2 + $0xc] sm:$0xe]
        %v1764 = vld [vmem:[#allocation2 + $0x18] sm:$0xe]
        %v1765 = vld [vmem:[#allocation2 + $0x24] sm:$0xe]
        %v1766 = vld [vmem:[#allocation2 + $0x30] sm:$0xe]
        %v1767 = vld [vmem:[#allocation2 + $0x3c] sm:$0xe]
        %v1768 = vld [vmem:[#allocation2 + $0x48] sm:$0xe]
        %v1769 = vld [vmem:[#allocation2 + $0x54] sm:$0xe]
        %v1770 = vld [vmem:[#allocation2 + $0x60] sm:$0xe]
        %v1771 = vld [vmem:[#allocation2 + $0x6c] sm:$0xe]
        %v1772 = vld [vmem:[#allocation2 + $0x78] sm:$0xe]
        %v1773 = vld [vmem:[#allocation2 + $0x84] sm:$0xe]
        %v1774 = vld [vmem:[#allocation2 + $0x90] sm:$0xe]
        %v1775 = vld [vmem:[#allocation2 + $0x9c] sm:$0xe]
        %v1776 = vld [vmem:[#allocation2 + $0xa8] sm:$0xe]
        %v1777 = vld [vmem:[#allocation2 + $0xb4] sm:$0xe]
        %vm1810 = vcmask 1042432
        %vm1811 = vcmask 1046532
        %vm1812 = vmor %vm1810, %vm1811
        %v1813 = vrot.slane %v1762, 5
        %v1814 = vrot.slane %v1813, 4
        %v1815 = vrot.slane %v861, 5
        %v1816 = vsel %vm1812, %v1814, %v1815
        %v1817 = vrot.slane %v1815, 4
        %v1818 = vrot.slane %v908, 5
        %v1819 = vsel %vm1812, %v1817, %v1818
        %v1820 = vrot.slane %v1763, 5
        %v1821 = vrot.slane %v1820, 4
        %v1822 = vrot.slane %v863, 5
        %v1823 = vsel %vm1812, %v1821, %v1822
        %v1824 = vrot.slane %v1822, 4
        %v1825 = vrot.slane %v909, 5
        %v1826 = vsel %vm1812, %v1824, %v1825
        %v1827 = vrot.slane %v1764, 5
        %v1828 = vrot.slane %v1827, 4
        %v1829 = vrot.slane %v865, 5
        %v1830 = vsel %vm1812, %v1828, %v1829
        %v1831 = vrot.slane %v1829, 4
        %v1832 = vrot.slane %v910, 5
        %v1833 = vsel %vm1812, %v1831, %v1832
        %v1834 = vrot.slane %v1765, 5
        %v1835 = vrot.slane %v1834, 4
        %v1836 = vrot.slane %v867, 5
        %v1837 = vsel %vm1812, %v1835, %v1836
        %v1838 = vrot.slane %v1836, 4
        %v1839 = vrot.slane %v911, 5
        %v1840 = vsel %vm1812, %v1838, %v1839
        %v1841 = vrot.slane %v1766, 5
        %v1842 = vrot.slane %v1841, 4
        %v1843 = vrot.slane %v869, 5
        %v1844 = vsel %vm1812, %v1842, %v1843
        %v1845 = vrot.slane %v1843, 4
        %v1846 = vrot.slane %v912, 5
        %v1847 = vsel %vm1812, %v1845, %v1846
        %v1848 = vrot.slane %v1767, 5
        %v1849 = vrot.slane %v1848, 4
        %v1850 = vrot.slane %v871, 5
        %v1851 = vsel %vm1812, %v1849, %v1850
        %v1852 = vrot.slane %v1850, 4
        %v1853 = vrot.slane %v913, 5
        %v1854 = vsel %vm1812, %v1852, %v1853
        %v1855 = vrot.slane %v1768, 5
        %v1856 = vrot.slane %v1855, 4
        %v1857 = vrot.slane %v873, 5
        %v1858 = vsel %vm1812, %v1856, %v1857
        %v1859 = vrot.slane %v1857, 4
        %v1860 = vrot.slane %v914, 5
        %v1861 = vsel %vm1812, %v1859, %v1860
        %v1862 = vrot.slane %v1769, 5
        %v1863 = vrot.slane %v1862, 4
        %v1864 = vrot.slane %v875, 5
        %v1865 = vsel %vm1812, %v1863, %v1864
        %v1866 = vrot.slane %v1864, 4
        %v1867 = vrot.slane %v915, 5
        %v1868 = vsel %vm1812, %v1866, %v1867
        %v1869 = vrot.slane %v1770, 5
        %v1870 = vrot.slane %v1869, 4
        %v1871 = vrot.slane %v877, 5
        %v1872 = vsel %vm1812, %v1870, %v1871
        %v1873 = vrot.slane %v1871, 4
        %v1874 = vrot.slane %v916, 5
        %v1875 = vsel %vm1812, %v1873, %v1874
        %v1876 = vrot.slane %v1771, 5
        %v1877 = vrot.slane %v1876, 4
        %v1878 = vrot.slane %v879, 5
        %v1879 = vsel %vm1812, %v1877, %v1878
        %v1880 = vrot.slane %v1878, 4
        %v1881 = vrot.slane %v917, 5
        %v1882 = vsel %vm1812, %v1880, %v1881
        %v1883 = vrot.slane %v1772, 5
        %v1884 = vrot.slane %v1883, 4
        %v1885 = vrot.slane %v881, 5
        %v1886 = vsel %vm1812, %v1884, %v1885
        %v1887 = vrot.slane %v1885, 4
        %v1888 = vrot.slane %v918, 5
        %v1889 = vsel %vm1812, %v1887, %v1888
        %v1890 = vrot.slane %v1773, 5
        %v1891 = vrot.slane %v1890, 4
        %v1892 = vrot.slane %v883, 5
        %v1893 = vsel %vm1812, %v1891, %v1892
        %v1894 = vrot.slane %v1892, 4
        %v1895 = vrot.slane %v919, 5
        %v1896 = vsel %vm1812, %v1894, %v1895
        %v1897 = vrot.slane %v1774, 5
        %v1898 = vrot.slane %v1897, 4
        %v1899 = vrot.slane %v885, 5
        %v1900 = vsel %vm1812, %v1898, %v1899
        %v1901 = vrot.slane %v1899, 4
        %v1902 = vrot.slane %v920, 5
        %v1903 = vsel %vm1812, %v1901, %v1902
        %v1904 = vrot.slane %v1775, 5
        %v1905 = vrot.slane %v1904, 4
        %v1906 = vrot.slane %v887, 5
        %v1907 = vsel %vm1812, %v1905, %v1906
        %v1908 = vrot.slane %v1906, 4
        %v1909 = vrot.slane %v921, 5
        %v1910 = vsel %vm1812, %v1908, %v1909
        %v1911 = vrot.slane %v1776, 5
        %v1912 = vrot.slane %v1911, 4
        %v1913 = vrot.slane %v889, 5
        %v1914 = vsel %vm1812, %v1912, %v1913
        %v1915 = vrot.slane %v1913, 4
        %v1916 = vrot.slane %v922, 5
        %v1917 = vsel %vm1812, %v1915, %v1916
        %v1918 = vrot.slane %v1777, 5
        %v1919 = vrot.slane %v1918, 4
        %v1920 = vrot.slane %v891, 5
        %v1921 = vsel %vm1812, %v1919, %v1920
        %v1922 = vrot.slane %v1920, 4
        %v1923 = vrot.slane %v923, 5
        %v1924 = vsel %vm1812, %v1922, %v1923
        %s1925 = scalar_lea.vmem [#allocation7], 128
        %v1926 = vld [vmem:[%s1925] sm:$0xf]
        %v1927 = vld [vmem:[%s1925 + $0x4] sm:$0xf]
        %v1928 = vld [vmem:[%s1925 + $0x8] sm:$0xf]
        %v1929 = vld [vmem:[%s1925 + $0xc] sm:$0xf]
        %v1930 = vld [vmem:[%s1925 + $0x10] sm:$0xf]
        %v1931 = vld [vmem:[%s1925 + $0x14] sm:$0xf]
        %v1932 = vld [vmem:[%s1925 + $0x18] sm:$0xf]
        %v1933 = vld [vmem:[%s1925 + $0x1c] sm:$0xf]
        %v1934 = vld [vmem:[%s1925 + $0x20] sm:$0xf]
        %v1935 = vld [vmem:[%s1925 + $0x24] sm:$0xf]
        %v1936 = vld [vmem:[%s1925 + $0x28] sm:$0xf]
        %v1937 = vld [vmem:[%s1925 + $0x2c] sm:$0xf]
        %v1938 = vld [vmem:[%s1925 + $0x30] sm:$0xf]
        %v1939 = vld [vmem:[%s1925 + $0x34] sm:$0xf]
        %v1940 = vld [vmem:[%s1925 + $0x38] sm:$0xf]
        %v1941 = vld [vmem:[%s1925 + $0x3c] sm:$0xf]
        %v1942 = vunpack.c.l.b16 %v1816
        %v1943 = vunpack.c.l.b16 %v1819
        %v1944 = vunpack.c.l.b16 %v1823
        %v1945 = vunpack.c.l.b16 %v1826
        %v1946 = vunpack.c.l.b16 %v1830
        %v1947 = vunpack.c.l.b16 %v1833
        %v1948 = vunpack.c.l.b16 %v1837
        %v1949 = vunpack.c.l.b16 %v1840
        %v1950 = vunpack.c.l.b16 %v1844
        %v1951 = vunpack.c.l.b16 %v1847
        %v1952 = vunpack.c.l.b16 %v1851
        %v1953 = vunpack.c.l.b16 %v1854
        %v1954 = vunpack.c.l.b16 %v1858
        %v1955 = vunpack.c.l.b16 %v1861
        %v1956 = vunpack.c.l.b16 %v1865
        %v1957 = vunpack.c.l.b16 %v1868
        %v1958 = vunpack.c.l.b16 %v1872
        %v1959 = vunpack.c.l.b16 %v1875
        %v1960 = vunpack.c.l.b16 %v1879
        %v1961 = vunpack.c.l.b16 %v1882
        %v1962 = vunpack.c.l.b16 %v1886
        %v1963 = vunpack.c.l.b16 %v1889
        %v1964 = vunpack.c.l.b16 %v1893
        %v1965 = vunpack.c.l.b16 %v1896
        %v1966 = vunpack.c.l.b16 %v1900
        %v1967 = vunpack.c.l.b16 %v1903
        %v1968 = vunpack.c.l.b16 %v1907
        %v1969 = vunpack.c.l.b16 %v1910
        %v1970 = vunpack.c.l.b16 %v1914
        %v1971 = vunpack.c.l.b16 %v1917
        %v1972 = vunpack.c.l.b16 %v1921
        %v1973 = vunpack.c.l.b16 %v1924
        %v1974 = vpack.c.b16 %v1943, %v1942
        %v1975 = vpack.c.b16 %v1945, %v1944
        %v1976 = vpack.c.b16 %v1947, %v1946
        %v1977 = vpack.c.b16 %v1949, %v1948
        %v1978 = vpack.c.b16 %v1951, %v1950
        %v1979 = vpack.c.b16 %v1953, %v1952
        %v1980 = vpack.c.b16 %v1955, %v1954
        %v1981 = vpack.c.b16 %v1957, %v1956
        %v1982 = vpack.c.b16 %v1959, %v1958
        %v1983 = vpack.c.b16 %v1961, %v1960
        %v1984 = vpack.c.b16 %v1963, %v1962
        %v1985 = vpack.c.b16 %v1965, %v1964
        %v1986 = vpack.c.b16 %v1967, %v1966
        %v1987 = vpack.c.b16 %v1969, %v1968
        %v1988 = vpack.c.b16 %v1971, %v1970
        %v1989 = vpack.c.b16 %v1973, %v1972
        %v2022 = vunpack.c.l.b16 %v1926
        %v2023 = vunpack.c.l.b16 %v1927
        %v2024 = vunpack.c.l.b16 %v1928
        %v2025 = vunpack.c.l.b16 %v1929
        %v2026 = vunpack.c.l.b16 %v1930
        %v2027 = vunpack.c.l.b16 %v1931
        %v2028 = vunpack.c.l.b16 %v1932
        %v2029 = vunpack.c.l.b16 %v1933
        %v2030 = vunpack.c.l.b16 %v1934
        %v2031 = vunpack.c.l.b16 %v1935
        %v2032 = vunpack.c.l.b16 %v1936
        %v2033 = vunpack.c.l.b16 %v1937
        %v2034 = vunpack.c.l.b16 %v1938
        %v2035 = vunpack.c.l.b16 %v1939
        %v2036 = vunpack.c.l.b16 %v1940
        %v2037 = vunpack.c.l.b16 %v1941
        %v2038 = vpack.c.b16 %v2023, %v2022
        %v2039 = vpack.c.b16 %v2025, %v2024
        %v2040 = vpack.c.b16 %v2027, %v2026
        %v2041 = vpack.c.b16 %v2029, %v2028
        %v2042 = vpack.c.b16 %v2031, %v2030
        %v2043 = vpack.c.b16 %v2033, %v2032
        %v2044 = vpack.c.b16 %v2035, %v2034
        %v2045 = vpack.c.b16 %v2037, %v2036
        %2054 = vmatpush.bf16.msra.mxu0 %v2045
        %2055 = vmatpush.bf16.msra.mxu0 %v2044
        %2056 = vmatpush.bf16.msra.mxu0 %v2043
        %2057 = vmatpush.bf16.msra.mxu0 %v2042
        %2058 = vmatpush.bf16.msra.mxu0 %v2041
        %2059 = vmatpush.bf16.msra.mxu0 %v2040
        %2060 = vmatpush.bf16.msra.mxu0 %v2039
        %2061 = vmatpush.bf16.msra.mxu0 %v2038
        %2062 = vmatmul.bf16.gmra.mxu0 %v1974
        %v2063 = vpop.f32.mrf.mxu0
        %v2064 = vadd.f32 0.0, %v2063
        %v2065 = vpop.f32.mrf.mxu0
        %v2066 = vadd.f32 0.0, %v2065
        %2067 = vmatmul.bf16.gmra.mxu0 %v1975
        %v2068 = vpop.f32.mrf.mxu0
        %v2069 = vadd.f32 0.0, %v2068
        %v2070 = vpop.f32.mrf.mxu0
        %v2071 = vadd.f32 0.0, %v2070
        %2072 = vmatmul.bf16.gmra.mxu0 %v1976
        %v2073 = vpop.f32.mrf.mxu0
        %v2074 = vadd.f32 0.0, %v2073
        %v2075 = vpop.f32.mrf.mxu0
        %v2076 = vadd.f32 0.0, %v2075
        %2077 = vmatmul.bf16.gmra.mxu0 %v1977
        %v2078 = vpop.f32.mrf.mxu0
        %v2079 = vadd.f32 0.0, %v2078
        %v2080 = vpop.f32.mrf.mxu0
        %v2081 = vadd.f32 0.0, %v2080
        %2082 = vmatmul.bf16.gmra.mxu0 %v1978
        %v2083 = vpop.f32.mrf.mxu0
        %v2084 = vadd.f32 0.0, %v2083
        %v2085 = vpop.f32.mrf.mxu0
        %v2086 = vadd.f32 0.0, %v2085
        %2087 = vmatmul.bf16.gmra.mxu0 %v1979
        %v2088 = vpop.f32.mrf.mxu0
        %v2089 = vadd.f32 0.0, %v2088
        %v2090 = vpop.f32.mrf.mxu0
        %v2091 = vadd.f32 0.0, %v2090
        %2092 = vmatmul.bf16.gmra.mxu0 %v1980
        %v2093 = vpop.f32.mrf.mxu0
        %v2094 = vadd.f32 0.0, %v2093
        %v2095 = vpop.f32.mrf.mxu0
        %v2096 = vadd.f32 0.0, %v2095
        %2097 = vmatmul.bf16.gmra.mxu0 %v1981
        %v2098 = vpop.f32.mrf.mxu0
        %v2099 = vadd.f32 0.0, %v2098
        %v2100 = vpop.f32.mrf.mxu0
        %v2101 = vadd.f32 0.0, %v2100
        %2102 = vmatmul.bf16.gmra.mxu0 %v1982
        %v2103 = vpop.f32.mrf.mxu0
        %v2104 = vadd.f32 0.0, %v2103
        %v2105 = vpop.f32.mrf.mxu0
        %v2106 = vadd.f32 0.0, %v2105
        %2107 = vmatmul.bf16.gmra.mxu0 %v1983
        %v2108 = vpop.f32.mrf.mxu0
        %v2109 = vadd.f32 0.0, %v2108
        %v2110 = vpop.f32.mrf.mxu0
        %v2111 = vadd.f32 0.0, %v2110
        %2112 = vmatmul.bf16.gmra.mxu0 %v1984
        %v2113 = vpop.f32.mrf.mxu0
        %v2114 = vadd.f32 0.0, %v2113
        %v2115 = vpop.f32.mrf.mxu0
        %v2116 = vadd.f32 0.0, %v2115
        %2117 = vmatmul.bf16.gmra.mxu0 %v1985
        %v2118 = vpop.f32.mrf.mxu0
        %v2119 = vadd.f32 0.0, %v2118
        %v2120 = vpop.f32.mrf.mxu0
        %v2121 = vadd.f32 0.0, %v2120
        %2122 = vmatmul.bf16.gmra.mxu0 %v1986
        %v2123 = vpop.f32.mrf.mxu0
        %v2124 = vadd.f32 0.0, %v2123
        %v2125 = vpop.f32.mrf.mxu0
        %v2126 = vadd.f32 0.0, %v2125
        %2127 = vmatmul.bf16.gmra.mxu0 %v1987
        %v2128 = vpop.f32.mrf.mxu0
        %v2129 = vadd.f32 0.0, %v2128
        %v2130 = vpop.f32.mrf.mxu0
        %v2131 = vadd.f32 0.0, %v2130
        %2132 = vmatmul.bf16.gmra.mxu0 %v1988
        %v2133 = vpop.f32.mrf.mxu0
        %v2134 = vadd.f32 0.0, %v2133
        %v2135 = vpop.f32.mrf.mxu0
        %v2136 = vadd.f32 0.0, %v2135
        %2137 = vmatmul.bf16.gmra.mxu0 %v1989
        %v2138 = vpop.f32.mrf.mxu0
        %v2139 = vadd.f32 0.0, %v2138
        %v2140 = vpop.f32.mrf.mxu0
        %v2141 = vadd.f32 0.0, %v2140
        %2142 = vdwg.mxu0
        %v2143 = vadd.f32 %v1683, %v2064
        %v2144 = vadd.f32 %v1685, %v2066
        %v2145 = vadd.f32 %v1688, %v2069
        %v2146 = vadd.f32 %v1690, %v2071
        %v2147 = vadd.f32 %v1693, %v2074
        %v2148 = vadd.f32 %v1695, %v2076
        %v2149 = vadd.f32 %v1698, %v2079
        %v2150 = vadd.f32 %v1700, %v2081
        %v2151 = vadd.f32 %v1703, %v2084
        %v2152 = vadd.f32 %v1705, %v2086
        %v2153 = vadd.f32 %v1708, %v2089
        %v2154 = vadd.f32 %v1710, %v2091
        %v2155 = vadd.f32 %v1713, %v2094
        %v2156 = vadd.f32 %v1715, %v2096
        %v2157 = vadd.f32 %v1718, %v2099
        %v2158 = vadd.f32 %v1720, %v2101
        %v2159 = vadd.f32 %v1723, %v2104
        %v2160 = vadd.f32 %v1725, %v2106
        %v2161 = vadd.f32 %v1728, %v2109
        %v2162 = vadd.f32 %v1730, %v2111
        %v2163 = vadd.f32 %v1733, %v2114
        %v2164 = vadd.f32 %v1735, %v2116
        %v2165 = vadd.f32 %v1738, %v2119
        %v2166 = vadd.f32 %v1740, %v2121
        %v2167 = vadd.f32 %v1743, %v2124
        %v2168 = vadd.f32 %v1745, %v2126
        %v2169 = vadd.f32 %v1748, %v2129
        %v2170 = vadd.f32 %v1750, %v2131
        %v2171 = vadd.f32 %v1753, %v2134
        %v2172 = vadd.f32 %v1755, %v2136
        %v2173 = vadd.f32 %v1758, %v2139
        %v2174 = vadd.f32 %v1760, %v2141
        %v2175 = vld [vmem:[%s742] sm:$0xf]
        %v2176 = vld [vmem:[%s742 + $0x4] sm:$0xf]
        %v2177 = vld [vmem:[%s742 + $0xc] sm:$0xf]
        %v2178 = vld [vmem:[%s742 + $0x10] sm:$0xf]
        %v2179 = vld [vmem:[%s742 + $0x18] sm:$0xf]
        %v2180 = vld [vmem:[%s742 + $0x1c] sm:$0xf]
        %v2181 = vld [vmem:[%s742 + $0x24] sm:$0xf]
        %v2182 = vld [vmem:[%s742 + $0x28] sm:$0xf]
        %v2183 = vld [vmem:[%s742 + $0x30] sm:$0xf]
        %v2184 = vld [vmem:[%s742 + $0x34] sm:$0xf]
        %v2185 = vld [vmem:[%s742 + $0x3c] sm:$0xf]
        %v2186 = vld [vmem:[%s742 + $0x40] sm:$0xf]
        %v2187 = vld [vmem:[%s742 + $0x48] sm:$0xf]
        %v2188 = vld [vmem:[%s742 + $0x4c] sm:$0xf]
        %v2189 = vld [vmem:[%s742 + $0x54] sm:$0xf]
        %v2190 = vld [vmem:[%s742 + $0x58] sm:$0xf]
        %v2191 = vld [vmem:[%s742 + $0x60] sm:$0xf]
        %v2192 = vld [vmem:[%s742 + $0x64] sm:$0xf]
        %v2193 = vld [vmem:[%s742 + $0x6c] sm:$0xf]
        %v2194 = vld [vmem:[%s742 + $0x70] sm:$0xf]
        %v2195 = vld [vmem:[%s742 + $0x78] sm:$0xf]
        %v2196 = vld [vmem:[%s742 + $0x7c] sm:$0xf]
        %v2197 = vld [vmem:[%s742 + $0x84] sm:$0xf]
        %v2198 = vld [vmem:[%s742 + $0x88] sm:$0xf]
        %v2199 = vld [vmem:[%s742 + $0x90] sm:$0xf]
        %v2200 = vld [vmem:[%s742 + $0x94] sm:$0xf]
        %v2201 = vld [vmem:[%s742 + $0x9c] sm:$0xf]
        %v2202 = vld [vmem:[%s742 + $0xa0] sm:$0xf]
        %v2203 = vld [vmem:[%s742 + $0xa8] sm:$0xf]
        %v2204 = vld [vmem:[%s742 + $0xac] sm:$0xf]
        %v2205 = vld [vmem:[%s742 + $0xb4] sm:$0xf]
        %v2206 = vld [vmem:[%s742 + $0xb8] sm:$0xf]
        %s2207 = scalar_lea.vmem [#allocation7], 192
        %v2208 = vld [vmem:[%s2207] sm:$0xf]
        %v2209 = vld [vmem:[%s2207 + $0x4] sm:$0xf]
        %v2210 = vld [vmem:[%s2207 + $0x8] sm:$0xf]
        %v2211 = vld [vmem:[%s2207 + $0xc] sm:$0xf]
        %v2212 = vld [vmem:[%s2207 + $0x10] sm:$0xf]
        %v2213 = vld [vmem:[%s2207 + $0x14] sm:$0xf]
        %v2214 = vld [vmem:[%s2207 + $0x18] sm:$0xf]
        %v2215 = vld [vmem:[%s2207 + $0x1c] sm:$0xf]
        %v2216 = vld [vmem:[%s2207 + $0x20] sm:$0xf]
        %v2217 = vld [vmem:[%s2207 + $0x24] sm:$0xf]
        %v2218 = vld [vmem:[%s2207 + $0x28] sm:$0xf]
        %v2219 = vld [vmem:[%s2207 + $0x2c] sm:$0xf]
        %v2220 = vld [vmem:[%s2207 + $0x30] sm:$0xf]
        %v2221 = vld [vmem:[%s2207 + $0x34] sm:$0xf]
        %v2222 = vld [vmem:[%s2207 + $0x38] sm:$0xf]
        %v2223 = vld [vmem:[%s2207 + $0x3c] sm:$0xf]
        %v2256 = vunpack.c.l.b16 %v2175
        %v2257 = vunpack.c.l.b16 %v2176
        %v2258 = vunpack.c.l.b16 %v2177
        %v2259 = vunpack.c.l.b16 %v2178
        %v2260 = vunpack.c.l.b16 %v2179
        %v2261 = vunpack.c.l.b16 %v2180
        %v2262 = vunpack.c.l.b16 %v2181
        %v2263 = vunpack.c.l.b16 %v2182
        %v2264 = vunpack.c.l.b16 %v2183
        %v2265 = vunpack.c.l.b16 %v2184
        %v2266 = vunpack.c.l.b16 %v2185
        %v2267 = vunpack.c.l.b16 %v2186
        %v2268 = vunpack.c.l.b16 %v2187
        %v2269 = vunpack.c.l.b16 %v2188
        %v2270 = vunpack.c.l.b16 %v2189
        %v2271 = vunpack.c.l.b16 %v2190
        %v2272 = vunpack.c.l.b16 %v2191
        %v2273 = vunpack.c.l.b16 %v2192
        %v2274 = vunpack.c.l.b16 %v2193
        %v2275 = vunpack.c.l.b16 %v2194
        %v2276 = vunpack.c.l.b16 %v2195
        %v2277 = vunpack.c.l.b16 %v2196
        %v2278 = vunpack.c.l.b16 %v2197
        %v2279 = vunpack.c.l.b16 %v2198
        %v2280 = vunpack.c.l.b16 %v2199
        %v2281 = vunpack.c.l.b16 %v2200
        %v2282 = vunpack.c.l.b16 %v2201
        %v2283 = vunpack.c.l.b16 %v2202
        %v2284 = vunpack.c.l.b16 %v2203
        %v2285 = vunpack.c.l.b16 %v2204
        %v2286 = vunpack.c.l.b16 %v2205
        %v2287 = vunpack.c.l.b16 %v2206
        %v2288 = vpack.c.b16 %v2257, %v2256
        %v2289 = vpack.c.b16 %v2259, %v2258
        %v2290 = vpack.c.b16 %v2261, %v2260
        %v2291 = vpack.c.b16 %v2263, %v2262
        %v2292 = vpack.c.b16 %v2265, %v2264
        %v2293 = vpack.c.b16 %v2267, %v2266
        %v2294 = vpack.c.b16 %v2269, %v2268
        %v2295 = vpack.c.b16 %v2271, %v2270
        %v2296 = vpack.c.b16 %v2273, %v2272
        %v2297 = vpack.c.b16 %v2275, %v2274
        %v2298 = vpack.c.b16 %v2277, %v2276
        %v2299 = vpack.c.b16 %v2279, %v2278
        %v2300 = vpack.c.b16 %v2281, %v2280
        %v2301 = vpack.c.b16 %v2283, %v2282
        %v2302 = vpack.c.b16 %v2285, %v2284
        %v2303 = vpack.c.b16 %v2287, %v2286
        %v2336 = vunpack.c.l.b16 %v2208
        %v2337 = vunpack.c.l.b16 %v2209
        %v2338 = vunpack.c.l.b16 %v2210
        %v2339 = vunpack.c.l.b16 %v2211
        %v2340 = vunpack.c.l.b16 %v2212
        %v2341 = vunpack.c.l.b16 %v2213
        %v2342 = vunpack.c.l.b16 %v2214
        %v2343 = vunpack.c.l.b16 %v2215
        %v2344 = vunpack.c.l.b16 %v2216
        %v2345 = vunpack.c.l.b16 %v2217
        %v2346 = vunpack.c.l.b16 %v2218
        %v2347 = vunpack.c.l.b16 %v2219
        %v2348 = vunpack.c.l.b16 %v2220
        %v2349 = vunpack.c.l.b16 %v2221
        %v2350 = vunpack.c.l.b16 %v2222
        %v2351 = vunpack.c.l.b16 %v2223
        %v2352 = vpack.c.b16 %v2337, %v2336
        %v2353 = vpack.c.b16 %v2339, %v2338
        %v2354 = vpack.c.b16 %v2341, %v2340
        %v2355 = vpack.c.b16 %v2343, %v2342
        %v2356 = vpack.c.b16 %v2345, %v2344
        %v2357 = vpack.c.b16 %v2347, %v2346
        %v2358 = vpack.c.b16 %v2349, %v2348
        %v2359 = vpack.c.b16 %v2351, %v2350
        %2368 = vmatpush.bf16.msra.mxu0 %v2359
        %2369 = vmatpush.bf16.msra.mxu0 %v2358
        %2370 = vmatpush.bf16.msra.mxu0 %v2357
        %2371 = vmatpush.bf16.msra.mxu0 %v2356
        %2372 = vmatpush.bf16.msra.mxu0 %v2355
        %2373 = vmatpush.bf16.msra.mxu0 %v2354
        %2374 = vmatpush.bf16.msra.mxu0 %v2353
        %2375 = vmatpush.bf16.msra.mxu0 %v2352
        %2376 = vmatmul.bf16.gmra.mxu0 %v2288
        %v2377 = vpop.f32.mrf.mxu0
        %v2378 = vadd.f32 0.0, %v2377
        %v2379 = vpop.f32.mrf.mxu0
        %v2380 = vadd.f32 0.0, %v2379
        %2381 = vmatmul.bf16.gmra.mxu0 %v2289
        %v2382 = vpop.f32.mrf.mxu0
        %v2383 = vadd.f32 0.0, %v2382
        %v2384 = vpop.f32.mrf.mxu0
        %v2385 = vadd.f32 0.0, %v2384
        %2386 = vmatmul.bf16.gmra.mxu0 %v2290
        %v2387 = vpop.f32.mrf.mxu0
        %v2388 = vadd.f32 0.0, %v2387
        %v2389 = vpop.f32.mrf.mxu0
        %v2390 = vadd.f32 0.0, %v2389
        %2391 = vmatmul.bf16.gmra.mxu0 %v2291
        %v2392 = vpop.f32.mrf.mxu0
        %v2393 = vadd.f32 0.0, %v2392
        %v2394 = vpop.f32.mrf.mxu0
        %v2395 = vadd.f32 0.0, %v2394
        %2396 = vmatmul.bf16.gmra.mxu0 %v2292
        %v2397 = vpop.f32.mrf.mxu0
        %v2398 = vadd.f32 0.0, %v2397
        %v2399 = vpop.f32.mrf.mxu0
        %v2400 = vadd.f32 0.0, %v2399
        %2401 = vmatmul.bf16.gmra.mxu0 %v2293
        %v2402 = vpop.f32.mrf.mxu0
        %v2403 = vadd.f32 0.0, %v2402
        %v2404 = vpop.f32.mrf.mxu0
        %v2405 = vadd.f32 0.0, %v2404
        %2406 = vmatmul.bf16.gmra.mxu0 %v2294
        %v2407 = vpop.f32.mrf.mxu0
        %v2408 = vadd.f32 0.0, %v2407
        %v2409 = vpop.f32.mrf.mxu0
        %v2410 = vadd.f32 0.0, %v2409
        %2411 = vmatmul.bf16.gmra.mxu0 %v2295
        %v2412 = vpop.f32.mrf.mxu0
        %v2413 = vadd.f32 0.0, %v2412
        %v2414 = vpop.f32.mrf.mxu0
        %v2415 = vadd.f32 0.0, %v2414
        %2416 = vmatmul.bf16.gmra.mxu0 %v2296
        %v2417 = vpop.f32.mrf.mxu0
        %v2418 = vadd.f32 0.0, %v2417
        %v2419 = vpop.f32.mrf.mxu0
        %v2420 = vadd.f32 0.0, %v2419
        %2421 = vmatmul.bf16.gmra.mxu0 %v2297
        %v2422 = vpop.f32.mrf.mxu0
        %v2423 = vadd.f32 0.0, %v2422
        %v2424 = vpop.f32.mrf.mxu0
        %v2425 = vadd.f32 0.0, %v2424
        %2426 = vmatmul.bf16.gmra.mxu0 %v2298
        %v2427 = vpop.f32.mrf.mxu0
        %v2428 = vadd.f32 0.0, %v2427
        %v2429 = vpop.f32.mrf.mxu0
        %v2430 = vadd.f32 0.0, %v2429
        %2431 = vmatmul.bf16.gmra.mxu0 %v2299
        %v2432 = vpop.f32.mrf.mxu0
        %v2433 = vadd.f32 0.0, %v2432
        %v2434 = vpop.f32.mrf.mxu0
        %v2435 = vadd.f32 0.0, %v2434
        %2436 = vmatmul.bf16.gmra.mxu0 %v2300
        %v2437 = vpop.f32.mrf.mxu0
        %v2438 = vadd.f32 0.0, %v2437
        %v2439 = vpop.f32.mrf.mxu0
        %v2440 = vadd.f32 0.0, %v2439
        %2441 = vmatmul.bf16.gmra.mxu0 %v2301
        %v2442 = vpop.f32.mrf.mxu0
        %v2443 = vadd.f32 0.0, %v2442
        %v2444 = vpop.f32.mrf.mxu0
        %v2445 = vadd.f32 0.0, %v2444
        %2446 = vmatmul.bf16.gmra.mxu0 %v2302
        %v2447 = vpop.f32.mrf.mxu0
        %v2448 = vadd.f32 0.0, %v2447
        %v2449 = vpop.f32.mrf.mxu0
        %v2450 = vadd.f32 0.0, %v2449
        %2451 = vmatmul.bf16.gmra.mxu0 %v2303
        %v2452 = vpop.f32.mrf.mxu0
        %v2453 = vadd.f32 0.0, %v2452
        %v2454 = vpop.f32.mrf.mxu0
        %v2455 = vadd.f32 0.0, %v2454
        %2456 = vdwg.mxu0
        %v2457 = vadd.f32 %v2143, %v2378
        %v2458 = vadd.f32 %v2144, %v2380
        %v2459 = vadd.f32 %v2145, %v2383
        %v2460 = vadd.f32 %v2146, %v2385
        %v2461 = vadd.f32 %v2147, %v2388
        %v2462 = vadd.f32 %v2148, %v2390
        %v2463 = vadd.f32 %v2149, %v2393
        %v2464 = vadd.f32 %v2150, %v2395
        %v2465 = vadd.f32 %v2151, %v2398
        %v2466 = vadd.f32 %v2152, %v2400
        %v2467 = vadd.f32 %v2153, %v2403
        %v2468 = vadd.f32 %v2154, %v2405
        %v2469 = vadd.f32 %v2155, %v2408
        %v2470 = vadd.f32 %v2156, %v2410
        %v2471 = vadd.f32 %v2157, %v2413
        %v2472 = vadd.f32 %v2158, %v2415
        %v2473 = vadd.f32 %v2159, %v2418
        %v2474 = vadd.f32 %v2160, %v2420
        %v2475 = vadd.f32 %v2161, %v2423
        %v2476 = vadd.f32 %v2162, %v2425
        %v2477 = vadd.f32 %v2163, %v2428
        %v2478 = vadd.f32 %v2164, %v2430
        %v2479 = vadd.f32 %v2165, %v2433
        %v2480 = vadd.f32 %v2166, %v2435
        %v2481 = vadd.f32 %v2167, %v2438
        %v2482 = vadd.f32 %v2168, %v2440
        %v2483 = vadd.f32 %v2169, %v2443
        %v2484 = vadd.f32 %v2170, %v2445
        %v2485 = vadd.f32 %v2171, %v2448
        %v2486 = vadd.f32 %v2172, %v2450
        %v2487 = vadd.f32 %v2173, %v2453
        %v2488 = vadd.f32 %v2174, %v2455
        %v2489 = vld [vmem:[%s742] sm:$0xf]
        %v2490 = vld [vmem:[%s742 + $0x4] sm:$0xf]
        %v2491 = vld [vmem:[%s742 + $0x8] sm:$0x1]
        %v2492 = vld [vmem:[%s742 + $0xc] sm:$0xf]
        %v2493 = vld [vmem:[%s742 + $0x10] sm:$0xf]
        %v2494 = vld [vmem:[%s742 + $0x14] sm:$0x1]
        %v2495 = vld [vmem:[%s742 + $0x18] sm:$0xf]
        %v2496 = vld [vmem:[%s742 + $0x1c] sm:$0xf]
        %v2497 = vld [vmem:[%s742 + $0x20] sm:$0x1]
        %v2498 = vld [vmem:[%s742 + $0x24] sm:$0xf]
        %v2499 = vld [vmem:[%s742 + $0x28] sm:$0xf]
        %v2500 = vld [vmem:[%s742 + $0x2c] sm:$0x1]
        %v2501 = vld [vmem:[%s742 + $0x30] sm:$0xf]
        %v2502 = vld [vmem:[%s742 + $0x34] sm:$0xf]
        %v2503 = vld [vmem:[%s742 + $0x38] sm:$0x1]
        %v2504 = vld [vmem:[%s742 + $0x3c] sm:$0xf]
        %v2505 = vld [vmem:[%s742 + $0x40] sm:$0xf]
        %v2506 = vld [vmem:[%s742 + $0x44] sm:$0x1]
        %v2507 = vld [vmem:[%s742 + $0x48] sm:$0xf]
        %v2508 = vld [vmem:[%s742 + $0x4c] sm:$0xf]
        %v2509 = vld [vmem:[%s742 + $0x50] sm:$0x1]
        %v2510 = vld [vmem:[%s742 + $0x54] sm:$0xf]
        %v2511 = vld [vmem:[%s742 + $0x58] sm:$0xf]
        %v2512 = vld [vmem:[%s742 + $0x5c] sm:$0x1]
        %v2513 = vld [vmem:[%s742 + $0x60] sm:$0xf]
        %v2514 = vld [vmem:[%s742 + $0x64] sm:$0xf]
        %v2515 = vld [vmem:[%s742 + $0x68] sm:$0x1]
        %v2516 = vld [vmem:[%s742 + $0x6c] sm:$0xf]
        %v2517 = vld [vmem:[%s742 + $0x70] sm:$0xf]
        %v2518 = vld [vmem:[%s742 + $0x74] sm:$0x1]
        %v2519 = vld [vmem:[%s742 + $0x78] sm:$0xf]
        %v2520 = vld [vmem:[%s742 + $0x7c] sm:$0xf]
        %v2521 = vld [vmem:[%s742 + $0x80] sm:$0x1]
        %v2522 = vld [vmem:[%s742 + $0x84] sm:$0xf]
        %v2523 = vld [vmem:[%s742 + $0x88] sm:$0xf]
        %v2524 = vld [vmem:[%s742 + $0x8c] sm:$0x1]
        %v2525 = vld [vmem:[%s742 + $0x90] sm:$0xf]
        %v2526 = vld [vmem:[%s742 + $0x94] sm:$0xf]
        %v2527 = vld [vmem:[%s742 + $0x98] sm:$0x1]
        %v2528 = vld [vmem:[%s742 + $0x9c] sm:$0xf]
        %v2529 = vld [vmem:[%s742 + $0xa0] sm:$0xf]
        %v2530 = vld [vmem:[%s742 + $0xa4] sm:$0x1]
        %v2531 = vld [vmem:[%s742 + $0xa8] sm:$0xf]
        %v2532 = vld [vmem:[%s742 + $0xac] sm:$0xf]
        %v2533 = vld [vmem:[%s742 + $0xb0] sm:$0x1]
        %v2534 = vld [vmem:[%s742 + $0xb4] sm:$0xf]
        %v2535 = vld [vmem:[%s742 + $0xb8] sm:$0xf]
        %v2536 = vld [vmem:[%s742 + $0xbc] sm:$0x1]
        %v2538 = vshrl.u32 %v2489, 16
        %v2540 = vrot.slane %v2538, 4
        %v2541 = vshll.u32 %v2489, 16
        %v2543 = vrot.slane %v2541, 5
        %v2544 = vor.u32 %v2540, %v2543
        %v2545 = vrot.slane %v2544, 4
        %v2547 = vshll.u32 %v2490, 16
        %v2549 = vrot.slane %v2547, 5
        %v2550 = vsel %vm926, %v2545, %v2549
        %v2551 = vshrl.u32 %v2490, 16
        %v2553 = vrot.slane %v2551, 4
        %v2554 = vor.u32 %v2553, %v2549
        %v2555 = vrot.slane %v2554, 4
        %v2557 = vshll.u32 %v2491, 16
        %v2559 = vrot.slane %v2557, 5
        %v2560 = vsel %vm926, %v2555, %v2559
        %v2562 = vshrl.u32 %v2492, 16
        %v2564 = vrot.slane %v2562, 4
        %v2565 = vshll.u32 %v2492, 16
        %v2567 = vrot.slane %v2565, 5
        %v2568 = vor.u32 %v2564, %v2567
        %v2569 = vrot.slane %v2568, 4
        %v2571 = vshll.u32 %v2493, 16
        %v2573 = vrot.slane %v2571, 5
        %v2574 = vsel %vm926, %v2569, %v2573
        %v2575 = vshrl.u32 %v2493, 16
        %v2577 = vrot.slane %v2575, 4
        %v2578 = vor.u32 %v2577, %v2573
        %v2579 = vrot.slane %v2578, 4
        %v2581 = vshll.u32 %v2494, 16
        %v2583 = vrot.slane %v2581, 5
        %v2584 = vsel %vm926, %v2579, %v2583
        %v2586 = vshrl.u32 %v2495, 16
        %v2588 = vrot.slane %v2586, 4
        %v2589 = vshll.u32 %v2495, 16
        %v2591 = vrot.slane %v2589, 5
        %v2592 = vor.u32 %v2588, %v2591
        %v2593 = vrot.slane %v2592, 4
        %v2595 = vshll.u32 %v2496, 16
        %v2597 = vrot.slane %v2595, 5
        %v2598 = vsel %vm926, %v2593, %v2597
        %v2599 = vshrl.u32 %v2496, 16
        %v2601 = vrot.slane %v2599, 4
        %v2602 = vor.u32 %v2601, %v2597
        %v2603 = vrot.slane %v2602, 4
        %v2605 = vshll.u32 %v2497, 16
        %v2607 = vrot.slane %v2605, 5
        %v2608 = vsel %vm926, %v2603, %v2607
        %v2610 = vshrl.u32 %v2498, 16
        %v2612 = vrot.slane %v2610, 4
        %v2613 = vshll.u32 %v2498, 16
        %v2615 = vrot.slane %v2613, 5
        %v2616 = vor.u32 %v2612, %v2615
        %v2617 = vrot.slane %v2616, 4
        %v2619 = vshll.u32 %v2499, 16
        %v2621 = vrot.slane %v2619, 5
        %v2622 = vsel %vm926, %v2617, %v2621
        %v2623 = vshrl.u32 %v2499, 16
        %v2625 = vrot.slane %v2623, 4
        %v2626 = vor.u32 %v2625, %v2621
        %v2627 = vrot.slane %v2626, 4
        %v2629 = vshll.u32 %v2500, 16
        %v2631 = vrot.slane %v2629, 5
        %v2632 = vsel %vm926, %v2627, %v2631
        %v2634 = vshrl.u32 %v2501, 16
        %v2636 = vrot.slane %v2634, 4
        %v2637 = vshll.u32 %v2501, 16
        %v2639 = vrot.slane %v2637, 5
        %v2640 = vor.u32 %v2636, %v2639
        %v2641 = vrot.slane %v2640, 4
        %v2643 = vshll.u32 %v2502, 16
        %v2645 = vrot.slane %v2643, 5
        %v2646 = vsel %vm926, %v2641, %v2645
        %v2647 = vshrl.u32 %v2502, 16
        %v2649 = vrot.slane %v2647, 4
        %v2650 = vor.u32 %v2649, %v2645
        %v2651 = vrot.slane %v2650, 4
        %v2653 = vshll.u32 %v2503, 16
        %v2655 = vrot.slane %v2653, 5
        %v2656 = vsel %vm926, %v2651, %v2655
        %v2658 = vshrl.u32 %v2504, 16
        %v2660 = vrot.slane %v2658, 4
        %v2661 = vshll.u32 %v2504, 16
        %v2663 = vrot.slane %v2661, 5
        %v2664 = vor.u32 %v2660, %v2663
        %v2665 = vrot.slane %v2664, 4
        %v2667 = vshll.u32 %v2505, 16
        %v2669 = vrot.slane %v2667, 5
        %v2670 = vsel %vm926, %v2665, %v2669
        %v2671 = vshrl.u32 %v2505, 16
        %v2673 = vrot.slane %v2671, 4
        %v2674 = vor.u32 %v2673, %v2669
        %v2675 = vrot.slane %v2674, 4
        %v2677 = vshll.u32 %v2506, 16
        %v2679 = vrot.slane %v2677, 5
        %v2680 = vsel %vm926, %v2675, %v2679
        %v2682 = vshrl.u32 %v2507, 16
        %v2684 = vrot.slane %v2682, 4
        %v2685 = vshll.u32 %v2507, 16
        %v2687 = vrot.slane %v2685, 5
        %v2688 = vor.u32 %v2684, %v2687
        %v2689 = vrot.slane %v2688, 4
        %v2691 = vshll.u32 %v2508, 16
        %v2693 = vrot.slane %v2691, 5
        %v2694 = vsel %vm926, %v2689, %v2693
        %v2695 = vshrl.u32 %v2508, 16
        %v2697 = vrot.slane %v2695, 4
        %v2698 = vor.u32 %v2697, %v2693
        %v2699 = vrot.slane %v2698, 4
        %v2701 = vshll.u32 %v2509, 16
        %v2703 = vrot.slane %v2701, 5
        %v2704 = vsel %vm926, %v2699, %v2703
        %v2706 = vshrl.u32 %v2510, 16
        %v2708 = vrot.slane %v2706, 4
        %v2709 = vshll.u32 %v2510, 16
        %v2711 = vrot.slane %v2709, 5
        %v2712 = vor.u32 %v2708, %v2711
        %v2713 = vrot.slane %v2712, 4
        %v2715 = vshll.u32 %v2511, 16
        %v2717 = vrot.slane %v2715, 5
        %v2718 = vsel %vm926, %v2713, %v2717
        %v2719 = vshrl.u32 %v2511, 16
        %v2721 = vrot.slane %v2719, 4
        %v2722 = vor.u32 %v2721, %v2717
        %v2723 = vrot.slane %v2722, 4
        %v2725 = vshll.u32 %v2512, 16
        %v2727 = vrot.slane %v2725, 5
        %v2728 = vsel %vm926, %v2723, %v2727
        %v2730 = vshrl.u32 %v2513, 16
        %v2732 = vrot.slane %v2730, 4
        %v2733 = vshll.u32 %v2513, 16
        %v2735 = vrot.slane %v2733, 5
        %v2736 = vor.u32 %v2732, %v2735
        %v2737 = vrot.slane %v2736, 4
        %v2739 = vshll.u32 %v2514, 16
        %v2741 = vrot.slane %v2739, 5
        %v2742 = vsel %vm926, %v2737, %v2741
        %v2743 = vshrl.u32 %v2514, 16
        %v2745 = vrot.slane %v2743, 4
        %v2746 = vor.u32 %v2745, %v2741
        %v2747 = vrot.slane %v2746, 4
        %v2749 = vshll.u32 %v2515, 16
        %v2751 = vrot.slane %v2749, 5
        %v2752 = vsel %vm926, %v2747, %v2751
        %v2754 = vshrl.u32 %v2516, 16
        %v2756 = vrot.slane %v2754, 4
        %v2757 = vshll.u32 %v2516, 16
        %v2759 = vrot.slane %v2757, 5
        %v2760 = vor.u32 %v2756, %v2759
        %v2761 = vrot.slane %v2760, 4
        %v2763 = vshll.u32 %v2517, 16
        %v2765 = vrot.slane %v2763, 5
        %v2766 = vsel %vm926, %v2761, %v2765
        %v2767 = vshrl.u32 %v2517, 16
        %v2769 = vrot.slane %v2767, 4
        %v2770 = vor.u32 %v2769, %v2765
        %v2771 = vrot.slane %v2770, 4
        %v2773 = vshll.u32 %v2518, 16
        %v2775 = vrot.slane %v2773, 5
        %v2776 = vsel %vm926, %v2771, %v2775
        %v2778 = vshrl.u32 %v2519, 16
        %v2780 = vrot.slane %v2778, 4
        %v2781 = vshll.u32 %v2519, 16
        %v2783 = vrot.slane %v2781, 5
        %v2784 = vor.u32 %v2780, %v2783
        %v2785 = vrot.slane %v2784, 4
        %v2787 = vshll.u32 %v2520, 16
        %v2789 = vrot.slane %v2787, 5
        %v2790 = vsel %vm926, %v2785, %v2789
        %v2791 = vshrl.u32 %v2520, 16
        %v2793 = vrot.slane %v2791, 4
        %v2794 = vor.u32 %v2793, %v2789
        %v2795 = vrot.slane %v2794, 4
        %v2797 = vshll.u32 %v2521, 16
        %v2799 = vrot.slane %v2797, 5
        %v2800 = vsel %vm926, %v2795, %v2799
        %v2802 = vshrl.u32 %v2522, 16
        %v2804 = vrot.slane %v2802, 4
        %v2805 = vshll.u32 %v2522, 16
        %v2807 = vrot.slane %v2805, 5
        %v2808 = vor.u32 %v2804, %v2807
        %v2809 = vrot.slane %v2808, 4
        %v2811 = vshll.u32 %v2523, 16
        %v2813 = vrot.slane %v2811, 5
        %v2814 = vsel %vm926, %v2809, %v2813
        %v2815 = vshrl.u32 %v2523, 16
        %v2817 = vrot.slane %v2815, 4
        %v2818 = vor.u32 %v2817, %v2813
        %v2819 = vrot.slane %v2818, 4
        %v2821 = vshll.u32 %v2524, 16
        %v2823 = vrot.slane %v2821, 5
        %v2824 = vsel %vm926, %v2819, %v2823
        %v2826 = vshrl.u32 %v2525, 16
        %v2828 = vrot.slane %v2826, 4
        %v2829 = vshll.u32 %v2525, 16
        %v2831 = vrot.slane %v2829, 5
        %v2832 = vor.u32 %v2828, %v2831
        %v2833 = vrot.slane %v2832, 4
        %v2835 = vshll.u32 %v2526, 16
        %v2837 = vrot.slane %v2835, 5
        %v2838 = vsel %vm926, %v2833, %v2837
        %v2839 = vshrl.u32 %v2526, 16
        %v2841 = vrot.slane %v2839, 4
        %v2842 = vor.u32 %v2841, %v2837
        %v2843 = vrot.slane %v2842, 4
        %v2845 = vshll.u32 %v2527, 16
        %v2847 = vrot.slane %v2845, 5
        %v2848 = vsel %vm926, %v2843, %v2847
        %v2850 = vshrl.u32 %v2528, 16
        %v2852 = vrot.slane %v2850, 4
        %v2853 = vshll.u32 %v2528, 16
        %v2855 = vrot.slane %v2853, 5
        %v2856 = vor.u32 %v2852, %v2855
        %v2857 = vrot.slane %v2856, 4
        %v2859 = vshll.u32 %v2529, 16
        %v2861 = vrot.slane %v2859, 5
        %v2862 = vsel %vm926, %v2857, %v2861
        %v2863 = vshrl.u32 %v2529, 16
        %v2865 = vrot.slane %v2863, 4
        %v2866 = vor.u32 %v2865, %v2861
        %v2867 = vrot.slane %v2866, 4
        %v2869 = vshll.u32 %v2530, 16
        %v2871 = vrot.slane %v2869, 5
        %v2872 = vsel %vm926, %v2867, %v2871
        %v2874 = vshrl.u32 %v2531, 16
        %v2876 = vrot.slane %v2874, 4
        %v2877 = vshll.u32 %v2531, 16
        %v2879 = vrot.slane %v2877, 5
        %v2880 = vor.u32 %v2876, %v2879
        %v2881 = vrot.slane %v2880, 4
        %v2883 = vshll.u32 %v2532, 16
        %v2885 = vrot.slane %v2883, 5
        %v2886 = vsel %vm926, %v2881, %v2885
        %v2887 = vshrl.u32 %v2532, 16
        %v2889 = vrot.slane %v2887, 4
        %v2890 = vor.u32 %v2889, %v2885
        %v2891 = vrot.slane %v2890, 4
        %v2893 = vshll.u32 %v2533, 16
        %v2895 = vrot.slane %v2893, 5
        %v2896 = vsel %vm926, %v2891, %v2895
        %v2898 = vshrl.u32 %v2534, 16
        %v2900 = vrot.slane %v2898, 4
        %v2901 = vshll.u32 %v2534, 16
        %v2903 = vrot.slane %v2901, 5
        %v2904 = vor.u32 %v2900, %v2903
        %v2905 = vrot.slane %v2904, 4
        %v2907 = vshll.u32 %v2535, 16
        %v2909 = vrot.slane %v2907, 5
        %v2910 = vsel %vm926, %v2905, %v2909
        %v2911 = vshrl.u32 %v2535, 16
        %v2913 = vrot.slane %v2911, 4
        %v2914 = vor.u32 %v2913, %v2909
        %v2915 = vrot.slane %v2914, 4
        %v2917 = vshll.u32 %v2536, 16
        %v2919 = vrot.slane %v2917, 5
        %v2920 = vsel %vm926, %v2915, %v2919
        %s2921 = scalar_lea.vmem [#allocation7], 256
        %v2922 = vld [vmem:[%s2921] sm:$0xf]
        %v2923 = vld [vmem:[%s2921 + $0x4] sm:$0xf]
        %v2924 = vld [vmem:[%s2921 + $0x8] sm:$0xf]
        %v2925 = vld [vmem:[%s2921 + $0xc] sm:$0xf]
        %v2926 = vld [vmem:[%s2921 + $0x10] sm:$0xf]
        %v2927 = vld [vmem:[%s2921 + $0x14] sm:$0xf]
        %v2928 = vld [vmem:[%s2921 + $0x18] sm:$0xf]
        %v2929 = vld [vmem:[%s2921 + $0x1c] sm:$0xf]
        %v2930 = vld [vmem:[%s2921 + $0x20] sm:$0xf]
        %v2931 = vld [vmem:[%s2921 + $0x24] sm:$0xf]
        %v2932 = vld [vmem:[%s2921 + $0x28] sm:$0xf]
        %v2933 = vld [vmem:[%s2921 + $0x2c] sm:$0xf]
        %v2934 = vld [vmem:[%s2921 + $0x30] sm:$0xf]
        %v2935 = vld [vmem:[%s2921 + $0x34] sm:$0xf]
        %v2936 = vld [vmem:[%s2921 + $0x38] sm:$0xf]
        %v2937 = vld [vmem:[%s2921 + $0x3c] sm:$0xf]
        %v2938 = vunpack.c.l.b16 %v2550
        %v2939 = vunpack.c.l.b16 %v2560
        %v2940 = vunpack.c.l.b16 %v2574
        %v2941 = vunpack.c.l.b16 %v2584
        %v2942 = vunpack.c.l.b16 %v2598
        %v2943 = vunpack.c.l.b16 %v2608
        %v2944 = vunpack.c.l.b16 %v2622
        %v2945 = vunpack.c.l.b16 %v2632
        %v2946 = vunpack.c.l.b16 %v2646
        %v2947 = vunpack.c.l.b16 %v2656
        %v2948 = vunpack.c.l.b16 %v2670
        %v2949 = vunpack.c.l.b16 %v2680
        %v2950 = vunpack.c.l.b16 %v2694
        %v2951 = vunpack.c.l.b16 %v2704
        %v2952 = vunpack.c.l.b16 %v2718
        %v2953 = vunpack.c.l.b16 %v2728
        %v2954 = vunpack.c.l.b16 %v2742
        %v2955 = vunpack.c.l.b16 %v2752
        %v2956 = vunpack.c.l.b16 %v2766
        %v2957 = vunpack.c.l.b16 %v2776
        %v2958 = vunpack.c.l.b16 %v2790
        %v2959 = vunpack.c.l.b16 %v2800
        %v2960 = vunpack.c.l.b16 %v2814
        %v2961 = vunpack.c.l.b16 %v2824
        %v2962 = vunpack.c.l.b16 %v2838
        %v2963 = vunpack.c.l.b16 %v2848
        %v2964 = vunpack.c.l.b16 %v2862
        %v2965 = vunpack.c.l.b16 %v2872
        %v2966 = vunpack.c.l.b16 %v2886
        %v2967 = vunpack.c.l.b16 %v2896
        %v2968 = vunpack.c.l.b16 %v2910
        %v2969 = vunpack.c.l.b16 %v2920
        %v2970 = vpack.c.b16 %v2939, %v2938
        %v2971 = vpack.c.b16 %v2941, %v2940
        %v2972 = vpack.c.b16 %v2943, %v2942
        %v2973 = vpack.c.b16 %v2945, %v2944
        %v2974 = vpack.c.b16 %v2947, %v2946
        %v2975 = vpack.c.b16 %v2949, %v2948
        %v2976 = vpack.c.b16 %v2951, %v2950
        %v2977 = vpack.c.b16 %v2953, %v2952
        %v2978 = vpack.c.b16 %v2955, %v2954
        %v2979 = vpack.c.b16 %v2957, %v2956
        %v2980 = vpack.c.b16 %v2959, %v2958
        %v2981 = vpack.c.b16 %v2961, %v2960
        %v2982 = vpack.c.b16 %v2963, %v2962
        %v2983 = vpack.c.b16 %v2965, %v2964
        %v2984 = vpack.c.b16 %v2967, %v2966
        %v2985 = vpack.c.b16 %v2969, %v2968
        %v3018 = vunpack.c.l.b16 %v2922
        %v3019 = vunpack.c.l.b16 %v2923
        %v3020 = vunpack.c.l.b16 %v2924
        %v3021 = vunpack.c.l.b16 %v2925
        %v3022 = vunpack.c.l.b16 %v2926
        %v3023 = vunpack.c.l.b16 %v2927
        %v3024 = vunpack.c.l.b16 %v2928
        %v3025 = vunpack.c.l.b16 %v2929
        %v3026 = vunpack.c.l.b16 %v2930
        %v3027 = vunpack.c.l.b16 %v2931
        %v3028 = vunpack.c.l.b16 %v2932
        %v3029 = vunpack.c.l.b16 %v2933
        %v3030 = vunpack.c.l.b16 %v2934
        %v3031 = vunpack.c.l.b16 %v2935
        %v3032 = vunpack.c.l.b16 %v2936
        %v3033 = vunpack.c.l.b16 %v2937
        %v3034 = vpack.c.b16 %v3019, %v3018
        %v3035 = vpack.c.b16 %v3021, %v3020
        %v3036 = vpack.c.b16 %v3023, %v3022
        %v3037 = vpack.c.b16 %v3025, %v3024
        %v3038 = vpack.c.b16 %v3027, %v3026
        %v3039 = vpack.c.b16 %v3029, %v3028
        %v3040 = vpack.c.b16 %v3031, %v3030
        %v3041 = vpack.c.b16 %v3033, %v3032
        %3050 = vmatpush.bf16.msra.mxu0 %v3041
        %3051 = vmatpush.bf16.msra.mxu0 %v3040
        %3052 = vmatpush.bf16.msra.mxu0 %v3039
        %3053 = vmatpush.bf16.msra.mxu0 %v3038
        %3054 = vmatpush.bf16.msra.mxu0 %v3037
        %3055 = vmatpush.bf16.msra.mxu0 %v3036
        %3056 = vmatpush.bf16.msra.mxu0 %v3035
        %3057 = vmatpush.bf16.msra.mxu0 %v3034
        %3058 = vmatmul.bf16.gmra.mxu0 %v2970
        %v3059 = vpop.f32.mrf.mxu0
        %v3060 = vadd.f32 0.0, %v3059
        %v3061 = vpop.f32.mrf.mxu0
        %v3062 = vadd.f32 0.0, %v3061
        %3063 = vmatmul.bf16.gmra.mxu0 %v2971
        %v3064 = vpop.f32.mrf.mxu0
        %v3065 = vadd.f32 0.0, %v3064
        %v3066 = vpop.f32.mrf.mxu0
        %v3067 = vadd.f32 0.0, %v3066
        %3068 = vmatmul.bf16.gmra.mxu0 %v2972
        %v3069 = vpop.f32.mrf.mxu0
        %v3070 = vadd.f32 0.0, %v3069
        %v3071 = vpop.f32.mrf.mxu0
        %v3072 = vadd.f32 0.0, %v3071
        %3073 = vmatmul.bf16.gmra.mxu0 %v2973
        %v3074 = vpop.f32.mrf.mxu0
        %v3075 = vadd.f32 0.0, %v3074
        %v3076 = vpop.f32.mrf.mxu0
        %v3077 = vadd.f32 0.0, %v3076
        %3078 = vmatmul.bf16.gmra.mxu0 %v2974
        %v3079 = vpop.f32.mrf.mxu0
        %v3080 = vadd.f32 0.0, %v3079
        %v3081 = vpop.f32.mrf.mxu0
        %v3082 = vadd.f32 0.0, %v3081
        %3083 = vmatmul.bf16.gmra.mxu0 %v2975
        %v3084 = vpop.f32.mrf.mxu0
        %v3085 = vadd.f32 0.0, %v3084
        %v3086 = vpop.f32.mrf.mxu0
        %v3087 = vadd.f32 0.0, %v3086
        %3088 = vmatmul.bf16.gmra.mxu0 %v2976
        %v3089 = vpop.f32.mrf.mxu0
        %v3090 = vadd.f32 0.0, %v3089
        %v3091 = vpop.f32.mrf.mxu0
        %v3092 = vadd.f32 0.0, %v3091
        %3093 = vmatmul.bf16.gmra.mxu0 %v2977
        %v3094 = vpop.f32.mrf.mxu0
        %v3095 = vadd.f32 0.0, %v3094
        %v3096 = vpop.f32.mrf.mxu0
        %v3097 = vadd.f32 0.0, %v3096
        %3098 = vmatmul.bf16.gmra.mxu0 %v2978
        %v3099 = vpop.f32.mrf.mxu0
        %v3100 = vadd.f32 0.0, %v3099
        %v3101 = vpop.f32.mrf.mxu0
        %v3102 = vadd.f32 0.0, %v3101
        %3103 = vmatmul.bf16.gmra.mxu0 %v2979
        %v3104 = vpop.f32.mrf.mxu0
        %v3105 = vadd.f32 0.0, %v3104
        %v3106 = vpop.f32.mrf.mxu0
        %v3107 = vadd.f32 0.0, %v3106
        %3108 = vmatmul.bf16.gmra.mxu0 %v2980
        %v3109 = vpop.f32.mrf.mxu0
        %v3110 = vadd.f32 0.0, %v3109
        %v3111 = vpop.f32.mrf.mxu0
        %v3112 = vadd.f32 0.0, %v3111
        %3113 = vmatmul.bf16.gmra.mxu0 %v2981
        %v3114 = vpop.f32.mrf.mxu0
        %v3115 = vadd.f32 0.0, %v3114
        %v3116 = vpop.f32.mrf.mxu0
        %v3117 = vadd.f32 0.0, %v3116
        %3118 = vmatmul.bf16.gmra.mxu0 %v2982
        %v3119 = vpop.f32.mrf.mxu0
        %v3120 = vadd.f32 0.0, %v3119
        %v3121 = vpop.f32.mrf.mxu0
        %v3122 = vadd.f32 0.0, %v3121
        %3123 = vmatmul.bf16.gmra.mxu0 %v2983
        %v3124 = vpop.f32.mrf.mxu0
        %v3125 = vadd.f32 0.0, %v3124
        %v3126 = vpop.f32.mrf.mxu0
        %v3127 = vadd.f32 0.0, %v3126
        %3128 = vmatmul.bf16.gmra.mxu0 %v2984
        %v3129 = vpop.f32.mrf.mxu0
        %v3130 = vadd.f32 0.0, %v3129
        %v3131 = vpop.f32.mrf.mxu0
        %v3132 = vadd.f32 0.0, %v3131
        %3133 = vmatmul.bf16.gmra.mxu0 %v2985
        %v3134 = vpop.f32.mrf.mxu0
        %v3135 = vadd.f32 0.0, %v3134
        %v3136 = vpop.f32.mrf.mxu0
        %v3137 = vadd.f32 0.0, %v3136
        %3138 = vdwg.mxu0
        %v3139 = vadd.f32 %v2457, %v3060
        %v3140 = vadd.f32 %v2458, %v3062
        %v3141 = vadd.f32 %v2459, %v3065
        %v3142 = vadd.f32 %v2460, %v3067
        %v3143 = vadd.f32 %v2461, %v3070
        %v3144 = vadd.f32 %v2462, %v3072
        %v3145 = vadd.f32 %v2463, %v3075
        %v3146 = vadd.f32 %v2464, %v3077
        %v3147 = vadd.f32 %v2465, %v3080
        %v3148 = vadd.f32 %v2466, %v3082
        %v3149 = vadd.f32 %v2467, %v3085
        %v3150 = vadd.f32 %v2468, %v3087
        %v3151 = vadd.f32 %v2469, %v3090
        %v3152 = vadd.f32 %v2470, %v3092
        %v3153 = vadd.f32 %v2471, %v3095
        %v3154 = vadd.f32 %v2472, %v3097
        %v3155 = vadd.f32 %v2473, %v3100
        %v3156 = vadd.f32 %v2474, %v3102
        %v3157 = vadd.f32 %v2475, %v3105
        %v3158 = vadd.f32 %v2476, %v3107
        %v3159 = vadd.f32 %v2477, %v3110
        %v3160 = vadd.f32 %v2478, %v3112
        %v3161 = vadd.f32 %v2479, %v3115
        %v3162 = vadd.f32 %v2480, %v3117
        %v3163 = vadd.f32 %v2481, %v3120
        %v3164 = vadd.f32 %v2482, %v3122
        %v3165 = vadd.f32 %v2483, %v3125
        %v3166 = vadd.f32 %v2484, %v3127
        %v3167 = vadd.f32 %v2485, %v3130
        %v3168 = vadd.f32 %v2486, %v3132
        %v3169 = vadd.f32 %v2487, %v3135
        %v3170 = vadd.f32 %v2488, %v3137
        %v3171 = vld [vmem:[%s742] sm:$0xe]
        %v3172 = vld [vmem:[%s742 + $0xc] sm:$0xe]
        %v3173 = vld [vmem:[%s742 + $0x18] sm:$0xe]
        %v3174 = vld [vmem:[%s742 + $0x24] sm:$0xe]
        %v3175 = vld [vmem:[%s742 + $0x30] sm:$0xe]
        %v3176 = vld [vmem:[%s742 + $0x3c] sm:$0xe]
        %v3177 = vld [vmem:[%s742 + $0x48] sm:$0xe]
        %v3178 = vld [vmem:[%s742 + $0x54] sm:$0xe]
        %v3179 = vld [vmem:[%s742 + $0x60] sm:$0xe]
        %v3180 = vld [vmem:[%s742 + $0x6c] sm:$0xe]
        %v3181 = vld [vmem:[%s742 + $0x78] sm:$0xe]
        %v3182 = vld [vmem:[%s742 + $0x84] sm:$0xe]
        %v3183 = vld [vmem:[%s742 + $0x90] sm:$0xe]
        %v3184 = vld [vmem:[%s742 + $0x9c] sm:$0xe]
        %v3185 = vld [vmem:[%s742 + $0xa8] sm:$0xe]
        %v3186 = vld [vmem:[%s742 + $0xb4] sm:$0xe]
        %v3235 = vrot.slane %v3171, 5
        %v3236 = vrot.slane %v3235, 4
        %v3237 = vrot.slane %v2490, 5
        %v3238 = vsel %vm1812, %v3236, %v3237
        %v3239 = vrot.slane %v3237, 4
        %v3240 = vrot.slane %v2491, 5
        %v3241 = vsel %vm1812, %v3239, %v3240
        %v3242 = vrot.slane %v3172, 5
        %v3243 = vrot.slane %v3242, 4
        %v3244 = vrot.slane %v2493, 5
        %v3245 = vsel %vm1812, %v3243, %v3244
        %v3246 = vrot.slane %v3244, 4
        %v3247 = vrot.slane %v2494, 5
        %v3248 = vsel %vm1812, %v3246, %v3247
        %v3249 = vrot.slane %v3173, 5
        %v3250 = vrot.slane %v3249, 4
        %v3251 = vrot.slane %v2496, 5
        %v3252 = vsel %vm1812, %v3250, %v3251
        %v3253 = vrot.slane %v3251, 4
        %v3254 = vrot.slane %v2497, 5
        %v3255 = vsel %vm1812, %v3253, %v3254
        %v3256 = vrot.slane %v3174, 5
        %v3257 = vrot.slane %v3256, 4
        %v3258 = vrot.slane %v2499, 5
        %v3259 = vsel %vm1812, %v3257, %v3258
        %v3260 = vrot.slane %v3258, 4
        %v3261 = vrot.slane %v2500, 5
        %v3262 = vsel %vm1812, %v3260, %v3261
        %v3263 = vrot.slane %v3175, 5
        %v3264 = vrot.slane %v3263, 4
        %v3265 = vrot.slane %v2502, 5
        %v3266 = vsel %vm1812, %v3264, %v3265
        %v3267 = vrot.slane %v3265, 4
        %v3268 = vrot.slane %v2503, 5
        %v3269 = vsel %vm1812, %v3267, %v3268
        %v3270 = vrot.slane %v3176, 5
        %v3271 = vrot.slane %v3270, 4
        %v3272 = vrot.slane %v2505, 5
        %v3273 = vsel %vm1812, %v3271, %v3272
        %v3274 = vrot.slane %v3272, 4
        %v3275 = vrot.slane %v2506, 5
        %v3276 = vsel %vm1812, %v3274, %v3275
        %v3277 = vrot.slane %v3177, 5
        %v3278 = vrot.slane %v3277, 4
        %v3279 = vrot.slane %v2508, 5
        %v3280 = vsel %vm1812, %v3278, %v3279
        %v3281 = vrot.slane %v3279, 4
        %v3282 = vrot.slane %v2509, 5
        %v3283 = vsel %vm1812, %v3281, %v3282
        %v3284 = vrot.slane %v3178, 5
        %v3285 = vrot.slane %v3284, 4
        %v3286 = vrot.slane %v2511, 5
        %v3287 = vsel %vm1812, %v3285, %v3286
        %v3288 = vrot.slane %v3286, 4
        %v3289 = vrot.slane %v2512, 5
        %v3290 = vsel %vm1812, %v3288, %v3289
        %v3291 = vrot.slane %v3179, 5
        %v3292 = vrot.slane %v3291, 4
        %v3293 = vrot.slane %v2514, 5
        %v3294 = vsel %vm1812, %v3292, %v3293
        %v3295 = vrot.slane %v3293, 4
        %v3296 = vrot.slane %v2515, 5
        %v3297 = vsel %vm1812, %v3295, %v3296
        %v3298 = vrot.slane %v3180, 5
        %v3299 = vrot.slane %v3298, 4
        %v3300 = vrot.slane %v2517, 5
        %v3301 = vsel %vm1812, %v3299, %v3300
        %v3302 = vrot.slane %v3300, 4
        %v3303 = vrot.slane %v2518, 5
        %v3304 = vsel %vm1812, %v3302, %v3303
        %v3305 = vrot.slane %v3181, 5
        %v3306 = vrot.slane %v3305, 4
        %v3307 = vrot.slane %v2520, 5
        %v3308 = vsel %vm1812, %v3306, %v3307
        %v3309 = vrot.slane %v3307, 4
        %v3310 = vrot.slane %v2521, 5
        %v3311 = vsel %vm1812, %v3309, %v3310
        %v3312 = vrot.slane %v3182, 5
        %v3313 = vrot.slane %v3312, 4
        %v3314 = vrot.slane %v2523, 5
        %v3315 = vsel %vm1812, %v3313, %v3314
        %v3316 = vrot.slane %v3314, 4
        %v3317 = vrot.slane %v2524, 5
        %v3318 = vsel %vm1812, %v3316, %v3317
        %v3319 = vrot.slane %v3183, 5
        %v3320 = vrot.slane %v3319, 4
        %v3321 = vrot.slane %v2526, 5
        %v3322 = vsel %vm1812, %v3320, %v3321
        %v3323 = vrot.slane %v3321, 4
        %v3324 = vrot.slane %v2527, 5
        %v3325 = vsel %vm1812, %v3323, %v3324
        %v3326 = vrot.slane %v3184, 5
        %v3327 = vrot.slane %v3326, 4
        %v3328 = vrot.slane %v2529, 5
        %v3329 = vsel %vm1812, %v3327, %v3328
        %v3330 = vrot.slane %v3328, 4
        %v3331 = vrot.slane %v2530, 5
        %v3332 = vsel %vm1812, %v3330, %v3331
        %v3333 = vrot.slane %v3185, 5
        %v3334 = vrot.slane %v3333, 4
        %v3335 = vrot.slane %v2532, 5
        %v3336 = vsel %vm1812, %v3334, %v3335
        %v3337 = vrot.slane %v3335, 4
        %v3338 = vrot.slane %v2533, 5
        %v3339 = vsel %vm1812, %v3337, %v3338
        %v3340 = vrot.slane %v3186, 5
        %v3341 = vrot.slane %v3340, 4
        %v3342 = vrot.slane %v2535, 5
        %v3343 = vsel %vm1812, %v3341, %v3342
        %v3344 = vrot.slane %v3342, 4
        %v3345 = vrot.slane %v2536, 5
        %v3346 = vsel %vm1812, %v3344, %v3345
        %s3347 = scalar_lea.vmem [#allocation7], 320
        %v3348 = vld [vmem:[%s3347] sm:$0xf]
        %v3349 = vld [vmem:[%s3347 + $0x4] sm:$0xf]
        %v3350 = vld [vmem:[%s3347 + $0x8] sm:$0xf]
        %v3351 = vld [vmem:[%s3347 + $0xc] sm:$0xf]
        %v3352 = vld [vmem:[%s3347 + $0x10] sm:$0xf]
        %v3353 = vld [vmem:[%s3347 + $0x14] sm:$0xf]
        %v3354 = vld [vmem:[%s3347 + $0x18] sm:$0xf]
        %v3355 = vld [vmem:[%s3347 + $0x1c] sm:$0xf]
        %v3356 = vld [vmem:[%s3347 + $0x20] sm:$0xf]
        %v3357 = vld [vmem:[%s3347 + $0x24] sm:$0xf]
        %v3358 = vld [vmem:[%s3347 + $0x28] sm:$0xf]
        %v3359 = vld [vmem:[%s3347 + $0x2c] sm:$0xf]
        %v3360 = vld [vmem:[%s3347 + $0x30] sm:$0xf]
        %v3361 = vld [vmem:[%s3347 + $0x34] sm:$0xf]
        %v3362 = vld [vmem:[%s3347 + $0x38] sm:$0xf]
        %v3363 = vld [vmem:[%s3347 + $0x3c] sm:$0xf]
        %v3364 = vunpack.c.l.b16 %v3238
        %v3365 = vunpack.c.l.b16 %v3241
        %v3366 = vunpack.c.l.b16 %v3245
        %v3367 = vunpack.c.l.b16 %v3248
        %v3368 = vunpack.c.l.b16 %v3252
        %v3369 = vunpack.c.l.b16 %v3255
        %v3370 = vunpack.c.l.b16 %v3259
        %v3371 = vunpack.c.l.b16 %v3262
        %v3372 = vunpack.c.l.b16 %v3266
        %v3373 = vunpack.c.l.b16 %v3269
        %v3374 = vunpack.c.l.b16 %v3273
        %v3375 = vunpack.c.l.b16 %v3276
        %v3376 = vunpack.c.l.b16 %v3280
        %v3377 = vunpack.c.l.b16 %v3283
        %v3378 = vunpack.c.l.b16 %v3287
        %v3379 = vunpack.c.l.b16 %v3290
        %v3380 = vunpack.c.l.b16 %v3294
        %v3381 = vunpack.c.l.b16 %v3297
        %v3382 = vunpack.c.l.b16 %v3301
        %v3383 = vunpack.c.l.b16 %v3304
        %v3384 = vunpack.c.l.b16 %v3308
        %v3385 = vunpack.c.l.b16 %v3311
        %v3386 = vunpack.c.l.b16 %v3315
        %v3387 = vunpack.c.l.b16 %v3318
        %v3388 = vunpack.c.l.b16 %v3322
        %v3389 = vunpack.c.l.b16 %v3325
        %v3390 = vunpack.c.l.b16 %v3329
        %v3391 = vunpack.c.l.b16 %v3332
        %v3392 = vunpack.c.l.b16 %v3336
        %v3393 = vunpack.c.l.b16 %v3339
        %v3394 = vunpack.c.l.b16 %v3343
        %v3395 = vunpack.c.l.b16 %v3346
        %v3396 = vpack.c.b16 %v3365, %v3364
        %v3397 = vpack.c.b16 %v3367, %v3366
        %v3398 = vpack.c.b16 %v3369, %v3368
        %v3399 = vpack.c.b16 %v3371, %v3370
        %v3400 = vpack.c.b16 %v3373, %v3372
        %v3401 = vpack.c.b16 %v3375, %v3374
        %v3402 = vpack.c.b16 %v3377, %v3376
        %v3403 = vpack.c.b16 %v3379, %v3378
        %v3404 = vpack.c.b16 %v3381, %v3380
        %v3405 = vpack.c.b16 %v3383, %v3382
        %v3406 = vpack.c.b16 %v3385, %v3384
        %v3407 = vpack.c.b16 %v3387, %v3386
        %v3408 = vpack.c.b16 %v3389, %v3388
        %v3409 = vpack.c.b16 %v3391, %v3390
        %v3410 = vpack.c.b16 %v3393, %v3392
        %v3411 = vpack.c.b16 %v3395, %v3394
        %v3444 = vunpack.c.l.b16 %v3348
        %v3445 = vunpack.c.l.b16 %v3349
        %v3446 = vunpack.c.l.b16 %v3350
        %v3447 = vunpack.c.l.b16 %v3351
        %v3448 = vunpack.c.l.b16 %v3352
        %v3449 = vunpack.c.l.b16 %v3353
        %v3450 = vunpack.c.l.b16 %v3354
        %v3451 = vunpack.c.l.b16 %v3355
        %v3452 = vunpack.c.l.b16 %v3356
        %v3453 = vunpack.c.l.b16 %v3357
        %v3454 = vunpack.c.l.b16 %v3358
        %v3455 = vunpack.c.l.b16 %v3359
        %v3456 = vunpack.c.l.b16 %v3360
        %v3457 = vunpack.c.l.b16 %v3361
        %v3458 = vunpack.c.l.b16 %v3362
        %v3459 = vunpack.c.l.b16 %v3363
        %v3460 = vpack.c.b16 %v3445, %v3444
        %v3461 = vpack.c.b16 %v3447, %v3446
        %v3462 = vpack.c.b16 %v3449, %v3448
        %v3463 = vpack.c.b16 %v3451, %v3450
        %v3464 = vpack.c.b16 %v3453, %v3452
        %v3465 = vpack.c.b16 %v3455, %v3454
        %v3466 = vpack.c.b16 %v3457, %v3456
        %v3467 = vpack.c.b16 %v3459, %v3458
        %3476 = vmatpush.bf16.msra.mxu0 %v3467
        %3477 = vmatpush.bf16.msra.mxu0 %v3466
        %3478 = vmatpush.bf16.msra.mxu0 %v3465
        %3479 = vmatpush.bf16.msra.mxu0 %v3464
        %3480 = vmatpush.bf16.msra.mxu0 %v3463
        %3481 = vmatpush.bf16.msra.mxu0 %v3462
        %3482 = vmatpush.bf16.msra.mxu0 %v3461
        %3483 = vmatpush.bf16.msra.mxu0 %v3460
        %3484 = vmatmul.bf16.gmra.mxu0 %v3396
        %v3485 = vpop.f32.mrf.mxu0
        %v3486 = vadd.f32 0.0, %v3485
        %v3487 = vpop.f32.mrf.mxu0
        %v3488 = vadd.f32 0.0, %v3487
        %3489 = vmatmul.bf16.gmra.mxu0 %v3397
        %v3490 = vpop.f32.mrf.mxu0
        %v3491 = vadd.f32 0.0, %v3490
        %v3492 = vpop.f32.mrf.mxu0
        %v3493 = vadd.f32 0.0, %v3492
        %3494 = vmatmul.bf16.gmra.mxu0 %v3398
        %v3495 = vpop.f32.mrf.mxu0
        %v3496 = vadd.f32 0.0, %v3495
        %v3497 = vpop.f32.mrf.mxu0
        %v3498 = vadd.f32 0.0, %v3497
        %3499 = vmatmul.bf16.gmra.mxu0 %v3399
        %v3500 = vpop.f32.mrf.mxu0
        %v3501 = vadd.f32 0.0, %v3500
        %v3502 = vpop.f32.mrf.mxu0
        %v3503 = vadd.f32 0.0, %v3502
        %3504 = vmatmul.bf16.gmra.mxu0 %v3400
        %v3505 = vpop.f32.mrf.mxu0
        %v3506 = vadd.f32 0.0, %v3505
        %v3507 = vpop.f32.mrf.mxu0
        %v3508 = vadd.f32 0.0, %v3507
        %3509 = vmatmul.bf16.gmra.mxu0 %v3401
        %v3510 = vpop.f32.mrf.mxu0
        %v3511 = vadd.f32 0.0, %v3510
        %v3512 = vpop.f32.mrf.mxu0
        %v3513 = vadd.f32 0.0, %v3512
        %3514 = vmatmul.bf16.gmra.mxu0 %v3402
        %v3515 = vpop.f32.mrf.mxu0
        %v3516 = vadd.f32 0.0, %v3515
        %v3517 = vpop.f32.mrf.mxu0
        %v3518 = vadd.f32 0.0, %v3517
        %3519 = vmatmul.bf16.gmra.mxu0 %v3403
        %v3520 = vpop.f32.mrf.mxu0
        %v3521 = vadd.f32 0.0, %v3520
        %v3522 = vpop.f32.mrf.mxu0
        %v3523 = vadd.f32 0.0, %v3522
        %3524 = vmatmul.bf16.gmra.mxu0 %v3404
        %v3525 = vpop.f32.mrf.mxu0
        %v3526 = vadd.f32 0.0, %v3525
        %v3527 = vpop.f32.mrf.mxu0
        %v3528 = vadd.f32 0.0, %v3527
        %3529 = vmatmul.bf16.gmra.mxu0 %v3405
        %v3530 = vpop.f32.mrf.mxu0
        %v3531 = vadd.f32 0.0, %v3530
        %v3532 = vpop.f32.mrf.mxu0
        %v3533 = vadd.f32 0.0, %v3532
        %3534 = vmatmul.bf16.gmra.mxu0 %v3406
        %v3535 = vpop.f32.mrf.mxu0
        %v3536 = vadd.f32 0.0, %v3535
        %v3537 = vpop.f32.mrf.mxu0
        %v3538 = vadd.f32 0.0, %v3537
        %3539 = vmatmul.bf16.gmra.mxu0 %v3407
        %v3540 = vpop.f32.mrf.mxu0
        %v3541 = vadd.f32 0.0, %v3540
        %v3542 = vpop.f32.mrf.mxu0
        %v3543 = vadd.f32 0.0, %v3542
        %3544 = vmatmul.bf16.gmra.mxu0 %v3408
        %v3545 = vpop.f32.mrf.mxu0
        %v3546 = vadd.f32 0.0, %v3545
        %v3547 = vpop.f32.mrf.mxu0
        %v3548 = vadd.f32 0.0, %v3547
        %3549 = vmatmul.bf16.gmra.mxu0 %v3409
        %v3550 = vpop.f32.mrf.mxu0
        %v3551 = vadd.f32 0.0, %v3550
        %v3552 = vpop.f32.mrf.mxu0
        %v3553 = vadd.f32 0.0, %v3552
        %3554 = vmatmul.bf16.gmra.mxu0 %v3410
        %v3555 = vpop.f32.mrf.mxu0
        %v3556 = vadd.f32 0.0, %v3555
        %v3557 = vpop.f32.mrf.mxu0
        %v3558 = vadd.f32 0.0, %v3557
        %3559 = vmatmul.bf16.gmra.mxu0 %v3411
        %v3560 = vpop.f32.mrf.mxu0
        %v3561 = vadd.f32 0.0, %v3560
        %v3562 = vpop.f32.mrf.mxu0
        %v3563 = vadd.f32 0.0, %v3562
        %3564 = vdwg.mxu0
        %v3565 = vadd.f32 %v3139, %v3486
        %v3566 = vadd.f32 %v3140, %v3488
        %v3567 = vadd.f32 %v3141, %v3491
        %v3568 = vadd.f32 %v3142, %v3493
        %v3569 = vadd.f32 %v3143, %v3496
        %v3570 = vadd.f32 %v3144, %v3498
        %v3571 = vadd.f32 %v3145, %v3501
        %v3572 = vadd.f32 %v3146, %v3503
        %v3573 = vadd.f32 %v3147, %v3506
        %v3574 = vadd.f32 %v3148, %v3508
        %v3575 = vadd.f32 %v3149, %v3511
        %v3576 = vadd.f32 %v3150, %v3513
        %v3577 = vadd.f32 %v3151, %v3516
        %v3578 = vadd.f32 %v3152, %v3518
        %v3579 = vadd.f32 %v3153, %v3521
        %v3580 = vadd.f32 %v3154, %v3523
        %v3581 = vadd.f32 %v3155, %v3526
        %v3582 = vadd.f32 %v3156, %v3528
        %v3583 = vadd.f32 %v3157, %v3531
        %v3584 = vadd.f32 %v3158, %v3533
        %v3585 = vadd.f32 %v3159, %v3536
        %v3586 = vadd.f32 %v3160, %v3538
        %v3587 = vadd.f32 %v3161, %v3541
        %v3588 = vadd.f32 %v3162, %v3543
        %v3589 = vadd.f32 %v3163, %v3546
        %v3590 = vadd.f32 %v3164, %v3548
        %v3591 = vadd.f32 %v3165, %v3551
        %v3592 = vadd.f32 %v3166, %v3553
        %v3593 = vadd.f32 %v3167, %v3556
        %v3594 = vadd.f32 %v3168, %v3558
        %v3595 = vadd.f32 %v3169, %v3561
        %v3596 = vadd.f32 %v3170, %v3563
        %s3597 = scalar_lea.vmem [#allocation2], 24
        %v3598 = vld [vmem:[%s3597] sm:$0xf]
        %v3599 = vld [vmem:[%s3597 + $0x4] sm:$0xf]
        %v3600 = vld [vmem:[%s3597 + $0xc] sm:$0xf]
        %v3601 = vld [vmem:[%s3597 + $0x10] sm:$0xf]
        %v3602 = vld [vmem:[%s3597 + $0x18] sm:$0xf]
        %v3603 = vld [vmem:[%s3597 + $0x1c] sm:$0xf]
        %v3604 = vld [vmem:[%s3597 + $0x24] sm:$0xf]
        %v3605 = vld [vmem:[%s3597 + $0x28] sm:$0xf]
        %v3606 = vld [vmem:[%s3597 + $0x30] sm:$0xf]
        %v3607 = vld [vmem:[%s3597 + $0x34] sm:$0xf]
        %v3608 = vld [vmem:[%s3597 + $0x3c] sm:$0xf]
        %v3609 = vld [vmem:[%s3597 + $0x40] sm:$0xf]
        %v3610 = vld [vmem:[%s3597 + $0x48] sm:$0xf]
        %v3611 = vld [vmem:[%s3597 + $0x4c] sm:$0xf]
        %v3612 = vld [vmem:[%s3597 + $0x54] sm:$0xf]
        %v3613 = vld [vmem:[%s3597 + $0x58] sm:$0xf]
        %v3614 = vld [vmem:[%s3597 + $0x60] sm:$0xf]
        %v3615 = vld [vmem:[%s3597 + $0x64] sm:$0xf]
        %v3616 = vld [vmem:[%s3597 + $0x6c] sm:$0xf]
        %v3617 = vld [vmem:[%s3597 + $0x70] sm:$0xf]
        %v3618 = vld [vmem:[%s3597 + $0x78] sm:$0xf]
        %v3619 = vld [vmem:[%s3597 + $0x7c] sm:$0xf]
        %v3620 = vld [vmem:[%s3597 + $0x84] sm:$0xf]
        %v3621 = vld [vmem:[%s3597 + $0x88] sm:$0xf]
        %v3622 = vld [vmem:[%s3597 + $0x90] sm:$0xf]
        %v3623 = vld [vmem:[%s3597 + $0x94] sm:$0xf]
        %v3624 = vld [vmem:[%s3597 + $0x9c] sm:$0xf]
        %v3625 = vld [vmem:[%s3597 + $0xa0] sm:$0xf]
        %v3626 = vld [vmem:[%s3597 + $0xa8] sm:$0xf]
        %v3627 = vld [vmem:[%s3597 + $0xac] sm:$0xf]
        %v3628 = vld [vmem:[%s3597 + $0xb4] sm:$0xf]
        %v3629 = vld [vmem:[%s3597 + $0xb8] sm:$0xf]
        %s3630 = scalar_lea.vmem [#allocation7], 384
        %v3631 = vld [vmem:[%s3630] sm:$0xf]
        %v3632 = vld [vmem:[%s3630 + $0x4] sm:$0xf]
        %v3633 = vld [vmem:[%s3630 + $0x8] sm:$0xf]
        %v3634 = vld [vmem:[%s3630 + $0xc] sm:$0xf]
        %v3635 = vld [vmem:[%s3630 + $0x10] sm:$0xf]
        %v3636 = vld [vmem:[%s3630 + $0x14] sm:$0xf]
        %v3637 = vld [vmem:[%s3630 + $0x18] sm:$0xf]
        %v3638 = vld [vmem:[%s3630 + $0x1c] sm:$0xf]
        %v3639 = vld [vmem:[%s3630 + $0x20] sm:$0xf]
        %v3640 = vld [vmem:[%s3630 + $0x24] sm:$0xf]
        %v3641 = vld [vmem:[%s3630 + $0x28] sm:$0xf]
        %v3642 = vld [vmem:[%s3630 + $0x2c] sm:$0xf]
        %v3643 = vld [vmem:[%s3630 + $0x30] sm:$0xf]
        %v3644 = vld [vmem:[%s3630 + $0x34] sm:$0xf]
        %v3645 = vld [vmem:[%s3630 + $0x38] sm:$0xf]
        %v3646 = vld [vmem:[%s3630 + $0x3c] sm:$0xf]
        %v3679 = vunpack.c.l.b16 %v3598
        %v3680 = vunpack.c.l.b16 %v3599
        %v3681 = vunpack.c.l.b16 %v3600
        %v3682 = vunpack.c.l.b16 %v3601
        %v3683 = vunpack.c.l.b16 %v3602
        %v3684 = vunpack.c.l.b16 %v3603
        %v3685 = vunpack.c.l.b16 %v3604
        %v3686 = vunpack.c.l.b16 %v3605
        %v3687 = vunpack.c.l.b16 %v3606
        %v3688 = vunpack.c.l.b16 %v3607
        %v3689 = vunpack.c.l.b16 %v3608
        %v3690 = vunpack.c.l.b16 %v3609
        %v3691 = vunpack.c.l.b16 %v3610
        %v3692 = vunpack.c.l.b16 %v3611
        %v3693 = vunpack.c.l.b16 %v3612
        %v3694 = vunpack.c.l.b16 %v3613
        %v3695 = vunpack.c.l.b16 %v3614
        %v3696 = vunpack.c.l.b16 %v3615
        %v3697 = vunpack.c.l.b16 %v3616
        %v3698 = vunpack.c.l.b16 %v3617
        %v3699 = vunpack.c.l.b16 %v3618
        %v3700 = vunpack.c.l.b16 %v3619
        %v3701 = vunpack.c.l.b16 %v3620
        %v3702 = vunpack.c.l.b16 %v3621
        %v3703 = vunpack.c.l.b16 %v3622
        %v3704 = vunpack.c.l.b16 %v3623
        %v3705 = vunpack.c.l.b16 %v3624
        %v3706 = vunpack.c.l.b16 %v3625
        %v3707 = vunpack.c.l.b16 %v3626
        %v3708 = vunpack.c.l.b16 %v3627
        %v3709 = vunpack.c.l.b16 %v3628
        %v3710 = vunpack.c.l.b16 %v3629
        %v3711 = vpack.c.b16 %v3680, %v3679
        %v3712 = vpack.c.b16 %v3682, %v3681
        %v3713 = vpack.c.b16 %v3684, %v3683
        %v3714 = vpack.c.b16 %v3686, %v3685
        %v3715 = vpack.c.b16 %v3688, %v3687
        %v3716 = vpack.c.b16 %v3690, %v3689
        %v3717 = vpack.c.b16 %v3692, %v3691
        %v3718 = vpack.c.b16 %v3694, %v3693
        %v3719 = vpack.c.b16 %v3696, %v3695
        %v3720 = vpack.c.b16 %v3698, %v3697
        %v3721 = vpack.c.b16 %v3700, %v3699
        %v3722 = vpack.c.b16 %v3702, %v3701
        %v3723 = vpack.c.b16 %v3704, %v3703
        %v3724 = vpack.c.b16 %v3706, %v3705
        %v3725 = vpack.c.b16 %v3708, %v3707
        %v3726 = vpack.c.b16 %v3710, %v3709
        %v3759 = vunpack.c.l.b16 %v3631
        %v3760 = vunpack.c.l.b16 %v3632
        %v3761 = vunpack.c.l.b16 %v3633
        %v3762 = vunpack.c.l.b16 %v3634
        %v3763 = vunpack.c.l.b16 %v3635
        %v3764 = vunpack.c.l.b16 %v3636
        %v3765 = vunpack.c.l.b16 %v3637
        %v3766 = vunpack.c.l.b16 %v3638
        %v3767 = vunpack.c.l.b16 %v3639
        %v3768 = vunpack.c.l.b16 %v3640
        %v3769 = vunpack.c.l.b16 %v3641
        %v3770 = vunpack.c.l.b16 %v3642
        %v3771 = vunpack.c.l.b16 %v3643
        %v3772 = vunpack.c.l.b16 %v3644
        %v3773 = vunpack.c.l.b16 %v3645
        %v3774 = vunpack.c.l.b16 %v3646
        %v3775 = vpack.c.b16 %v3760, %v3759
        %v3776 = vpack.c.b16 %v3762, %v3761
        %v3777 = vpack.c.b16 %v3764, %v3763
        %v3778 = vpack.c.b16 %v3766, %v3765
        %v3779 = vpack.c.b16 %v3768, %v3767
        %v3780 = vpack.c.b16 %v3770, %v3769
        %v3781 = vpack.c.b16 %v3772, %v3771
        %v3782 = vpack.c.b16 %v3774, %v3773
        %3791 = vmatpush.bf16.msra.mxu0 %v3782
        %3792 = vmatpush.bf16.msra.mxu0 %v3781
        %3793 = vmatpush.bf16.msra.mxu0 %v3780
        %3794 = vmatpush.bf16.msra.mxu0 %v3779
        %3795 = vmatpush.bf16.msra.mxu0 %v3778
        %3796 = vmatpush.bf16.msra.mxu0 %v3777
        %3797 = vmatpush.bf16.msra.mxu0 %v3776
        %3798 = vmatpush.bf16.msra.mxu0 %v3775
        %3799 = vmatmul.bf16.gmra.mxu0 %v3711
        %v3800 = vpop.f32.mrf.mxu0
        %v3801 = vadd.f32 0.0, %v3800
        %v3802 = vpop.f32.mrf.mxu0
        %v3803 = vadd.f32 0.0, %v3802
        %3804 = vmatmul.bf16.gmra.mxu0 %v3712
        %v3805 = vpop.f32.mrf.mxu0
        %v3806 = vadd.f32 0.0, %v3805
        %v3807 = vpop.f32.mrf.mxu0
        %v3808 = vadd.f32 0.0, %v3807
        %3809 = vmatmul.bf16.gmra.mxu0 %v3713
        %v3810 = vpop.f32.mrf.mxu0
        %v3811 = vadd.f32 0.0, %v3810
        %v3812 = vpop.f32.mrf.mxu0
        %v3813 = vadd.f32 0.0, %v3812
        %3814 = vmatmul.bf16.gmra.mxu0 %v3714
        %v3815 = vpop.f32.mrf.mxu0
        %v3816 = vadd.f32 0.0, %v3815
        %v3817 = vpop.f32.mrf.mxu0
        %v3818 = vadd.f32 0.0, %v3817
        %3819 = vmatmul.bf16.gmra.mxu0 %v3715
        %v3820 = vpop.f32.mrf.mxu0
        %v3821 = vadd.f32 0.0, %v3820
        %v3822 = vpop.f32.mrf.mxu0
        %v3823 = vadd.f32 0.0, %v3822
        %3824 = vmatmul.bf16.gmra.mxu0 %v3716
        %v3825 = vpop.f32.mrf.mxu0
        %v3826 = vadd.f32 0.0, %v3825
        %v3827 = vpop.f32.mrf.mxu0
        %v3828 = vadd.f32 0.0, %v3827
        %3829 = vmatmul.bf16.gmra.mxu0 %v3717
        %v3830 = vpop.f32.mrf.mxu0
        %v3831 = vadd.f32 0.0, %v3830
        %v3832 = vpop.f32.mrf.mxu0
        %v3833 = vadd.f32 0.0, %v3832
        %3834 = vmatmul.bf16.gmra.mxu0 %v3718
        %v3835 = vpop.f32.mrf.mxu0
        %v3836 = vadd.f32 0.0, %v3835
        %v3837 = vpop.f32.mrf.mxu0
        %v3838 = vadd.f32 0.0, %v3837
        %3839 = vmatmul.bf16.gmra.mxu0 %v3719
        %v3840 = vpop.f32.mrf.mxu0
        %v3841 = vadd.f32 0.0, %v3840
        %v3842 = vpop.f32.mrf.mxu0
        %v3843 = vadd.f32 0.0, %v3842
        %3844 = vmatmul.bf16.gmra.mxu0 %v3720
        %v3845 = vpop.f32.mrf.mxu0
        %v3846 = vadd.f32 0.0, %v3845
        %v3847 = vpop.f32.mrf.mxu0
        %v3848 = vadd.f32 0.0, %v3847
        %3849 = vmatmul.bf16.gmra.mxu0 %v3721
        %v3850 = vpop.f32.mrf.mxu0
        %v3851 = vadd.f32 0.0, %v3850
        %v3852 = vpop.f32.mrf.mxu0
        %v3853 = vadd.f32 0.0, %v3852
        %3854 = vmatmul.bf16.gmra.mxu0 %v3722
        %v3855 = vpop.f32.mrf.mxu0
        %v3856 = vadd.f32 0.0, %v3855
        %v3857 = vpop.f32.mrf.mxu0
        %v3858 = vadd.f32 0.0, %v3857
        %3859 = vmatmul.bf16.gmra.mxu0 %v3723
        %v3860 = vpop.f32.mrf.mxu0
        %v3861 = vadd.f32 0.0, %v3860
        %v3862 = vpop.f32.mrf.mxu0
        %v3863 = vadd.f32 0.0, %v3862
        %3864 = vmatmul.bf16.gmra.mxu0 %v3724
        %v3865 = vpop.f32.mrf.mxu0
        %v3866 = vadd.f32 0.0, %v3865
        %v3867 = vpop.f32.mrf.mxu0
        %v3868 = vadd.f32 0.0, %v3867
        %3869 = vmatmul.bf16.gmra.mxu0 %v3725
        %v3870 = vpop.f32.mrf.mxu0
        %v3871 = vadd.f32 0.0, %v3870
        %v3872 = vpop.f32.mrf.mxu0
        %v3873 = vadd.f32 0.0, %v3872
        %3874 = vmatmul.bf16.gmra.mxu0 %v3726
        %v3875 = vpop.f32.mrf.mxu0
        %v3876 = vadd.f32 0.0, %v3875
        %v3877 = vpop.f32.mrf.mxu0
        %v3878 = vadd.f32 0.0, %v3877
        %3879 = vdwg.mxu0
        %v3880 = vadd.f32 %v3565, %v3801
        %v3881 = vadd.f32 %v3566, %v3803
        %v3882 = vadd.f32 %v3567, %v3806
        %v3883 = vadd.f32 %v3568, %v3808
        %v3884 = vadd.f32 %v3569, %v3811
        %v3885 = vadd.f32 %v3570, %v3813
        %v3886 = vadd.f32 %v3571, %v3816
        %v3887 = vadd.f32 %v3572, %v3818
        %v3888 = vadd.f32 %v3573, %v3821
        %v3889 = vadd.f32 %v3574, %v3823
        %v3890 = vadd.f32 %v3575, %v3826
        %v3891 = vadd.f32 %v3576, %v3828
        %v3892 = vadd.f32 %v3577, %v3831
        %v3893 = vadd.f32 %v3578, %v3833
        %v3894 = vadd.f32 %v3579, %v3836
        %v3895 = vadd.f32 %v3580, %v3838
        %v3896 = vadd.f32 %v3581, %v3841
        %v3897 = vadd.f32 %v3582, %v3843
        %v3898 = vadd.f32 %v3583, %v3846
        %v3899 = vadd.f32 %v3584, %v3848
        %v3900 = vadd.f32 %v3585, %v3851
        %v3901 = vadd.f32 %v3586, %v3853
        %v3902 = vadd.f32 %v3587, %v3856
        %v3903 = vadd.f32 %v3588, %v3858
        %v3904 = vadd.f32 %v3589, %v3861
        %v3905 = vadd.f32 %v3590, %v3863
        %v3906 = vadd.f32 %v3591, %v3866
        %v3907 = vadd.f32 %v3592, %v3868
        %v3908 = vadd.f32 %v3593, %v3871
        %v3909 = vadd.f32 %v3594, %v3873
        %v3910 = vadd.f32 %v3595, %v3876
        %v3911 = vadd.f32 %v3596, %v3878
        %v3912 = vld [vmem:[%s3597] sm:$0xf]
        %v3913 = vld [vmem:[%s3597 + $0x4] sm:$0xf]
        %v3914 = vld [vmem:[%s3597 + $0x8] sm:$0x1]
        %v3915 = vld [vmem:[%s3597 + $0xc] sm:$0xf]
        %v3916 = vld [vmem:[%s3597 + $0x10] sm:$0xf]
        %v3917 = vld [vmem:[%s3597 + $0x14] sm:$0x1]
        %v3918 = vld [vmem:[%s3597 + $0x18] sm:$0xf]
        %v3919 = vld [vmem:[%s3597 + $0x1c] sm:$0xf]
        %v3920 = vld [vmem:[%s3597 + $0x20] sm:$0x1]
        %v3921 = vld [vmem:[%s3597 + $0x24] sm:$0xf]
        %v3922 = vld [vmem:[%s3597 + $0x28] sm:$0xf]
        %v3923 = vld [vmem:[%s3597 + $0x2c] sm:$0x1]
        %v3924 = vld [vmem:[%s3597 + $0x30] sm:$0xf]
        %v3925 = vld [vmem:[%s3597 + $0x34] sm:$0xf]
        %v3926 = vld [vmem:[%s3597 + $0x38] sm:$0x1]
        %v3927 = vld [vmem:[%s3597 + $0x3c] sm:$0xf]
        %v3928 = vld [vmem:[%s3597 + $0x40] sm:$0xf]
        %v3929 = vld [vmem:[%s3597 + $0x44] sm:$0x1]
        %v3930 = vld [vmem:[%s3597 + $0x48] sm:$0xf]
        %v3931 = vld [vmem:[%s3597 + $0x4c] sm:$0xf]
        %v3932 = vld [vmem:[%s3597 + $0x50] sm:$0x1]
        %v3933 = vld [vmem:[%s3597 + $0x54] sm:$0xf]
        %v3934 = vld [vmem:[%s3597 + $0x58] sm:$0xf]
        %v3935 = vld [vmem:[%s3597 + $0x5c] sm:$0x1]
        %v3936 = vld [vmem:[%s3597 + $0x60] sm:$0xf]
        %v3937 = vld [vmem:[%s3597 + $0x64] sm:$0xf]
        %v3938 = vld [vmem:[%s3597 + $0x68] sm:$0x1]
        %v3939 = vld [vmem:[%s3597 + $0x6c] sm:$0xf]
        %v3940 = vld [vmem:[%s3597 + $0x70] sm:$0xf]
        %v3941 = vld [vmem:[%s3597 + $0x74] sm:$0x1]
        %v3942 = vld [vmem:[%s3597 + $0x78] sm:$0xf]
        %v3943 = vld [vmem:[%s3597 + $0x7c] sm:$0xf]
        %v3944 = vld [vmem:[%s3597 + $0x80] sm:$0x1]
        %v3945 = vld [vmem:[%s3597 + $0x84] sm:$0xf]
        %v3946 = vld [vmem:[%s3597 + $0x88] sm:$0xf]
        %v3947 = vld [vmem:[%s3597 + $0x8c] sm:$0x1]
        %v3948 = vld [vmem:[%s3597 + $0x90] sm:$0xf]
        %v3949 = vld [vmem:[%s3597 + $0x94] sm:$0xf]
        %v3950 = vld [vmem:[%s3597 + $0x98] sm:$0x1]
        %v3951 = vld [vmem:[%s3597 + $0x9c] sm:$0xf]
        %v3952 = vld [vmem:[%s3597 + $0xa0] sm:$0xf]
        %v3953 = vld [vmem:[%s3597 + $0xa4] sm:$0x1]
        %v3954 = vld [vmem:[%s3597 + $0xa8] sm:$0xf]
        %v3955 = vld [vmem:[%s3597 + $0xac] sm:$0xf]
        %v3956 = vld [vmem:[%s3597 + $0xb0] sm:$0x1]
        %v3957 = vld [vmem:[%s3597 + $0xb4] sm:$0xf]
        %v3958 = vld [vmem:[%s3597 + $0xb8] sm:$0xf]
        %v3959 = vld [vmem:[%s3597 + $0xbc] sm:$0x1]
        %v3961 = vshrl.u32 %v3912, 16
        %v3963 = vrot.slane %v3961, 4
        %v3964 = vshll.u32 %v3912, 16
        %v3966 = vrot.slane %v3964, 5
        %v3967 = vor.u32 %v3963, %v3966
        %v3968 = vrot.slane %v3967, 4
        %v3970 = vshll.u32 %v3913, 16
        %v3972 = vrot.slane %v3970, 5
        %v3973 = vsel %vm926, %v3968, %v3972
        %v3974 = vshrl.u32 %v3913, 16
        %v3976 = vrot.slane %v3974, 4
        %v3977 = vor.u32 %v3976, %v3972
        %v3978 = vrot.slane %v3977, 4
        %v3980 = vshll.u32 %v3914, 16
        %v3982 = vrot.slane %v3980, 5
        %v3983 = vsel %vm926, %v3978, %v3982
        %v3985 = vshrl.u32 %v3915, 16
        %v3987 = vrot.slane %v3985, 4
        %v3988 = vshll.u32 %v3915, 16
        %v3990 = vrot.slane %v3988, 5
        %v3991 = vor.u32 %v3987, %v3990
        %v3992 = vrot.slane %v3991, 4
        %v3994 = vshll.u32 %v3916, 16
        %v3996 = vrot.slane %v3994, 5
        %v3997 = vsel %vm926, %v3992, %v3996
        %v3998 = vshrl.u32 %v3916, 16
        %v4000 = vrot.slane %v3998, 4
        %v4001 = vor.u32 %v4000, %v3996
        %v4002 = vrot.slane %v4001, 4
        %v4004 = vshll.u32 %v3917, 16
        %v4006 = vrot.slane %v4004, 5
        %v4007 = vsel %vm926, %v4002, %v4006
        %v4009 = vshrl.u32 %v3918, 16
        %v4011 = vrot.slane %v4009, 4
        %v4012 = vshll.u32 %v3918, 16
        %v4014 = vrot.slane %v4012, 5
        %v4015 = vor.u32 %v4011, %v4014
        %v4016 = vrot.slane %v4015, 4
        %v4018 = vshll.u32 %v3919, 16
        %v4020 = vrot.slane %v4018, 5
        %v4021 = vsel %vm926, %v4016, %v4020
        %v4022 = vshrl.u32 %v3919, 16
        %v4024 = vrot.slane %v4022, 4
        %v4025 = vor.u32 %v4024, %v4020
        %v4026 = vrot.slane %v4025, 4
        %v4028 = vshll.u32 %v3920, 16
        %v4030 = vrot.slane %v4028, 5
        %v4031 = vsel %vm926, %v4026, %v4030
        %v4033 = vshrl.u32 %v3921, 16
        %v4035 = vrot.slane %v4033, 4
        %v4036 = vshll.u32 %v3921, 16
        %v4038 = vrot.slane %v4036, 5
        %v4039 = vor.u32 %v4035, %v4038
        %v4040 = vrot.slane %v4039, 4
        %v4042 = vshll.u32 %v3922, 16
        %v4044 = vrot.slane %v4042, 5
        %v4045 = vsel %vm926, %v4040, %v4044
        %v4046 = vshrl.u32 %v3922, 16
        %v4048 = vrot.slane %v4046, 4
        %v4049 = vor.u32 %v4048, %v4044
        %v4050 = vrot.slane %v4049, 4
        %v4052 = vshll.u32 %v3923, 16
        %v4054 = vrot.slane %v4052, 5
        %v4055 = vsel %vm926, %v4050, %v4054
        %v4057 = vshrl.u32 %v3924, 16
        %v4059 = vrot.slane %v4057, 4
        %v4060 = vshll.u32 %v3924, 16
        %v4062 = vrot.slane %v4060, 5
        %v4063 = vor.u32 %v4059, %v4062
        %v4064 = vrot.slane %v4063, 4
        %v4066 = vshll.u32 %v3925, 16
        %v4068 = vrot.slane %v4066, 5
        %v4069 = vsel %vm926, %v4064, %v4068
        %v4070 = vshrl.u32 %v3925, 16
        %v4072 = vrot.slane %v4070, 4
        %v4073 = vor.u32 %v4072, %v4068
        %v4074 = vrot.slane %v4073, 4
        %v4076 = vshll.u32 %v3926, 16
        %v4078 = vrot.slane %v4076, 5
        %v4079 = vsel %vm926, %v4074, %v4078
        %v4081 = vshrl.u32 %v3927, 16
        %v4083 = vrot.slane %v4081, 4
        %v4084 = vshll.u32 %v3927, 16
        %v4086 = vrot.slane %v4084, 5
        %v4087 = vor.u32 %v4083, %v4086
        %v4088 = vrot.slane %v4087, 4
        %v4090 = vshll.u32 %v3928, 16
        %v4092 = vrot.slane %v4090, 5
        %v4093 = vsel %vm926, %v4088, %v4092
        %v4094 = vshrl.u32 %v3928, 16
        %v4096 = vrot.slane %v4094, 4
        %v4097 = vor.u32 %v4096, %v4092
        %v4098 = vrot.slane %v4097, 4
        %v4100 = vshll.u32 %v3929, 16
        %v4102 = vrot.slane %v4100, 5
        %v4103 = vsel %vm926, %v4098, %v4102
        %v4105 = vshrl.u32 %v3930, 16
        %v4107 = vrot.slane %v4105, 4
        %v4108 = vshll.u32 %v3930, 16
        %v4110 = vrot.slane %v4108, 5
        %v4111 = vor.u32 %v4107, %v4110
        %v4112 = vrot.slane %v4111, 4
        %v4114 = vshll.u32 %v3931, 16
        %v4116 = vrot.slane %v4114, 5
        %v4117 = vsel %vm926, %v4112, %v4116
        %v4118 = vshrl.u32 %v3931, 16
        %v4120 = vrot.slane %v4118, 4
        %v4121 = vor.u32 %v4120, %v4116
        %v4122 = vrot.slane %v4121, 4
        %v4124 = vshll.u32 %v3932, 16
        %v4126 = vrot.slane %v4124, 5
        %v4127 = vsel %vm926, %v4122, %v4126
        %v4129 = vshrl.u32 %v3933, 16
        %v4131 = vrot.slane %v4129, 4
        %v4132 = vshll.u32 %v3933, 16
        %v4134 = vrot.slane %v4132, 5
        %v4135 = vor.u32 %v4131, %v4134
        %v4136 = vrot.slane %v4135, 4
        %v4138 = vshll.u32 %v3934, 16
        %v4140 = vrot.slane %v4138, 5
        %v4141 = vsel %vm926, %v4136, %v4140
        %v4142 = vshrl.u32 %v3934, 16
        %v4144 = vrot.slane %v4142, 4
        %v4145 = vor.u32 %v4144, %v4140
        %v4146 = vrot.slane %v4145, 4
        %v4148 = vshll.u32 %v3935, 16
        %v4150 = vrot.slane %v4148, 5
        %v4151 = vsel %vm926, %v4146, %v4150
        %v4153 = vshrl.u32 %v3936, 16
        %v4155 = vrot.slane %v4153, 4
        %v4156 = vshll.u32 %v3936, 16
        %v4158 = vrot.slane %v4156, 5
        %v4159 = vor.u32 %v4155, %v4158
        %v4160 = vrot.slane %v4159, 4
        %v4162 = vshll.u32 %v3937, 16
        %v4164 = vrot.slane %v4162, 5
        %v4165 = vsel %vm926, %v4160, %v4164
        %v4166 = vshrl.u32 %v3937, 16
        %v4168 = vrot.slane %v4166, 4
        %v4169 = vor.u32 %v4168, %v4164
        %v4170 = vrot.slane %v4169, 4
        %v4172 = vshll.u32 %v3938, 16
        %v4174 = vrot.slane %v4172, 5
        %v4175 = vsel %vm926, %v4170, %v4174
        %v4177 = vshrl.u32 %v3939, 16
        %v4179 = vrot.slane %v4177, 4
        %v4180 = vshll.u32 %v3939, 16
        %v4182 = vrot.slane %v4180, 5
        %v4183 = vor.u32 %v4179, %v4182
        %v4184 = vrot.slane %v4183, 4
        %v4186 = vshll.u32 %v3940, 16
        %v4188 = vrot.slane %v4186, 5
        %v4189 = vsel %vm926, %v4184, %v4188
        %v4190 = vshrl.u32 %v3940, 16
        %v4192 = vrot.slane %v4190, 4
        %v4193 = vor.u32 %v4192, %v4188
        %v4194 = vrot.slane %v4193, 4
        %v4196 = vshll.u32 %v3941, 16
        %v4198 = vrot.slane %v4196, 5
        %v4199 = vsel %vm926, %v4194, %v4198
        %v4201 = vshrl.u32 %v3942, 16
        %v4203 = vrot.slane %v4201, 4
        %v4204 = vshll.u32 %v3942, 16
        %v4206 = vrot.slane %v4204, 5
        %v4207 = vor.u32 %v4203, %v4206
        %v4208 = vrot.slane %v4207, 4
        %v4210 = vshll.u32 %v3943, 16
        %v4212 = vrot.slane %v4210, 5
        %v4213 = vsel %vm926, %v4208, %v4212
        %v4214 = vshrl.u32 %v3943, 16
        %v4216 = vrot.slane %v4214, 4
        %v4217 = vor.u32 %v4216, %v4212
        %v4218 = vrot.slane %v4217, 4
        %v4220 = vshll.u32 %v3944, 16
        %v4222 = vrot.slane %v4220, 5
        %v4223 = vsel %vm926, %v4218, %v4222
        %v4225 = vshrl.u32 %v3945, 16
        %v4227 = vrot.slane %v4225, 4
        %v4228 = vshll.u32 %v3945, 16
        %v4230 = vrot.slane %v4228, 5
        %v4231 = vor.u32 %v4227, %v4230
        %v4232 = vrot.slane %v4231, 4
        %v4234 = vshll.u32 %v3946, 16
        %v4236 = vrot.slane %v4234, 5
        %v4237 = vsel %vm926, %v4232, %v4236
        %v4238 = vshrl.u32 %v3946, 16
        %v4240 = vrot.slane %v4238, 4
        %v4241 = vor.u32 %v4240, %v4236
        %v4242 = vrot.slane %v4241, 4
        %v4244 = vshll.u32 %v3947, 16
        %v4246 = vrot.slane %v4244, 5
        %v4247 = vsel %vm926, %v4242, %v4246
        %v4249 = vshrl.u32 %v3948, 16
        %v4251 = vrot.slane %v4249, 4
        %v4252 = vshll.u32 %v3948, 16
        %v4254 = vrot.slane %v4252, 5
        %v4255 = vor.u32 %v4251, %v4254
        %v4256 = vrot.slane %v4255, 4
        %v4258 = vshll.u32 %v3949, 16
        %v4260 = vrot.slane %v4258, 5
        %v4261 = vsel %vm926, %v4256, %v4260
        %v4262 = vshrl.u32 %v3949, 16
        %v4264 = vrot.slane %v4262, 4
        %v4265 = vor.u32 %v4264, %v4260
        %v4266 = vrot.slane %v4265, 4
        %v4268 = vshll.u32 %v3950, 16
        %v4270 = vrot.slane %v4268, 5
        %v4271 = vsel %vm926, %v4266, %v4270
        %v4273 = vshrl.u32 %v3951, 16
        %v4275 = vrot.slane %v4273, 4
        %v4276 = vshll.u32 %v3951, 16
        %v4278 = vrot.slane %v4276, 5
        %v4279 = vor.u32 %v4275, %v4278
        %v4280 = vrot.slane %v4279, 4
        %v4282 = vshll.u32 %v3952, 16
        %v4284 = vrot.slane %v4282, 5
        %v4285 = vsel %vm926, %v4280, %v4284
        %v4286 = vshrl.u32 %v3952, 16
        %v4288 = vrot.slane %v4286, 4
        %v4289 = vor.u32 %v4288, %v4284
        %v4290 = vrot.slane %v4289, 4
        %v4292 = vshll.u32 %v3953, 16
        %v4294 = vrot.slane %v4292, 5
        %v4295 = vsel %vm926, %v4290, %v4294
        %v4297 = vshrl.u32 %v3954, 16
        %v4299 = vrot.slane %v4297, 4
        %v4300 = vshll.u32 %v3954, 16
        %v4302 = vrot.slane %v4300, 5
        %v4303 = vor.u32 %v4299, %v4302
        %v4304 = vrot.slane %v4303, 4
        %v4306 = vshll.u32 %v3955, 16
        %v4308 = vrot.slane %v4306, 5
        %v4309 = vsel %vm926, %v4304, %v4308
        %v4310 = vshrl.u32 %v3955, 16
        %v4312 = vrot.slane %v4310, 4
        %v4313 = vor.u32 %v4312, %v4308
        %v4314 = vrot.slane %v4313, 4
        %v4316 = vshll.u32 %v3956, 16
        %v4318 = vrot.slane %v4316, 5
        %v4319 = vsel %vm926, %v4314, %v4318
        %v4321 = vshrl.u32 %v3957, 16
        %v4323 = vrot.slane %v4321, 4
        %v4324 = vshll.u32 %v3957, 16
        %v4326 = vrot.slane %v4324, 5
        %v4327 = vor.u32 %v4323, %v4326
        %v4328 = vrot.slane %v4327, 4
        %v4330 = vshll.u32 %v3958, 16
        %v4332 = vrot.slane %v4330, 5
        %v4333 = vsel %vm926, %v4328, %v4332
        %v4334 = vshrl.u32 %v3958, 16
        %v4336 = vrot.slane %v4334, 4
        %v4337 = vor.u32 %v4336, %v4332
        %v4338 = vrot.slane %v4337, 4
        %v4340 = vshll.u32 %v3959, 16
        %v4342 = vrot.slane %v4340, 5
        %v4343 = vsel %vm926, %v4338, %v4342
        %s4344 = scalar_lea.vmem [#allocation7], 448
        %v4345 = vld [vmem:[%s4344] sm:$0xf]
        %v4346 = vld [vmem:[%s4344 + $0x4] sm:$0xf]
        %v4347 = vld [vmem:[%s4344 + $0x8] sm:$0xf]
        %v4348 = vld [vmem:[%s4344 + $0xc] sm:$0xf]
        %v4349 = vld [vmem:[%s4344 + $0x10] sm:$0xf]
        %v4350 = vld [vmem:[%s4344 + $0x14] sm:$0xf]
        %v4351 = vld [vmem:[%s4344 + $0x18] sm:$0xf]
        %v4352 = vld [vmem:[%s4344 + $0x1c] sm:$0xf]
        %v4353 = vld [vmem:[%s4344 + $0x20] sm:$0xf]
        %v4354 = vld [vmem:[%s4344 + $0x24] sm:$0xf]
        %v4355 = vld [vmem:[%s4344 + $0x28] sm:$0xf]
        %v4356 = vld [vmem:[%s4344 + $0x2c] sm:$0xf]
        %v4357 = vld [vmem:[%s4344 + $0x30] sm:$0xf]
        %v4358 = vld [vmem:[%s4344 + $0x34] sm:$0xf]
        %v4359 = vld [vmem:[%s4344 + $0x38] sm:$0xf]
        %v4360 = vld [vmem:[%s4344 + $0x3c] sm:$0xf]
        %v4361 = vunpack.c.l.b16 %v3973
        %v4362 = vunpack.c.l.b16 %v3983
        %v4363 = vunpack.c.l.b16 %v3997
        %v4364 = vunpack.c.l.b16 %v4007
        %v4365 = vunpack.c.l.b16 %v4021
        %v4366 = vunpack.c.l.b16 %v4031
        %v4367 = vunpack.c.l.b16 %v4045
        %v4368 = vunpack.c.l.b16 %v4055
        %v4369 = vunpack.c.l.b16 %v4069
        %v4370 = vunpack.c.l.b16 %v4079
        %v4371 = vunpack.c.l.b16 %v4093
        %v4372 = vunpack.c.l.b16 %v4103
        %v4373 = vunpack.c.l.b16 %v4117
        %v4374 = vunpack.c.l.b16 %v4127
        %v4375 = vunpack.c.l.b16 %v4141
        %v4376 = vunpack.c.l.b16 %v4151
        %v4377 = vunpack.c.l.b16 %v4165
        %v4378 = vunpack.c.l.b16 %v4175
        %v4379 = vunpack.c.l.b16 %v4189
        %v4380 = vunpack.c.l.b16 %v4199
        %v4381 = vunpack.c.l.b16 %v4213
        %v4382 = vunpack.c.l.b16 %v4223
        %v4383 = vunpack.c.l.b16 %v4237
        %v4384 = vunpack.c.l.b16 %v4247
        %v4385 = vunpack.c.l.b16 %v4261
        %v4386 = vunpack.c.l.b16 %v4271
        %v4387 = vunpack.c.l.b16 %v4285
        %v4388 = vunpack.c.l.b16 %v4295
        %v4389 = vunpack.c.l.b16 %v4309
        %v4390 = vunpack.c.l.b16 %v4319
        %v4391 = vunpack.c.l.b16 %v4333
        %v4392 = vunpack.c.l.b16 %v4343
        %v4393 = vpack.c.b16 %v4362, %v4361
        %v4394 = vpack.c.b16 %v4364, %v4363
        %v4395 = vpack.c.b16 %v4366, %v4365
        %v4396 = vpack.c.b16 %v4368, %v4367
        %v4397 = vpack.c.b16 %v4370, %v4369
        %v4398 = vpack.c.b16 %v4372, %v4371
        %v4399 = vpack.c.b16 %v4374, %v4373
        %v4400 = vpack.c.b16 %v4376, %v4375
        %v4401 = vpack.c.b16 %v4378, %v4377
        %v4402 = vpack.c.b16 %v4380, %v4379
        %v4403 = vpack.c.b16 %v4382, %v4381
        %v4404 = vpack.c.b16 %v4384, %v4383
        %v4405 = vpack.c.b16 %v4386, %v4385
        %v4406 = vpack.c.b16 %v4388, %v4387
        %v4407 = vpack.c.b16 %v4390, %v4389
        %v4408 = vpack.c.b16 %v4392, %v4391
        %v4441 = vunpack.c.l.b16 %v4345
        %v4442 = vunpack.c.l.b16 %v4346
        %v4443 = vunpack.c.l.b16 %v4347
        %v4444 = vunpack.c.l.b16 %v4348
        %v4445 = vunpack.c.l.b16 %v4349
        %v4446 = vunpack.c.l.b16 %v4350
        %v4447 = vunpack.c.l.b16 %v4351
        %v4448 = vunpack.c.l.b16 %v4352
        %v4449 = vunpack.c.l.b16 %v4353
        %v4450 = vunpack.c.l.b16 %v4354
        %v4451 = vunpack.c.l.b16 %v4355
        %v4452 = vunpack.c.l.b16 %v4356
        %v4453 = vunpack.c.l.b16 %v4357
        %v4454 = vunpack.c.l.b16 %v4358
        %v4455 = vunpack.c.l.b16 %v4359
        %v4456 = vunpack.c.l.b16 %v4360
        %v4457 = vpack.c.b16 %v4442, %v4441
        %v4458 = vpack.c.b16 %v4444, %v4443
        %v4459 = vpack.c.b16 %v4446, %v4445
        %v4460 = vpack.c.b16 %v4448, %v4447
        %v4461 = vpack.c.b16 %v4450, %v4449
        %v4462 = vpack.c.b16 %v4452, %v4451
        %v4463 = vpack.c.b16 %v4454, %v4453
        %v4464 = vpack.c.b16 %v4456, %v4455
        %4473 = vmatpush.bf16.msra.mxu0 %v4464
        %4474 = vmatpush.bf16.msra.mxu0 %v4463
        %4475 = vmatpush.bf16.msra.mxu0 %v4462
        %4476 = vmatpush.bf16.msra.mxu0 %v4461
        %4477 = vmatpush.bf16.msra.mxu0 %v4460
        %4478 = vmatpush.bf16.msra.mxu0 %v4459
        %4479 = vmatpush.bf16.msra.mxu0 %v4458
        %4480 = vmatpush.bf16.msra.mxu0 %v4457
        %4481 = vmatmul.bf16.gmra.mxu0 %v4393
        %v4482 = vpop.f32.mrf.mxu0
        %v4483 = vadd.f32 0.0, %v4482
        %v4484 = vpop.f32.mrf.mxu0
        %v4485 = vadd.f32 0.0, %v4484
        %4486 = vmatmul.bf16.gmra.mxu0 %v4394
        %v4487 = vpop.f32.mrf.mxu0
        %v4488 = vadd.f32 0.0, %v4487
        %v4489 = vpop.f32.mrf.mxu0
        %v4490 = vadd.f32 0.0, %v4489
        %4491 = vmatmul.bf16.gmra.mxu0 %v4395
        %v4492 = vpop.f32.mrf.mxu0
        %v4493 = vadd.f32 0.0, %v4492
        %v4494 = vpop.f32.mrf.mxu0
        %v4495 = vadd.f32 0.0, %v4494
        %4496 = vmatmul.bf16.gmra.mxu0 %v4396
        %v4497 = vpop.f32.mrf.mxu0
        %v4498 = vadd.f32 0.0, %v4497
        %v4499 = vpop.f32.mrf.mxu0
        %v4500 = vadd.f32 0.0, %v4499
        %4501 = vmatmul.bf16.gmra.mxu0 %v4397
        %v4502 = vpop.f32.mrf.mxu0
        %v4503 = vadd.f32 0.0, %v4502
        %v4504 = vpop.f32.mrf.mxu0
        %v4505 = vadd.f32 0.0, %v4504
        %4506 = vmatmul.bf16.gmra.mxu0 %v4398
        %v4507 = vpop.f32.mrf.mxu0
        %v4508 = vadd.f32 0.0, %v4507
        %v4509 = vpop.f32.mrf.mxu0
        %v4510 = vadd.f32 0.0, %v4509
        %4511 = vmatmul.bf16.gmra.mxu0 %v4399
        %v4512 = vpop.f32.mrf.mxu0
        %v4513 = vadd.f32 0.0, %v4512
        %v4514 = vpop.f32.mrf.mxu0
        %v4515 = vadd.f32 0.0, %v4514
        %4516 = vmatmul.bf16.gmra.mxu0 %v4400
        %v4517 = vpop.f32.mrf.mxu0
        %v4518 = vadd.f32 0.0, %v4517
        %v4519 = vpop.f32.mrf.mxu0
        %v4520 = vadd.f32 0.0, %v4519
        %4521 = vmatmul.bf16.gmra.mxu0 %v4401
        %v4522 = vpop.f32.mrf.mxu0
        %v4523 = vadd.f32 0.0, %v4522
        %v4524 = vpop.f32.mrf.mxu0
        %v4525 = vadd.f32 0.0, %v4524
        %4526 = vmatmul.bf16.gmra.mxu0 %v4402
        %v4527 = vpop.f32.mrf.mxu0
        %v4528 = vadd.f32 0.0, %v4527
        %v4529 = vpop.f32.mrf.mxu0
        %v4530 = vadd.f32 0.0, %v4529
        %4531 = vmatmul.bf16.gmra.mxu0 %v4403
        %v4532 = vpop.f32.mrf.mxu0
        %v4533 = vadd.f32 0.0, %v4532
        %v4534 = vpop.f32.mrf.mxu0
        %v4535 = vadd.f32 0.0, %v4534
        %4536 = vmatmul.bf16.gmra.mxu0 %v4404
        %v4537 = vpop.f32.mrf.mxu0
        %v4538 = vadd.f32 0.0, %v4537
        %v4539 = vpop.f32.mrf.mxu0
        %v4540 = vadd.f32 0.0, %v4539
        %4541 = vmatmul.bf16.gmra.mxu0 %v4405
        %v4542 = vpop.f32.mrf.mxu0
        %v4543 = vadd.f32 0.0, %v4542
        %v4544 = vpop.f32.mrf.mxu0
        %v4545 = vadd.f32 0.0, %v4544
        %4546 = vmatmul.bf16.gmra.mxu0 %v4406
        %v4547 = vpop.f32.mrf.mxu0
        %v4548 = vadd.f32 0.0, %v4547
        %v4549 = vpop.f32.mrf.mxu0
        %v4550 = vadd.f32 0.0, %v4549
        %4551 = vmatmul.bf16.gmra.mxu0 %v4407
        %v4552 = vpop.f32.mrf.mxu0
        %v4553 = vadd.f32 0.0, %v4552
        %v4554 = vpop.f32.mrf.mxu0
        %v4555 = vadd.f32 0.0, %v4554
        %4556 = vmatmul.bf16.gmra.mxu0 %v4408
        %v4557 = vpop.f32.mrf.mxu0
        %v4558 = vadd.f32 0.0, %v4557
        %v4559 = vpop.f32.mrf.mxu0
        %v4560 = vadd.f32 0.0, %v4559
        %4561 = vdwg.mxu0
        %v4562 = vadd.f32 %v3880, %v4483
        %v4563 = vadd.f32 %v3881, %v4485
        %v4564 = vadd.f32 %v3882, %v4488
        %v4565 = vadd.f32 %v3883, %v4490
        %v4566 = vadd.f32 %v3884, %v4493
        %v4567 = vadd.f32 %v3885, %v4495
        %v4568 = vadd.f32 %v3886, %v4498
        %v4569 = vadd.f32 %v3887, %v4500
        %v4570 = vadd.f32 %v3888, %v4503
        %v4571 = vadd.f32 %v3889, %v4505
        %v4572 = vadd.f32 %v3890, %v4508
        %v4573 = vadd.f32 %v3891, %v4510
        %v4574 = vadd.f32 %v3892, %v4513
        %v4575 = vadd.f32 %v3893, %v4515
        %v4576 = vadd.f32 %v3894, %v4518
        %v4577 = vadd.f32 %v3895, %v4520
        %v4578 = vadd.f32 %v3896, %v4523
        %v4579 = vadd.f32 %v3897, %v4525
        %v4580 = vadd.f32 %v3898, %v4528
        %v4581 = vadd.f32 %v3899, %v4530
        %v4582 = vadd.f32 %v3900, %v4533
        %v4583 = vadd.f32 %v3901, %v4535
        %v4584 = vadd.f32 %v3902, %v4538
        %v4585 = vadd.f32 %v3903, %v4540
        %v4586 = vadd.f32 %v3904, %v4543
        %v4587 = vadd.f32 %v3905, %v4545
        %v4588 = vadd.f32 %v3906, %v4548
        %v4589 = vadd.f32 %v3907, %v4550
        %v4590 = vadd.f32 %v3908, %v4553
        %v4591 = vadd.f32 %v3909, %v4555
        %v4592 = vadd.f32 %v3910, %v4558
        %v4593 = vadd.f32 %v3911, %v4560
        %v4594 = vld [vmem:[%s3597] sm:$0xe]
        %v4595 = vld [vmem:[%s3597 + $0xc] sm:$0xe]
        %v4596 = vld [vmem:[%s3597 + $0x18] sm:$0xe]
        %v4597 = vld [vmem:[%s3597 + $0x24] sm:$0xe]
        %v4598 = vld [vmem:[%s3597 + $0x30] sm:$0xe]
        %v4599 = vld [vmem:[%s3597 + $0x3c] sm:$0xe]
        %v4600 = vld [vmem:[%s3597 + $0x48] sm:$0xe]
        %v4601 = vld [vmem:[%s3597 + $0x54] sm:$0xe]
        %v4602 = vld [vmem:[%s3597 + $0x60] sm:$0xe]
        %v4603 = vld [vmem:[%s3597 + $0x6c] sm:$0xe]
        %v4604 = vld [vmem:[%s3597 + $0x78] sm:$0xe]
        %v4605 = vld [vmem:[%s3597 + $0x84] sm:$0xe]
        %v4606 = vld [vmem:[%s3597 + $0x90] sm:$0xe]
        %v4607 = vld [vmem:[%s3597 + $0x9c] sm:$0xe]
        %v4608 = vld [vmem:[%s3597 + $0xa8] sm:$0xe]
        %v4609 = vld [vmem:[%s3597 + $0xb4] sm:$0xe]
        %v4658 = vrot.slane %v4594, 5
        %v4659 = vrot.slane %v4658, 4
        %v4660 = vrot.slane %v3913, 5
        %v4661 = vsel %vm1812, %v4659, %v4660
        %v4662 = vrot.slane %v4660, 4
        %v4663 = vrot.slane %v3914, 5
        %v4664 = vsel %vm1812, %v4662, %v4663
        %v4665 = vrot.slane %v4595, 5
        %v4666 = vrot.slane %v4665, 4
        %v4667 = vrot.slane %v3916, 5
        %v4668 = vsel %vm1812, %v4666, %v4667
        %v4669 = vrot.slane %v4667, 4
        %v4670 = vrot.slane %v3917, 5
        %v4671 = vsel %vm1812, %v4669, %v4670
        %v4672 = vrot.slane %v4596, 5
        %v4673 = vrot.slane %v4672, 4
        %v4674 = vrot.slane %v3919, 5
        %v4675 = vsel %vm1812, %v4673, %v4674
        %v4676 = vrot.slane %v4674, 4
        %v4677 = vrot.slane %v3920, 5
        %v4678 = vsel %vm1812, %v4676, %v4677
        %v4679 = vrot.slane %v4597, 5
        %v4680 = vrot.slane %v4679, 4
        %v4681 = vrot.slane %v3922, 5
        %v4682 = vsel %vm1812, %v4680, %v4681
        %v4683 = vrot.slane %v4681, 4
        %v4684 = vrot.slane %v3923, 5
        %v4685 = vsel %vm1812, %v4683, %v4684
        %v4686 = vrot.slane %v4598, 5
        %v4687 = vrot.slane %v4686, 4
        %v4688 = vrot.slane %v3925, 5
        %v4689 = vsel %vm1812, %v4687, %v4688
        %v4690 = vrot.slane %v4688, 4
        %v4691 = vrot.slane %v3926, 5
        %v4692 = vsel %vm1812, %v4690, %v4691
        %v4693 = vrot.slane %v4599, 5
        %v4694 = vrot.slane %v4693, 4
        %v4695 = vrot.slane %v3928, 5
        %v4696 = vsel %vm1812, %v4694, %v4695
        %v4697 = vrot.slane %v4695, 4
        %v4698 = vrot.slane %v3929, 5
        %v4699 = vsel %vm1812, %v4697, %v4698
        %v4700 = vrot.slane %v4600, 5
        %v4701 = vrot.slane %v4700, 4
        %v4702 = vrot.slane %v3931, 5
        %v4703 = vsel %vm1812, %v4701, %v4702
        %v4704 = vrot.slane %v4702, 4
        %v4705 = vrot.slane %v3932, 5
        %v4706 = vsel %vm1812, %v4704, %v4705
        %v4707 = vrot.slane %v4601, 5
        %v4708 = vrot.slane %v4707, 4
        %v4709 = vrot.slane %v3934, 5
        %v4710 = vsel %vm1812, %v4708, %v4709
        %v4711 = vrot.slane %v4709, 4
        %v4712 = vrot.slane %v3935, 5
        %v4713 = vsel %vm1812, %v4711, %v4712
        %v4714 = vrot.slane %v4602, 5
        %v4715 = vrot.slane %v4714, 4
        %v4716 = vrot.slane %v3937, 5
        %v4717 = vsel %vm1812, %v4715, %v4716
        %v4718 = vrot.slane %v4716, 4
        %v4719 = vrot.slane %v3938, 5
        %v4720 = vsel %vm1812, %v4718, %v4719
        %v4721 = vrot.slane %v4603, 5
        %v4722 = vrot.slane %v4721, 4
        %v4723 = vrot.slane %v3940, 5
        %v4724 = vsel %vm1812, %v4722, %v4723
        %v4725 = vrot.slane %v4723, 4
        %v4726 = vrot.slane %v3941, 5
        %v4727 = vsel %vm1812, %v4725, %v4726
        %v4728 = vrot.slane %v4604, 5
        %v4729 = vrot.slane %v4728, 4
        %v4730 = vrot.slane %v3943, 5
        %v4731 = vsel %vm1812, %v4729, %v4730
        %v4732 = vrot.slane %v4730, 4
        %v4733 = vrot.slane %v3944, 5
        %v4734 = vsel %vm1812, %v4732, %v4733
        %v4735 = vrot.slane %v4605, 5
        %v4736 = vrot.slane %v4735, 4
        %v4737 = vrot.slane %v3946, 5
        %v4738 = vsel %vm1812, %v4736, %v4737
        %v4739 = vrot.slane %v4737, 4
        %v4740 = vrot.slane %v3947, 5
        %v4741 = vsel %vm1812, %v4739, %v4740
        %v4742 = vrot.slane %v4606, 5
        %v4743 = vrot.slane %v4742, 4
        %v4744 = vrot.slane %v3949, 5
        %v4745 = vsel %vm1812, %v4743, %v4744
        %v4746 = vrot.slane %v4744, 4
        %v4747 = vrot.slane %v3950, 5
        %v4748 = vsel %vm1812, %v4746, %v4747
        %v4749 = vrot.slane %v4607, 5
        %v4750 = vrot.slane %v4749, 4
        %v4751 = vrot.slane %v3952, 5
        %v4752 = vsel %vm1812, %v4750, %v4751
        %v4753 = vrot.slane %v4751, 4
        %v4754 = vrot.slane %v3953, 5
        %v4755 = vsel %vm1812, %v4753, %v4754
        %v4756 = vrot.slane %v4608, 5
        %v4757 = vrot.slane %v4756, 4
        %v4758 = vrot.slane %v3955, 5
        %v4759 = vsel %vm1812, %v4757, %v4758
        %v4760 = vrot.slane %v4758, 4
        %v4761 = vrot.slane %v3956, 5
        %v4762 = vsel %vm1812, %v4760, %v4761
        %v4763 = vrot.slane %v4609, 5
        %v4764 = vrot.slane %v4763, 4
        %v4765 = vrot.slane %v3958, 5
        %v4766 = vsel %vm1812, %v4764, %v4765
        %v4767 = vrot.slane %v4765, 4
        %v4768 = vrot.slane %v3959, 5
        %v4769 = vsel %vm1812, %v4767, %v4768
        %s4770 = scalar_lea.vmem [#allocation7], 512
        %v4771 = vld [vmem:[%s4770] sm:$0xf]
        %v4772 = vld [vmem:[%s4770 + $0x4] sm:$0xf]
        %v4773 = vld [vmem:[%s4770 + $0x8] sm:$0xf]
        %v4774 = vld [vmem:[%s4770 + $0xc] sm:$0xf]
        %v4775 = vld [vmem:[%s4770 + $0x10] sm:$0xf]
        %v4776 = vld [vmem:[%s4770 + $0x14] sm:$0xf]
        %v4777 = vld [vmem:[%s4770 + $0x18] sm:$0xf]
        %v4778 = vld [vmem:[%s4770 + $0x1c] sm:$0xf]
        %v4779 = vld [vmem:[%s4770 + $0x20] sm:$0xf]
        %v4780 = vld [vmem:[%s4770 + $0x24] sm:$0xf]
        %v4781 = vld [vmem:[%s4770 + $0x28] sm:$0xf]
        %v4782 = vld [vmem:[%s4770 + $0x2c] sm:$0xf]
        %v4783 = vld [vmem:[%s4770 + $0x30] sm:$0xf]
        %v4784 = vld [vmem:[%s4770 + $0x34] sm:$0xf]
        %v4785 = vld [vmem:[%s4770 + $0x38] sm:$0xf]
        %v4786 = vld [vmem:[%s4770 + $0x3c] sm:$0xf]
        %v4787 = vunpack.c.l.b16 %v4661
        %v4788 = vunpack.c.l.b16 %v4664
        %v4789 = vunpack.c.l.b16 %v4668
        %v4790 = vunpack.c.l.b16 %v4671
        %v4791 = vunpack.c.l.b16 %v4675
        %v4792 = vunpack.c.l.b16 %v4678
        %v4793 = vunpack.c.l.b16 %v4682
        %v4794 = vunpack.c.l.b16 %v4685
        %v4795 = vunpack.c.l.b16 %v4689
        %v4796 = vunpack.c.l.b16 %v4692
        %v4797 = vunpack.c.l.b16 %v4696
        %v4798 = vunpack.c.l.b16 %v4699
        %v4799 = vunpack.c.l.b16 %v4703
        %v4800 = vunpack.c.l.b16 %v4706
        %v4801 = vunpack.c.l.b16 %v4710
        %v4802 = vunpack.c.l.b16 %v4713
        %v4803 = vunpack.c.l.b16 %v4717
        %v4804 = vunpack.c.l.b16 %v4720
        %v4805 = vunpack.c.l.b16 %v4724
        %v4806 = vunpack.c.l.b16 %v4727
        %v4807 = vunpack.c.l.b16 %v4731
        %v4808 = vunpack.c.l.b16 %v4734
        %v4809 = vunpack.c.l.b16 %v4738
        %v4810 = vunpack.c.l.b16 %v4741
        %v4811 = vunpack.c.l.b16 %v4745
        %v4812 = vunpack.c.l.b16 %v4748
        %v4813 = vunpack.c.l.b16 %v4752
        %v4814 = vunpack.c.l.b16 %v4755
        %v4815 = vunpack.c.l.b16 %v4759
        %v4816 = vunpack.c.l.b16 %v4762
        %v4817 = vunpack.c.l.b16 %v4766
        %v4818 = vunpack.c.l.b16 %v4769
        %v4819 = vpack.c.b16 %v4788, %v4787
        %v4820 = vpack.c.b16 %v4790, %v4789
        %v4821 = vpack.c.b16 %v4792, %v4791
        %v4822 = vpack.c.b16 %v4794, %v4793
        %v4823 = vpack.c.b16 %v4796, %v4795
        %v4824 = vpack.c.b16 %v4798, %v4797
        %v4825 = vpack.c.b16 %v4800, %v4799
        %v4826 = vpack.c.b16 %v4802, %v4801
        %v4827 = vpack.c.b16 %v4804, %v4803
        %v4828 = vpack.c.b16 %v4806, %v4805
        %v4829 = vpack.c.b16 %v4808, %v4807
        %v4830 = vpack.c.b16 %v4810, %v4809
        %v4831 = vpack.c.b16 %v4812, %v4811
        %v4832 = vpack.c.b16 %v4814, %v4813
        %v4833 = vpack.c.b16 %v4816, %v4815
        %v4834 = vpack.c.b16 %v4818, %v4817
        %v4867 = vunpack.c.l.b16 %v4771
        %v4868 = vunpack.c.l.b16 %v4772
        %v4869 = vunpack.c.l.b16 %v4773
        %v4870 = vunpack.c.l.b16 %v4774
        %v4871 = vunpack.c.l.b16 %v4775
        %v4872 = vunpack.c.l.b16 %v4776
        %v4873 = vunpack.c.l.b16 %v4777
        %v4874 = vunpack.c.l.b16 %v4778
        %v4875 = vunpack.c.l.b16 %v4779
        %v4876 = vunpack.c.l.b16 %v4780
        %v4877 = vunpack.c.l.b16 %v4781
        %v4878 = vunpack.c.l.b16 %v4782
        %v4879 = vunpack.c.l.b16 %v4783
        %v4880 = vunpack.c.l.b16 %v4784
        %v4881 = vunpack.c.l.b16 %v4785
        %v4882 = vunpack.c.l.b16 %v4786
        %v4883 = vpack.c.b16 %v4868, %v4867
        %v4884 = vpack.c.b16 %v4870, %v4869
        %v4885 = vpack.c.b16 %v4872, %v4871
        %v4886 = vpack.c.b16 %v4874, %v4873
        %v4887 = vpack.c.b16 %v4876, %v4875
        %v4888 = vpack.c.b16 %v4878, %v4877
        %v4889 = vpack.c.b16 %v4880, %v4879
        %v4890 = vpack.c.b16 %v4882, %v4881
        %4899 = vmatpush.bf16.msra.mxu0 %v4890
        %4900 = vmatpush.bf16.msra.mxu0 %v4889
        %4901 = vmatpush.bf16.msra.mxu0 %v4888
        %4902 = vmatpush.bf16.msra.mxu0 %v4887
        %4903 = vmatpush.bf16.msra.mxu0 %v4886
        %4904 = vmatpush.bf16.msra.mxu0 %v4885
        %4905 = vmatpush.bf16.msra.mxu0 %v4884
        %4906 = vmatpush.bf16.msra.mxu0 %v4883
        %4907 = vmatmul.bf16.gmra.mxu0 %v4819
        %v4908 = vpop.f32.mrf.mxu0
        %v4909 = vadd.f32 0.0, %v4908
        %v4910 = vpop.f32.mrf.mxu0
        %v4911 = vadd.f32 0.0, %v4910
        %4912 = vmatmul.bf16.gmra.mxu0 %v4820
        %v4913 = vpop.f32.mrf.mxu0
        %v4914 = vadd.f32 0.0, %v4913
        %v4915 = vpop.f32.mrf.mxu0
        %v4916 = vadd.f32 0.0, %v4915
        %4917 = vmatmul.bf16.gmra.mxu0 %v4821
        %v4918 = vpop.f32.mrf.mxu0
        %v4919 = vadd.f32 0.0, %v4918
        %v4920 = vpop.f32.mrf.mxu0
        %v4921 = vadd.f32 0.0, %v4920
        %4922 = vmatmul.bf16.gmra.mxu0 %v4822
        %v4923 = vpop.f32.mrf.mxu0
        %v4924 = vadd.f32 0.0, %v4923
        %v4925 = vpop.f32.mrf.mxu0
        %v4926 = vadd.f32 0.0, %v4925
        %4927 = vmatmul.bf16.gmra.mxu0 %v4823
        %v4928 = vpop.f32.mrf.mxu0
        %v4929 = vadd.f32 0.0, %v4928
        %v4930 = vpop.f32.mrf.mxu0
        %v4931 = vadd.f32 0.0, %v4930
        %4932 = vmatmul.bf16.gmra.mxu0 %v4824
        %v4933 = vpop.f32.mrf.mxu0
        %v4934 = vadd.f32 0.0, %v4933
        %v4935 = vpop.f32.mrf.mxu0
        %v4936 = vadd.f32 0.0, %v4935
        %4937 = vmatmul.bf16.gmra.mxu0 %v4825
        %v4938 = vpop.f32.mrf.mxu0
        %v4939 = vadd.f32 0.0, %v4938
        %v4940 = vpop.f32.mrf.mxu0
        %v4941 = vadd.f32 0.0, %v4940
        %4942 = vmatmul.bf16.gmra.mxu0 %v4826
        %v4943 = vpop.f32.mrf.mxu0
        %v4944 = vadd.f32 0.0, %v4943
        %v4945 = vpop.f32.mrf.mxu0
        %v4946 = vadd.f32 0.0, %v4945
        %4947 = vmatmul.bf16.gmra.mxu0 %v4827
        %v4948 = vpop.f32.mrf.mxu0
        %v4949 = vadd.f32 0.0, %v4948
        %v4950 = vpop.f32.mrf.mxu0
        %v4951 = vadd.f32 0.0, %v4950
        %4952 = vmatmul.bf16.gmra.mxu0 %v4828
        %v4953 = vpop.f32.mrf.mxu0
        %v4954 = vadd.f32 0.0, %v4953
        %v4955 = vpop.f32.mrf.mxu0
        %v4956 = vadd.f32 0.0, %v4955
        %4957 = vmatmul.bf16.gmra.mxu0 %v4829
        %v4958 = vpop.f32.mrf.mxu0
        %v4959 = vadd.f32 0.0, %v4958
        %v4960 = vpop.f32.mrf.mxu0
        %v4961 = vadd.f32 0.0, %v4960
        %4962 = vmatmul.bf16.gmra.mxu0 %v4830
        %v4963 = vpop.f32.mrf.mxu0
        %v4964 = vadd.f32 0.0, %v4963
        %v4965 = vpop.f32.mrf.mxu0
        %v4966 = vadd.f32 0.0, %v4965
        %4967 = vmatmul.bf16.gmra.mxu0 %v4831
        %v4968 = vpop.f32.mrf.mxu0
        %v4969 = vadd.f32 0.0, %v4968
        %v4970 = vpop.f32.mrf.mxu0
        %v4971 = vadd.f32 0.0, %v4970
        %4972 = vmatmul.bf16.gmra.mxu0 %v4832
        %v4973 = vpop.f32.mrf.mxu0
        %v4974 = vadd.f32 0.0, %v4973
        %v4975 = vpop.f32.mrf.mxu0
        %v4976 = vadd.f32 0.0, %v4975
        %4977 = vmatmul.bf16.gmra.mxu0 %v4833
        %v4978 = vpop.f32.mrf.mxu0
        %v4979 = vadd.f32 0.0, %v4978
        %v4980 = vpop.f32.mrf.mxu0
        %v4981 = vadd.f32 0.0, %v4980
        %4982 = vmatmul.bf16.gmra.mxu0 %v4834
        %v4983 = vpop.f32.mrf.mxu0
        %v4984 = vadd.f32 0.0, %v4983
        %v4985 = vpop.f32.mrf.mxu0
        %v4986 = vadd.f32 0.0, %v4985
        %4987 = vdwg.mxu0
        %v4988 = vadd.f32 %v4562, %v4909
        %v4989 = vadd.f32 %v4563, %v4911
        %v4990 = vadd.f32 %v4564, %v4914
        %v4991 = vadd.f32 %v4565, %v4916
        %v4992 = vadd.f32 %v4566, %v4919
        %v4993 = vadd.f32 %v4567, %v4921
        %v4994 = vadd.f32 %v4568, %v4924
        %v4995 = vadd.f32 %v4569, %v4926
        %v4996 = vadd.f32 %v4570, %v4929
        %v4997 = vadd.f32 %v4571, %v4931
        %v4998 = vadd.f32 %v4572, %v4934
        %v4999 = vadd.f32 %v4573, %v4936
        %v5000 = vadd.f32 %v4574, %v4939
        %v5001 = vadd.f32 %v4575, %v4941
        %v5002 = vadd.f32 %v4576, %v4944
        %v5003 = vadd.f32 %v4577, %v4946
        %v5004 = vadd.f32 %v4578, %v4949
        %v5005 = vadd.f32 %v4579, %v4951
        %v5006 = vadd.f32 %v4580, %v4954
        %v5007 = vadd.f32 %v4581, %v4956
        %v5008 = vadd.f32 %v4582, %v4959
        %v5009 = vadd.f32 %v4583, %v4961
        %v5010 = vadd.f32 %v4584, %v4964
        %v5011 = vadd.f32 %v4585, %v4966
        %v5012 = vadd.f32 %v4586, %v4969
        %v5013 = vadd.f32 %v4587, %v4971
        %v5014 = vadd.f32 %v4588, %v4974
        %v5015 = vadd.f32 %v4589, %v4976
        %v5016 = vadd.f32 %v4590, %v4979
        %v5017 = vadd.f32 %v4591, %v4981
        %v5018 = vadd.f32 %v4592, %v4984
        %v5019 = vadd.f32 %v4593, %v4986
        %v5020 = vld [vmem:[%s2] sm:$0x1]
        %v5022 = vperm.slane %v5020, 0
        %v5024 = vadd.f32 %v4988, %v5022
        %v5025 = vadd.f32 %v4989, %v5022
        %v5026 = vadd.f32 %v4990, %v5022
        %v5027 = vadd.f32 %v4991, %v5022
        %v5028 = vadd.f32 %v4992, %v5022
        %v5029 = vadd.f32 %v4993, %v5022
        %v5030 = vadd.f32 %v4994, %v5022
        %v5031 = vadd.f32 %v4995, %v5022
        %v5032 = vadd.f32 %v4996, %v5022
        %v5033 = vadd.f32 %v4997, %v5022
        %v5034 = vadd.f32 %v4998, %v5022
        %v5035 = vadd.f32 %v4999, %v5022
        %v5036 = vadd.f32 %v5000, %v5022
        %v5037 = vadd.f32 %v5001, %v5022
        %v5038 = vadd.f32 %v5002, %v5022
        %v5039 = vadd.f32 %v5003, %v5022
        %v5040 = vadd.f32 %v5004, %v5022
        %v5041 = vadd.f32 %v5005, %v5022
        %v5042 = vadd.f32 %v5006, %v5022
        %v5043 = vadd.f32 %v5007, %v5022
        %v5044 = vadd.f32 %v5008, %v5022
        %v5045 = vadd.f32 %v5009, %v5022
        %v5046 = vadd.f32 %v5010, %v5022
        %v5047 = vadd.f32 %v5011, %v5022
        %v5048 = vadd.f32 %v5012, %v5022
        %v5049 = vadd.f32 %v5013, %v5022
        %v5050 = vadd.f32 %v5014, %v5022
        %v5051 = vadd.f32 %v5015, %v5022
        %v5052 = vadd.f32 %v5016, %v5022
        %v5053 = vadd.f32 %v5017, %v5022
        %v5054 = vadd.f32 %v5018, %v5022
        %v5055 = vadd.f32 %v5019, %v5022
        %v5056 = vmax.f32 %v5024, 0.0
        %v5057 = vmax.f32 %v5025, 0.0
        %v5058 = vmax.f32 %v5026, 0.0
        %v5059 = vmax.f32 %v5027, 0.0
        %v5060 = vmax.f32 %v5028, 0.0
        %v5061 = vmax.f32 %v5029, 0.0
        %v5062 = vmax.f32 %v5030, 0.0
        %v5063 = vmax.f32 %v5031, 0.0
        %v5064 = vmax.f32 %v5032, 0.0
        %v5065 = vmax.f32 %v5033, 0.0
        %v5066 = vmax.f32 %v5034, 0.0
        %v5067 = vmax.f32 %v5035, 0.0
        %v5068 = vmax.f32 %v5036, 0.0
        %v5069 = vmax.f32 %v5037, 0.0
        %v5070 = vmax.f32 %v5038, 0.0
        %v5071 = vmax.f32 %v5039, 0.0
        %v5072 = vmax.f32 %v5040, 0.0
        %v5073 = vmax.f32 %v5041, 0.0
        %v5074 = vmax.f32 %v5042, 0.0
        %v5075 = vmax.f32 %v5043, 0.0
        %v5076 = vmax.f32 %v5044, 0.0
        %v5077 = vmax.f32 %v5045, 0.0
        %v5078 = vmax.f32 %v5046, 0.0
        %v5079 = vmax.f32 %v5047, 0.0
        %v5080 = vmax.f32 %v5048, 0.0
        %v5081 = vmax.f32 %v5049, 0.0
        %v5082 = vmax.f32 %v5050, 0.0
        %v5083 = vmax.f32 %v5051, 0.0
        %v5084 = vmax.f32 %v5052, 0.0
        %v5085 = vmax.f32 %v5053, 0.0
        %v5086 = vmax.f32 %v5054, 0.0
        %v5087 = vmax.f32 %v5055, 0.0
        %v5088 = vpack.c.bf16 %v5056, %v5056
        %v5089 = vpack.c.bf16 %v5057, %v5057
        %v5090 = vpack.c.bf16 %v5058, %v5058
        %v5091 = vpack.c.bf16 %v5059, %v5059
        %v5092 = vpack.c.bf16 %v5060, %v5060
        %v5093 = vpack.c.bf16 %v5061, %v5061
        %v5094 = vpack.c.bf16 %v5062, %v5062
        %v5095 = vpack.c.bf16 %v5063, %v5063
        %v5096 = vpack.c.bf16 %v5064, %v5064
        %v5097 = vpack.c.bf16 %v5065, %v5065
        %v5098 = vpack.c.bf16 %v5066, %v5066
        %v5099 = vpack.c.bf16 %v5067, %v5067
        %v5100 = vpack.c.bf16 %v5068, %v5068
        %v5101 = vpack.c.bf16 %v5069, %v5069
        %v5102 = vpack.c.bf16 %v5070, %v5070
        %v5103 = vpack.c.bf16 %v5071, %v5071
        %v5104 = vpack.c.bf16 %v5072, %v5072
        %v5105 = vpack.c.bf16 %v5073, %v5073
        %v5106 = vpack.c.bf16 %v5074, %v5074
        %v5107 = vpack.c.bf16 %v5075, %v5075
        %v5108 = vpack.c.bf16 %v5076, %v5076
        %v5109 = vpack.c.bf16 %v5077, %v5077
        %v5110 = vpack.c.bf16 %v5078, %v5078
        %v5111 = vpack.c.bf16 %v5079, %v5079
        %v5112 = vpack.c.bf16 %v5080, %v5080
        %v5113 = vpack.c.bf16 %v5081, %v5081
        %v5114 = vpack.c.bf16 %v5082, %v5082
        %v5115 = vpack.c.bf16 %v5083, %v5083
        %v5116 = vpack.c.bf16 %v5084, %v5084
        %v5117 = vpack.c.bf16 %v5085, %v5085
        %v5118 = vpack.c.bf16 %v5086, %v5086
        %v5119 = vpack.c.bf16 %v5087, %v5087
        %v5121 = vshrl.u32 %v5088, 16
        %v5123 = vrot.slane %v5121, 7
        %v5124 = vshll.u32 %v5088, 16
        %v5126 = vor.u32 %v5123, %v5124
        %v5127 = vrot.slane %v5123, 4
        %v5129 = vshrl.u32 %v5089, 16
        %v5131 = vrot.slane %v5129, 7
        %v5132 = vshll.u32 %v5089, 16
        %v5134 = vor.u32 %v5131, %v5132
        %v5135 = vsel %vm421, %v5127, %v5134
        %v5136 = vrot.slane %v5131, 4
        %v5138 = vshrl.u32 %v5090, 16
        %v5140 = vrot.slane %v5138, 7
        %v5141 = vshll.u32 %v5090, 16
        %v5143 = vor.u32 %v5140, %v5141
        %v5144 = vrot.slane %v5140, 4
        %v5146 = vshrl.u32 %v5091, 16
        %v5148 = vrot.slane %v5146, 7
        %v5149 = vshll.u32 %v5091, 16
        %v5151 = vor.u32 %v5148, %v5149
        %v5152 = vsel %vm421, %v5144, %v5151
        %v5153 = vrot.slane %v5148, 4
        %v5155 = vshrl.u32 %v5092, 16
        %v5157 = vrot.slane %v5155, 7
        %v5158 = vshll.u32 %v5092, 16
        %v5160 = vor.u32 %v5157, %v5158
        %v5161 = vrot.slane %v5157, 4
        %v5163 = vshrl.u32 %v5093, 16
        %v5165 = vrot.slane %v5163, 7
        %v5166 = vshll.u32 %v5093, 16
        %v5168 = vor.u32 %v5165, %v5166
        %v5169 = vsel %vm421, %v5161, %v5168
        %v5170 = vrot.slane %v5165, 4
        %v5172 = vshrl.u32 %v5094, 16
        %v5174 = vrot.slane %v5172, 7
        %v5175 = vshll.u32 %v5094, 16
        %v5177 = vor.u32 %v5174, %v5175
        %v5178 = vrot.slane %v5174, 4
        %v5180 = vshrl.u32 %v5095, 16
        %v5182 = vrot.slane %v5180, 7
        %v5183 = vshll.u32 %v5095, 16
        %v5185 = vor.u32 %v5182, %v5183
        %v5186 = vsel %vm421, %v5178, %v5185
        %v5187 = vrot.slane %v5182, 4
        %v5189 = vshrl.u32 %v5096, 16
        %v5191 = vrot.slane %v5189, 7
        %v5192 = vshll.u32 %v5096, 16
        %v5194 = vor.u32 %v5191, %v5192
        %v5195 = vrot.slane %v5191, 4
        %v5197 = vshrl.u32 %v5097, 16
        %v5199 = vrot.slane %v5197, 7
        %v5200 = vshll.u32 %v5097, 16
        %v5202 = vor.u32 %v5199, %v5200
        %v5203 = vsel %vm421, %v5195, %v5202
        %v5204 = vrot.slane %v5199, 4
        %v5206 = vshrl.u32 %v5098, 16
        %v5208 = vrot.slane %v5206, 7
        %v5209 = vshll.u32 %v5098, 16
        %v5211 = vor.u32 %v5208, %v5209
        %v5212 = vrot.slane %v5208, 4
        %v5214 = vshrl.u32 %v5099, 16
        %v5216 = vrot.slane %v5214, 7
        %v5217 = vshll.u32 %v5099, 16
        %v5219 = vor.u32 %v5216, %v5217
        %v5220 = vsel %vm421, %v5212, %v5219
        %v5221 = vrot.slane %v5216, 4
        %v5223 = vshrl.u32 %v5100, 16
        %v5225 = vrot.slane %v5223, 7
        %v5226 = vshll.u32 %v5100, 16
        %v5228 = vor.u32 %v5225, %v5226
        %v5229 = vrot.slane %v5225, 4
        %v5231 = vshrl.u32 %v5101, 16
        %v5233 = vrot.slane %v5231, 7
        %v5234 = vshll.u32 %v5101, 16
        %v5236 = vor.u32 %v5233, %v5234
        %v5237 = vsel %vm421, %v5229, %v5236
        %v5238 = vrot.slane %v5233, 4
        %v5240 = vshrl.u32 %v5102, 16
        %v5242 = vrot.slane %v5240, 7
        %v5243 = vshll.u32 %v5102, 16
        %v5245 = vor.u32 %v5242, %v5243
        %v5246 = vrot.slane %v5242, 4
        %v5248 = vshrl.u32 %v5103, 16
        %v5250 = vrot.slane %v5248, 7
        %v5251 = vshll.u32 %v5103, 16
        %v5253 = vor.u32 %v5250, %v5251
        %v5254 = vsel %vm421, %v5246, %v5253
        %v5255 = vrot.slane %v5250, 4
        %v5257 = vshrl.u32 %v5104, 16
        %v5259 = vrot.slane %v5257, 7
        %v5260 = vshll.u32 %v5104, 16
        %v5262 = vor.u32 %v5259, %v5260
        %v5263 = vrot.slane %v5259, 4
        %v5265 = vshrl.u32 %v5105, 16
        %v5267 = vrot.slane %v5265, 7
        %v5268 = vshll.u32 %v5105, 16
        %v5270 = vor.u32 %v5267, %v5268
        %v5271 = vsel %vm421, %v5263, %v5270
        %v5272 = vrot.slane %v5267, 4
        %v5274 = vshrl.u32 %v5106, 16
        %v5276 = vrot.slane %v5274, 7
        %v5277 = vshll.u32 %v5106, 16
        %v5279 = vor.u32 %v5276, %v5277
        %v5280 = vrot.slane %v5276, 4
        %v5282 = vshrl.u32 %v5107, 16
        %v5284 = vrot.slane %v5282, 7
        %v5285 = vshll.u32 %v5107, 16
        %v5287 = vor.u32 %v5284, %v5285
        %v5288 = vsel %vm421, %v5280, %v5287
        %v5289 = vrot.slane %v5284, 4
        %v5291 = vshrl.u32 %v5108, 16
        %v5293 = vrot.slane %v5291, 7
        %v5294 = vshll.u32 %v5108, 16
        %v5296 = vor.u32 %v5293, %v5294
        %v5297 = vrot.slane %v5293, 4
        %v5299 = vshrl.u32 %v5109, 16
        %v5301 = vrot.slane %v5299, 7
        %v5302 = vshll.u32 %v5109, 16
        %v5304 = vor.u32 %v5301, %v5302
        %v5305 = vsel %vm421, %v5297, %v5304
        %v5306 = vrot.slane %v5301, 4
        %v5308 = vshrl.u32 %v5110, 16
        %v5310 = vrot.slane %v5308, 7
        %v5311 = vshll.u32 %v5110, 16
        %v5313 = vor.u32 %v5310, %v5311
        %v5314 = vrot.slane %v5310, 4
        %v5316 = vshrl.u32 %v5111, 16
        %v5318 = vrot.slane %v5316, 7
        %v5319 = vshll.u32 %v5111, 16
        %v5321 = vor.u32 %v5318, %v5319
        %v5322 = vsel %vm421, %v5314, %v5321
        %v5323 = vrot.slane %v5318, 4
        %v5325 = vshrl.u32 %v5112, 16
        %v5327 = vrot.slane %v5325, 7
        %v5328 = vshll.u32 %v5112, 16
        %v5330 = vor.u32 %v5327, %v5328
        %v5331 = vrot.slane %v5327, 4
        %v5333 = vshrl.u32 %v5113, 16
        %v5335 = vrot.slane %v5333, 7
        %v5336 = vshll.u32 %v5113, 16
        %v5338 = vor.u32 %v5335, %v5336
        %v5339 = vsel %vm421, %v5331, %v5338
        %v5340 = vrot.slane %v5335, 4
        %v5342 = vshrl.u32 %v5114, 16
        %v5344 = vrot.slane %v5342, 7
        %v5345 = vshll.u32 %v5114, 16
        %v5347 = vor.u32 %v5344, %v5345
        %v5348 = vrot.slane %v5344, 4
        %v5350 = vshrl.u32 %v5115, 16
        %v5352 = vrot.slane %v5350, 7
        %v5353 = vshll.u32 %v5115, 16
        %v5355 = vor.u32 %v5352, %v5353
        %v5356 = vsel %vm421, %v5348, %v5355
        %v5357 = vrot.slane %v5352, 4
        %v5359 = vshrl.u32 %v5116, 16
        %v5361 = vrot.slane %v5359, 7
        %v5362 = vshll.u32 %v5116, 16
        %v5364 = vor.u32 %v5361, %v5362
        %v5365 = vrot.slane %v5361, 4
        %v5367 = vshrl.u32 %v5117, 16
        %v5369 = vrot.slane %v5367, 7
        %v5370 = vshll.u32 %v5117, 16
        %v5372 = vor.u32 %v5369, %v5370
        %v5373 = vsel %vm421, %v5365, %v5372
        %v5374 = vrot.slane %v5369, 4
        %v5376 = vshrl.u32 %v5118, 16
        %v5378 = vrot.slane %v5376, 7
        %v5379 = vshll.u32 %v5118, 16
        %v5381 = vor.u32 %v5378, %v5379
        %v5382 = vrot.slane %v5378, 4
        %v5384 = vshrl.u32 %v5119, 16
        %v5386 = vrot.slane %v5384, 7
        %v5387 = vshll.u32 %v5119, 16
        %v5389 = vor.u32 %v5386, %v5387
        %v5390 = vsel %vm421, %v5382, %v5389
        %v5391 = vrot.slane %v5386, 4
        %s5440 = scalar_lea.vmem [#allocation3], 12
        %v5441 = vld [vmem:[%s5440] sm:$0xf]
        %v5442 = vsel %vm745, %v5126, %v5441
        %5443 = vst [vmem:[%s5440] sm:$0xf] %v5442
        %5444 = vst [vmem:[%s5440 + $0x4] sm:$0xf] %v5135
        %v5445 = vld [vmem:[%s5440 + $0x8] sm:$0x1]
        %v5446 = vsel %vm751, %v5136, %v5445
        %5447 = vst [vmem:[%s5440 + $0x8] sm:$0x1] %v5446
        %v5448 = vld [vmem:[%s5440 + $0xc] sm:$0xf]
        %v5449 = vsel %vm745, %v5143, %v5448
        %5450 = vst [vmem:[%s5440 + $0xc] sm:$0xf] %v5449
        %5451 = vst [vmem:[%s5440 + $0x10] sm:$0xf] %v5152
        %v5452 = vld [vmem:[%s5440 + $0x14] sm:$0x1]
        %v5453 = vsel %vm751, %v5153, %v5452
        %5454 = vst [vmem:[%s5440 + $0x14] sm:$0x1] %v5453
        %v5455 = vld [vmem:[%s5440 + $0x18] sm:$0xf]
        %v5456 = vsel %vm745, %v5160, %v5455
        %5457 = vst [vmem:[%s5440 + $0x18] sm:$0xf] %v5456
        %5458 = vst [vmem:[%s5440 + $0x1c] sm:$0xf] %v5169
        %v5459 = vld [vmem:[%s5440 + $0x20] sm:$0x1]
        %v5460 = vsel %vm751, %v5170, %v5459
        %5461 = vst [vmem:[%s5440 + $0x20] sm:$0x1] %v5460
        %v5462 = vld [vmem:[%s5440 + $0x24] sm:$0xf]
        %v5463 = vsel %vm745, %v5177, %v5462
        %5464 = vst [vmem:[%s5440 + $0x24] sm:$0xf] %v5463
        %5465 = vst [vmem:[%s5440 + $0x28] sm:$0xf] %v5186
        %v5466 = vld [vmem:[%s5440 + $0x2c] sm:$0x1]
        %v5467 = vsel %vm751, %v5187, %v5466
        %5468 = vst [vmem:[%s5440 + $0x2c] sm:$0x1] %v5467
        %v5469 = vld [vmem:[%s5440 + $0x30] sm:$0xf]
        %v5470 = vsel %vm745, %v5194, %v5469
        %5471 = vst [vmem:[%s5440 + $0x30] sm:$0xf] %v5470
        %5472 = vst [vmem:[%s5440 + $0x34] sm:$0xf] %v5203
        %v5473 = vld [vmem:[%s5440 + $0x38] sm:$0x1]
        %v5474 = vsel %vm751, %v5204, %v5473
        %5475 = vst [vmem:[%s5440 + $0x38] sm:$0x1] %v5474
        %v5476 = vld [vmem:[%s5440 + $0x3c] sm:$0xf]
        %v5477 = vsel %vm745, %v5211, %v5476
        %5478 = vst [vmem:[%s5440 + $0x3c] sm:$0xf] %v5477
        %5479 = vst [vmem:[%s5440 + $0x40] sm:$0xf] %v5220
        %v5480 = vld [vmem:[%s5440 + $0x44] sm:$0x1]
        %v5481 = vsel %vm751, %v5221, %v5480
        %5482 = vst [vmem:[%s5440 + $0x44] sm:$0x1] %v5481
        %v5483 = vld [vmem:[%s5440 + $0x48] sm:$0xf]
        %v5484 = vsel %vm745, %v5228, %v5483
        %5485 = vst [vmem:[%s5440 + $0x48] sm:$0xf] %v5484
        %5486 = vst [vmem:[%s5440 + $0x4c] sm:$0xf] %v5237
        %v5487 = vld [vmem:[%s5440 + $0x50] sm:$0x1]
        %v5488 = vsel %vm751, %v5238, %v5487
        %5489 = vst [vmem:[%s5440 + $0x50] sm:$0x1] %v5488
        %v5490 = vld [vmem:[%s5440 + $0x54] sm:$0xf]
        %v5491 = vsel %vm745, %v5245, %v5490
        %5492 = vst [vmem:[%s5440 + $0x54] sm:$0xf] %v5491
        %5493 = vst [vmem:[%s5440 + $0x58] sm:$0xf] %v5254
        %v5494 = vld [vmem:[%s5440 + $0x5c] sm:$0x1]
        %v5495 = vsel %vm751, %v5255, %v5494
        %5496 = vst [vmem:[%s5440 + $0x5c] sm:$0x1] %v5495
        %v5497 = vld [vmem:[%s5440 + $0x60] sm:$0xf]
        %v5498 = vsel %vm745, %v5262, %v5497
        %5499 = vst [vmem:[%s5440 + $0x60] sm:$0xf] %v5498
        %5500 = vst [vmem:[%s5440 + $0x64] sm:$0xf] %v5271
        %v5501 = vld [vmem:[%s5440 + $0x68] sm:$0x1]
        %v5502 = vsel %vm751, %v5272, %v5501
        %5503 = vst [vmem:[%s5440 + $0x68] sm:$0x1] %v5502
        %v5504 = vld [vmem:[%s5440 + $0x6c] sm:$0xf]
        %v5505 = vsel %vm745, %v5279, %v5504
        %5506 = vst [vmem:[%s5440 + $0x6c] sm:$0xf] %v5505
        %5507 = vst [vmem:[%s5440 + $0x70] sm:$0xf] %v5288
        %v5508 = vld [vmem:[%s5440 + $0x74] sm:$0x1]
        %v5509 = vsel %vm751, %v5289, %v5508
        %5510 = vst [vmem:[%s5440 + $0x74] sm:$0x1] %v5509
        %v5511 = vld [vmem:[%s5440 + $0x78] sm:$0xf]
        %v5512 = vsel %vm745, %v5296, %v5511
        %5513 = vst [vmem:[%s5440 + $0x78] sm:$0xf] %v5512
        %5514 = vst [vmem:[%s5440 + $0x7c] sm:$0xf] %v5305
        %v5515 = vld [vmem:[%s5440 + $0x80] sm:$0x1]
        %v5516 = vsel %vm751, %v5306, %v5515
        %5517 = vst [vmem:[%s5440 + $0x80] sm:$0x1] %v5516
        %v5518 = vld [vmem:[%s5440 + $0x84] sm:$0xf]
        %v5519 = vsel %vm745, %v5313, %v5518
        %5520 = vst [vmem:[%s5440 + $0x84] sm:$0xf] %v5519
        %5521 = vst [vmem:[%s5440 + $0x88] sm:$0xf] %v5322
        %v5522 = vld [vmem:[%s5440 + $0x8c] sm:$0x1]
        %v5523 = vsel %vm751, %v5323, %v5522
        %5524 = vst [vmem:[%s5440 + $0x8c] sm:$0x1] %v5523
        %v5525 = vld [vmem:[%s5440 + $0x90] sm:$0xf]
        %v5526 = vsel %vm745, %v5330, %v5525
        %5527 = vst [vmem:[%s5440 + $0x90] sm:$0xf] %v5526
        %5528 = vst [vmem:[%s5440 + $0x94] sm:$0xf] %v5339
        %v5529 = vld [vmem:[%s5440 + $0x98] sm:$0x1]
        %v5530 = vsel %vm751, %v5340, %v5529
        %5531 = vst [vmem:[%s5440 + $0x98] sm:$0x1] %v5530
        %v5532 = vld [vmem:[%s5440 + $0x9c] sm:$0xf]
        %v5533 = vsel %vm745, %v5347, %v5532
        %5534 = vst [vmem:[%s5440 + $0x9c] sm:$0xf] %v5533
        %5535 = vst [vmem:[%s5440 + $0xa0] sm:$0xf] %v5356
        %v5536 = vld [vmem:[%s5440 + $0xa4] sm:$0x1]
        %v5537 = vsel %vm751, %v5357, %v5536
        %5538 = vst [vmem:[%s5440 + $0xa4] sm:$0x1] %v5537
        %v5539 = vld [vmem:[%s5440 + $0xa8] sm:$0xf]
        %v5540 = vsel %vm745, %v5364, %v5539
        %5541 = vst [vmem:[%s5440 + $0xa8] sm:$0xf] %v5540
        %5542 = vst [vmem:[%s5440 + $0xac] sm:$0xf] %v5373
        %v5543 = vld [vmem:[%s5440 + $0xb0] sm:$0x1]
        %v5544 = vsel %vm751, %v5374, %v5543
        %5545 = vst [vmem:[%s5440 + $0xb0] sm:$0x1] %v5544
        %v5546 = vld [vmem:[%s5440 + $0xb4] sm:$0xf]
        %v5547 = vsel %vm745, %v5381, %v5546
        %5548 = vst [vmem:[%s5440 + $0xb4] sm:$0xf] %v5547
        %5549 = vst [vmem:[%s5440 + $0xb8] sm:$0xf] %v5390
        %v5550 = vld [vmem:[%s5440 + $0xbc] sm:$0x1]
        %v5551 = vsel %vm751, %v5391, %v5550
        %5552 = vst [vmem:[%s5440 + $0xbc] sm:$0x1] %v5551
        %v5553 = vld [vmem:[#allocation3] sm:$0xf]
        %v5554 = vld [vmem:[#allocation3 + $0x4] sm:$0xf]
        %v5555 = vld [vmem:[#allocation3 + $0xc] sm:$0xf]
        %v5556 = vld [vmem:[#allocation3 + $0x10] sm:$0xf]
        %v5557 = vld [vmem:[#allocation3 + $0x18] sm:$0xf]
        %v5558 = vld [vmem:[#allocation3 + $0x1c] sm:$0xf]
        %v5559 = vld [vmem:[#allocation3 + $0x24] sm:$0xf]
        %v5560 = vld [vmem:[#allocation3 + $0x28] sm:$0xf]
        %v5561 = vld [vmem:[#allocation3 + $0x30] sm:$0xf]
        %v5562 = vld [vmem:[#allocation3 + $0x34] sm:$0xf]
        %v5563 = vld [vmem:[#allocation3 + $0x3c] sm:$0xf]
        %v5564 = vld [vmem:[#allocation3 + $0x40] sm:$0xf]
        %v5565 = vld [vmem:[#allocation3 + $0x48] sm:$0xf]
        %v5566 = vld [vmem:[#allocation3 + $0x4c] sm:$0xf]
        %v5567 = vld [vmem:[#allocation3 + $0x54] sm:$0xf]
        %v5568 = vld [vmem:[#allocation3 + $0x58] sm:$0xf]
        %v5569 = vld [vmem:[#allocation3 + $0x60] sm:$0xf]
        %v5570 = vld [vmem:[#allocation3 + $0x64] sm:$0xf]
        %v5571 = vld [vmem:[#allocation3 + $0x6c] sm:$0xf]
        %v5572 = vld [vmem:[#allocation3 + $0x70] sm:$0xf]
        %v5573 = vld [vmem:[#allocation3 + $0x78] sm:$0xf]
        %v5574 = vld [vmem:[#allocation3 + $0x7c] sm:$0xf]
        %v5575 = vld [vmem:[#allocation3 + $0x84] sm:$0xf]
        %v5576 = vld [vmem:[#allocation3 + $0x88] sm:$0xf]
        %v5577 = vld [vmem:[#allocation3 + $0x90] sm:$0xf]
        %v5578 = vld [vmem:[#allocation3 + $0x94] sm:$0xf]
        %v5579 = vld [vmem:[#allocation3 + $0x9c] sm:$0xf]
        %v5580 = vld [vmem:[#allocation3 + $0xa0] sm:$0xf]
        %v5581 = vld [vmem:[#allocation3 + $0xa8] sm:$0xf]
        %v5582 = vld [vmem:[#allocation3 + $0xac] sm:$0xf]
        %v5583 = vld [vmem:[#allocation3 + $0xb4] sm:$0xf]
        %v5584 = vld [vmem:[#allocation3 + $0xb8] sm:$0xf]
        %v5585 = vld [vmem:[#allocation9] sm:$0xf]
        %v5586 = vld [vmem:[#allocation9 + $0x4] sm:$0xf]
        %v5587 = vld [vmem:[#allocation9 + $0x8] sm:$0xf]
        %v5588 = vld [vmem:[#allocation9 + $0xc] sm:$0xf]
        %v5589 = vld [vmem:[#allocation9 + $0x10] sm:$0xf]
        %v5590 = vld [vmem:[#allocation9 + $0x14] sm:$0xf]
        %v5591 = vld [vmem:[#allocation9 + $0x18] sm:$0xf]
        %v5592 = vld [vmem:[#allocation9 + $0x1c] sm:$0xf]
        %v5593 = vld [vmem:[#allocation9 + $0x20] sm:$0xf]
        %v5594 = vld [vmem:[#allocation9 + $0x24] sm:$0xf]
        %v5595 = vld [vmem:[#allocation9 + $0x28] sm:$0xf]
        %v5596 = vld [vmem:[#allocation9 + $0x2c] sm:$0xf]
        %v5597 = vld [vmem:[#allocation9 + $0x30] sm:$0xf]
        %v5598 = vld [vmem:[#allocation9 + $0x34] sm:$0xf]
        %v5599 = vld [vmem:[#allocation9 + $0x38] sm:$0xf]
        %v5600 = vld [vmem:[#allocation9 + $0x3c] sm:$0xf]
        %v5601 = vld [vmem:[#allocation3 + $0x8] sm:$0x1]
        %v5602 = vld [vmem:[#allocation3 + $0x14] sm:$0x1]
        %v5603 = vld [vmem:[#allocation3 + $0x20] sm:$0x1]
        %v5604 = vld [vmem:[#allocation3 + $0x2c] sm:$0x1]
        %v5605 = vld [vmem:[#allocation3 + $0x38] sm:$0x1]
        %v5606 = vld [vmem:[#allocation3 + $0x44] sm:$0x1]
        %v5607 = vld [vmem:[#allocation3 + $0x50] sm:$0x1]
        %v5608 = vld [vmem:[#allocation3 + $0x5c] sm:$0x1]
        %v5609 = vld [vmem:[#allocation3 + $0x68] sm:$0x1]
        %v5610 = vld [vmem:[#allocation3 + $0x74] sm:$0x1]
        %v5611 = vld [vmem:[#allocation3 + $0x80] sm:$0x1]
        %v5612 = vld [vmem:[#allocation3 + $0x8c] sm:$0x1]
        %v5613 = vld [vmem:[#allocation3 + $0x98] sm:$0x1]
        %v5614 = vld [vmem:[#allocation3 + $0xa4] sm:$0x1]
        %v5615 = vld [vmem:[#allocation3 + $0xb0] sm:$0x1]
        %v5616 = vld [vmem:[#allocation3 + $0xbc] sm:$0x1]
        %v5618 = vshrl.u32 %v5553, 16
        %v5620 = vrot.slane %v5618, 4
        %v5621 = vshll.u32 %v5553, 16
        %v5623 = vrot.slane %v5621, 5
        %v5624 = vor.u32 %v5620, %v5623
        %v5625 = vrot.slane %v5624, 4
        %v5627 = vshll.u32 %v5554, 16
        %v5629 = vrot.slane %v5627, 5
        %v5630 = vsel %vm926, %v5625, %v5629
        %v5631 = vshrl.u32 %v5554, 16
        %v5633 = vrot.slane %v5631, 4
        %v5634 = vor.u32 %v5633, %v5629
        %v5635 = vrot.slane %v5634, 4
        %v5637 = vshll.u32 %v5601, 16
        %v5639 = vrot.slane %v5637, 5
        %v5640 = vsel %vm926, %v5635, %v5639
        %v5642 = vshrl.u32 %v5555, 16
        %v5644 = vrot.slane %v5642, 4
        %v5645 = vshll.u32 %v5555, 16
        %v5647 = vrot.slane %v5645, 5
        %v5648 = vor.u32 %v5644, %v5647
        %v5649 = vrot.slane %v5648, 4
        %v5651 = vshll.u32 %v5556, 16
        %v5653 = vrot.slane %v5651, 5
        %v5654 = vsel %vm926, %v5649, %v5653
        %v5655 = vshrl.u32 %v5556, 16
        %v5657 = vrot.slane %v5655, 4
        %v5658 = vor.u32 %v5657, %v5653
        %v5659 = vrot.slane %v5658, 4
        %v5661 = vshll.u32 %v5602, 16
        %v5663 = vrot.slane %v5661, 5
        %v5664 = vsel %vm926, %v5659, %v5663
        %v5666 = vshrl.u32 %v5557, 16
        %v5668 = vrot.slane %v5666, 4
        %v5669 = vshll.u32 %v5557, 16
        %v5671 = vrot.slane %v5669, 5
        %v5672 = vor.u32 %v5668, %v5671
        %v5673 = vrot.slane %v5672, 4
        %v5675 = vshll.u32 %v5558, 16
        %v5677 = vrot.slane %v5675, 5
        %v5678 = vsel %vm926, %v5673, %v5677
        %v5679 = vshrl.u32 %v5558, 16
        %v5681 = vrot.slane %v5679, 4
        %v5682 = vor.u32 %v5681, %v5677
        %v5683 = vrot.slane %v5682, 4
        %v5685 = vshll.u32 %v5603, 16
        %v5687 = vrot.slane %v5685, 5
        %v5688 = vsel %vm926, %v5683, %v5687
        %v5690 = vshrl.u32 %v5559, 16
        %v5692 = vrot.slane %v5690, 4
        %v5693 = vshll.u32 %v5559, 16
        %v5695 = vrot.slane %v5693, 5
        %v5696 = vor.u32 %v5692, %v5695
        %v5697 = vrot.slane %v5696, 4
        %v5699 = vshll.u32 %v5560, 16
        %v5701 = vrot.slane %v5699, 5
        %v5702 = vsel %vm926, %v5697, %v5701
        %v5703 = vshrl.u32 %v5560, 16
        %v5705 = vrot.slane %v5703, 4
        %v5706 = vor.u32 %v5705, %v5701
        %v5707 = vrot.slane %v5706, 4
        %v5709 = vshll.u32 %v5604, 16
        %v5711 = vrot.slane %v5709, 5
        %v5712 = vsel %vm926, %v5707, %v5711
        %v5714 = vshrl.u32 %v5561, 16
        %v5716 = vrot.slane %v5714, 4
        %v5717 = vshll.u32 %v5561, 16
        %v5719 = vrot.slane %v5717, 5
        %v5720 = vor.u32 %v5716, %v5719
        %v5721 = vrot.slane %v5720, 4
        %v5723 = vshll.u32 %v5562, 16
        %v5725 = vrot.slane %v5723, 5
        %v5726 = vsel %vm926, %v5721, %v5725
        %v5727 = vshrl.u32 %v5562, 16
        %v5729 = vrot.slane %v5727, 4
        %v5730 = vor.u32 %v5729, %v5725
        %v5731 = vrot.slane %v5730, 4
        %v5733 = vshll.u32 %v5605, 16
        %v5735 = vrot.slane %v5733, 5
        %v5736 = vsel %vm926, %v5731, %v5735
        %v5738 = vshrl.u32 %v5563, 16
        %v5740 = vrot.slane %v5738, 4
        %v5741 = vshll.u32 %v5563, 16
        %v5743 = vrot.slane %v5741, 5
        %v5744 = vor.u32 %v5740, %v5743
        %v5745 = vrot.slane %v5744, 4
        %v5747 = vshll.u32 %v5564, 16
        %v5749 = vrot.slane %v5747, 5
        %v5750 = vsel %vm926, %v5745, %v5749
        %v5751 = vshrl.u32 %v5564, 16
        %v5753 = vrot.slane %v5751, 4
        %v5754 = vor.u32 %v5753, %v5749
        %v5755 = vrot.slane %v5754, 4
        %v5757 = vshll.u32 %v5606, 16
        %v5759 = vrot.slane %v5757, 5
        %v5760 = vsel %vm926, %v5755, %v5759
        %v5762 = vshrl.u32 %v5565, 16
        %v5764 = vrot.slane %v5762, 4
        %v5765 = vshll.u32 %v5565, 16
        %v5767 = vrot.slane %v5765, 5
        %v5768 = vor.u32 %v5764, %v5767
        %v5769 = vrot.slane %v5768, 4
        %v5771 = vshll.u32 %v5566, 16
        %v5773 = vrot.slane %v5771, 5
        %v5774 = vsel %vm926, %v5769, %v5773
        %v5775 = vshrl.u32 %v5566, 16
        %v5777 = vrot.slane %v5775, 4
        %v5778 = vor.u32 %v5777, %v5773
        %v5779 = vrot.slane %v5778, 4
        %v5781 = vshll.u32 %v5607, 16
        %v5783 = vrot.slane %v5781, 5
        %v5784 = vsel %vm926, %v5779, %v5783
        %v5786 = vshrl.u32 %v5567, 16
        %v5788 = vrot.slane %v5786, 4
        %v5789 = vshll.u32 %v5567, 16
        %v5791 = vrot.slane %v5789, 5
        %v5792 = vor.u32 %v5788, %v5791
        %v5793 = vrot.slane %v5792, 4
        %v5795 = vshll.u32 %v5568, 16
        %v5797 = vrot.slane %v5795, 5
        %v5798 = vsel %vm926, %v5793, %v5797
        %v5799 = vshrl.u32 %v5568, 16
        %v5801 = vrot.slane %v5799, 4
        %v5802 = vor.u32 %v5801, %v5797
        %v5803 = vrot.slane %v5802, 4
        %v5805 = vshll.u32 %v5608, 16
        %v5807 = vrot.slane %v5805, 5
        %v5808 = vsel %vm926, %v5803, %v5807
        %v5810 = vshrl.u32 %v5569, 16
        %v5812 = vrot.slane %v5810, 4
        %v5813 = vshll.u32 %v5569, 16
        %v5815 = vrot.slane %v5813, 5
        %v5816 = vor.u32 %v5812, %v5815
        %v5817 = vrot.slane %v5816, 4
        %v5819 = vshll.u32 %v5570, 16
        %v5821 = vrot.slane %v5819, 5
        %v5822 = vsel %vm926, %v5817, %v5821
        %v5823 = vshrl.u32 %v5570, 16
        %v5825 = vrot.slane %v5823, 4
        %v5826 = vor.u32 %v5825, %v5821
        %v5827 = vrot.slane %v5826, 4
        %v5829 = vshll.u32 %v5609, 16
        %v5831 = vrot.slane %v5829, 5
        %v5832 = vsel %vm926, %v5827, %v5831
        %v5834 = vshrl.u32 %v5571, 16
        %v5836 = vrot.slane %v5834, 4
        %v5837 = vshll.u32 %v5571, 16
        %v5839 = vrot.slane %v5837, 5
        %v5840 = vor.u32 %v5836, %v5839
        %v5841 = vrot.slane %v5840, 4
        %v5843 = vshll.u32 %v5572, 16
        %v5845 = vrot.slane %v5843, 5
        %v5846 = vsel %vm926, %v5841, %v5845
        %v5847 = vshrl.u32 %v5572, 16
        %v5849 = vrot.slane %v5847, 4
        %v5850 = vor.u32 %v5849, %v5845
        %v5851 = vrot.slane %v5850, 4
        %v5853 = vshll.u32 %v5610, 16
        %v5855 = vrot.slane %v5853, 5
        %v5856 = vsel %vm926, %v5851, %v5855
        %v5858 = vshrl.u32 %v5573, 16
        %v5860 = vrot.slane %v5858, 4
        %v5861 = vshll.u32 %v5573, 16
        %v5863 = vrot.slane %v5861, 5
        %v5864 = vor.u32 %v5860, %v5863
        %v5865 = vrot.slane %v5864, 4
        %v5867 = vshll.u32 %v5574, 16
        %v5869 = vrot.slane %v5867, 5
        %v5870 = vsel %vm926, %v5865, %v5869
        %v5871 = vshrl.u32 %v5574, 16
        %v5873 = vrot.slane %v5871, 4
        %v5874 = vor.u32 %v5873, %v5869
        %v5875 = vrot.slane %v5874, 4
        %v5877 = vshll.u32 %v5611, 16
        %v5879 = vrot.slane %v5877, 5
        %v5880 = vsel %vm926, %v5875, %v5879
        %v5882 = vshrl.u32 %v5575, 16
        %v5884 = vrot.slane %v5882, 4
        %v5885 = vshll.u32 %v5575, 16
        %v5887 = vrot.slane %v5885, 5
        %v5888 = vor.u32 %v5884, %v5887
        %v5889 = vrot.slane %v5888, 4
        %v5891 = vshll.u32 %v5576, 16
        %v5893 = vrot.slane %v5891, 5
        %v5894 = vsel %vm926, %v5889, %v5893
        %v5895 = vshrl.u32 %v5576, 16
        %v5897 = vrot.slane %v5895, 4
        %v5898 = vor.u32 %v5897, %v5893
        %v5899 = vrot.slane %v5898, 4
        %v5901 = vshll.u32 %v5612, 16
        %v5903 = vrot.slane %v5901, 5
        %v5904 = vsel %vm926, %v5899, %v5903
        %v5906 = vshrl.u32 %v5577, 16
        %v5908 = vrot.slane %v5906, 4
        %v5909 = vshll.u32 %v5577, 16
        %v5911 = vrot.slane %v5909, 5
        %v5912 = vor.u32 %v5908, %v5911
        %v5913 = vrot.slane %v5912, 4
        %v5915 = vshll.u32 %v5578, 16
        %v5917 = vrot.slane %v5915, 5
        %v5918 = vsel %vm926, %v5913, %v5917
        %v5919 = vshrl.u32 %v5578, 16
        %v5921 = vrot.slane %v5919, 4
        %v5922 = vor.u32 %v5921, %v5917
        %v5923 = vrot.slane %v5922, 4
        %v5925 = vshll.u32 %v5613, 16
        %v5927 = vrot.slane %v5925, 5
        %v5928 = vsel %vm926, %v5923, %v5927
        %v5930 = vshrl.u32 %v5579, 16
        %v5932 = vrot.slane %v5930, 4
        %v5933 = vshll.u32 %v5579, 16
        %v5935 = vrot.slane %v5933, 5
        %v5936 = vor.u32 %v5932, %v5935
        %v5937 = vrot.slane %v5936, 4
        %v5939 = vshll.u32 %v5580, 16
        %v5941 = vrot.slane %v5939, 5
        %v5942 = vsel %vm926, %v5937, %v5941
        %v5943 = vshrl.u32 %v5580, 16
        %v5945 = vrot.slane %v5943, 4
        %v5946 = vor.u32 %v5945, %v5941
        %v5947 = vrot.slane %v5946, 4
        %v5949 = vshll.u32 %v5614, 16
        %v5951 = vrot.slane %v5949, 5
        %v5952 = vsel %vm926, %v5947, %v5951
        %v5954 = vshrl.u32 %v5581, 16
        %v5956 = vrot.slane %v5954, 4
        %v5957 = vshll.u32 %v5581, 16
        %v5959 = vrot.slane %v5957, 5
        %v5960 = vor.u32 %v5956, %v5959
        %v5961 = vrot.slane %v5960, 4
        %v5963 = vshll.u32 %v5582, 16
        %v5965 = vrot.slane %v5963, 5
        %v5966 = vsel %vm926, %v5961, %v5965
        %v5967 = vshrl.u32 %v5582, 16
        %v5969 = vrot.slane %v5967, 4
        %v5970 = vor.u32 %v5969, %v5965
        %v5971 = vrot.slane %v5970, 4
        %v5973 = vshll.u32 %v5615, 16
        %v5975 = vrot.slane %v5973, 5
        %v5976 = vsel %vm926, %v5971, %v5975
        %v5978 = vshrl.u32 %v5583, 16
        %v5980 = vrot.slane %v5978, 4
        %v5981 = vshll.u32 %v5583, 16
        %v5983 = vrot.slane %v5981, 5
        %v5984 = vor.u32 %v5980, %v5983
        %v5985 = vrot.slane %v5984, 4
        %v5987 = vshll.u32 %v5584, 16
        %v5989 = vrot.slane %v5987, 5
        %v5990 = vsel %vm926, %v5985, %v5989
        %v5991 = vshrl.u32 %v5584, 16
        %v5993 = vrot.slane %v5991, 4
        %v5994 = vor.u32 %v5993, %v5989
        %v5995 = vrot.slane %v5994, 4
        %v5997 = vshll.u32 %v5616, 16
        %v5999 = vrot.slane %v5997, 5
        %v6000 = vsel %vm926, %v5995, %v5999
        %s6001 = scalar_lea.vmem [#allocation9], 64
        %v6002 = vld [vmem:[%s6001] sm:$0xf]
        %v6003 = vld [vmem:[%s6001 + $0x4] sm:$0xf]
        %v6004 = vld [vmem:[%s6001 + $0x8] sm:$0xf]
        %v6005 = vld [vmem:[%s6001 + $0xc] sm:$0xf]
        %v6006 = vld [vmem:[%s6001 + $0x10] sm:$0xf]
        %v6007 = vld [vmem:[%s6001 + $0x14] sm:$0xf]
        %v6008 = vld [vmem:[%s6001 + $0x18] sm:$0xf]
        %v6009 = vld [vmem:[%s6001 + $0x1c] sm:$0xf]
        %v6010 = vld [vmem:[%s6001 + $0x20] sm:$0xf]
        %v6011 = vld [vmem:[%s6001 + $0x24] sm:$0xf]
        %v6012 = vld [vmem:[%s6001 + $0x28] sm:$0xf]
        %v6013 = vld [vmem:[%s6001 + $0x2c] sm:$0xf]
        %v6014 = vld [vmem:[%s6001 + $0x30] sm:$0xf]
        %v6015 = vld [vmem:[%s6001 + $0x34] sm:$0xf]
        %v6016 = vld [vmem:[%s6001 + $0x38] sm:$0xf]
        %v6017 = vld [vmem:[%s6001 + $0x3c] sm:$0xf]
        %v6018 = vunpack.c.l.b16 %v5630
        %v6019 = vunpack.c.l.b16 %v5640
        %v6020 = vunpack.c.l.b16 %v5654
        %v6021 = vunpack.c.l.b16 %v5664
        %v6022 = vunpack.c.l.b16 %v5678
        %v6023 = vunpack.c.l.b16 %v5688
        %v6024 = vunpack.c.l.b16 %v5702
        %v6025 = vunpack.c.l.b16 %v5712
        %v6026 = vunpack.c.l.b16 %v5726
        %v6027 = vunpack.c.l.b16 %v5736
        %v6028 = vunpack.c.l.b16 %v5750
        %v6029 = vunpack.c.l.b16 %v5760
        %v6030 = vunpack.c.l.b16 %v5774
        %v6031 = vunpack.c.l.b16 %v5784
        %v6032 = vunpack.c.l.b16 %v5798
        %v6033 = vunpack.c.l.b16 %v5808
        %v6034 = vunpack.c.l.b16 %v5822
        %v6035 = vunpack.c.l.b16 %v5832
        %v6036 = vunpack.c.l.b16 %v5846
        %v6037 = vunpack.c.l.b16 %v5856
        %v6038 = vunpack.c.l.b16 %v5870
        %v6039 = vunpack.c.l.b16 %v5880
        %v6040 = vunpack.c.l.b16 %v5894
        %v6041 = vunpack.c.l.b16 %v5904
        %v6042 = vunpack.c.l.b16 %v5918
        %v6043 = vunpack.c.l.b16 %v5928
        %v6044 = vunpack.c.l.b16 %v5942
        %v6045 = vunpack.c.l.b16 %v5952
        %v6046 = vunpack.c.l.b16 %v5966
        %v6047 = vunpack.c.l.b16 %v5976
        %v6048 = vunpack.c.l.b16 %v5990
        %v6049 = vunpack.c.l.b16 %v6000
        %v6050 = vpack.c.b16 %v6019, %v6018
        %v6051 = vpack.c.b16 %v6021, %v6020
        %v6052 = vpack.c.b16 %v6023, %v6022
        %v6053 = vpack.c.b16 %v6025, %v6024
        %v6054 = vpack.c.b16 %v6027, %v6026
        %v6055 = vpack.c.b16 %v6029, %v6028
        %v6056 = vpack.c.b16 %v6031, %v6030
        %v6057 = vpack.c.b16 %v6033, %v6032
        %v6058 = vpack.c.b16 %v6035, %v6034
        %v6059 = vpack.c.b16 %v6037, %v6036
        %v6060 = vpack.c.b16 %v6039, %v6038
        %v6061 = vpack.c.b16 %v6041, %v6040
        %v6062 = vpack.c.b16 %v6043, %v6042
        %v6063 = vpack.c.b16 %v6045, %v6044
        %v6064 = vpack.c.b16 %v6047, %v6046
        %v6065 = vpack.c.b16 %v6049, %v6048
        %v6098 = vunpack.c.l.b16 %v6002
        %v6099 = vunpack.c.l.b16 %v6003
        %v6100 = vunpack.c.l.b16 %v6004
        %v6101 = vunpack.c.l.b16 %v6005
        %v6102 = vunpack.c.l.b16 %v6006
        %v6103 = vunpack.c.l.b16 %v6007
        %v6104 = vunpack.c.l.b16 %v6008
        %v6105 = vunpack.c.l.b16 %v6009
        %v6106 = vunpack.c.l.b16 %v6010
        %v6107 = vunpack.c.l.b16 %v6011
        %v6108 = vunpack.c.l.b16 %v6012
        %v6109 = vunpack.c.l.b16 %v6013
        %v6110 = vunpack.c.l.b16 %v6014
        %v6111 = vunpack.c.l.b16 %v6015
        %v6112 = vunpack.c.l.b16 %v6016
        %v6113 = vunpack.c.l.b16 %v6017
        %v6114 = vpack.c.b16 %v6099, %v6098
        %v6115 = vpack.c.b16 %v6101, %v6100
        %v6116 = vpack.c.b16 %v6103, %v6102
        %v6117 = vpack.c.b16 %v6105, %v6104
        %v6118 = vpack.c.b16 %v6107, %v6106
        %v6119 = vpack.c.b16 %v6109, %v6108
        %v6120 = vpack.c.b16 %v6111, %v6110
        %v6121 = vpack.c.b16 %v6113, %v6112
        %6130 = vmatpush.bf16.msra.mxu0 %v6121
        %6131 = vmatpush.bf16.msra.mxu0 %v6120
        %6132 = vmatpush.bf16.msra.mxu0 %v6119
        %6133 = vmatpush.bf16.msra.mxu0 %v6118
        %6134 = vmatpush.bf16.msra.mxu0 %v6117
        %6135 = vmatpush.bf16.msra.mxu0 %v6116
        %6136 = vmatpush.bf16.msra.mxu0 %v6115
        %6137 = vmatpush.bf16.msra.mxu0 %v6114
        %6138 = vmatmul.bf16.gmra.mxu0 %v6050
        %v6139 = vpop.f32.mrf.mxu0
        %v6140 = vadd.f32 0.0, %v6139
        %v6141 = vpop.f32.mrf.mxu0
        %v6142 = vadd.f32 0.0, %v6141
        %6143 = vmatmul.bf16.gmra.mxu0 %v6051
        %v6144 = vpop.f32.mrf.mxu0
        %v6145 = vadd.f32 0.0, %v6144
        %v6146 = vpop.f32.mrf.mxu0
        %v6147 = vadd.f32 0.0, %v6146
        %6148 = vmatmul.bf16.gmra.mxu0 %v6052
        %v6149 = vpop.f32.mrf.mxu0
        %v6150 = vadd.f32 0.0, %v6149
        %v6151 = vpop.f32.mrf.mxu0
        %v6152 = vadd.f32 0.0, %v6151
        %6153 = vmatmul.bf16.gmra.mxu0 %v6053
        %v6154 = vpop.f32.mrf.mxu0
        %v6155 = vadd.f32 0.0, %v6154
        %v6156 = vpop.f32.mrf.mxu0
        %v6157 = vadd.f32 0.0, %v6156
        %6158 = vmatmul.bf16.gmra.mxu0 %v6054
        %v6159 = vpop.f32.mrf.mxu0
        %v6160 = vadd.f32 0.0, %v6159
        %v6161 = vpop.f32.mrf.mxu0
        %v6162 = vadd.f32 0.0, %v6161
        %6163 = vmatmul.bf16.gmra.mxu0 %v6055
        %v6164 = vpop.f32.mrf.mxu0
        %v6165 = vadd.f32 0.0, %v6164
        %v6166 = vpop.f32.mrf.mxu0
        %v6167 = vadd.f32 0.0, %v6166
        %6168 = vmatmul.bf16.gmra.mxu0 %v6056
        %v6169 = vpop.f32.mrf.mxu0
        %v6170 = vadd.f32 0.0, %v6169
        %v6171 = vpop.f32.mrf.mxu0
        %v6172 = vadd.f32 0.0, %v6171
        %6173 = vmatmul.bf16.gmra.mxu0 %v6057
        %v6174 = vpop.f32.mrf.mxu0
        %v6175 = vadd.f32 0.0, %v6174
        %v6176 = vpop.f32.mrf.mxu0
        %v6177 = vadd.f32 0.0, %v6176
        %6178 = vmatmul.bf16.gmra.mxu0 %v6058
        %v6179 = vpop.f32.mrf.mxu0
        %v6180 = vadd.f32 0.0, %v6179
        %v6181 = vpop.f32.mrf.mxu0
        %v6182 = vadd.f32 0.0, %v6181
        %6183 = vmatmul.bf16.gmra.mxu0 %v6059
        %v6184 = vpop.f32.mrf.mxu0
        %v6185 = vadd.f32 0.0, %v6184
        %v6186 = vpop.f32.mrf.mxu0
        %v6187 = vadd.f32 0.0, %v6186
        %6188 = vmatmul.bf16.gmra.mxu0 %v6060
        %v6189 = vpop.f32.mrf.mxu0
        %v6190 = vadd.f32 0.0, %v6189
        %v6191 = vpop.f32.mrf.mxu0
        %v6192 = vadd.f32 0.0, %v6191
        %6193 = vmatmul.bf16.gmra.mxu0 %v6061
        %v6194 = vpop.f32.mrf.mxu0
        %v6195 = vadd.f32 0.0, %v6194
        %v6196 = vpop.f32.mrf.mxu0
        %v6197 = vadd.f32 0.0, %v6196
        %6198 = vmatmul.bf16.gmra.mxu0 %v6062
        %v6199 = vpop.f32.mrf.mxu0
        %v6200 = vadd.f32 0.0, %v6199
        %v6201 = vpop.f32.mrf.mxu0
        %v6202 = vadd.f32 0.0, %v6201
        %6203 = vmatmul.bf16.gmra.mxu0 %v6063
        %v6204 = vpop.f32.mrf.mxu0
        %v6205 = vadd.f32 0.0, %v6204
        %v6206 = vpop.f32.mrf.mxu0
        %v6207 = vadd.f32 0.0, %v6206
        %6208 = vmatmul.bf16.gmra.mxu0 %v6064
        %v6209 = vpop.f32.mrf.mxu0
        %v6210 = vadd.f32 0.0, %v6209
        %v6211 = vpop.f32.mrf.mxu0
        %v6212 = vadd.f32 0.0, %v6211
        %6213 = vmatmul.bf16.gmra.mxu0 %v6065
        %v6214 = vpop.f32.mrf.mxu0
        %v6215 = vadd.f32 0.0, %v6214
        %v6216 = vpop.f32.mrf.mxu0
        %v6217 = vadd.f32 0.0, %v6216
        %6218 = vdwg.mxu0
        %v6251 = vunpack.c.l.b16 %v5553
        %v6252 = vunpack.c.l.b16 %v5554
        %v6253 = vunpack.c.l.b16 %v5555
        %v6254 = vunpack.c.l.b16 %v5556
        %v6255 = vunpack.c.l.b16 %v5557
        %v6256 = vunpack.c.l.b16 %v5558
        %v6257 = vunpack.c.l.b16 %v5559
        %v6258 = vunpack.c.l.b16 %v5560
        %v6259 = vunpack.c.l.b16 %v5561
        %v6260 = vunpack.c.l.b16 %v5562
        %v6261 = vunpack.c.l.b16 %v5563
        %v6262 = vunpack.c.l.b16 %v5564
        %v6263 = vunpack.c.l.b16 %v5565
        %v6264 = vunpack.c.l.b16 %v5566
        %v6265 = vunpack.c.l.b16 %v5567
        %v6266 = vunpack.c.l.b16 %v5568
        %v6267 = vunpack.c.l.b16 %v5569
        %v6268 = vunpack.c.l.b16 %v5570
        %v6269 = vunpack.c.l.b16 %v5571
        %v6270 = vunpack.c.l.b16 %v5572
        %v6271 = vunpack.c.l.b16 %v5573
        %v6272 = vunpack.c.l.b16 %v5574
        %v6273 = vunpack.c.l.b16 %v5575
        %v6274 = vunpack.c.l.b16 %v5576
        %v6275 = vunpack.c.l.b16 %v5577
        %v6276 = vunpack.c.l.b16 %v5578
        %v6277 = vunpack.c.l.b16 %v5579
        %v6278 = vunpack.c.l.b16 %v5580
        %v6279 = vunpack.c.l.b16 %v5581
        %v6280 = vunpack.c.l.b16 %v5582
        %v6281 = vunpack.c.l.b16 %v5583
        %v6282 = vunpack.c.l.b16 %v5584
        %v6283 = vpack.c.b16 %v6252, %v6251
        %v6284 = vpack.c.b16 %v6254, %v6253
        %v6285 = vpack.c.b16 %v6256, %v6255
        %v6286 = vpack.c.b16 %v6258, %v6257
        %v6287 = vpack.c.b16 %v6260, %v6259
        %v6288 = vpack.c.b16 %v6262, %v6261
        %v6289 = vpack.c.b16 %v6264, %v6263
        %v6290 = vpack.c.b16 %v6266, %v6265
        %v6291 = vpack.c.b16 %v6268, %v6267
        %v6292 = vpack.c.b16 %v6270, %v6269
        %v6293 = vpack.c.b16 %v6272, %v6271
        %v6294 = vpack.c.b16 %v6274, %v6273
        %v6295 = vpack.c.b16 %v6276, %v6275
        %v6296 = vpack.c.b16 %v6278, %v6277
        %v6297 = vpack.c.b16 %v6280, %v6279
        %v6298 = vpack.c.b16 %v6282, %v6281
        %v6331 = vunpack.c.l.b16 %v5585
        %v6332 = vunpack.c.l.b16 %v5586
        %v6333 = vunpack.c.l.b16 %v5587
        %v6334 = vunpack.c.l.b16 %v5588
        %v6335 = vunpack.c.l.b16 %v5589
        %v6336 = vunpack.c.l.b16 %v5590
        %v6337 = vunpack.c.l.b16 %v5591
        %v6338 = vunpack.c.l.b16 %v5592
        %v6339 = vunpack.c.l.b16 %v5593
        %v6340 = vunpack.c.l.b16 %v5594
        %v6341 = vunpack.c.l.b16 %v5595
        %v6342 = vunpack.c.l.b16 %v5596
        %v6343 = vunpack.c.l.b16 %v5597
        %v6344 = vunpack.c.l.b16 %v5598
        %v6345 = vunpack.c.l.b16 %v5599
        %v6346 = vunpack.c.l.b16 %v5600
        %v6347 = vpack.c.b16 %v6332, %v6331
        %v6348 = vpack.c.b16 %v6334, %v6333
        %v6349 = vpack.c.b16 %v6336, %v6335
        %v6350 = vpack.c.b16 %v6338, %v6337
        %v6351 = vpack.c.b16 %v6340, %v6339
        %v6352 = vpack.c.b16 %v6342, %v6341
        %v6353 = vpack.c.b16 %v6344, %v6343
        %v6354 = vpack.c.b16 %v6346, %v6345
        %6363 = vmatpush.bf16.msra.mxu0 %v6354
        %6364 = vmatpush.bf16.msra.mxu0 %v6353
        %6365 = vmatpush.bf16.msra.mxu0 %v6352
        %6366 = vmatpush.bf16.msra.mxu0 %v6351
        %6367 = vmatpush.bf16.msra.mxu0 %v6350
        %6368 = vmatpush.bf16.msra.mxu0 %v6349
        %6369 = vmatpush.bf16.msra.mxu0 %v6348
        %6370 = vmatpush.bf16.msra.mxu0 %v6347
        %6371 = vmatmul.bf16.gmra.mxu0 %v6283
        %v6372 = vpop.f32.mrf.mxu0
        %v6373 = vadd.f32 %v6140, %v6372
        %v6374 = vpop.f32.mrf.mxu0
        %v6375 = vadd.f32 %v6142, %v6374
        %6376 = vmatmul.bf16.gmra.mxu0 %v6284
        %v6377 = vpop.f32.mrf.mxu0
        %v6378 = vadd.f32 %v6145, %v6377
        %v6379 = vpop.f32.mrf.mxu0
        %v6380 = vadd.f32 %v6147, %v6379
        %6381 = vmatmul.bf16.gmra.mxu0 %v6285
        %v6382 = vpop.f32.mrf.mxu0
        %v6383 = vadd.f32 %v6150, %v6382
        %v6384 = vpop.f32.mrf.mxu0
        %v6385 = vadd.f32 %v6152, %v6384
        %6386 = vmatmul.bf16.gmra.mxu0 %v6286
        %v6387 = vpop.f32.mrf.mxu0
        %v6388 = vadd.f32 %v6155, %v6387
        %v6389 = vpop.f32.mrf.mxu0
        %v6390 = vadd.f32 %v6157, %v6389
        %6391 = vmatmul.bf16.gmra.mxu0 %v6287
        %v6392 = vpop.f32.mrf.mxu0
        %v6393 = vadd.f32 %v6160, %v6392
        %v6394 = vpop.f32.mrf.mxu0
        %v6395 = vadd.f32 %v6162, %v6394
        %6396 = vmatmul.bf16.gmra.mxu0 %v6288
        %v6397 = vpop.f32.mrf.mxu0
        %v6398 = vadd.f32 %v6165, %v6397
        %v6399 = vpop.f32.mrf.mxu0
        %v6400 = vadd.f32 %v6167, %v6399
        %6401 = vmatmul.bf16.gmra.mxu0 %v6289
        %v6402 = vpop.f32.mrf.mxu0
        %v6403 = vadd.f32 %v6170, %v6402
        %v6404 = vpop.f32.mrf.mxu0
        %v6405 = vadd.f32 %v6172, %v6404
        %6406 = vmatmul.bf16.gmra.mxu0 %v6290
        %v6407 = vpop.f32.mrf.mxu0
        %v6408 = vadd.f32 %v6175, %v6407
        %v6409 = vpop.f32.mrf.mxu0
        %v6410 = vadd.f32 %v6177, %v6409
        %6411 = vmatmul.bf16.gmra.mxu0 %v6291
        %v6412 = vpop.f32.mrf.mxu0
        %v6413 = vadd.f32 %v6180, %v6412
        %v6414 = vpop.f32.mrf.mxu0
        %v6415 = vadd.f32 %v6182, %v6414
        %6416 = vmatmul.bf16.gmra.mxu0 %v6292
        %v6417 = vpop.f32.mrf.mxu0
        %v6418 = vadd.f32 %v6185, %v6417
        %v6419 = vpop.f32.mrf.mxu0
        %v6420 = vadd.f32 %v6187, %v6419
        %6421 = vmatmul.bf16.gmra.mxu0 %v6293
        %v6422 = vpop.f32.mrf.mxu0
        %v6423 = vadd.f32 %v6190, %v6422
        %v6424 = vpop.f32.mrf.mxu0
        %v6425 = vadd.f32 %v6192, %v6424
        %6426 = vmatmul.bf16.gmra.mxu0 %v6294
        %v6427 = vpop.f32.mrf.mxu0
        %v6428 = vadd.f32 %v6195, %v6427
        %v6429 = vpop.f32.mrf.mxu0
        %v6430 = vadd.f32 %v6197, %v6429
        %6431 = vmatmul.bf16.gmra.mxu0 %v6295
        %v6432 = vpop.f32.mrf.mxu0
        %v6433 = vadd.f32 %v6200, %v6432
        %v6434 = vpop.f32.mrf.mxu0
        %v6435 = vadd.f32 %v6202, %v6434
        %6436 = vmatmul.bf16.gmra.mxu0 %v6296
        %v6437 = vpop.f32.mrf.mxu0
        %v6438 = vadd.f32 %v6205, %v6437
        %v6439 = vpop.f32.mrf.mxu0
        %v6440 = vadd.f32 %v6207, %v6439
        %6441 = vmatmul.bf16.gmra.mxu0 %v6297
        %v6442 = vpop.f32.mrf.mxu0
        %v6443 = vadd.f32 %v6210, %v6442
        %v6444 = vpop.f32.mrf.mxu0
        %v6445 = vadd.f32 %v6212, %v6444
        %6446 = vmatmul.bf16.gmra.mxu0 %v6298
        %v6447 = vpop.f32.mrf.mxu0
        %v6448 = vadd.f32 %v6215, %v6447
        %v6449 = vpop.f32.mrf.mxu0
        %v6450 = vadd.f32 %v6217, %v6449
        %6451 = vdwg.mxu0
        %v6452 = vld [vmem:[#allocation3] sm:$0xe]
        %v6453 = vld [vmem:[#allocation3 + $0xc] sm:$0xe]
        %v6454 = vld [vmem:[#allocation3 + $0x18] sm:$0xe]
        %v6455 = vld [vmem:[#allocation3 + $0x24] sm:$0xe]
        %v6456 = vld [vmem:[#allocation3 + $0x30] sm:$0xe]
        %v6457 = vld [vmem:[#allocation3 + $0x3c] sm:$0xe]
        %v6458 = vld [vmem:[#allocation3 + $0x48] sm:$0xe]
        %v6459 = vld [vmem:[#allocation3 + $0x54] sm:$0xe]
        %v6460 = vld [vmem:[#allocation3 + $0x60] sm:$0xe]
        %v6461 = vld [vmem:[#allocation3 + $0x6c] sm:$0xe]
        %v6462 = vld [vmem:[#allocation3 + $0x78] sm:$0xe]
        %v6463 = vld [vmem:[#allocation3 + $0x84] sm:$0xe]
        %v6464 = vld [vmem:[#allocation3 + $0x90] sm:$0xe]
        %v6465 = vld [vmem:[#allocation3 + $0x9c] sm:$0xe]
        %v6466 = vld [vmem:[#allocation3 + $0xa8] sm:$0xe]
        %v6467 = vld [vmem:[#allocation3 + $0xb4] sm:$0xe]
        %v6500 = vrot.slane %v6452, 5
        %v6501 = vrot.slane %v6500, 4
        %v6502 = vrot.slane %v5554, 5
        %v6503 = vsel %vm1812, %v6501, %v6502
        %v6504 = vrot.slane %v6502, 4
        %v6505 = vrot.slane %v5601, 5
        %v6506 = vsel %vm1812, %v6504, %v6505
        %v6507 = vrot.slane %v6453, 5
        %v6508 = vrot.slane %v6507, 4
        %v6509 = vrot.slane %v5556, 5
        %v6510 = vsel %vm1812, %v6508, %v6509
        %v6511 = vrot.slane %v6509, 4
        %v6512 = vrot.slane %v5602, 5
        %v6513 = vsel %vm1812, %v6511, %v6512
        %v6514 = vrot.slane %v6454, 5
        %v6515 = vrot.slane %v6514, 4
        %v6516 = vrot.slane %v5558, 5
        %v6517 = vsel %vm1812, %v6515, %v6516
        %v6518 = vrot.slane %v6516, 4
        %v6519 = vrot.slane %v5603, 5
        %v6520 = vsel %vm1812, %v6518, %v6519
        %v6521 = vrot.slane %v6455, 5
        %v6522 = vrot.slane %v6521, 4
        %v6523 = vrot.slane %v5560, 5
        %v6524 = vsel %vm1812, %v6522, %v6523
        %v6525 = vrot.slane %v6523, 4
        %v6526 = vrot.slane %v5604, 5
        %v6527 = vsel %vm1812, %v6525, %v6526
        %v6528 = vrot.slane %v6456, 5
        %v6529 = vrot.slane %v6528, 4
        %v6530 = vrot.slane %v5562, 5
        %v6531 = vsel %vm1812, %v6529, %v6530
        %v6532 = vrot.slane %v6530, 4
        %v6533 = vrot.slane %v5605, 5
        %v6534 = vsel %vm1812, %v6532, %v6533
        %v6535 = vrot.slane %v6457, 5
        %v6536 = vrot.slane %v6535, 4
        %v6537 = vrot.slane %v5564, 5
        %v6538 = vsel %vm1812, %v6536, %v6537
        %v6539 = vrot.slane %v6537, 4
        %v6540 = vrot.slane %v5606, 5
        %v6541 = vsel %vm1812, %v6539, %v6540
        %v6542 = vrot.slane %v6458, 5
        %v6543 = vrot.slane %v6542, 4
        %v6544 = vrot.slane %v5566, 5
        %v6545 = vsel %vm1812, %v6543, %v6544
        %v6546 = vrot.slane %v6544, 4
        %v6547 = vrot.slane %v5607, 5
        %v6548 = vsel %vm1812, %v6546, %v6547
        %v6549 = vrot.slane %v6459, 5
        %v6550 = vrot.slane %v6549, 4
        %v6551 = vrot.slane %v5568, 5
        %v6552 = vsel %vm1812, %v6550, %v6551
        %v6553 = vrot.slane %v6551, 4
        %v6554 = vrot.slane %v5608, 5
        %v6555 = vsel %vm1812, %v6553, %v6554
        %v6556 = vrot.slane %v6460, 5
        %v6557 = vrot.slane %v6556, 4
        %v6558 = vrot.slane %v5570, 5
        %v6559 = vsel %vm1812, %v6557, %v6558
        %v6560 = vrot.slane %v6558, 4
        %v6561 = vrot.slane %v5609, 5
        %v6562 = vsel %vm1812, %v6560, %v6561
        %v6563 = vrot.slane %v6461, 5
        %v6564 = vrot.slane %v6563, 4
        %v6565 = vrot.slane %v5572, 5
        %v6566 = vsel %vm1812, %v6564, %v6565
        %v6567 = vrot.slane %v6565, 4
        %v6568 = vrot.slane %v5610, 5
        %v6569 = vsel %vm1812, %v6567, %v6568
        %v6570 = vrot.slane %v6462, 5
        %v6571 = vrot.slane %v6570, 4
        %v6572 = vrot.slane %v5574, 5
        %v6573 = vsel %vm1812, %v6571, %v6572
        %v6574 = vrot.slane %v6572, 4
        %v6575 = vrot.slane %v5611, 5
        %v6576 = vsel %vm1812, %v6574, %v6575
        %v6577 = vrot.slane %v6463, 5
        %v6578 = vrot.slane %v6577, 4
        %v6579 = vrot.slane %v5576, 5
        %v6580 = vsel %vm1812, %v6578, %v6579
        %v6581 = vrot.slane %v6579, 4
        %v6582 = vrot.slane %v5612, 5
        %v6583 = vsel %vm1812, %v6581, %v6582
        %v6584 = vrot.slane %v6464, 5
        %v6585 = vrot.slane %v6584, 4
        %v6586 = vrot.slane %v5578, 5
        %v6587 = vsel %vm1812, %v6585, %v6586
        %v6588 = vrot.slane %v6586, 4
        %v6589 = vrot.slane %v5613, 5
        %v6590 = vsel %vm1812, %v6588, %v6589
        %v6591 = vrot.slane %v6465, 5
        %v6592 = vrot.slane %v6591, 4
        %v6593 = vrot.slane %v5580, 5
        %v6594 = vsel %vm1812, %v6592, %v6593
        %v6595 = vrot.slane %v6593, 4
        %v6596 = vrot.slane %v5614, 5
        %v6597 = vsel %vm1812, %v6595, %v6596
        %v6598 = vrot.slane %v6466, 5
        %v6599 = vrot.slane %v6598, 4
        %v6600 = vrot.slane %v5582, 5
        %v6601 = vsel %vm1812, %v6599, %v6600
        %v6602 = vrot.slane %v6600, 4
        %v6603 = vrot.slane %v5615, 5
        %v6604 = vsel %vm1812, %v6602, %v6603
        %v6605 = vrot.slane %v6467, 5
        %v6606 = vrot.slane %v6605, 4
        %v6607 = vrot.slane %v5584, 5
        %v6608 = vsel %vm1812, %v6606, %v6607
        %v6609 = vrot.slane %v6607, 4
        %v6610 = vrot.slane %v5616, 5
        %v6611 = vsel %vm1812, %v6609, %v6610
        %s6612 = scalar_lea.vmem [#allocation9], 128
        %v6613 = vld [vmem:[%s6612] sm:$0xf]
        %v6614 = vld [vmem:[%s6612 + $0x4] sm:$0xf]
        %v6615 = vld [vmem:[%s6612 + $0x8] sm:$0xf]
        %v6616 = vld [vmem:[%s6612 + $0xc] sm:$0xf]
        %v6617 = vld [vmem:[%s6612 + $0x10] sm:$0xf]
        %v6618 = vld [vmem:[%s6612 + $0x14] sm:$0xf]
        %v6619 = vld [vmem:[%s6612 + $0x18] sm:$0xf]
        %v6620 = vld [vmem:[%s6612 + $0x1c] sm:$0xf]
        %v6621 = vld [vmem:[%s6612 + $0x20] sm:$0xf]
        %v6622 = vld [vmem:[%s6612 + $0x24] sm:$0xf]
        %v6623 = vld [vmem:[%s6612 + $0x28] sm:$0xf]
        %v6624 = vld [vmem:[%s6612 + $0x2c] sm:$0xf]
        %v6625 = vld [vmem:[%s6612 + $0x30] sm:$0xf]
        %v6626 = vld [vmem:[%s6612 + $0x34] sm:$0xf]
        %v6627 = vld [vmem:[%s6612 + $0x38] sm:$0xf]
        %v6628 = vld [vmem:[%s6612 + $0x3c] sm:$0xf]
        %v6629 = vunpack.c.l.b16 %v6503
        %v6630 = vunpack.c.l.b16 %v6506
        %v6631 = vunpack.c.l.b16 %v6510
        %v6632 = vunpack.c.l.b16 %v6513
        %v6633 = vunpack.c.l.b16 %v6517
        %v6634 = vunpack.c.l.b16 %v6520
        %v6635 = vunpack.c.l.b16 %v6524
        %v6636 = vunpack.c.l.b16 %v6527
        %v6637 = vunpack.c.l.b16 %v6531
        %v6638 = vunpack.c.l.b16 %v6534
        %v6639 = vunpack.c.l.b16 %v6538
        %v6640 = vunpack.c.l.b16 %v6541
        %v6641 = vunpack.c.l.b16 %v6545
        %v6642 = vunpack.c.l.b16 %v6548
        %v6643 = vunpack.c.l.b16 %v6552
        %v6644 = vunpack.c.l.b16 %v6555
        %v6645 = vunpack.c.l.b16 %v6559
        %v6646 = vunpack.c.l.b16 %v6562
        %v6647 = vunpack.c.l.b16 %v6566
        %v6648 = vunpack.c.l.b16 %v6569
        %v6649 = vunpack.c.l.b16 %v6573
        %v6650 = vunpack.c.l.b16 %v6576
        %v6651 = vunpack.c.l.b16 %v6580
        %v6652 = vunpack.c.l.b16 %v6583
        %v6653 = vunpack.c.l.b16 %v6587
        %v6654 = vunpack.c.l.b16 %v6590
        %v6655 = vunpack.c.l.b16 %v6594
        %v6656 = vunpack.c.l.b16 %v6597
        %v6657 = vunpack.c.l.b16 %v6601
        %v6658 = vunpack.c.l.b16 %v6604
        %v6659 = vunpack.c.l.b16 %v6608
        %v6660 = vunpack.c.l.b16 %v6611
        %v6661 = vpack.c.b16 %v6630, %v6629
        %v6662 = vpack.c.b16 %v6632, %v6631
        %v6663 = vpack.c.b16 %v6634, %v6633
        %v6664 = vpack.c.b16 %v6636, %v6635
        %v6665 = vpack.c.b16 %v6638, %v6637
        %v6666 = vpack.c.b16 %v6640, %v6639
        %v6667 = vpack.c.b16 %v6642, %v6641
        %v6668 = vpack.c.b16 %v6644, %v6643
        %v6669 = vpack.c.b16 %v6646, %v6645
        %v6670 = vpack.c.b16 %v6648, %v6647
        %v6671 = vpack.c.b16 %v6650, %v6649
        %v6672 = vpack.c.b16 %v6652, %v6651
        %v6673 = vpack.c.b16 %v6654, %v6653
        %v6674 = vpack.c.b16 %v6656, %v6655
        %v6675 = vpack.c.b16 %v6658, %v6657
        %v6676 = vpack.c.b16 %v6660, %v6659
        %v6709 = vunpack.c.l.b16 %v6613
        %v6710 = vunpack.c.l.b16 %v6614
        %v6711 = vunpack.c.l.b16 %v6615
        %v6712 = vunpack.c.l.b16 %v6616
        %v6713 = vunpack.c.l.b16 %v6617
        %v6714 = vunpack.c.l.b16 %v6618
        %v6715 = vunpack.c.l.b16 %v6619
        %v6716 = vunpack.c.l.b16 %v6620
        %v6717 = vunpack.c.l.b16 %v6621
        %v6718 = vunpack.c.l.b16 %v6622
        %v6719 = vunpack.c.l.b16 %v6623
        %v6720 = vunpack.c.l.b16 %v6624
        %v6721 = vunpack.c.l.b16 %v6625
        %v6722 = vunpack.c.l.b16 %v6626
        %v6723 = vunpack.c.l.b16 %v6627
        %v6724 = vunpack.c.l.b16 %v6628
        %v6725 = vpack.c.b16 %v6710, %v6709
        %v6726 = vpack.c.b16 %v6712, %v6711
        %v6727 = vpack.c.b16 %v6714, %v6713
        %v6728 = vpack.c.b16 %v6716, %v6715
        %v6729 = vpack.c.b16 %v6718, %v6717
        %v6730 = vpack.c.b16 %v6720, %v6719
        %v6731 = vpack.c.b16 %v6722, %v6721
        %v6732 = vpack.c.b16 %v6724, %v6723
        %6741 = vmatpush.bf16.msra.mxu0 %v6732
        %6742 = vmatpush.bf16.msra.mxu0 %v6731
        %6743 = vmatpush.bf16.msra.mxu0 %v6730
        %6744 = vmatpush.bf16.msra.mxu0 %v6729
        %6745 = vmatpush.bf16.msra.mxu0 %v6728
        %6746 = vmatpush.bf16.msra.mxu0 %v6727
        %6747 = vmatpush.bf16.msra.mxu0 %v6726
        %6748 = vmatpush.bf16.msra.mxu0 %v6725
        %6749 = vmatmul.bf16.gmra.mxu0 %v6661
        %v6750 = vpop.f32.mrf.mxu0
        %v6751 = vadd.f32 0.0, %v6750
        %v6752 = vpop.f32.mrf.mxu0
        %v6753 = vadd.f32 0.0, %v6752
        %6754 = vmatmul.bf16.gmra.mxu0 %v6662
        %v6755 = vpop.f32.mrf.mxu0
        %v6756 = vadd.f32 0.0, %v6755
        %v6757 = vpop.f32.mrf.mxu0
        %v6758 = vadd.f32 0.0, %v6757
        %6759 = vmatmul.bf16.gmra.mxu0 %v6663
        %v6760 = vpop.f32.mrf.mxu0
        %v6761 = vadd.f32 0.0, %v6760
        %v6762 = vpop.f32.mrf.mxu0
        %v6763 = vadd.f32 0.0, %v6762
        %6764 = vmatmul.bf16.gmra.mxu0 %v6664
        %v6765 = vpop.f32.mrf.mxu0
        %v6766 = vadd.f32 0.0, %v6765
        %v6767 = vpop.f32.mrf.mxu0
        %v6768 = vadd.f32 0.0, %v6767
        %6769 = vmatmul.bf16.gmra.mxu0 %v6665
        %v6770 = vpop.f32.mrf.mxu0
        %v6771 = vadd.f32 0.0, %v6770
        %v6772 = vpop.f32.mrf.mxu0
        %v6773 = vadd.f32 0.0, %v6772
        %6774 = vmatmul.bf16.gmra.mxu0 %v6666
        %v6775 = vpop.f32.mrf.mxu0
        %v6776 = vadd.f32 0.0, %v6775
        %v6777 = vpop.f32.mrf.mxu0
        %v6778 = vadd.f32 0.0, %v6777
        %6779 = vmatmul.bf16.gmra.mxu0 %v6667
        %v6780 = vpop.f32.mrf.mxu0
        %v6781 = vadd.f32 0.0, %v6780
        %v6782 = vpop.f32.mrf.mxu0
        %v6783 = vadd.f32 0.0, %v6782
        %6784 = vmatmul.bf16.gmra.mxu0 %v6668
        %v6785 = vpop.f32.mrf.mxu0
        %v6786 = vadd.f32 0.0, %v6785
        %v6787 = vpop.f32.mrf.mxu0
        %v6788 = vadd.f32 0.0, %v6787
        %6789 = vmatmul.bf16.gmra.mxu0 %v6669
        %v6790 = vpop.f32.mrf.mxu0
        %v6791 = vadd.f32 0.0, %v6790
        %v6792 = vpop.f32.mrf.mxu0
        %v6793 = vadd.f32 0.0, %v6792
        %6794 = vmatmul.bf16.gmra.mxu0 %v6670
        %v6795 = vpop.f32.mrf.mxu0
        %v6796 = vadd.f32 0.0, %v6795
        %v6797 = vpop.f32.mrf.mxu0
        %v6798 = vadd.f32 0.0, %v6797
        %6799 = vmatmul.bf16.gmra.mxu0 %v6671
        %v6800 = vpop.f32.mrf.mxu0
        %v6801 = vadd.f32 0.0, %v6800
        %v6802 = vpop.f32.mrf.mxu0
        %v6803 = vadd.f32 0.0, %v6802
        %6804 = vmatmul.bf16.gmra.mxu0 %v6672
        %v6805 = vpop.f32.mrf.mxu0
        %v6806 = vadd.f32 0.0, %v6805
        %v6807 = vpop.f32.mrf.mxu0
        %v6808 = vadd.f32 0.0, %v6807
        %6809 = vmatmul.bf16.gmra.mxu0 %v6673
        %v6810 = vpop.f32.mrf.mxu0
        %v6811 = vadd.f32 0.0, %v6810
        %v6812 = vpop.f32.mrf.mxu0
        %v6813 = vadd.f32 0.0, %v6812
        %6814 = vmatmul.bf16.gmra.mxu0 %v6674
        %v6815 = vpop.f32.mrf.mxu0
        %v6816 = vadd.f32 0.0, %v6815
        %v6817 = vpop.f32.mrf.mxu0
        %v6818 = vadd.f32 0.0, %v6817
        %6819 = vmatmul.bf16.gmra.mxu0 %v6675
        %v6820 = vpop.f32.mrf.mxu0
        %v6821 = vadd.f32 0.0, %v6820
        %v6822 = vpop.f32.mrf.mxu0
        %v6823 = vadd.f32 0.0, %v6822
        %6824 = vmatmul.bf16.gmra.mxu0 %v6676
        %v6825 = vpop.f32.mrf.mxu0
        %v6826 = vadd.f32 0.0, %v6825
        %v6827 = vpop.f32.mrf.mxu0
        %v6828 = vadd.f32 0.0, %v6827
        %6829 = vdwg.mxu0
        %v6830 = vadd.f32 %v6373, %v6751
        %v6831 = vadd.f32 %v6375, %v6753
        %v6832 = vadd.f32 %v6378, %v6756
        %v6833 = vadd.f32 %v6380, %v6758
        %v6834 = vadd.f32 %v6383, %v6761
        %v6835 = vadd.f32 %v6385, %v6763
        %v6836 = vadd.f32 %v6388, %v6766
        %v6837 = vadd.f32 %v6390, %v6768
        %v6838 = vadd.f32 %v6393, %v6771
        %v6839 = vadd.f32 %v6395, %v6773
        %v6840 = vadd.f32 %v6398, %v6776
        %v6841 = vadd.f32 %v6400, %v6778
        %v6842 = vadd.f32 %v6403, %v6781
        %v6843 = vadd.f32 %v6405, %v6783
        %v6844 = vadd.f32 %v6408, %v6786
        %v6845 = vadd.f32 %v6410, %v6788
        %v6846 = vadd.f32 %v6413, %v6791
        %v6847 = vadd.f32 %v6415, %v6793
        %v6848 = vadd.f32 %v6418, %v6796
        %v6849 = vadd.f32 %v6420, %v6798
        %v6850 = vadd.f32 %v6423, %v6801
        %v6851 = vadd.f32 %v6425, %v6803
        %v6852 = vadd.f32 %v6428, %v6806
        %v6853 = vadd.f32 %v6430, %v6808
        %v6854 = vadd.f32 %v6433, %v6811
        %v6855 = vadd.f32 %v6435, %v6813
        %v6856 = vadd.f32 %v6438, %v6816
        %v6857 = vadd.f32 %v6440, %v6818
        %v6858 = vadd.f32 %v6443, %v6821
        %v6859 = vadd.f32 %v6445, %v6823
        %v6860 = vadd.f32 %v6448, %v6826
        %v6861 = vadd.f32 %v6450, %v6828
        %v6862 = vld [vmem:[%s5440] sm:$0xf]
        %v6863 = vld [vmem:[%s5440 + $0x4] sm:$0xf]
        %v6864 = vld [vmem:[%s5440 + $0xc] sm:$0xf]
        %v6865 = vld [vmem:[%s5440 + $0x10] sm:$0xf]
        %v6866 = vld [vmem:[%s5440 + $0x18] sm:$0xf]
        %v6867 = vld [vmem:[%s5440 + $0x1c] sm:$0xf]
        %v6868 = vld [vmem:[%s5440 + $0x24] sm:$0xf]
        %v6869 = vld [vmem:[%s5440 + $0x28] sm:$0xf]
        %v6870 = vld [vmem:[%s5440 + $0x30] sm:$0xf]
        %v6871 = vld [vmem:[%s5440 + $0x34] sm:$0xf]
        %v6872 = vld [vmem:[%s5440 + $0x3c] sm:$0xf]
        %v6873 = vld [vmem:[%s5440 + $0x40] sm:$0xf]
        %v6874 = vld [vmem:[%s5440 + $0x48] sm:$0xf]
        %v6875 = vld [vmem:[%s5440 + $0x4c] sm:$0xf]
        %v6876 = vld [vmem:[%s5440 + $0x54] sm:$0xf]
        %v6877 = vld [vmem:[%s5440 + $0x58] sm:$0xf]
        %v6878 = vld [vmem:[%s5440 + $0x60] sm:$0xf]
        %v6879 = vld [vmem:[%s5440 + $0x64] sm:$0xf]
        %v6880 = vld [vmem:[%s5440 + $0x6c] sm:$0xf]
        %v6881 = vld [vmem:[%s5440 + $0x70] sm:$0xf]
        %v6882 = vld [vmem:[%s5440 + $0x78] sm:$0xf]
        %v6883 = vld [vmem:[%s5440 + $0x7c] sm:$0xf]
        %v6884 = vld [vmem:[%s5440 + $0x84] sm:$0xf]
        %v6885 = vld [vmem:[%s5440 + $0x88] sm:$0xf]
        %v6886 = vld [vmem:[%s5440 + $0x90] sm:$0xf]
        %v6887 = vld [vmem:[%s5440 + $0x94] sm:$0xf]
        %v6888 = vld [vmem:[%s5440 + $0x9c] sm:$0xf]
        %v6889 = vld [vmem:[%s5440 + $0xa0] sm:$0xf]
        %v6890 = vld [vmem:[%s5440 + $0xa8] sm:$0xf]
        %v6891 = vld [vmem:[%s5440 + $0xac] sm:$0xf]
        %v6892 = vld [vmem:[%s5440 + $0xb4] sm:$0xf]
        %v6893 = vld [vmem:[%s5440 + $0xb8] sm:$0xf]
        %s6894 = scalar_lea.vmem [#allocation9], 192
        %v6895 = vld [vmem:[%s6894] sm:$0xf]
        %v6896 = vld [vmem:[%s6894 + $0x4] sm:$0xf]
        %v6897 = vld [vmem:[%s6894 + $0x8] sm:$0xf]
        %v6898 = vld [vmem:[%s6894 + $0xc] sm:$0xf]
        %v6899 = vld [vmem:[%s6894 + $0x10] sm:$0xf]
        %v6900 = vld [vmem:[%s6894 + $0x14] sm:$0xf]
        %v6901 = vld [vmem:[%s6894 + $0x18] sm:$0xf]
        %v6902 = vld [vmem:[%s6894 + $0x1c] sm:$0xf]
        %v6903 = vld [vmem:[%s6894 + $0x20] sm:$0xf]
        %v6904 = vld [vmem:[%s6894 + $0x24] sm:$0xf]
        %v6905 = vld [vmem:[%s6894 + $0x28] sm:$0xf]
        %v6906 = vld [vmem:[%s6894 + $0x2c] sm:$0xf]
        %v6907 = vld [vmem:[%s6894 + $0x30] sm:$0xf]
        %v6908 = vld [vmem:[%s6894 + $0x34] sm:$0xf]
        %v6909 = vld [vmem:[%s6894 + $0x38] sm:$0xf]
        %v6910 = vld [vmem:[%s6894 + $0x3c] sm:$0xf]
        %v6943 = vunpack.c.l.b16 %v6862
        %v6944 = vunpack.c.l.b16 %v6863
        %v6945 = vunpack.c.l.b16 %v6864
        %v6946 = vunpack.c.l.b16 %v6865
        %v6947 = vunpack.c.l.b16 %v6866
        %v6948 = vunpack.c.l.b16 %v6867
        %v6949 = vunpack.c.l.b16 %v6868
        %v6950 = vunpack.c.l.b16 %v6869
        %v6951 = vunpack.c.l.b16 %v6870
        %v6952 = vunpack.c.l.b16 %v6871
        %v6953 = vunpack.c.l.b16 %v6872
        %v6954 = vunpack.c.l.b16 %v6873
        %v6955 = vunpack.c.l.b16 %v6874
        %v6956 = vunpack.c.l.b16 %v6875
        %v6957 = vunpack.c.l.b16 %v6876
        %v6958 = vunpack.c.l.b16 %v6877
        %v6959 = vunpack.c.l.b16 %v6878
        %v6960 = vunpack.c.l.b16 %v6879
        %v6961 = vunpack.c.l.b16 %v6880
        %v6962 = vunpack.c.l.b16 %v6881
        %v6963 = vunpack.c.l.b16 %v6882
        %v6964 = vunpack.c.l.b16 %v6883
        %v6965 = vunpack.c.l.b16 %v6884
        %v6966 = vunpack.c.l.b16 %v6885
        %v6967 = vunpack.c.l.b16 %v6886
        %v6968 = vunpack.c.l.b16 %v6887
        %v6969 = vunpack.c.l.b16 %v6888
        %v6970 = vunpack.c.l.b16 %v6889
        %v6971 = vunpack.c.l.b16 %v6890
        %v6972 = vunpack.c.l.b16 %v6891
        %v6973 = vunpack.c.l.b16 %v6892
        %v6974 = vunpack.c.l.b16 %v6893
        %v6975 = vpack.c.b16 %v6944, %v6943
        %v6976 = vpack.c.b16 %v6946, %v6945
        %v6977 = vpack.c.b16 %v6948, %v6947
        %v6978 = vpack.c.b16 %v6950, %v6949
        %v6979 = vpack.c.b16 %v6952, %v6951
        %v6980 = vpack.c.b16 %v6954, %v6953
        %v6981 = vpack.c.b16 %v6956, %v6955
        %v6982 = vpack.c.b16 %v6958, %v6957
        %v6983 = vpack.c.b16 %v6960, %v6959
        %v6984 = vpack.c.b16 %v6962, %v6961
        %v6985 = vpack.c.b16 %v6964, %v6963
        %v6986 = vpack.c.b16 %v6966, %v6965
        %v6987 = vpack.c.b16 %v6968, %v6967
        %v6988 = vpack.c.b16 %v6970, %v6969
        %v6989 = vpack.c.b16 %v6972, %v6971
        %v6990 = vpack.c.b16 %v6974, %v6973
        %v7023 = vunpack.c.l.b16 %v6895
        %v7024 = vunpack.c.l.b16 %v6896
        %v7025 = vunpack.c.l.b16 %v6897
        %v7026 = vunpack.c.l.b16 %v6898
        %v7027 = vunpack.c.l.b16 %v6899
        %v7028 = vunpack.c.l.b16 %v6900
        %v7029 = vunpack.c.l.b16 %v6901
        %v7030 = vunpack.c.l.b16 %v6902
        %v7031 = vunpack.c.l.b16 %v6903
        %v7032 = vunpack.c.l.b16 %v6904
        %v7033 = vunpack.c.l.b16 %v6905
        %v7034 = vunpack.c.l.b16 %v6906
        %v7035 = vunpack.c.l.b16 %v6907
        %v7036 = vunpack.c.l.b16 %v6908
        %v7037 = vunpack.c.l.b16 %v6909
        %v7038 = vunpack.c.l.b16 %v6910
        %v7039 = vpack.c.b16 %v7024, %v7023
        %v7040 = vpack.c.b16 %v7026, %v7025
        %v7041 = vpack.c.b16 %v7028, %v7027
        %v7042 = vpack.c.b16 %v7030, %v7029
        %v7043 = vpack.c.b16 %v7032, %v7031
        %v7044 = vpack.c.b16 %v7034, %v7033
        %v7045 = vpack.c.b16 %v7036, %v7035
        %v7046 = vpack.c.b16 %v7038, %v7037
        %7055 = vmatpush.bf16.msra.mxu0 %v7046
        %7056 = vmatpush.bf16.msra.mxu0 %v7045
        %7057 = vmatpush.bf16.msra.mxu0 %v7044
        %7058 = vmatpush.bf16.msra.mxu0 %v7043
        %7059 = vmatpush.bf16.msra.mxu0 %v7042
        %7060 = vmatpush.bf16.msra.mxu0 %v7041
        %7061 = vmatpush.bf16.msra.mxu0 %v7040
        %7062 = vmatpush.bf16.msra.mxu0 %v7039
        %7063 = vmatmul.bf16.gmra.mxu0 %v6975
        %v7064 = vpop.f32.mrf.mxu0
        %v7065 = vadd.f32 0.0, %v7064
        %v7066 = vpop.f32.mrf.mxu0
        %v7067 = vadd.f32 0.0, %v7066
        %7068 = vmatmul.bf16.gmra.mxu0 %v6976
        %v7069 = vpop.f32.mrf.mxu0
        %v7070 = vadd.f32 0.0, %v7069
        %v7071 = vpop.f32.mrf.mxu0
        %v7072 = vadd.f32 0.0, %v7071
        %7073 = vmatmul.bf16.gmra.mxu0 %v6977
        %v7074 = vpop.f32.mrf.mxu0
        %v7075 = vadd.f32 0.0, %v7074
        %v7076 = vpop.f32.mrf.mxu0
        %v7077 = vadd.f32 0.0, %v7076
        %7078 = vmatmul.bf16.gmra.mxu0 %v6978
        %v7079 = vpop.f32.mrf.mxu0
        %v7080 = vadd.f32 0.0, %v7079
        %v7081 = vpop.f32.mrf.mxu0
        %v7082 = vadd.f32 0.0, %v7081
        %7083 = vmatmul.bf16.gmra.mxu0 %v6979
        %v7084 = vpop.f32.mrf.mxu0
        %v7085 = vadd.f32 0.0, %v7084
        %v7086 = vpop.f32.mrf.mxu0
        %v7087 = vadd.f32 0.0, %v7086
        %7088 = vmatmul.bf16.gmra.mxu0 %v6980
        %v7089 = vpop.f32.mrf.mxu0
        %v7090 = vadd.f32 0.0, %v7089
        %v7091 = vpop.f32.mrf.mxu0
        %v7092 = vadd.f32 0.0, %v7091
        %7093 = vmatmul.bf16.gmra.mxu0 %v6981
        %v7094 = vpop.f32.mrf.mxu0
        %v7095 = vadd.f32 0.0, %v7094
        %v7096 = vpop.f32.mrf.mxu0
        %v7097 = vadd.f32 0.0, %v7096
        %7098 = vmatmul.bf16.gmra.mxu0 %v6982
        %v7099 = vpop.f32.mrf.mxu0
        %v7100 = vadd.f32 0.0, %v7099
        %v7101 = vpop.f32.mrf.mxu0
        %v7102 = vadd.f32 0.0, %v7101
        %7103 = vmatmul.bf16.gmra.mxu0 %v6983
        %v7104 = vpop.f32.mrf.mxu0
        %v7105 = vadd.f32 0.0, %v7104
        %v7106 = vpop.f32.mrf.mxu0
        %v7107 = vadd.f32 0.0, %v7106
        %7108 = vmatmul.bf16.gmra.mxu0 %v6984
        %v7109 = vpop.f32.mrf.mxu0
        %v7110 = vadd.f32 0.0, %v7109
        %v7111 = vpop.f32.mrf.mxu0
        %v7112 = vadd.f32 0.0, %v7111
        %7113 = vmatmul.bf16.gmra.mxu0 %v6985
        %v7114 = vpop.f32.mrf.mxu0
        %v7115 = vadd.f32 0.0, %v7114
        %v7116 = vpop.f32.mrf.mxu0
        %v7117 = vadd.f32 0.0, %v7116
        %7118 = vmatmul.bf16.gmra.mxu0 %v6986
        %v7119 = vpop.f32.mrf.mxu0
        %v7120 = vadd.f32 0.0, %v7119
        %v7121 = vpop.f32.mrf.mxu0
        %v7122 = vadd.f32 0.0, %v7121
        %7123 = vmatmul.bf16.gmra.mxu0 %v6987
        %v7124 = vpop.f32.mrf.mxu0
        %v7125 = vadd.f32 0.0, %v7124
        %v7126 = vpop.f32.mrf.mxu0
        %v7127 = vadd.f32 0.0, %v7126
        %7128 = vmatmul.bf16.gmra.mxu0 %v6988
        %v7129 = vpop.f32.mrf.mxu0
        %v7130 = vadd.f32 0.0, %v7129
        %v7131 = vpop.f32.mrf.mxu0
        %v7132 = vadd.f32 0.0, %v7131
        %7133 = vmatmul.bf16.gmra.mxu0 %v6989
        %v7134 = vpop.f32.mrf.mxu0
        %v7135 = vadd.f32 0.0, %v7134
        %v7136 = vpop.f32.mrf.mxu0
        %v7137 = vadd.f32 0.0, %v7136
        %7138 = vmatmul.bf16.gmra.mxu0 %v6990
        %v7139 = vpop.f32.mrf.mxu0
        %v7140 = vadd.f32 0.0, %v7139
        %v7141 = vpop.f32.mrf.mxu0
        %v7142 = vadd.f32 0.0, %v7141
        %7143 = vdwg.mxu0
        %v7144 = vadd.f32 %v6830, %v7065
        %v7145 = vadd.f32 %v6831, %v7067
        %v7146 = vadd.f32 %v6832, %v7070
        %v7147 = vadd.f32 %v6833, %v7072
        %v7148 = vadd.f32 %v6834, %v7075
        %v7149 = vadd.f32 %v6835, %v7077
        %v7150 = vadd.f32 %v6836, %v7080
        %v7151 = vadd.f32 %v6837, %v7082
        %v7152 = vadd.f32 %v6838, %v7085
        %v7153 = vadd.f32 %v6839, %v7087
        %v7154 = vadd.f32 %v6840, %v7090
        %v7155 = vadd.f32 %v6841, %v7092
        %v7156 = vadd.f32 %v6842, %v7095
        %v7157 = vadd.f32 %v6843, %v7097
        %v7158 = vadd.f32 %v6844, %v7100
        %v7159 = vadd.f32 %v6845, %v7102
        %v7160 = vadd.f32 %v6846, %v7105
        %v7161 = vadd.f32 %v6847, %v7107
        %v7162 = vadd.f32 %v6848, %v7110
        %v7163 = vadd.f32 %v6849, %v7112
        %v7164 = vadd.f32 %v6850, %v7115
        %v7165 = vadd.f32 %v6851, %v7117
        %v7166 = vadd.f32 %v6852, %v7120
        %v7167 = vadd.f32 %v6853, %v7122
        %v7168 = vadd.f32 %v6854, %v7125
        %v7169 = vadd.f32 %v6855, %v7127
        %v7170 = vadd.f32 %v6856, %v7130
        %v7171 = vadd.f32 %v6857, %v7132
        %v7172 = vadd.f32 %v6858, %v7135
        %v7173 = vadd.f32 %v6859, %v7137
        %v7174 = vadd.f32 %v6860, %v7140
        %v7175 = vadd.f32 %v6861, %v7142
        %v7176 = vld [vmem:[%s5440] sm:$0xf]
        %v7177 = vld [vmem:[%s5440 + $0x4] sm:$0xf]
        %v7178 = vld [vmem:[%s5440 + $0x8] sm:$0x1]
        %v7179 = vld [vmem:[%s5440 + $0xc] sm:$0xf]
        %v7180 = vld [vmem:[%s5440 + $0x10] sm:$0xf]
        %v7181 = vld [vmem:[%s5440 + $0x14] sm:$0x1]
        %v7182 = vld [vmem:[%s5440 + $0x18] sm:$0xf]
        %v7183 = vld [vmem:[%s5440 + $0x1c] sm:$0xf]
        %v7184 = vld [vmem:[%s5440 + $0x20] sm:$0x1]
        %v7185 = vld [vmem:[%s5440 + $0x24] sm:$0xf]
        %v7186 = vld [vmem:[%s5440 + $0x28] sm:$0xf]
        %v7187 = vld [vmem:[%s5440 + $0x2c] sm:$0x1]
        %v7188 = vld [vmem:[%s5440 + $0x30] sm:$0xf]
        %v7189 = vld [vmem:[%s5440 + $0x34] sm:$0xf]
        %v7190 = vld [vmem:[%s5440 + $0x38] sm:$0x1]
        %v7191 = vld [vmem:[%s5440 + $0x3c] sm:$0xf]
        %v7192 = vld [vmem:[%s5440 + $0x40] sm:$0xf]
        %v7193 = vld [vmem:[%s5440 + $0x44] sm:$0x1]
        %v7194 = vld [vmem:[%s5440 + $0x48] sm:$0xf]
        %v7195 = vld [vmem:[%s5440 + $0x4c] sm:$0xf]
        %v7196 = vld [vmem:[%s5440 + $0x50] sm:$0x1]
        %v7197 = vld [vmem:[%s5440 + $0x54] sm:$0xf]
        %v7198 = vld [vmem:[%s5440 + $0x58] sm:$0xf]
        %v7199 = vld [vmem:[%s5440 + $0x5c] sm:$0x1]
        %v7200 = vld [vmem:[%s5440 + $0x60] sm:$0xf]
        %v7201 = vld [vmem:[%s5440 + $0x64] sm:$0xf]
        %v7202 = vld [vmem:[%s5440 + $0x68] sm:$0x1]
        %v7203 = vld [vmem:[%s5440 + $0x6c] sm:$0xf]
        %v7204 = vld [vmem:[%s5440 + $0x70] sm:$0xf]
        %v7205 = vld [vmem:[%s5440 + $0x74] sm:$0x1]
        %v7206 = vld [vmem:[%s5440 + $0x78] sm:$0xf]
        %v7207 = vld [vmem:[%s5440 + $0x7c] sm:$0xf]
        %v7208 = vld [vmem:[%s5440 + $0x80] sm:$0x1]
        %v7209 = vld [vmem:[%s5440 + $0x84] sm:$0xf]
        %v7210 = vld [vmem:[%s5440 + $0x88] sm:$0xf]
        %v7211 = vld [vmem:[%s5440 + $0x8c] sm:$0x1]
        %v7212 = vld [vmem:[%s5440 + $0x90] sm:$0xf]
        %v7213 = vld [vmem:[%s5440 + $0x94] sm:$0xf]
        %v7214 = vld [vmem:[%s5440 + $0x98] sm:$0x1]
        %v7215 = vld [vmem:[%s5440 + $0x9c] sm:$0xf]
        %v7216 = vld [vmem:[%s5440 + $0xa0] sm:$0xf]
        %v7217 = vld [vmem:[%s5440 + $0xa4] sm:$0x1]
        %v7218 = vld [vmem:[%s5440 + $0xa8] sm:$0xf]
        %v7219 = vld [vmem:[%s5440 + $0xac] sm:$0xf]
        %v7220 = vld [vmem:[%s5440 + $0xb0] sm:$0x1]
        %v7221 = vld [vmem:[%s5440 + $0xb4] sm:$0xf]
        %v7222 = vld [vmem:[%s5440 + $0xb8] sm:$0xf]
        %v7223 = vld [vmem:[%s5440 + $0xbc] sm:$0x1]
        %v7225 = vshrl.u32 %v7176, 16
        %v7227 = vrot.slane %v7225, 4
        %v7228 = vshll.u32 %v7176, 16
        %v7230 = vrot.slane %v7228, 5
        %v7231 = vor.u32 %v7227, %v7230
        %v7232 = vrot.slane %v7231, 4
        %v7234 = vshll.u32 %v7177, 16
        %v7236 = vrot.slane %v7234, 5
        %v7237 = vsel %vm926, %v7232, %v7236
        %v7238 = vshrl.u32 %v7177, 16
        %v7240 = vrot.slane %v7238, 4
        %v7241 = vor.u32 %v7240, %v7236
        %v7242 = vrot.slane %v7241, 4
        %v7244 = vshll.u32 %v7178, 16
        %v7246 = vrot.slane %v7244, 5
        %v7247 = vsel %vm926, %v7242, %v7246
        %v7249 = vshrl.u32 %v7179, 16
        %v7251 = vrot.slane %v7249, 4
        %v7252 = vshll.u32 %v7179, 16
        %v7254 = vrot.slane %v7252, 5
        %v7255 = vor.u32 %v7251, %v7254
        %v7256 = vrot.slane %v7255, 4
        %v7258 = vshll.u32 %v7180, 16
        %v7260 = vrot.slane %v7258, 5
        %v7261 = vsel %vm926, %v7256, %v7260
        %v7262 = vshrl.u32 %v7180, 16
        %v7264 = vrot.slane %v7262, 4
        %v7265 = vor.u32 %v7264, %v7260
        %v7266 = vrot.slane %v7265, 4
        %v7268 = vshll.u32 %v7181, 16
        %v7270 = vrot.slane %v7268, 5
        %v7271 = vsel %vm926, %v7266, %v7270
        %v7273 = vshrl.u32 %v7182, 16
        %v7275 = vrot.slane %v7273, 4
        %v7276 = vshll.u32 %v7182, 16
        %v7278 = vrot.slane %v7276, 5
        %v7279 = vor.u32 %v7275, %v7278
        %v7280 = vrot.slane %v7279, 4
        %v7282 = vshll.u32 %v7183, 16
        %v7284 = vrot.slane %v7282, 5
        %v7285 = vsel %vm926, %v7280, %v7284
        %v7286 = vshrl.u32 %v7183, 16
        %v7288 = vrot.slane %v7286, 4
        %v7289 = vor.u32 %v7288, %v7284
        %v7290 = vrot.slane %v7289, 4
        %v7292 = vshll.u32 %v7184, 16
        %v7294 = vrot.slane %v7292, 5
        %v7295 = vsel %vm926, %v7290, %v7294
        %v7297 = vshrl.u32 %v7185, 16
        %v7299 = vrot.slane %v7297, 4
        %v7300 = vshll.u32 %v7185, 16
        %v7302 = vrot.slane %v7300, 5
        %v7303 = vor.u32 %v7299, %v7302
        %v7304 = vrot.slane %v7303, 4
        %v7306 = vshll.u32 %v7186, 16
        %v7308 = vrot.slane %v7306, 5
        %v7309 = vsel %vm926, %v7304, %v7308
        %v7310 = vshrl.u32 %v7186, 16
        %v7312 = vrot.slane %v7310, 4
        %v7313 = vor.u32 %v7312, %v7308
        %v7314 = vrot.slane %v7313, 4
        %v7316 = vshll.u32 %v7187, 16
        %v7318 = vrot.slane %v7316, 5
        %v7319 = vsel %vm926, %v7314, %v7318
        %v7321 = vshrl.u32 %v7188, 16
        %v7323 = vrot.slane %v7321, 4
        %v7324 = vshll.u32 %v7188, 16
        %v7326 = vrot.slane %v7324, 5
        %v7327 = vor.u32 %v7323, %v7326
        %v7328 = vrot.slane %v7327, 4
        %v7330 = vshll.u32 %v7189, 16
        %v7332 = vrot.slane %v7330, 5
        %v7333 = vsel %vm926, %v7328, %v7332
        %v7334 = vshrl.u32 %v7189, 16
        %v7336 = vrot.slane %v7334, 4
        %v7337 = vor.u32 %v7336, %v7332
        %v7338 = vrot.slane %v7337, 4
        %v7340 = vshll.u32 %v7190, 16
        %v7342 = vrot.slane %v7340, 5
        %v7343 = vsel %vm926, %v7338, %v7342
        %v7345 = vshrl.u32 %v7191, 16
        %v7347 = vrot.slane %v7345, 4
        %v7348 = vshll.u32 %v7191, 16
        %v7350 = vrot.slane %v7348, 5
        %v7351 = vor.u32 %v7347, %v7350
        %v7352 = vrot.slane %v7351, 4
        %v7354 = vshll.u32 %v7192, 16
        %v7356 = vrot.slane %v7354, 5
        %v7357 = vsel %vm926, %v7352, %v7356
        %v7358 = vshrl.u32 %v7192, 16
        %v7360 = vrot.slane %v7358, 4
        %v7361 = vor.u32 %v7360, %v7356
        %v7362 = vrot.slane %v7361, 4
        %v7364 = vshll.u32 %v7193, 16
        %v7366 = vrot.slane %v7364, 5
        %v7367 = vsel %vm926, %v7362, %v7366
        %v7369 = vshrl.u32 %v7194, 16
        %v7371 = vrot.slane %v7369, 4
        %v7372 = vshll.u32 %v7194, 16
        %v7374 = vrot.slane %v7372, 5
        %v7375 = vor.u32 %v7371, %v7374
        %v7376 = vrot.slane %v7375, 4
        %v7378 = vshll.u32 %v7195, 16
        %v7380 = vrot.slane %v7378, 5
        %v7381 = vsel %vm926, %v7376, %v7380
        %v7382 = vshrl.u32 %v7195, 16
        %v7384 = vrot.slane %v7382, 4
        %v7385 = vor.u32 %v7384, %v7380
        %v7386 = vrot.slane %v7385, 4
        %v7388 = vshll.u32 %v7196, 16
        %v7390 = vrot.slane %v7388, 5
        %v7391 = vsel %vm926, %v7386, %v7390
        %v7393 = vshrl.u32 %v7197, 16
        %v7395 = vrot.slane %v7393, 4
        %v7396 = vshll.u32 %v7197, 16
        %v7398 = vrot.slane %v7396, 5
        %v7399 = vor.u32 %v7395, %v7398
        %v7400 = vrot.slane %v7399, 4
        %v7402 = vshll.u32 %v7198, 16
        %v7404 = vrot.slane %v7402, 5
        %v7405 = vsel %vm926, %v7400, %v7404
        %v7406 = vshrl.u32 %v7198, 16
        %v7408 = vrot.slane %v7406, 4
        %v7409 = vor.u32 %v7408, %v7404
        %v7410 = vrot.slane %v7409, 4
        %v7412 = vshll.u32 %v7199, 16
        %v7414 = vrot.slane %v7412, 5
        %v7415 = vsel %vm926, %v7410, %v7414
        %v7417 = vshrl.u32 %v7200, 16
        %v7419 = vrot.slane %v7417, 4
        %v7420 = vshll.u32 %v7200, 16
        %v7422 = vrot.slane %v7420, 5
        %v7423 = vor.u32 %v7419, %v7422
        %v7424 = vrot.slane %v7423, 4
        %v7426 = vshll.u32 %v7201, 16
        %v7428 = vrot.slane %v7426, 5
        %v7429 = vsel %vm926, %v7424, %v7428
        %v7430 = vshrl.u32 %v7201, 16
        %v7432 = vrot.slane %v7430, 4
        %v7433 = vor.u32 %v7432, %v7428
        %v7434 = vrot.slane %v7433, 4
        %v7436 = vshll.u32 %v7202, 16
        %v7438 = vrot.slane %v7436, 5
        %v7439 = vsel %vm926, %v7434, %v7438
        %v7441 = vshrl.u32 %v7203, 16
        %v7443 = vrot.slane %v7441, 4
        %v7444 = vshll.u32 %v7203, 16
        %v7446 = vrot.slane %v7444, 5
        %v7447 = vor.u32 %v7443, %v7446
        %v7448 = vrot.slane %v7447, 4
        %v7450 = vshll.u32 %v7204, 16
        %v7452 = vrot.slane %v7450, 5
        %v7453 = vsel %vm926, %v7448, %v7452
        %v7454 = vshrl.u32 %v7204, 16
        %v7456 = vrot.slane %v7454, 4
        %v7457 = vor.u32 %v7456, %v7452
        %v7458 = vrot.slane %v7457, 4
        %v7460 = vshll.u32 %v7205, 16
        %v7462 = vrot.slane %v7460, 5
        %v7463 = vsel %vm926, %v7458, %v7462
        %v7465 = vshrl.u32 %v7206, 16
        %v7467 = vrot.slane %v7465, 4
        %v7468 = vshll.u32 %v7206, 16
        %v7470 = vrot.slane %v7468, 5
        %v7471 = vor.u32 %v7467, %v7470
        %v7472 = vrot.slane %v7471, 4
        %v7474 = vshll.u32 %v7207, 16
        %v7476 = vrot.slane %v7474, 5
        %v7477 = vsel %vm926, %v7472, %v7476
        %v7478 = vshrl.u32 %v7207, 16
        %v7480 = vrot.slane %v7478, 4
        %v7481 = vor.u32 %v7480, %v7476
        %v7482 = vrot.slane %v7481, 4
        %v7484 = vshll.u32 %v7208, 16
        %v7486 = vrot.slane %v7484, 5
        %v7487 = vsel %vm926, %v7482, %v7486
        %v7489 = vshrl.u32 %v7209, 16
        %v7491 = vrot.slane %v7489, 4
        %v7492 = vshll.u32 %v7209, 16
        %v7494 = vrot.slane %v7492, 5
        %v7495 = vor.u32 %v7491, %v7494
        %v7496 = vrot.slane %v7495, 4
        %v7498 = vshll.u32 %v7210, 16
        %v7500 = vrot.slane %v7498, 5
        %v7501 = vsel %vm926, %v7496, %v7500
        %v7502 = vshrl.u32 %v7210, 16
        %v7504 = vrot.slane %v7502, 4
        %v7505 = vor.u32 %v7504, %v7500
        %v7506 = vrot.slane %v7505, 4
        %v7508 = vshll.u32 %v7211, 16
        %v7510 = vrot.slane %v7508, 5
        %v7511 = vsel %vm926, %v7506, %v7510
        %v7513 = vshrl.u32 %v7212, 16
        %v7515 = vrot.slane %v7513, 4
        %v7516 = vshll.u32 %v7212, 16
        %v7518 = vrot.slane %v7516, 5
        %v7519 = vor.u32 %v7515, %v7518
        %v7520 = vrot.slane %v7519, 4
        %v7522 = vshll.u32 %v7213, 16
        %v7524 = vrot.slane %v7522, 5
        %v7525 = vsel %vm926, %v7520, %v7524
        %v7526 = vshrl.u32 %v7213, 16
        %v7528 = vrot.slane %v7526, 4
        %v7529 = vor.u32 %v7528, %v7524
        %v7530 = vrot.slane %v7529, 4
        %v7532 = vshll.u32 %v7214, 16
        %v7534 = vrot.slane %v7532, 5
        %v7535 = vsel %vm926, %v7530, %v7534
        %v7537 = vshrl.u32 %v7215, 16
        %v7539 = vrot.slane %v7537, 4
        %v7540 = vshll.u32 %v7215, 16
        %v7542 = vrot.slane %v7540, 5
        %v7543 = vor.u32 %v7539, %v7542
        %v7544 = vrot.slane %v7543, 4
        %v7546 = vshll.u32 %v7216, 16
        %v7548 = vrot.slane %v7546, 5
        %v7549 = vsel %vm926, %v7544, %v7548
        %v7550 = vshrl.u32 %v7216, 16
        %v7552 = vrot.slane %v7550, 4
        %v7553 = vor.u32 %v7552, %v7548
        %v7554 = vrot.slane %v7553, 4
        %v7556 = vshll.u32 %v7217, 16
        %v7558 = vrot.slane %v7556, 5
        %v7559 = vsel %vm926, %v7554, %v7558
        %v7561 = vshrl.u32 %v7218, 16
        %v7563 = vrot.slane %v7561, 4
        %v7564 = vshll.u32 %v7218, 16
        %v7566 = vrot.slane %v7564, 5
        %v7567 = vor.u32 %v7563, %v7566
        %v7568 = vrot.slane %v7567, 4
        %v7570 = vshll.u32 %v7219, 16
        %v7572 = vrot.slane %v7570, 5
        %v7573 = vsel %vm926, %v7568, %v7572
        %v7574 = vshrl.u32 %v7219, 16
        %v7576 = vrot.slane %v7574, 4
        %v7577 = vor.u32 %v7576, %v7572
        %v7578 = vrot.slane %v7577, 4
        %v7580 = vshll.u32 %v7220, 16
        %v7582 = vrot.slane %v7580, 5
        %v7583 = vsel %vm926, %v7578, %v7582
        %v7585 = vshrl.u32 %v7221, 16
        %v7587 = vrot.slane %v7585, 4
        %v7588 = vshll.u32 %v7221, 16
        %v7590 = vrot.slane %v7588, 5
        %v7591 = vor.u32 %v7587, %v7590
        %v7592 = vrot.slane %v7591, 4
        %v7594 = vshll.u32 %v7222, 16
        %v7596 = vrot.slane %v7594, 5
        %v7597 = vsel %vm926, %v7592, %v7596
        %v7598 = vshrl.u32 %v7222, 16
        %v7600 = vrot.slane %v7598, 4
        %v7601 = vor.u32 %v7600, %v7596
        %v7602 = vrot.slane %v7601, 4
        %v7604 = vshll.u32 %v7223, 16
        %v7606 = vrot.slane %v7604, 5
        %v7607 = vsel %vm926, %v7602, %v7606
        %s7608 = scalar_lea.vmem [#allocation9], 256
        %v7609 = vld [vmem:[%s7608] sm:$0xf]
        %v7610 = vld [vmem:[%s7608 + $0x4] sm:$0xf]
        %v7611 = vld [vmem:[%s7608 + $0x8] sm:$0xf]
        %v7612 = vld [vmem:[%s7608 + $0xc] sm:$0xf]
        %v7613 = vld [vmem:[%s7608 + $0x10] sm:$0xf]
        %v7614 = vld [vmem:[%s7608 + $0x14] sm:$0xf]
        %v7615 = vld [vmem:[%s7608 + $0x18] sm:$0xf]
        %v7616 = vld [vmem:[%s7608 + $0x1c] sm:$0xf]
        %v7617 = vld [vmem:[%s7608 + $0x20] sm:$0xf]
        %v7618 = vld [vmem:[%s7608 + $0x24] sm:$0xf]
        %v7619 = vld [vmem:[%s7608 + $0x28] sm:$0xf]
        %v7620 = vld [vmem:[%s7608 + $0x2c] sm:$0xf]
        %v7621 = vld [vmem:[%s7608 + $0x30] sm:$0xf]
        %v7622 = vld [vmem:[%s7608 + $0x34] sm:$0xf]
        %v7623 = vld [vmem:[%s7608 + $0x38] sm:$0xf]
        %v7624 = vld [vmem:[%s7608 + $0x3c] sm:$0xf]
        %v7625 = vunpack.c.l.b16 %v7237
        %v7626 = vunpack.c.l.b16 %v7247
        %v7627 = vunpack.c.l.b16 %v7261
        %v7628 = vunpack.c.l.b16 %v7271
        %v7629 = vunpack.c.l.b16 %v7285
        %v7630 = vunpack.c.l.b16 %v7295
        %v7631 = vunpack.c.l.b16 %v7309
        %v7632 = vunpack.c.l.b16 %v7319
        %v7633 = vunpack.c.l.b16 %v7333
        %v7634 = vunpack.c.l.b16 %v7343
        %v7635 = vunpack.c.l.b16 %v7357
        %v7636 = vunpack.c.l.b16 %v7367
        %v7637 = vunpack.c.l.b16 %v7381
        %v7638 = vunpack.c.l.b16 %v7391
        %v7639 = vunpack.c.l.b16 %v7405
        %v7640 = vunpack.c.l.b16 %v7415
        %v7641 = vunpack.c.l.b16 %v7429
        %v7642 = vunpack.c.l.b16 %v7439
        %v7643 = vunpack.c.l.b16 %v7453
        %v7644 = vunpack.c.l.b16 %v7463
        %v7645 = vunpack.c.l.b16 %v7477
        %v7646 = vunpack.c.l.b16 %v7487
        %v7647 = vunpack.c.l.b16 %v7501
        %v7648 = vunpack.c.l.b16 %v7511
        %v7649 = vunpack.c.l.b16 %v7525
        %v7650 = vunpack.c.l.b16 %v7535
        %v7651 = vunpack.c.l.b16 %v7549
        %v7652 = vunpack.c.l.b16 %v7559
        %v7653 = vunpack.c.l.b16 %v7573
        %v7654 = vunpack.c.l.b16 %v7583
        %v7655 = vunpack.c.l.b16 %v7597
        %v7656 = vunpack.c.l.b16 %v7607
        %v7657 = vpack.c.b16 %v7626, %v7625
        %v7658 = vpack.c.b16 %v7628, %v7627
        %v7659 = vpack.c.b16 %v7630, %v7629
        %v7660 = vpack.c.b16 %v7632, %v7631
        %v7661 = vpack.c.b16 %v7634, %v7633
        %v7662 = vpack.c.b16 %v7636, %v7635
        %v7663 = vpack.c.b16 %v7638, %v7637
        %v7664 = vpack.c.b16 %v7640, %v7639
        %v7665 = vpack.c.b16 %v7642, %v7641
        %v7666 = vpack.c.b16 %v7644, %v7643
        %v7667 = vpack.c.b16 %v7646, %v7645
        %v7668 = vpack.c.b16 %v7648, %v7647
        %v7669 = vpack.c.b16 %v7650, %v7649
        %v7670 = vpack.c.b16 %v7652, %v7651
        %v7671 = vpack.c.b16 %v7654, %v7653
        %v7672 = vpack.c.b16 %v7656, %v7655
        %v7705 = vunpack.c.l.b16 %v7609
        %v7706 = vunpack.c.l.b16 %v7610
        %v7707 = vunpack.c.l.b16 %v7611
        %v7708 = vunpack.c.l.b16 %v7612
        %v7709 = vunpack.c.l.b16 %v7613
        %v7710 = vunpack.c.l.b16 %v7614
        %v7711 = vunpack.c.l.b16 %v7615
        %v7712 = vunpack.c.l.b16 %v7616
        %v7713 = vunpack.c.l.b16 %v7617
        %v7714 = vunpack.c.l.b16 %v7618
        %v7715 = vunpack.c.l.b16 %v7619
        %v7716 = vunpack.c.l.b16 %v7620
        %v7717 = vunpack.c.l.b16 %v7621
        %v7718 = vunpack.c.l.b16 %v7622
        %v7719 = vunpack.c.l.b16 %v7623
        %v7720 = vunpack.c.l.b16 %v7624
        %v7721 = vpack.c.b16 %v7706, %v7705
        %v7722 = vpack.c.b16 %v7708, %v7707
        %v7723 = vpack.c.b16 %v7710, %v7709
        %v7724 = vpack.c.b16 %v7712, %v7711
        %v7725 = vpack.c.b16 %v7714, %v7713
        %v7726 = vpack.c.b16 %v7716, %v7715
        %v7727 = vpack.c.b16 %v7718, %v7717
        %v7728 = vpack.c.b16 %v7720, %v7719
        %7737 = vmatpush.bf16.msra.mxu0 %v7728
        %7738 = vmatpush.bf16.msra.mxu0 %v7727
        %7739 = vmatpush.bf16.msra.mxu0 %v7726
        %7740 = vmatpush.bf16.msra.mxu0 %v7725
        %7741 = vmatpush.bf16.msra.mxu0 %v7724
        %7742 = vmatpush.bf16.msra.mxu0 %v7723
        %7743 = vmatpush.bf16.msra.mxu0 %v7722
        %7744 = vmatpush.bf16.msra.mxu0 %v7721
        %7745 = vmatmul.bf16.gmra.mxu0 %v7657
        %v7746 = vpop.f32.mrf.mxu0
        %v7747 = vadd.f32 0.0, %v7746
        %v7748 = vpop.f32.mrf.mxu0
        %v7749 = vadd.f32 0.0, %v7748
        %7750 = vmatmul.bf16.gmra.mxu0 %v7658
        %v7751 = vpop.f32.mrf.mxu0
        %v7752 = vadd.f32 0.0, %v7751
        %v7753 = vpop.f32.mrf.mxu0
        %v7754 = vadd.f32 0.0, %v7753
        %7755 = vmatmul.bf16.gmra.mxu0 %v7659
        %v7756 = vpop.f32.mrf.mxu0
        %v7757 = vadd.f32 0.0, %v7756
        %v7758 = vpop.f32.mrf.mxu0
        %v7759 = vadd.f32 0.0, %v7758
        %7760 = vmatmul.bf16.gmra.mxu0 %v7660
        %v7761 = vpop.f32.mrf.mxu0
        %v7762 = vadd.f32 0.0, %v7761
        %v7763 = vpop.f32.mrf.mxu0
        %v7764 = vadd.f32 0.0, %v7763
        %7765 = vmatmul.bf16.gmra.mxu0 %v7661
        %v7766 = vpop.f32.mrf.mxu0
        %v7767 = vadd.f32 0.0, %v7766
        %v7768 = vpop.f32.mrf.mxu0
        %v7769 = vadd.f32 0.0, %v7768
        %7770 = vmatmul.bf16.gmra.mxu0 %v7662
        %v7771 = vpop.f32.mrf.mxu0
        %v7772 = vadd.f32 0.0, %v7771
        %v7773 = vpop.f32.mrf.mxu0
        %v7774 = vadd.f32 0.0, %v7773
        %7775 = vmatmul.bf16.gmra.mxu0 %v7663
        %v7776 = vpop.f32.mrf.mxu0
        %v7777 = vadd.f32 0.0, %v7776
        %v7778 = vpop.f32.mrf.mxu0
        %v7779 = vadd.f32 0.0, %v7778
        %7780 = vmatmul.bf16.gmra.mxu0 %v7664
        %v7781 = vpop.f32.mrf.mxu0
        %v7782 = vadd.f32 0.0, %v7781
        %v7783 = vpop.f32.mrf.mxu0
        %v7784 = vadd.f32 0.0, %v7783
        %7785 = vmatmul.bf16.gmra.mxu0 %v7665
        %v7786 = vpop.f32.mrf.mxu0
        %v7787 = vadd.f32 0.0, %v7786
        %v7788 = vpop.f32.mrf.mxu0
        %v7789 = vadd.f32 0.0, %v7788
        %7790 = vmatmul.bf16.gmra.mxu0 %v7666
        %v7791 = vpop.f32.mrf.mxu0
        %v7792 = vadd.f32 0.0, %v7791
        %v7793 = vpop.f32.mrf.mxu0
        %v7794 = vadd.f32 0.0, %v7793
        %7795 = vmatmul.bf16.gmra.mxu0 %v7667
        %v7796 = vpop.f32.mrf.mxu0
        %v7797 = vadd.f32 0.0, %v7796
        %v7798 = vpop.f32.mrf.mxu0
        %v7799 = vadd.f32 0.0, %v7798
        %7800 = vmatmul.bf16.gmra.mxu0 %v7668
        %v7801 = vpop.f32.mrf.mxu0
        %v7802 = vadd.f32 0.0, %v7801
        %v7803 = vpop.f32.mrf.mxu0
        %v7804 = vadd.f32 0.0, %v7803
        %7805 = vmatmul.bf16.gmra.mxu0 %v7669
        %v7806 = vpop.f32.mrf.mxu0
        %v7807 = vadd.f32 0.0, %v7806
        %v7808 = vpop.f32.mrf.mxu0
        %v7809 = vadd.f32 0.0, %v7808
        %7810 = vmatmul.bf16.gmra.mxu0 %v7670
        %v7811 = vpop.f32.mrf.mxu0
        %v7812 = vadd.f32 0.0, %v7811
        %v7813 = vpop.f32.mrf.mxu0
        %v7814 = vadd.f32 0.0, %v7813
        %7815 = vmatmul.bf16.gmra.mxu0 %v7671
        %v7816 = vpop.f32.mrf.mxu0
        %v7817 = vadd.f32 0.0, %v7816
        %v7818 = vpop.f32.mrf.mxu0
        %v7819 = vadd.f32 0.0, %v7818
        %7820 = vmatmul.bf16.gmra.mxu0 %v7672
        %v7821 = vpop.f32.mrf.mxu0
        %v7822 = vadd.f32 0.0, %v7821
        %v7823 = vpop.f32.mrf.mxu0
        %v7824 = vadd.f32 0.0, %v7823
        %7825 = vdwg.mxu0
        %v7826 = vadd.f32 %v7144, %v7747
        %v7827 = vadd.f32 %v7145, %v7749
        %v7828 = vadd.f32 %v7146, %v7752
        %v7829 = vadd.f32 %v7147, %v7754
        %v7830 = vadd.f32 %v7148, %v7757
        %v7831 = vadd.f32 %v7149, %v7759
        %v7832 = vadd.f32 %v7150, %v7762
        %v7833 = vadd.f32 %v7151, %v7764
        %v7834 = vadd.f32 %v7152, %v7767
        %v7835 = vadd.f32 %v7153, %v7769
        %v7836 = vadd.f32 %v7154, %v7772
        %v7837 = vadd.f32 %v7155, %v7774
        %v7838 = vadd.f32 %v7156, %v7777
        %v7839 = vadd.f32 %v7157, %v7779
        %v7840 = vadd.f32 %v7158, %v7782
        %v7841 = vadd.f32 %v7159, %v7784
        %v7842 = vadd.f32 %v7160, %v7787
        %v7843 = vadd.f32 %v7161, %v7789
        %v7844 = vadd.f32 %v7162, %v7792
        %v7845 = vadd.f32 %v7163, %v7794
        %v7846 = vadd.f32 %v7164, %v7797
        %v7847 = vadd.f32 %v7165, %v7799
        %v7848 = vadd.f32 %v7166, %v7802
        %v7849 = vadd.f32 %v7167, %v7804
        %v7850 = vadd.f32 %v7168, %v7807
        %v7851 = vadd.f32 %v7169, %v7809
        %v7852 = vadd.f32 %v7170, %v7812
        %v7853 = vadd.f32 %v7171, %v7814
        %v7854 = vadd.f32 %v7172, %v7817
        %v7855 = vadd.f32 %v7173, %v7819
        %v7856 = vadd.f32 %v7174, %v7822
        %v7857 = vadd.f32 %v7175, %v7824
        %v7858 = vld [vmem:[%s5440] sm:$0xe]
        %v7859 = vld [vmem:[%s5440 + $0xc] sm:$0xe]
        %v7860 = vld [vmem:[%s5440 + $0x18] sm:$0xe]
        %v7861 = vld [vmem:[%s5440 + $0x24] sm:$0xe]
        %v7862 = vld [vmem:[%s5440 + $0x30] sm:$0xe]
        %v7863 = vld [vmem:[%s5440 + $0x3c] sm:$0xe]
        %v7864 = vld [vmem:[%s5440 + $0x48] sm:$0xe]
        %v7865 = vld [vmem:[%s5440 + $0x54] sm:$0xe]
        %v7866 = vld [vmem:[%s5440 + $0x60] sm:$0xe]
        %v7867 = vld [vmem:[%s5440 + $0x6c] sm:$0xe]
        %v7868 = vld [vmem:[%s5440 + $0x78] sm:$0xe]
        %v7869 = vld [vmem:[%s5440 + $0x84] sm:$0xe]
        %v7870 = vld [vmem:[%s5440 + $0x90] sm:$0xe]
        %v7871 = vld [vmem:[%s5440 + $0x9c] sm:$0xe]
        %v7872 = vld [vmem:[%s5440 + $0xa8] sm:$0xe]
        %v7873 = vld [vmem:[%s5440 + $0xb4] sm:$0xe]
        %v7922 = vrot.slane %v7858, 5
        %v7923 = vrot.slane %v7922, 4
        %v7924 = vrot.slane %v7177, 5
        %v7925 = vsel %vm1812, %v7923, %v7924
        %v7926 = vrot.slane %v7924, 4
        %v7927 = vrot.slane %v7178, 5
        %v7928 = vsel %vm1812, %v7926, %v7927
        %v7929 = vrot.slane %v7859, 5
        %v7930 = vrot.slane %v7929, 4
        %v7931 = vrot.slane %v7180, 5
        %v7932 = vsel %vm1812, %v7930, %v7931
        %v7933 = vrot.slane %v7931, 4
        %v7934 = vrot.slane %v7181, 5
        %v7935 = vsel %vm1812, %v7933, %v7934
        %v7936 = vrot.slane %v7860, 5
        %v7937 = vrot.slane %v7936, 4
        %v7938 = vrot.slane %v7183, 5
        %v7939 = vsel %vm1812, %v7937, %v7938
        %v7940 = vrot.slane %v7938, 4
        %v7941 = vrot.slane %v7184, 5
        %v7942 = vsel %vm1812, %v7940, %v7941
        %v7943 = vrot.slane %v7861, 5
        %v7944 = vrot.slane %v7943, 4
        %v7945 = vrot.slane %v7186, 5
        %v7946 = vsel %vm1812, %v7944, %v7945
        %v7947 = vrot.slane %v7945, 4
        %v7948 = vrot.slane %v7187, 5
        %v7949 = vsel %vm1812, %v7947, %v7948
        %v7950 = vrot.slane %v7862, 5
        %v7951 = vrot.slane %v7950, 4
        %v7952 = vrot.slane %v7189, 5
        %v7953 = vsel %vm1812, %v7951, %v7952
        %v7954 = vrot.slane %v7952, 4
        %v7955 = vrot.slane %v7190, 5
        %v7956 = vsel %vm1812, %v7954, %v7955
        %v7957 = vrot.slane %v7863, 5
        %v7958 = vrot.slane %v7957, 4
        %v7959 = vrot.slane %v7192, 5
        %v7960 = vsel %vm1812, %v7958, %v7959
        %v7961 = vrot.slane %v7959, 4
        %v7962 = vrot.slane %v7193, 5
        %v7963 = vsel %vm1812, %v7961, %v7962
        %v7964 = vrot.slane %v7864, 5
        %v7965 = vrot.slane %v7964, 4
        %v7966 = vrot.slane %v7195, 5
        %v7967 = vsel %vm1812, %v7965, %v7966
        %v7968 = vrot.slane %v7966, 4
        %v7969 = vrot.slane %v7196, 5
        %v7970 = vsel %vm1812, %v7968, %v7969
        %v7971 = vrot.slane %v7865, 5
        %v7972 = vrot.slane %v7971, 4
        %v7973 = vrot.slane %v7198, 5
        %v7974 = vsel %vm1812, %v7972, %v7973
        %v7975 = vrot.slane %v7973, 4
        %v7976 = vrot.slane %v7199, 5
        %v7977 = vsel %vm1812, %v7975, %v7976
        %v7978 = vrot.slane %v7866, 5
        %v7979 = vrot.slane %v7978, 4
        %v7980 = vrot.slane %v7201, 5
        %v7981 = vsel %vm1812, %v7979, %v7980
        %v7982 = vrot.slane %v7980, 4
        %v7983 = vrot.slane %v7202, 5
        %v7984 = vsel %vm1812, %v7982, %v7983
        %v7985 = vrot.slane %v7867, 5
        %v7986 = vrot.slane %v7985, 4
        %v7987 = vrot.slane %v7204, 5
        %v7988 = vsel %vm1812, %v7986, %v7987
        %v7989 = vrot.slane %v7987, 4
        %v7990 = vrot.slane %v7205, 5
        %v7991 = vsel %vm1812, %v7989, %v7990
        %v7992 = vrot.slane %v7868, 5
        %v7993 = vrot.slane %v7992, 4
        %v7994 = vrot.slane %v7207, 5
        %v7995 = vsel %vm1812, %v7993, %v7994
        %v7996 = vrot.slane %v7994, 4
        %v7997 = vrot.slane %v7208, 5
        %v7998 = vsel %vm1812, %v7996, %v7997
        %v7999 = vrot.slane %v7869, 5
        %v8000 = vrot.slane %v7999, 4
        %v8001 = vrot.slane %v7210, 5
        %v8002 = vsel %vm1812, %v8000, %v8001
        %v8003 = vrot.slane %v8001, 4
        %v8004 = vrot.slane %v7211, 5
        %v8005 = vsel %vm1812, %v8003, %v8004
        %v8006 = vrot.slane %v7870, 5
        %v8007 = vrot.slane %v8006, 4
        %v8008 = vrot.slane %v7213, 5
        %v8009 = vsel %vm1812, %v8007, %v8008
        %v8010 = vrot.slane %v8008, 4
        %v8011 = vrot.slane %v7214, 5
        %v8012 = vsel %vm1812, %v8010, %v8011
        %v8013 = vrot.slane %v7871, 5
        %v8014 = vrot.slane %v8013, 4
        %v8015 = vrot.slane %v7216, 5
        %v8016 = vsel %vm1812, %v8014, %v8015
        %v8017 = vrot.slane %v8015, 4
        %v8018 = vrot.slane %v7217, 5
        %v8019 = vsel %vm1812, %v8017, %v8018
        %v8020 = vrot.slane %v7872, 5
        %v8021 = vrot.slane %v8020, 4
        %v8022 = vrot.slane %v7219, 5
        %v8023 = vsel %vm1812, %v8021, %v8022
        %v8024 = vrot.slane %v8022, 4
        %v8025 = vrot.slane %v7220, 5
        %v8026 = vsel %vm1812, %v8024, %v8025
        %v8027 = vrot.slane %v7873, 5
        %v8028 = vrot.slane %v8027, 4
        %v8029 = vrot.slane %v7222, 5
        %v8030 = vsel %vm1812, %v8028, %v8029
        %v8031 = vrot.slane %v8029, 4
        %v8032 = vrot.slane %v7223, 5
        %v8033 = vsel %vm1812, %v8031, %v8032
        %s8034 = scalar_lea.vmem [#allocation9], 320
        %v8035 = vld [vmem:[%s8034] sm:$0xf]
        %v8036 = vld [vmem:[%s8034 + $0x4] sm:$0xf]
        %v8037 = vld [vmem:[%s8034 + $0x8] sm:$0xf]
        %v8038 = vld [vmem:[%s8034 + $0xc] sm:$0xf]
        %v8039 = vld [vmem:[%s8034 + $0x10] sm:$0xf]
        %v8040 = vld [vmem:[%s8034 + $0x14] sm:$0xf]
        %v8041 = vld [vmem:[%s8034 + $0x18] sm:$0xf]
        %v8042 = vld [vmem:[%s8034 + $0x1c] sm:$0xf]
        %v8043 = vld [vmem:[%s8034 + $0x20] sm:$0xf]
        %v8044 = vld [vmem:[%s8034 + $0x24] sm:$0xf]
        %v8045 = vld [vmem:[%s8034 + $0x28] sm:$0xf]
        %v8046 = vld [vmem:[%s8034 + $0x2c] sm:$0xf]
        %v8047 = vld [vmem:[%s8034 + $0x30] sm:$0xf]
        %v8048 = vld [vmem:[%s8034 + $0x34] sm:$0xf]
        %v8049 = vld [vmem:[%s8034 + $0x38] sm:$0xf]
        %v8050 = vld [vmem:[%s8034 + $0x3c] sm:$0xf]
        %v8051 = vunpack.c.l.b16 %v7925
        %v8052 = vunpack.c.l.b16 %v7928
        %v8053 = vunpack.c.l.b16 %v7932
        %v8054 = vunpack.c.l.b16 %v7935
        %v8055 = vunpack.c.l.b16 %v7939
        %v8056 = vunpack.c.l.b16 %v7942
        %v8057 = vunpack.c.l.b16 %v7946
        %v8058 = vunpack.c.l.b16 %v7949
        %v8059 = vunpack.c.l.b16 %v7953
        %v8060 = vunpack.c.l.b16 %v7956
        %v8061 = vunpack.c.l.b16 %v7960
        %v8062 = vunpack.c.l.b16 %v7963
        %v8063 = vunpack.c.l.b16 %v7967
        %v8064 = vunpack.c.l.b16 %v7970
        %v8065 = vunpack.c.l.b16 %v7974
        %v8066 = vunpack.c.l.b16 %v7977
        %v8067 = vunpack.c.l.b16 %v7981
        %v8068 = vunpack.c.l.b16 %v7984
        %v8069 = vunpack.c.l.b16 %v7988
        %v8070 = vunpack.c.l.b16 %v7991
        %v8071 = vunpack.c.l.b16 %v7995
        %v8072 = vunpack.c.l.b16 %v7998
        %v8073 = vunpack.c.l.b16 %v8002
        %v8074 = vunpack.c.l.b16 %v8005
        %v8075 = vunpack.c.l.b16 %v8009
        %v8076 = vunpack.c.l.b16 %v8012
        %v8077 = vunpack.c.l.b16 %v8016
        %v8078 = vunpack.c.l.b16 %v8019
        %v8079 = vunpack.c.l.b16 %v8023
        %v8080 = vunpack.c.l.b16 %v8026
        %v8081 = vunpack.c.l.b16 %v8030
        %v8082 = vunpack.c.l.b16 %v8033
        %v8083 = vpack.c.b16 %v8052, %v8051
        %v8084 = vpack.c.b16 %v8054, %v8053
        %v8085 = vpack.c.b16 %v8056, %v8055
        %v8086 = vpack.c.b16 %v8058, %v8057
        %v8087 = vpack.c.b16 %v8060, %v8059
        %v8088 = vpack.c.b16 %v8062, %v8061
        %v8089 = vpack.c.b16 %v8064, %v8063
        %v8090 = vpack.c.b16 %v8066, %v8065
        %v8091 = vpack.c.b16 %v8068, %v8067
        %v8092 = vpack.c.b16 %v8070, %v8069
        %v8093 = vpack.c.b16 %v8072, %v8071
        %v8094 = vpack.c.b16 %v8074, %v8073
        %v8095 = vpack.c.b16 %v8076, %v8075
        %v8096 = vpack.c.b16 %v8078, %v8077
        %v8097 = vpack.c.b16 %v8080, %v8079
        %v8098 = vpack.c.b16 %v8082, %v8081
        %v8131 = vunpack.c.l.b16 %v8035
        %v8132 = vunpack.c.l.b16 %v8036
        %v8133 = vunpack.c.l.b16 %v8037
        %v8134 = vunpack.c.l.b16 %v8038
        %v8135 = vunpack.c.l.b16 %v8039
        %v8136 = vunpack.c.l.b16 %v8040
        %v8137 = vunpack.c.l.b16 %v8041
        %v8138 = vunpack.c.l.b16 %v8042
        %v8139 = vunpack.c.l.b16 %v8043
        %v8140 = vunpack.c.l.b16 %v8044
        %v8141 = vunpack.c.l.b16 %v8045
        %v8142 = vunpack.c.l.b16 %v8046
        %v8143 = vunpack.c.l.b16 %v8047
        %v8144 = vunpack.c.l.b16 %v8048
        %v8145 = vunpack.c.l.b16 %v8049
        %v8146 = vunpack.c.l.b16 %v8050
        %v8147 = vpack.c.b16 %v8132, %v8131
        %v8148 = vpack.c.b16 %v8134, %v8133
        %v8149 = vpack.c.b16 %v8136, %v8135
        %v8150 = vpack.c.b16 %v8138, %v8137
        %v8151 = vpack.c.b16 %v8140, %v8139
        %v8152 = vpack.c.b16 %v8142, %v8141
        %v8153 = vpack.c.b16 %v8144, %v8143
        %v8154 = vpack.c.b16 %v8146, %v8145
        %8163 = vmatpush.bf16.msra.mxu0 %v8154
        %8164 = vmatpush.bf16.msra.mxu0 %v8153
        %8165 = vmatpush.bf16.msra.mxu0 %v8152
        %8166 = vmatpush.bf16.msra.mxu0 %v8151
        %8167 = vmatpush.bf16.msra.mxu0 %v8150
        %8168 = vmatpush.bf16.msra.mxu0 %v8149
        %8169 = vmatpush.bf16.msra.mxu0 %v8148
        %8170 = vmatpush.bf16.msra.mxu0 %v8147
        %8171 = vmatmul.bf16.gmra.mxu0 %v8083
        %v8172 = vpop.f32.mrf.mxu0
        %v8173 = vadd.f32 0.0, %v8172
        %v8174 = vpop.f32.mrf.mxu0
        %v8175 = vadd.f32 0.0, %v8174
        %8176 = vmatmul.bf16.gmra.mxu0 %v8084
        %v8177 = vpop.f32.mrf.mxu0
        %v8178 = vadd.f32 0.0, %v8177
        %v8179 = vpop.f32.mrf.mxu0
        %v8180 = vadd.f32 0.0, %v8179
        %8181 = vmatmul.bf16.gmra.mxu0 %v8085
        %v8182 = vpop.f32.mrf.mxu0
        %v8183 = vadd.f32 0.0, %v8182
        %v8184 = vpop.f32.mrf.mxu0
        %v8185 = vadd.f32 0.0, %v8184
        %8186 = vmatmul.bf16.gmra.mxu0 %v8086
        %v8187 = vpop.f32.mrf.mxu0
        %v8188 = vadd.f32 0.0, %v8187
        %v8189 = vpop.f32.mrf.mxu0
        %v8190 = vadd.f32 0.0, %v8189
        %8191 = vmatmul.bf16.gmra.mxu0 %v8087
        %v8192 = vpop.f32.mrf.mxu0
        %v8193 = vadd.f32 0.0, %v8192
        %v8194 = vpop.f32.mrf.mxu0
        %v8195 = vadd.f32 0.0, %v8194
        %8196 = vmatmul.bf16.gmra.mxu0 %v8088
        %v8197 = vpop.f32.mrf.mxu0
        %v8198 = vadd.f32 0.0, %v8197
        %v8199 = vpop.f32.mrf.mxu0
        %v8200 = vadd.f32 0.0, %v8199
        %8201 = vmatmul.bf16.gmra.mxu0 %v8089
        %v8202 = vpop.f32.mrf.mxu0
        %v8203 = vadd.f32 0.0, %v8202
        %v8204 = vpop.f32.mrf.mxu0
        %v8205 = vadd.f32 0.0, %v8204
        %8206 = vmatmul.bf16.gmra.mxu0 %v8090
        %v8207 = vpop.f32.mrf.mxu0
        %v8208 = vadd.f32 0.0, %v8207
        %v8209 = vpop.f32.mrf.mxu0
        %v8210 = vadd.f32 0.0, %v8209
        %8211 = vmatmul.bf16.gmra.mxu0 %v8091
        %v8212 = vpop.f32.mrf.mxu0
        %v8213 = vadd.f32 0.0, %v8212
        %v8214 = vpop.f32.mrf.mxu0
        %v8215 = vadd.f32 0.0, %v8214
        %8216 = vmatmul.bf16.gmra.mxu0 %v8092
        %v8217 = vpop.f32.mrf.mxu0
        %v8218 = vadd.f32 0.0, %v8217
        %v8219 = vpop.f32.mrf.mxu0
        %v8220 = vadd.f32 0.0, %v8219
        %8221 = vmatmul.bf16.gmra.mxu0 %v8093
        %v8222 = vpop.f32.mrf.mxu0
        %v8223 = vadd.f32 0.0, %v8222
        %v8224 = vpop.f32.mrf.mxu0
        %v8225 = vadd.f32 0.0, %v8224
        %8226 = vmatmul.bf16.gmra.mxu0 %v8094
        %v8227 = vpop.f32.mrf.mxu0
        %v8228 = vadd.f32 0.0, %v8227
        %v8229 = vpop.f32.mrf.mxu0
        %v8230 = vadd.f32 0.0, %v8229
        %8231 = vmatmul.bf16.gmra.mxu0 %v8095
        %v8232 = vpop.f32.mrf.mxu0
        %v8233 = vadd.f32 0.0, %v8232
        %v8234 = vpop.f32.mrf.mxu0
        %v8235 = vadd.f32 0.0, %v8234
        %8236 = vmatmul.bf16.gmra.mxu0 %v8096
        %v8237 = vpop.f32.mrf.mxu0
        %v8238 = vadd.f32 0.0, %v8237
        %v8239 = vpop.f32.mrf.mxu0
        %v8240 = vadd.f32 0.0, %v8239
        %8241 = vmatmul.bf16.gmra.mxu0 %v8097
        %v8242 = vpop.f32.mrf.mxu0
        %v8243 = vadd.f32 0.0, %v8242
        %v8244 = vpop.f32.mrf.mxu0
        %v8245 = vadd.f32 0.0, %v8244
        %8246 = vmatmul.bf16.gmra.mxu0 %v8098
        %v8247 = vpop.f32.mrf.mxu0
        %v8248 = vadd.f32 0.0, %v8247
        %v8249 = vpop.f32.mrf.mxu0
        %v8250 = vadd.f32 0.0, %v8249
        %8251 = vdwg.mxu0
        %v8252 = vadd.f32 %v7826, %v8173
        %v8253 = vadd.f32 %v7827, %v8175
        %v8254 = vadd.f32 %v7828, %v8178
        %v8255 = vadd.f32 %v7829, %v8180
        %v8256 = vadd.f32 %v7830, %v8183
        %v8257 = vadd.f32 %v7831, %v8185
        %v8258 = vadd.f32 %v7832, %v8188
        %v8259 = vadd.f32 %v7833, %v8190
        %v8260 = vadd.f32 %v7834, %v8193
        %v8261 = vadd.f32 %v7835, %v8195
        %v8262 = vadd.f32 %v7836, %v8198
        %v8263 = vadd.f32 %v7837, %v8200
        %v8264 = vadd.f32 %v7838, %v8203
        %v8265 = vadd.f32 %v7839, %v8205
        %v8266 = vadd.f32 %v7840, %v8208
        %v8267 = vadd.f32 %v7841, %v8210
        %v8268 = vadd.f32 %v7842, %v8213
        %v8269 = vadd.f32 %v7843, %v8215
        %v8270 = vadd.f32 %v7844, %v8218
        %v8271 = vadd.f32 %v7845, %v8220
        %v8272 = vadd.f32 %v7846, %v8223
        %v8273 = vadd.f32 %v7847, %v8225
        %v8274 = vadd.f32 %v7848, %v8228
        %v8275 = vadd.f32 %v7849, %v8230
        %v8276 = vadd.f32 %v7850, %v8233
        %v8277 = vadd.f32 %v7851, %v8235
        %v8278 = vadd.f32 %v7852, %v8238
        %v8279 = vadd.f32 %v7853, %v8240
        %v8280 = vadd.f32 %v7854, %v8243
        %v8281 = vadd.f32 %v7855, %v8245
        %v8282 = vadd.f32 %v7856, %v8248
        %v8283 = vadd.f32 %v7857, %v8250
        %s8284 = scalar_lea.vmem [#allocation3], 24
        %v8285 = vld [vmem:[%s8284] sm:$0xf]
        %v8286 = vld [vmem:[%s8284 + $0x4] sm:$0xf]
        %v8287 = vld [vmem:[%s8284 + $0xc] sm:$0xf]
        %v8288 = vld [vmem:[%s8284 + $0x10] sm:$0xf]
        %v8289 = vld [vmem:[%s8284 + $0x18] sm:$0xf]
        %v8290 = vld [vmem:[%s8284 + $0x1c] sm:$0xf]
        %v8291 = vld [vmem:[%s8284 + $0x24] sm:$0xf]
        %v8292 = vld [vmem:[%s8284 + $0x28] sm:$0xf]
        %v8293 = vld [vmem:[%s8284 + $0x30] sm:$0xf]
        %v8294 = vld [vmem:[%s8284 + $0x34] sm:$0xf]
        %v8295 = vld [vmem:[%s8284 + $0x3c] sm:$0xf]
        %v8296 = vld [vmem:[%s8284 + $0x40] sm:$0xf]
        %v8297 = vld [vmem:[%s8284 + $0x48] sm:$0xf]
        %v8298 = vld [vmem:[%s8284 + $0x4c] sm:$0xf]
        %v8299 = vld [vmem:[%s8284 + $0x54] sm:$0xf]
        %v8300 = vld [vmem:[%s8284 + $0x58] sm:$0xf]
        %v8301 = vld [vmem:[%s8284 + $0x60] sm:$0xf]
        %v8302 = vld [vmem:[%s8284 + $0x64] sm:$0xf]
        %v8303 = vld [vmem:[%s8284 + $0x6c] sm:$0xf]
        %v8304 = vld [vmem:[%s8284 + $0x70] sm:$0xf]
        %v8305 = vld [vmem:[%s8284 + $0x78] sm:$0xf]
        %v8306 = vld [vmem:[%s8284 + $0x7c] sm:$0xf]
        %v8307 = vld [vmem:[%s8284 + $0x84] sm:$0xf]
        %v8308 = vld [vmem:[%s8284 + $0x88] sm:$0xf]
        %v8309 = vld [vmem:[%s8284 + $0x90] sm:$0xf]
        %v8310 = vld [vmem:[%s8284 + $0x94] sm:$0xf]
        %v8311 = vld [vmem:[%s8284 + $0x9c] sm:$0xf]
        %v8312 = vld [vmem:[%s8284 + $0xa0] sm:$0xf]
        %v8313 = vld [vmem:[%s8284 + $0xa8] sm:$0xf]
        %v8314 = vld [vmem:[%s8284 + $0xac] sm:$0xf]
        %v8315 = vld [vmem:[%s8284 + $0xb4] sm:$0xf]
        %v8316 = vld [vmem:[%s8284 + $0xb8] sm:$0xf]
        %s8317 = scalar_lea.vmem [#allocation9], 384
        %v8318 = vld [vmem:[%s8317] sm:$0xf]
        %v8319 = vld [vmem:[%s8317 + $0x4] sm:$0xf]
        %v8320 = vld [vmem:[%s8317 + $0x8] sm:$0xf]
        %v8321 = vld [vmem:[%s8317 + $0xc] sm:$0xf]
        %v8322 = vld [vmem:[%s8317 + $0x10] sm:$0xf]
        %v8323 = vld [vmem:[%s8317 + $0x14] sm:$0xf]
        %v8324 = vld [vmem:[%s8317 + $0x18] sm:$0xf]
        %v8325 = vld [vmem:[%s8317 + $0x1c] sm:$0xf]
        %v8326 = vld [vmem:[%s8317 + $0x20] sm:$0xf]
        %v8327 = vld [vmem:[%s8317 + $0x24] sm:$0xf]
        %v8328 = vld [vmem:[%s8317 + $0x28] sm:$0xf]
        %v8329 = vld [vmem:[%s8317 + $0x2c] sm:$0xf]
        %v8330 = vld [vmem:[%s8317 + $0x30] sm:$0xf]
        %v8331 = vld [vmem:[%s8317 + $0x34] sm:$0xf]
        %v8332 = vld [vmem:[%s8317 + $0x38] sm:$0xf]
        %v8333 = vld [vmem:[%s8317 + $0x3c] sm:$0xf]
        %v8366 = vunpack.c.l.b16 %v8285
        %v8367 = vunpack.c.l.b16 %v8286
        %v8368 = vunpack.c.l.b16 %v8287
        %v8369 = vunpack.c.l.b16 %v8288
        %v8370 = vunpack.c.l.b16 %v8289
        %v8371 = vunpack.c.l.b16 %v8290
        %v8372 = vunpack.c.l.b16 %v8291
        %v8373 = vunpack.c.l.b16 %v8292
        %v8374 = vunpack.c.l.b16 %v8293
        %v8375 = vunpack.c.l.b16 %v8294
        %v8376 = vunpack.c.l.b16 %v8295
        %v8377 = vunpack.c.l.b16 %v8296
        %v8378 = vunpack.c.l.b16 %v8297
        %v8379 = vunpack.c.l.b16 %v8298
        %v8380 = vunpack.c.l.b16 %v8299
        %v8381 = vunpack.c.l.b16 %v8300
        %v8382 = vunpack.c.l.b16 %v8301
        %v8383 = vunpack.c.l.b16 %v8302
        %v8384 = vunpack.c.l.b16 %v8303
        %v8385 = vunpack.c.l.b16 %v8304
        %v8386 = vunpack.c.l.b16 %v8305
        %v8387 = vunpack.c.l.b16 %v8306
        %v8388 = vunpack.c.l.b16 %v8307
        %v8389 = vunpack.c.l.b16 %v8308
        %v8390 = vunpack.c.l.b16 %v8309
        %v8391 = vunpack.c.l.b16 %v8310
        %v8392 = vunpack.c.l.b16 %v8311
        %v8393 = vunpack.c.l.b16 %v8312
        %v8394 = vunpack.c.l.b16 %v8313
        %v8395 = vunpack.c.l.b16 %v8314
        %v8396 = vunpack.c.l.b16 %v8315
        %v8397 = vunpack.c.l.b16 %v8316
        %v8398 = vpack.c.b16 %v8367, %v8366
        %v8399 = vpack.c.b16 %v8369, %v8368
        %v8400 = vpack.c.b16 %v8371, %v8370
        %v8401 = vpack.c.b16 %v8373, %v8372
        %v8402 = vpack.c.b16 %v8375, %v8374
        %v8403 = vpack.c.b16 %v8377, %v8376
        %v8404 = vpack.c.b16 %v8379, %v8378
        %v8405 = vpack.c.b16 %v8381, %v8380
        %v8406 = vpack.c.b16 %v8383, %v8382
        %v8407 = vpack.c.b16 %v8385, %v8384
        %v8408 = vpack.c.b16 %v8387, %v8386
        %v8409 = vpack.c.b16 %v8389, %v8388
        %v8410 = vpack.c.b16 %v8391, %v8390
        %v8411 = vpack.c.b16 %v8393, %v8392
        %v8412 = vpack.c.b16 %v8395, %v8394
        %v8413 = vpack.c.b16 %v8397, %v8396
        %v8446 = vunpack.c.l.b16 %v8318
        %v8447 = vunpack.c.l.b16 %v8319
        %v8448 = vunpack.c.l.b16 %v8320
        %v8449 = vunpack.c.l.b16 %v8321
        %v8450 = vunpack.c.l.b16 %v8322
        %v8451 = vunpack.c.l.b16 %v8323
        %v8452 = vunpack.c.l.b16 %v8324
        %v8453 = vunpack.c.l.b16 %v8325
        %v8454 = vunpack.c.l.b16 %v8326
        %v8455 = vunpack.c.l.b16 %v8327
        %v8456 = vunpack.c.l.b16 %v8328
        %v8457 = vunpack.c.l.b16 %v8329
        %v8458 = vunpack.c.l.b16 %v8330
        %v8459 = vunpack.c.l.b16 %v8331
        %v8460 = vunpack.c.l.b16 %v8332
        %v8461 = vunpack.c.l.b16 %v8333
        %v8462 = vpack.c.b16 %v8447, %v8446
        %v8463 = vpack.c.b16 %v8449, %v8448
        %v8464 = vpack.c.b16 %v8451, %v8450
        %v8465 = vpack.c.b16 %v8453, %v8452
        %v8466 = vpack.c.b16 %v8455, %v8454
        %v8467 = vpack.c.b16 %v8457, %v8456
        %v8468 = vpack.c.b16 %v8459, %v8458
        %v8469 = vpack.c.b16 %v8461, %v8460
        %8478 = vmatpush.bf16.msra.mxu0 %v8469
        %8479 = vmatpush.bf16.msra.mxu0 %v8468
        %8480 = vmatpush.bf16.msra.mxu0 %v8467
        %8481 = vmatpush.bf16.msra.mxu0 %v8466
        %8482 = vmatpush.bf16.msra.mxu0 %v8465
        %8483 = vmatpush.bf16.msra.mxu0 %v8464
        %8484 = vmatpush.bf16.msra.mxu0 %v8463
        %8485 = vmatpush.bf16.msra.mxu0 %v8462
        %8486 = vmatmul.bf16.gmra.mxu0 %v8398
        %v8487 = vpop.f32.mrf.mxu0
        %v8488 = vadd.f32 0.0, %v8487
        %v8489 = vpop.f32.mrf.mxu0
        %v8490 = vadd.f32 0.0, %v8489
        %8491 = vmatmul.bf16.gmra.mxu0 %v8399
        %v8492 = vpop.f32.mrf.mxu0
        %v8493 = vadd.f32 0.0, %v8492
        %v8494 = vpop.f32.mrf.mxu0
        %v8495 = vadd.f32 0.0, %v8494
        %8496 = vmatmul.bf16.gmra.mxu0 %v8400
        %v8497 = vpop.f32.mrf.mxu0
        %v8498 = vadd.f32 0.0, %v8497
        %v8499 = vpop.f32.mrf.mxu0
        %v8500 = vadd.f32 0.0, %v8499
        %8501 = vmatmul.bf16.gmra.mxu0 %v8401
        %v8502 = vpop.f32.mrf.mxu0
        %v8503 = vadd.f32 0.0, %v8502
        %v8504 = vpop.f32.mrf.mxu0
        %v8505 = vadd.f32 0.0, %v8504
        %8506 = vmatmul.bf16.gmra.mxu0 %v8402
        %v8507 = vpop.f32.mrf.mxu0
        %v8508 = vadd.f32 0.0, %v8507
        %v8509 = vpop.f32.mrf.mxu0
        %v8510 = vadd.f32 0.0, %v8509
        %8511 = vmatmul.bf16.gmra.mxu0 %v8403
        %v8512 = vpop.f32.mrf.mxu0
        %v8513 = vadd.f32 0.0, %v8512
        %v8514 = vpop.f32.mrf.mxu0
        %v8515 = vadd.f32 0.0, %v8514
        %8516 = vmatmul.bf16.gmra.mxu0 %v8404
        %v8517 = vpop.f32.mrf.mxu0
        %v8518 = vadd.f32 0.0, %v8517
        %v8519 = vpop.f32.mrf.mxu0
        %v8520 = vadd.f32 0.0, %v8519
        %8521 = vmatmul.bf16.gmra.mxu0 %v8405
        %v8522 = vpop.f32.mrf.mxu0
        %v8523 = vadd.f32 0.0, %v8522
        %v8524 = vpop.f32.mrf.mxu0
        %v8525 = vadd.f32 0.0, %v8524
        %8526 = vmatmul.bf16.gmra.mxu0 %v8406
        %v8527 = vpop.f32.mrf.mxu0
        %v8528 = vadd.f32 0.0, %v8527
        %v8529 = vpop.f32.mrf.mxu0
        %v8530 = vadd.f32 0.0, %v8529
        %8531 = vmatmul.bf16.gmra.mxu0 %v8407
        %v8532 = vpop.f32.mrf.mxu0
        %v8533 = vadd.f32 0.0, %v8532
        %v8534 = vpop.f32.mrf.mxu0
        %v8535 = vadd.f32 0.0, %v8534
        %8536 = vmatmul.bf16.gmra.mxu0 %v8408
        %v8537 = vpop.f32.mrf.mxu0
        %v8538 = vadd.f32 0.0, %v8537
        %v8539 = vpop.f32.mrf.mxu0
        %v8540 = vadd.f32 0.0, %v8539
        %8541 = vmatmul.bf16.gmra.mxu0 %v8409
        %v8542 = vpop.f32.mrf.mxu0
        %v8543 = vadd.f32 0.0, %v8542
        %v8544 = vpop.f32.mrf.mxu0
        %v8545 = vadd.f32 0.0, %v8544
        %8546 = vmatmul.bf16.gmra.mxu0 %v8410
        %v8547 = vpop.f32.mrf.mxu0
        %v8548 = vadd.f32 0.0, %v8547
        %v8549 = vpop.f32.mrf.mxu0
        %v8550 = vadd.f32 0.0, %v8549
        %8551 = vmatmul.bf16.gmra.mxu0 %v8411
        %v8552 = vpop.f32.mrf.mxu0
        %v8553 = vadd.f32 0.0, %v8552
        %v8554 = vpop.f32.mrf.mxu0
        %v8555 = vadd.f32 0.0, %v8554
        %8556 = vmatmul.bf16.gmra.mxu0 %v8412
        %v8557 = vpop.f32.mrf.mxu0
        %v8558 = vadd.f32 0.0, %v8557
        %v8559 = vpop.f32.mrf.mxu0
        %v8560 = vadd.f32 0.0, %v8559
        %8561 = vmatmul.bf16.gmra.mxu0 %v8413
        %v8562 = vpop.f32.mrf.mxu0
        %v8563 = vadd.f32 0.0, %v8562
        %v8564 = vpop.f32.mrf.mxu0
        %v8565 = vadd.f32 0.0, %v8564
        %8566 = vdwg.mxu0
        %v8567 = vadd.f32 %v8252, %v8488
        %v8568 = vadd.f32 %v8253, %v8490
        %v8569 = vadd.f32 %v8254, %v8493
        %v8570 = vadd.f32 %v8255, %v8495
        %v8571 = vadd.f32 %v8256, %v8498
        %v8572 = vadd.f32 %v8257, %v8500
        %v8573 = vadd.f32 %v8258, %v8503
        %v8574 = vadd.f32 %v8259, %v8505
        %v8575 = vadd.f32 %v8260, %v8508
        %v8576 = vadd.f32 %v8261, %v8510
        %v8577 = vadd.f32 %v8262, %v8513
        %v8578 = vadd.f32 %v8263, %v8515
        %v8579 = vadd.f32 %v8264, %v8518
        %v8580 = vadd.f32 %v8265, %v8520
        %v8581 = vadd.f32 %v8266, %v8523
        %v8582 = vadd.f32 %v8267, %v8525
        %v8583 = vadd.f32 %v8268, %v8528
        %v8584 = vadd.f32 %v8269, %v8530
        %v8585 = vadd.f32 %v8270, %v8533
        %v8586 = vadd.f32 %v8271, %v8535
        %v8587 = vadd.f32 %v8272, %v8538
        %v8588 = vadd.f32 %v8273, %v8540
        %v8589 = vadd.f32 %v8274, %v8543
        %v8590 = vadd.f32 %v8275, %v8545
        %v8591 = vadd.f32 %v8276, %v8548
        %v8592 = vadd.f32 %v8277, %v8550
        %v8593 = vadd.f32 %v8278, %v8553
        %v8594 = vadd.f32 %v8279, %v8555
        %v8595 = vadd.f32 %v8280, %v8558
        %v8596 = vadd.f32 %v8281, %v8560
        %v8597 = vadd.f32 %v8282, %v8563
        %v8598 = vadd.f32 %v8283, %v8565
        %v8599 = vld [vmem:[%s8284] sm:$0xf]
        %v8600 = vld [vmem:[%s8284 + $0x4] sm:$0xf]
        %v8601 = vld [vmem:[%s8284 + $0x8] sm:$0x1]
        %v8602 = vld [vmem:[%s8284 + $0xc] sm:$0xf]
        %v8603 = vld [vmem:[%s8284 + $0x10] sm:$0xf]
        %v8604 = vld [vmem:[%s8284 + $0x14] sm:$0x1]
        %v8605 = vld [vmem:[%s8284 + $0x18] sm:$0xf]
        %v8606 = vld [vmem:[%s8284 + $0x1c] sm:$0xf]
        %v8607 = vld [vmem:[%s8284 + $0x20] sm:$0x1]
        %v8608 = vld [vmem:[%s8284 + $0x24] sm:$0xf]
        %v8609 = vld [vmem:[%s8284 + $0x28] sm:$0xf]
        %v8610 = vld [vmem:[%s8284 + $0x2c] sm:$0x1]
        %v8611 = vld [vmem:[%s8284 + $0x30] sm:$0xf]
        %v8612 = vld [vmem:[%s8284 + $0x34] sm:$0xf]
        %v8613 = vld [vmem:[%s8284 + $0x38] sm:$0x1]
        %v8614 = vld [vmem:[%s8284 + $0x3c] sm:$0xf]
        %v8615 = vld [vmem:[%s8284 + $0x40] sm:$0xf]
        %v8616 = vld [vmem:[%s8284 + $0x44] sm:$0x1]
        %v8617 = vld [vmem:[%s8284 + $0x48] sm:$0xf]
        %v8618 = vld [vmem:[%s8284 + $0x4c] sm:$0xf]
        %v8619 = vld [vmem:[%s8284 + $0x50] sm:$0x1]
        %v8620 = vld [vmem:[%s8284 + $0x54] sm:$0xf]
        %v8621 = vld [vmem:[%s8284 + $0x58] sm:$0xf]
        %v8622 = vld [vmem:[%s8284 + $0x5c] sm:$0x1]
        %v8623 = vld [vmem:[%s8284 + $0x60] sm:$0xf]
        %v8624 = vld [vmem:[%s8284 + $0x64] sm:$0xf]
        %v8625 = vld [vmem:[%s8284 + $0x68] sm:$0x1]
        %v8626 = vld [vmem:[%s8284 + $0x6c] sm:$0xf]
        %v8627 = vld [vmem:[%s8284 + $0x70] sm:$0xf]
        %v8628 = vld [vmem:[%s8284 + $0x74] sm:$0x1]
        %v8629 = vld [vmem:[%s8284 + $0x78] sm:$0xf]
        %v8630 = vld [vmem:[%s8284 + $0x7c] sm:$0xf]
        %v8631 = vld [vmem:[%s8284 + $0x80] sm:$0x1]
        %v8632 = vld [vmem:[%s8284 + $0x84] sm:$0xf]
        %v8633 = vld [vmem:[%s8284 + $0x88] sm:$0xf]
        %v8634 = vld [vmem:[%s8284 + $0x8c] sm:$0x1]
        %v8635 = vld [vmem:[%s8284 + $0x90] sm:$0xf]
        %v8636 = vld [vmem:[%s8284 + $0x94] sm:$0xf]
        %v8637 = vld [vmem:[%s8284 + $0x98] sm:$0x1]
        %v8638 = vld [vmem:[%s8284 + $0x9c] sm:$0xf]
        %v8639 = vld [vmem:[%s8284 + $0xa0] sm:$0xf]
        %v8640 = vld [vmem:[%s8284 + $0xa4] sm:$0x1]
        %v8641 = vld [vmem:[%s8284 + $0xa8] sm:$0xf]
        %v8642 = vld [vmem:[%s8284 + $0xac] sm:$0xf]
        %v8643 = vld [vmem:[%s8284 + $0xb0] sm:$0x1]
        %v8644 = vld [vmem:[%s8284 + $0xb4] sm:$0xf]
        %v8645 = vld [vmem:[%s8284 + $0xb8] sm:$0xf]
        %v8646 = vld [vmem:[%s8284 + $0xbc] sm:$0x1]
        %v8648 = vshrl.u32 %v8599, 16
        %v8650 = vrot.slane %v8648, 4
        %v8651 = vshll.u32 %v8599, 16
        %v8653 = vrot.slane %v8651, 5
        %v8654 = vor.u32 %v8650, %v8653
        %v8655 = vrot.slane %v8654, 4
        %v8657 = vshll.u32 %v8600, 16
        %v8659 = vrot.slane %v8657, 5
        %v8660 = vsel %vm926, %v8655, %v8659
        %v8661 = vshrl.u32 %v8600, 16
        %v8663 = vrot.slane %v8661, 4
        %v8664 = vor.u32 %v8663, %v8659
        %v8665 = vrot.slane %v8664, 4
        %v8667 = vshll.u32 %v8601, 16
        %v8669 = vrot.slane %v8667, 5
        %v8670 = vsel %vm926, %v8665, %v8669
        %v8672 = vshrl.u32 %v8602, 16
        %v8674 = vrot.slane %v8672, 4
        %v8675 = vshll.u32 %v8602, 16
        %v8677 = vrot.slane %v8675, 5
        %v8678 = vor.u32 %v8674, %v8677
        %v8679 = vrot.slane %v8678, 4
        %v8681 = vshll.u32 %v8603, 16
        %v8683 = vrot.slane %v8681, 5
        %v8684 = vsel %vm926, %v8679, %v8683
        %v8685 = vshrl.u32 %v8603, 16
        %v8687 = vrot.slane %v8685, 4
        %v8688 = vor.u32 %v8687, %v8683
        %v8689 = vrot.slane %v8688, 4
        %v8691 = vshll.u32 %v8604, 16
        %v8693 = vrot.slane %v8691, 5
        %v8694 = vsel %vm926, %v8689, %v8693
        %v8696 = vshrl.u32 %v8605, 16
        %v8698 = vrot.slane %v8696, 4
        %v8699 = vshll.u32 %v8605, 16
        %v8701 = vrot.slane %v8699, 5
        %v8702 = vor.u32 %v8698, %v8701
        %v8703 = vrot.slane %v8702, 4
        %v8705 = vshll.u32 %v8606, 16
        %v8707 = vrot.slane %v8705, 5
        %v8708 = vsel %vm926, %v8703, %v8707
        %v8709 = vshrl.u32 %v8606, 16
        %v8711 = vrot.slane %v8709, 4
        %v8712 = vor.u32 %v8711, %v8707
        %v8713 = vrot.slane %v8712, 4
        %v8715 = vshll.u32 %v8607, 16
        %v8717 = vrot.slane %v8715, 5
        %v8718 = vsel %vm926, %v8713, %v8717
        %v8720 = vshrl.u32 %v8608, 16
        %v8722 = vrot.slane %v8720, 4
        %v8723 = vshll.u32 %v8608, 16
        %v8725 = vrot.slane %v8723, 5
        %v8726 = vor.u32 %v8722, %v8725
        %v8727 = vrot.slane %v8726, 4
        %v8729 = vshll.u32 %v8609, 16
        %v8731 = vrot.slane %v8729, 5
        %v8732 = vsel %vm926, %v8727, %v8731
        %v8733 = vshrl.u32 %v8609, 16
        %v8735 = vrot.slane %v8733, 4
        %v8736 = vor.u32 %v8735, %v8731
        %v8737 = vrot.slane %v8736, 4
        %v8739 = vshll.u32 %v8610, 16
        %v8741 = vrot.slane %v8739, 5
        %v8742 = vsel %vm926, %v8737, %v8741
        %v8744 = vshrl.u32 %v8611, 16
        %v8746 = vrot.slane %v8744, 4
        %v8747 = vshll.u32 %v8611, 16
        %v8749 = vrot.slane %v8747, 5
        %v8750 = vor.u32 %v8746, %v8749
        %v8751 = vrot.slane %v8750, 4
        %v8753 = vshll.u32 %v8612, 16
        %v8755 = vrot.slane %v8753, 5
        %v8756 = vsel %vm926, %v8751, %v8755
        %v8757 = vshrl.u32 %v8612, 16
        %v8759 = vrot.slane %v8757, 4
        %v8760 = vor.u32 %v8759, %v8755
        %v8761 = vrot.slane %v8760, 4
        %v8763 = vshll.u32 %v8613, 16
        %v8765 = vrot.slane %v8763, 5
        %v8766 = vsel %vm926, %v8761, %v8765
        %v8768 = vshrl.u32 %v8614, 16
        %v8770 = vrot.slane %v8768, 4
        %v8771 = vshll.u32 %v8614, 16
        %v8773 = vrot.slane %v8771, 5
        %v8774 = vor.u32 %v8770, %v8773
        %v8775 = vrot.slane %v8774, 4
        %v8777 = vshll.u32 %v8615, 16
        %v8779 = vrot.slane %v8777, 5
        %v8780 = vsel %vm926, %v8775, %v8779
        %v8781 = vshrl.u32 %v8615, 16
        %v8783 = vrot.slane %v8781, 4
        %v8784 = vor.u32 %v8783, %v8779
        %v8785 = vrot.slane %v8784, 4
        %v8787 = vshll.u32 %v8616, 16
        %v8789 = vrot.slane %v8787, 5
        %v8790 = vsel %vm926, %v8785, %v8789
        %v8792 = vshrl.u32 %v8617, 16
        %v8794 = vrot.slane %v8792, 4
        %v8795 = vshll.u32 %v8617, 16
        %v8797 = vrot.slane %v8795, 5
        %v8798 = vor.u32 %v8794, %v8797
        %v8799 = vrot.slane %v8798, 4
        %v8801 = vshll.u32 %v8618, 16
        %v8803 = vrot.slane %v8801, 5
        %v8804 = vsel %vm926, %v8799, %v8803
        %v8805 = vshrl.u32 %v8618, 16
        %v8807 = vrot.slane %v8805, 4
        %v8808 = vor.u32 %v8807, %v8803
        %v8809 = vrot.slane %v8808, 4
        %v8811 = vshll.u32 %v8619, 16
        %v8813 = vrot.slane %v8811, 5
        %v8814 = vsel %vm926, %v8809, %v8813
        %v8816 = vshrl.u32 %v8620, 16
        %v8818 = vrot.slane %v8816, 4
        %v8819 = vshll.u32 %v8620, 16
        %v8821 = vrot.slane %v8819, 5
        %v8822 = vor.u32 %v8818, %v8821
        %v8823 = vrot.slane %v8822, 4
        %v8825 = vshll.u32 %v8621, 16
        %v8827 = vrot.slane %v8825, 5
        %v8828 = vsel %vm926, %v8823, %v8827
        %v8829 = vshrl.u32 %v8621, 16
        %v8831 = vrot.slane %v8829, 4
        %v8832 = vor.u32 %v8831, %v8827
        %v8833 = vrot.slane %v8832, 4
        %v8835 = vshll.u32 %v8622, 16
        %v8837 = vrot.slane %v8835, 5
        %v8838 = vsel %vm926, %v8833, %v8837
        %v8840 = vshrl.u32 %v8623, 16
        %v8842 = vrot.slane %v8840, 4
        %v8843 = vshll.u32 %v8623, 16
        %v8845 = vrot.slane %v8843, 5
        %v8846 = vor.u32 %v8842, %v8845
        %v8847 = vrot.slane %v8846, 4
        %v8849 = vshll.u32 %v8624, 16
        %v8851 = vrot.slane %v8849, 5
        %v8852 = vsel %vm926, %v8847, %v8851
        %v8853 = vshrl.u32 %v8624, 16
        %v8855 = vrot.slane %v8853, 4
        %v8856 = vor.u32 %v8855, %v8851
        %v8857 = vrot.slane %v8856, 4
        %v8859 = vshll.u32 %v8625, 16
        %v8861 = vrot.slane %v8859, 5
        %v8862 = vsel %vm926, %v8857, %v8861
        %v8864 = vshrl.u32 %v8626, 16
        %v8866 = vrot.slane %v8864, 4
        %v8867 = vshll.u32 %v8626, 16
        %v8869 = vrot.slane %v8867, 5
        %v8870 = vor.u32 %v8866, %v8869
        %v8871 = vrot.slane %v8870, 4
        %v8873 = vshll.u32 %v8627, 16
        %v8875 = vrot.slane %v8873, 5
        %v8876 = vsel %vm926, %v8871, %v8875
        %v8877 = vshrl.u32 %v8627, 16
        %v8879 = vrot.slane %v8877, 4
        %v8880 = vor.u32 %v8879, %v8875
        %v8881 = vrot.slane %v8880, 4
        %v8883 = vshll.u32 %v8628, 16
        %v8885 = vrot.slane %v8883, 5
        %v8886 = vsel %vm926, %v8881, %v8885
        %v8888 = vshrl.u32 %v8629, 16
        %v8890 = vrot.slane %v8888, 4
        %v8891 = vshll.u32 %v8629, 16
        %v8893 = vrot.slane %v8891, 5
        %v8894 = vor.u32 %v8890, %v8893
        %v8895 = vrot.slane %v8894, 4
        %v8897 = vshll.u32 %v8630, 16
        %v8899 = vrot.slane %v8897, 5
        %v8900 = vsel %vm926, %v8895, %v8899
        %v8901 = vshrl.u32 %v8630, 16
        %v8903 = vrot.slane %v8901, 4
        %v8904 = vor.u32 %v8903, %v8899
        %v8905 = vrot.slane %v8904, 4
        %v8907 = vshll.u32 %v8631, 16
        %v8909 = vrot.slane %v8907, 5
        %v8910 = vsel %vm926, %v8905, %v8909
        %v8912 = vshrl.u32 %v8632, 16
        %v8914 = vrot.slane %v8912, 4
        %v8915 = vshll.u32 %v8632, 16
        %v8917 = vrot.slane %v8915, 5
        %v8918 = vor.u32 %v8914, %v8917
        %v8919 = vrot.slane %v8918, 4
        %v8921 = vshll.u32 %v8633, 16
        %v8923 = vrot.slane %v8921, 5
        %v8924 = vsel %vm926, %v8919, %v8923
        %v8925 = vshrl.u32 %v8633, 16
        %v8927 = vrot.slane %v8925, 4
        %v8928 = vor.u32 %v8927, %v8923
        %v8929 = vrot.slane %v8928, 4
        %v8931 = vshll.u32 %v8634, 16
        %v8933 = vrot.slane %v8931, 5
        %v8934 = vsel %vm926, %v8929, %v8933
        %v8936 = vshrl.u32 %v8635, 16
        %v8938 = vrot.slane %v8936, 4
        %v8939 = vshll.u32 %v8635, 16
        %v8941 = vrot.slane %v8939, 5
        %v8942 = vor.u32 %v8938, %v8941
        %v8943 = vrot.slane %v8942, 4
        %v8945 = vshll.u32 %v8636, 16
        %v8947 = vrot.slane %v8945, 5
        %v8948 = vsel %vm926, %v8943, %v8947
        %v8949 = vshrl.u32 %v8636, 16
        %v8951 = vrot.slane %v8949, 4
        %v8952 = vor.u32 %v8951, %v8947
        %v8953 = vrot.slane %v8952, 4
        %v8955 = vshll.u32 %v8637, 16
        %v8957 = vrot.slane %v8955, 5
        %v8958 = vsel %vm926, %v8953, %v8957
        %v8960 = vshrl.u32 %v8638, 16
        %v8962 = vrot.slane %v8960, 4
        %v8963 = vshll.u32 %v8638, 16
        %v8965 = vrot.slane %v8963, 5
        %v8966 = vor.u32 %v8962, %v8965
        %v8967 = vrot.slane %v8966, 4
        %v8969 = vshll.u32 %v8639, 16
        %v8971 = vrot.slane %v8969, 5
        %v8972 = vsel %vm926, %v8967, %v8971
        %v8973 = vshrl.u32 %v8639, 16
        %v8975 = vrot.slane %v8973, 4
        %v8976 = vor.u32 %v8975, %v8971
        %v8977 = vrot.slane %v8976, 4
        %v8979 = vshll.u32 %v8640, 16
        %v8981 = vrot.slane %v8979, 5
        %v8982 = vsel %vm926, %v8977, %v8981
        %v8984 = vshrl.u32 %v8641, 16
        %v8986 = vrot.slane %v8984, 4
        %v8987 = vshll.u32 %v8641, 16
        %v8989 = vrot.slane %v8987, 5
        %v8990 = vor.u32 %v8986, %v8989
        %v8991 = vrot.slane %v8990, 4
        %v8993 = vshll.u32 %v8642, 16
        %v8995 = vrot.slane %v8993, 5
        %v8996 = vsel %vm926, %v8991, %v8995
        %v8997 = vshrl.u32 %v8642, 16
        %v8999 = vrot.slane %v8997, 4
        %v9000 = vor.u32 %v8999, %v8995
        %v9001 = vrot.slane %v9000, 4
        %v9003 = vshll.u32 %v8643, 16
        %v9005 = vrot.slane %v9003, 5
        %v9006 = vsel %vm926, %v9001, %v9005
        %v9008 = vshrl.u32 %v8644, 16
        %v9010 = vrot.slane %v9008, 4
        %v9011 = vshll.u32 %v8644, 16
        %v9013 = vrot.slane %v9011, 5
        %v9014 = vor.u32 %v9010, %v9013
        %v9015 = vrot.slane %v9014, 4
        %v9017 = vshll.u32 %v8645, 16
        %v9019 = vrot.slane %v9017, 5
        %v9020 = vsel %vm926, %v9015, %v9019
        %v9021 = vshrl.u32 %v8645, 16
        %v9023 = vrot.slane %v9021, 4
        %v9024 = vor.u32 %v9023, %v9019
        %v9025 = vrot.slane %v9024, 4
        %v9027 = vshll.u32 %v8646, 16
        %v9029 = vrot.slane %v9027, 5
        %v9030 = vsel %vm926, %v9025, %v9029
        %s9031 = scalar_lea.vmem [#allocation9], 448
        %v9032 = vld [vmem:[%s9031] sm:$0xf]
        %v9033 = vld [vmem:[%s9031 + $0x4] sm:$0xf]
        %v9034 = vld [vmem:[%s9031 + $0x8] sm:$0xf]
        %v9035 = vld [vmem:[%s9031 + $0xc] sm:$0xf]
        %v9036 = vld [vmem:[%s9031 + $0x10] sm:$0xf]
        %v9037 = vld [vmem:[%s9031 + $0x14] sm:$0xf]
        %v9038 = vld [vmem:[%s9031 + $0x18] sm:$0xf]
        %v9039 = vld [vmem:[%s9031 + $0x1c] sm:$0xf]
        %v9040 = vld [vmem:[%s9031 + $0x20] sm:$0xf]
        %v9041 = vld [vmem:[%s9031 + $0x24] sm:$0xf]
        %v9042 = vld [vmem:[%s9031 + $0x28] sm:$0xf]
        %v9043 = vld [vmem:[%s9031 + $0x2c] sm:$0xf]
        %v9044 = vld [vmem:[%s9031 + $0x30] sm:$0xf]
        %v9045 = vld [vmem:[%s9031 + $0x34] sm:$0xf]
        %v9046 = vld [vmem:[%s9031 + $0x38] sm:$0xf]
        %v9047 = vld [vmem:[%s9031 + $0x3c] sm:$0xf]
        %v9048 = vunpack.c.l.b16 %v8660
        %v9049 = vunpack.c.l.b16 %v8670
        %v9050 = vunpack.c.l.b16 %v8684
        %v9051 = vunpack.c.l.b16 %v8694
        %v9052 = vunpack.c.l.b16 %v8708
        %v9053 = vunpack.c.l.b16 %v8718
        %v9054 = vunpack.c.l.b16 %v8732
        %v9055 = vunpack.c.l.b16 %v8742
        %v9056 = vunpack.c.l.b16 %v8756
        %v9057 = vunpack.c.l.b16 %v8766
        %v9058 = vunpack.c.l.b16 %v8780
        %v9059 = vunpack.c.l.b16 %v8790
        %v9060 = vunpack.c.l.b16 %v8804
        %v9061 = vunpack.c.l.b16 %v8814
        %v9062 = vunpack.c.l.b16 %v8828
        %v9063 = vunpack.c.l.b16 %v8838
        %v9064 = vunpack.c.l.b16 %v8852
        %v9065 = vunpack.c.l.b16 %v8862
        %v9066 = vunpack.c.l.b16 %v8876
        %v9067 = vunpack.c.l.b16 %v8886
        %v9068 = vunpack.c.l.b16 %v8900
        %v9069 = vunpack.c.l.b16 %v8910
        %v9070 = vunpack.c.l.b16 %v8924
        %v9071 = vunpack.c.l.b16 %v8934
        %v9072 = vunpack.c.l.b16 %v8948
        %v9073 = vunpack.c.l.b16 %v8958
        %v9074 = vunpack.c.l.b16 %v8972
        %v9075 = vunpack.c.l.b16 %v8982
        %v9076 = vunpack.c.l.b16 %v8996
        %v9077 = vunpack.c.l.b16 %v9006
        %v9078 = vunpack.c.l.b16 %v9020
        %v9079 = vunpack.c.l.b16 %v9030
        %v9080 = vpack.c.b16 %v9049, %v9048
        %v9081 = vpack.c.b16 %v9051, %v9050
        %v9082 = vpack.c.b16 %v9053, %v9052
        %v9083 = vpack.c.b16 %v9055, %v9054
        %v9084 = vpack.c.b16 %v9057, %v9056
        %v9085 = vpack.c.b16 %v9059, %v9058
        %v9086 = vpack.c.b16 %v9061, %v9060
        %v9087 = vpack.c.b16 %v9063, %v9062
        %v9088 = vpack.c.b16 %v9065, %v9064
        %v9089 = vpack.c.b16 %v9067, %v9066
        %v9090 = vpack.c.b16 %v9069, %v9068
        %v9091 = vpack.c.b16 %v9071, %v9070
        %v9092 = vpack.c.b16 %v9073, %v9072
        %v9093 = vpack.c.b16 %v9075, %v9074
        %v9094 = vpack.c.b16 %v9077, %v9076
        %v9095 = vpack.c.b16 %v9079, %v9078
        %v9128 = vunpack.c.l.b16 %v9032
        %v9129 = vunpack.c.l.b16 %v9033
        %v9130 = vunpack.c.l.b16 %v9034
        %v9131 = vunpack.c.l.b16 %v9035
        %v9132 = vunpack.c.l.b16 %v9036
        %v9133 = vunpack.c.l.b16 %v9037
        %v9134 = vunpack.c.l.b16 %v9038
        %v9135 = vunpack.c.l.b16 %v9039
        %v9136 = vunpack.c.l.b16 %v9040
        %v9137 = vunpack.c.l.b16 %v9041
        %v9138 = vunpack.c.l.b16 %v9042
        %v9139 = vunpack.c.l.b16 %v9043
        %v9140 = vunpack.c.l.b16 %v9044
        %v9141 = vunpack.c.l.b16 %v9045
        %v9142 = vunpack.c.l.b16 %v9046
        %v9143 = vunpack.c.l.b16 %v9047
        %v9144 = vpack.c.b16 %v9129, %v9128
        %v9145 = vpack.c.b16 %v9131, %v9130
        %v9146 = vpack.c.b16 %v9133, %v9132
        %v9147 = vpack.c.b16 %v9135, %v9134
        %v9148 = vpack.c.b16 %v9137, %v9136
        %v9149 = vpack.c.b16 %v9139, %v9138
        %v9150 = vpack.c.b16 %v9141, %v9140
        %v9151 = vpack.c.b16 %v9143, %v9142
        %9160 = vmatpush.bf16.msra.mxu0 %v9151
        %9161 = vmatpush.bf16.msra.mxu0 %v9150
        %9162 = vmatpush.bf16.msra.mxu0 %v9149
        %9163 = vmatpush.bf16.msra.mxu0 %v9148
        %9164 = vmatpush.bf16.msra.mxu0 %v9147
        %9165 = vmatpush.bf16.msra.mxu0 %v9146
        %9166 = vmatpush.bf16.msra.mxu0 %v9145
        %9167 = vmatpush.bf16.msra.mxu0 %v9144
        %9168 = vmatmul.bf16.gmra.mxu0 %v9080
        %v9169 = vpop.f32.mrf.mxu0
        %v9170 = vadd.f32 0.0, %v9169
        %v9171 = vpop.f32.mrf.mxu0
        %v9172 = vadd.f32 0.0, %v9171
        %9173 = vmatmul.bf16.gmra.mxu0 %v9081
        %v9174 = vpop.f32.mrf.mxu0
        %v9175 = vadd.f32 0.0, %v9174
        %v9176 = vpop.f32.mrf.mxu0
        %v9177 = vadd.f32 0.0, %v9176
        %9178 = vmatmul.bf16.gmra.mxu0 %v9082
        %v9179 = vpop.f32.mrf.mxu0
        %v9180 = vadd.f32 0.0, %v9179
        %v9181 = vpop.f32.mrf.mxu0
        %v9182 = vadd.f32 0.0, %v9181
        %9183 = vmatmul.bf16.gmra.mxu0 %v9083
        %v9184 = vpop.f32.mrf.mxu0
        %v9185 = vadd.f32 0.0, %v9184
        %v9186 = vpop.f32.mrf.mxu0
        %v9187 = vadd.f32 0.0, %v9186
        %9188 = vmatmul.bf16.gmra.mxu0 %v9084
        %v9189 = vpop.f32.mrf.mxu0
        %v9190 = vadd.f32 0.0, %v9189
        %v9191 = vpop.f32.mrf.mxu0
        %v9192 = vadd.f32 0.0, %v9191
        %9193 = vmatmul.bf16.gmra.mxu0 %v9085
        %v9194 = vpop.f32.mrf.mxu0
        %v9195 = vadd.f32 0.0, %v9194
        %v9196 = vpop.f32.mrf.mxu0
        %v9197 = vadd.f32 0.0, %v9196
        %9198 = vmatmul.bf16.gmra.mxu0 %v9086
        %v9199 = vpop.f32.mrf.mxu0
        %v9200 = vadd.f32 0.0, %v9199
        %v9201 = vpop.f32.mrf.mxu0
        %v9202 = vadd.f32 0.0, %v9201
        %9203 = vmatmul.bf16.gmra.mxu0 %v9087
        %v9204 = vpop.f32.mrf.mxu0
        %v9205 = vadd.f32 0.0, %v9204
        %v9206 = vpop.f32.mrf.mxu0
        %v9207 = vadd.f32 0.0, %v9206
        %9208 = vmatmul.bf16.gmra.mxu0 %v9088
        %v9209 = vpop.f32.mrf.mxu0
        %v9210 = vadd.f32 0.0, %v9209
        %v9211 = vpop.f32.mrf.mxu0
        %v9212 = vadd.f32 0.0, %v9211
        %9213 = vmatmul.bf16.gmra.mxu0 %v9089
        %v9214 = vpop.f32.mrf.mxu0
        %v9215 = vadd.f32 0.0, %v9214
        %v9216 = vpop.f32.mrf.mxu0
        %v9217 = vadd.f32 0.0, %v9216
        %9218 = vmatmul.bf16.gmra.mxu0 %v9090
        %v9219 = vpop.f32.mrf.mxu0
        %v9220 = vadd.f32 0.0, %v9219
        %v9221 = vpop.f32.mrf.mxu0
        %v9222 = vadd.f32 0.0, %v9221
        %9223 = vmatmul.bf16.gmra.mxu0 %v9091
        %v9224 = vpop.f32.mrf.mxu0
        %v9225 = vadd.f32 0.0, %v9224
        %v9226 = vpop.f32.mrf.mxu0
        %v9227 = vadd.f32 0.0, %v9226
        %9228 = vmatmul.bf16.gmra.mxu0 %v9092
        %v9229 = vpop.f32.mrf.mxu0
        %v9230 = vadd.f32 0.0, %v9229
        %v9231 = vpop.f32.mrf.mxu0
        %v9232 = vadd.f32 0.0, %v9231
        %9233 = vmatmul.bf16.gmra.mxu0 %v9093
        %v9234 = vpop.f32.mrf.mxu0
        %v9235 = vadd.f32 0.0, %v9234
        %v9236 = vpop.f32.mrf.mxu0
        %v9237 = vadd.f32 0.0, %v9236
        %9238 = vmatmul.bf16.gmra.mxu0 %v9094
        %v9239 = vpop.f32.mrf.mxu0
        %v9240 = vadd.f32 0.0, %v9239
        %v9241 = vpop.f32.mrf.mxu0
        %v9242 = vadd.f32 0.0, %v9241
        %9243 = vmatmul.bf16.gmra.mxu0 %v9095
        %v9244 = vpop.f32.mrf.mxu0
        %v9245 = vadd.f32 0.0, %v9244
        %v9246 = vpop.f32.mrf.mxu0
        %v9247 = vadd.f32 0.0, %v9246
        %9248 = vdwg.mxu0
        %v9249 = vadd.f32 %v8567, %v9170
        %v9250 = vadd.f32 %v8568, %v9172
        %v9251 = vadd.f32 %v8569, %v9175
        %v9252 = vadd.f32 %v8570, %v9177
        %v9253 = vadd.f32 %v8571, %v9180
        %v9254 = vadd.f32 %v8572, %v9182
        %v9255 = vadd.f32 %v8573, %v9185
        %v9256 = vadd.f32 %v8574, %v9187
        %v9257 = vadd.f32 %v8575, %v9190
        %v9258 = vadd.f32 %v8576, %v9192
        %v9259 = vadd.f32 %v8577, %v9195
        %v9260 = vadd.f32 %v8578, %v9197
        %v9261 = vadd.f32 %v8579, %v9200
        %v9262 = vadd.f32 %v8580, %v9202
        %v9263 = vadd.f32 %v8581, %v9205
        %v9264 = vadd.f32 %v8582, %v9207
        %v9265 = vadd.f32 %v8583, %v9210
        %v9266 = vadd.f32 %v8584, %v9212
        %v9267 = vadd.f32 %v8585, %v9215
        %v9268 = vadd.f32 %v8586, %v9217
        %v9269 = vadd.f32 %v8587, %v9220
        %v9270 = vadd.f32 %v8588, %v9222
        %v9271 = vadd.f32 %v8589, %v9225
        %v9272 = vadd.f32 %v8590, %v9227
        %v9273 = vadd.f32 %v8591, %v9230
        %v9274 = vadd.f32 %v8592, %v9232
        %v9275 = vadd.f32 %v8593, %v9235
        %v9276 = vadd.f32 %v8594, %v9237
        %v9277 = vadd.f32 %v8595, %v9240
        %v9278 = vadd.f32 %v8596, %v9242
        %v9279 = vadd.f32 %v8597, %v9245
        %v9280 = vadd.f32 %v8598, %v9247
        %v9281 = vld [vmem:[%s8284] sm:$0xe]
        %v9282 = vld [vmem:[%s8284 + $0xc] sm:$0xe]
        %v9283 = vld [vmem:[%s8284 + $0x18] sm:$0xe]
        %v9284 = vld [vmem:[%s8284 + $0x24] sm:$0xe]
        %v9285 = vld [vmem:[%s8284 + $0x30] sm:$0xe]
        %v9286 = vld [vmem:[%s8284 + $0x3c] sm:$0xe]
        %v9287 = vld [vmem:[%s8284 + $0x48] sm:$0xe]
        %v9288 = vld [vmem:[%s8284 + $0x54] sm:$0xe]
        %v9289 = vld [vmem:[%s8284 + $0x60] sm:$0xe]
        %v9290 = vld [vmem:[%s8284 + $0x6c] sm:$0xe]
        %v9291 = vld [vmem:[%s8284 + $0x78] sm:$0xe]
        %v9292 = vld [vmem:[%s8284 + $0x84] sm:$0xe]
        %v9293 = vld [vmem:[%s8284 + $0x90] sm:$0xe]
        %v9294 = vld [vmem:[%s8284 + $0x9c] sm:$0xe]
        %v9295 = vld [vmem:[%s8284 + $0xa8] sm:$0xe]
        %v9296 = vld [vmem:[%s8284 + $0xb4] sm:$0xe]
        %v9345 = vrot.slane %v9281, 5
        %v9346 = vrot.slane %v9345, 4
        %v9347 = vrot.slane %v8600, 5
        %v9348 = vsel %vm1812, %v9346, %v9347
        %v9349 = vrot.slane %v9347, 4
        %v9350 = vrot.slane %v8601, 5
        %v9351 = vsel %vm1812, %v9349, %v9350
        %v9352 = vrot.slane %v9282, 5
        %v9353 = vrot.slane %v9352, 4
        %v9354 = vrot.slane %v8603, 5
        %v9355 = vsel %vm1812, %v9353, %v9354
        %v9356 = vrot.slane %v9354, 4
        %v9357 = vrot.slane %v8604, 5
        %v9358 = vsel %vm1812, %v9356, %v9357
        %v9359 = vrot.slane %v9283, 5
        %v9360 = vrot.slane %v9359, 4
        %v9361 = vrot.slane %v8606, 5
        %v9362 = vsel %vm1812, %v9360, %v9361
        %v9363 = vrot.slane %v9361, 4
        %v9364 = vrot.slane %v8607, 5
        %v9365 = vsel %vm1812, %v9363, %v9364
        %v9366 = vrot.slane %v9284, 5
        %v9367 = vrot.slane %v9366, 4
        %v9368 = vrot.slane %v8609, 5
        %v9369 = vsel %vm1812, %v9367, %v9368
        %v9370 = vrot.slane %v9368, 4
        %v9371 = vrot.slane %v8610, 5
        %v9372 = vsel %vm1812, %v9370, %v9371
        %v9373 = vrot.slane %v9285, 5
        %v9374 = vrot.slane %v9373, 4
        %v9375 = vrot.slane %v8612, 5
        %v9376 = vsel %vm1812, %v9374, %v9375
        %v9377 = vrot.slane %v9375, 4
        %v9378 = vrot.slane %v8613, 5
        %v9379 = vsel %vm1812, %v9377, %v9378
        %v9380 = vrot.slane %v9286, 5
        %v9381 = vrot.slane %v9380, 4
        %v9382 = vrot.slane %v8615, 5
        %v9383 = vsel %vm1812, %v9381, %v9382
        %v9384 = vrot.slane %v9382, 4
        %v9385 = vrot.slane %v8616, 5
        %v9386 = vsel %vm1812, %v9384, %v9385
        %v9387 = vrot.slane %v9287, 5
        %v9388 = vrot.slane %v9387, 4
        %v9389 = vrot.slane %v8618, 5
        %v9390 = vsel %vm1812, %v9388, %v9389
        %v9391 = vrot.slane %v9389, 4
        %v9392 = vrot.slane %v8619, 5
        %v9393 = vsel %vm1812, %v9391, %v9392
        %v9394 = vrot.slane %v9288, 5
        %v9395 = vrot.slane %v9394, 4
        %v9396 = vrot.slane %v8621, 5
        %v9397 = vsel %vm1812, %v9395, %v9396
        %v9398 = vrot.slane %v9396, 4
        %v9399 = vrot.slane %v8622, 5
        %v9400 = vsel %vm1812, %v9398, %v9399
        %v9401 = vrot.slane %v9289, 5
        %v9402 = vrot.slane %v9401, 4
        %v9403 = vrot.slane %v8624, 5
        %v9404 = vsel %vm1812, %v9402, %v9403
        %v9405 = vrot.slane %v9403, 4
        %v9406 = vrot.slane %v8625, 5
        %v9407 = vsel %vm1812, %v9405, %v9406
        %v9408 = vrot.slane %v9290, 5
        %v9409 = vrot.slane %v9408, 4
        %v9410 = vrot.slane %v8627, 5
        %v9411 = vsel %vm1812, %v9409, %v9410
        %v9412 = vrot.slane %v9410, 4
        %v9413 = vrot.slane %v8628, 5
        %v9414 = vsel %vm1812, %v9412, %v9413
        %v9415 = vrot.slane %v9291, 5
        %v9416 = vrot.slane %v9415, 4
        %v9417 = vrot.slane %v8630, 5
        %v9418 = vsel %vm1812, %v9416, %v9417
        %v9419 = vrot.slane %v9417, 4
        %v9420 = vrot.slane %v8631, 5
        %v9421 = vsel %vm1812, %v9419, %v9420
        %v9422 = vrot.slane %v9292, 5
        %v9423 = vrot.slane %v9422, 4
        %v9424 = vrot.slane %v8633, 5
        %v9425 = vsel %vm1812, %v9423, %v9424
        %v9426 = vrot.slane %v9424, 4
        %v9427 = vrot.slane %v8634, 5
        %v9428 = vsel %vm1812, %v9426, %v9427
        %v9429 = vrot.slane %v9293, 5
        %v9430 = vrot.slane %v9429, 4
        %v9431 = vrot.slane %v8636, 5
        %v9432 = vsel %vm1812, %v9430, %v9431
        %v9433 = vrot.slane %v9431, 4
        %v9434 = vrot.slane %v8637, 5
        %v9435 = vsel %vm1812, %v9433, %v9434
        %v9436 = vrot.slane %v9294, 5
        %v9437 = vrot.slane %v9436, 4
        %v9438 = vrot.slane %v8639, 5
        %v9439 = vsel %vm1812, %v9437, %v9438
        %v9440 = vrot.slane %v9438, 4
        %v9441 = vrot.slane %v8640, 5
        %v9442 = vsel %vm1812, %v9440, %v9441
        %v9443 = vrot.slane %v9295, 5
        %v9444 = vrot.slane %v9443, 4
        %v9445 = vrot.slane %v8642, 5
        %v9446 = vsel %vm1812, %v9444, %v9445
        %v9447 = vrot.slane %v9445, 4
        %v9448 = vrot.slane %v8643, 5
        %v9449 = vsel %vm1812, %v9447, %v9448
        %v9450 = vrot.slane %v9296, 5
        %v9451 = vrot.slane %v9450, 4
        %v9452 = vrot.slane %v8645, 5
        %v9453 = vsel %vm1812, %v9451, %v9452
        %v9454 = vrot.slane %v9452, 4
        %v9455 = vrot.slane %v8646, 5
        %v9456 = vsel %vm1812, %v9454, %v9455
        %s9457 = scalar_lea.vmem [#allocation9], 512
        %v9458 = vld [vmem:[%s9457] sm:$0xf]
        %v9459 = vld [vmem:[%s9457 + $0x4] sm:$0xf]
        %v9460 = vld [vmem:[%s9457 + $0x8] sm:$0xf]
        %v9461 = vld [vmem:[%s9457 + $0xc] sm:$0xf]
        %v9462 = vld [vmem:[%s9457 + $0x10] sm:$0xf]
        %v9463 = vld [vmem:[%s9457 + $0x14] sm:$0xf]
        %v9464 = vld [vmem:[%s9457 + $0x18] sm:$0xf]
        %v9465 = vld [vmem:[%s9457 + $0x1c] sm:$0xf]
        %v9466 = vld [vmem:[%s9457 + $0x20] sm:$0xf]
        %v9467 = vld [vmem:[%s9457 + $0x24] sm:$0xf]
        %v9468 = vld [vmem:[%s9457 + $0x28] sm:$0xf]
        %v9469 = vld [vmem:[%s9457 + $0x2c] sm:$0xf]
        %v9470 = vld [vmem:[%s9457 + $0x30] sm:$0xf]
        %v9471 = vld [vmem:[%s9457 + $0x34] sm:$0xf]
        %v9472 = vld [vmem:[%s9457 + $0x38] sm:$0xf]
        %v9473 = vld [vmem:[%s9457 + $0x3c] sm:$0xf]
        %v9474 = vunpack.c.l.b16 %v9348
        %v9475 = vunpack.c.l.b16 %v9351
        %v9476 = vunpack.c.l.b16 %v9355
        %v9477 = vunpack.c.l.b16 %v9358
        %v9478 = vunpack.c.l.b16 %v9362
        %v9479 = vunpack.c.l.b16 %v9365
        %v9480 = vunpack.c.l.b16 %v9369
        %v9481 = vunpack.c.l.b16 %v9372
        %v9482 = vunpack.c.l.b16 %v9376
        %v9483 = vunpack.c.l.b16 %v9379
        %v9484 = vunpack.c.l.b16 %v9383
        %v9485 = vunpack.c.l.b16 %v9386
        %v9486 = vunpack.c.l.b16 %v9390
        %v9487 = vunpack.c.l.b16 %v9393
        %v9488 = vunpack.c.l.b16 %v9397
        %v9489 = vunpack.c.l.b16 %v9400
        %v9490 = vunpack.c.l.b16 %v9404
        %v9491 = vunpack.c.l.b16 %v9407
        %v9492 = vunpack.c.l.b16 %v9411
        %v9493 = vunpack.c.l.b16 %v9414
        %v9494 = vunpack.c.l.b16 %v9418
        %v9495 = vunpack.c.l.b16 %v9421
        %v9496 = vunpack.c.l.b16 %v9425
        %v9497 = vunpack.c.l.b16 %v9428
        %v9498 = vunpack.c.l.b16 %v9432
        %v9499 = vunpack.c.l.b16 %v9435
        %v9500 = vunpack.c.l.b16 %v9439
        %v9501 = vunpack.c.l.b16 %v9442
        %v9502 = vunpack.c.l.b16 %v9446
        %v9503 = vunpack.c.l.b16 %v9449
        %v9504 = vunpack.c.l.b16 %v9453
        %v9505 = vunpack.c.l.b16 %v9456
        %v9506 = vpack.c.b16 %v9475, %v9474
        %v9507 = vpack.c.b16 %v9477, %v9476
        %v9508 = vpack.c.b16 %v9479, %v9478
        %v9509 = vpack.c.b16 %v9481, %v9480
        %v9510 = vpack.c.b16 %v9483, %v9482
        %v9511 = vpack.c.b16 %v9485, %v9484
        %v9512 = vpack.c.b16 %v9487, %v9486
        %v9513 = vpack.c.b16 %v9489, %v9488
        %v9514 = vpack.c.b16 %v9491, %v9490
        %v9515 = vpack.c.b16 %v9493, %v9492
        %v9516 = vpack.c.b16 %v9495, %v9494
        %v9517 = vpack.c.b16 %v9497, %v9496
        %v9518 = vpack.c.b16 %v9499, %v9498
        %v9519 = vpack.c.b16 %v9501, %v9500
        %v9520 = vpack.c.b16 %v9503, %v9502
        %v9521 = vpack.c.b16 %v9505, %v9504
        %v9554 = vunpack.c.l.b16 %v9458
        %v9555 = vunpack.c.l.b16 %v9459
        %v9556 = vunpack.c.l.b16 %v9460
        %v9557 = vunpack.c.l.b16 %v9461
        %v9558 = vunpack.c.l.b16 %v9462
        %v9559 = vunpack.c.l.b16 %v9463
        %v9560 = vunpack.c.l.b16 %v9464
        %v9561 = vunpack.c.l.b16 %v9465
        %v9562 = vunpack.c.l.b16 %v9466
        %v9563 = vunpack.c.l.b16 %v9467
        %v9564 = vunpack.c.l.b16 %v9468
        %v9565 = vunpack.c.l.b16 %v9469
        %v9566 = vunpack.c.l.b16 %v9470
        %v9567 = vunpack.c.l.b16 %v9471
        %v9568 = vunpack.c.l.b16 %v9472
        %v9569 = vunpack.c.l.b16 %v9473
        %v9570 = vpack.c.b16 %v9555, %v9554
        %v9571 = vpack.c.b16 %v9557, %v9556
        %v9572 = vpack.c.b16 %v9559, %v9558
        %v9573 = vpack.c.b16 %v9561, %v9560
        %v9574 = vpack.c.b16 %v9563, %v9562
        %v9575 = vpack.c.b16 %v9565, %v9564
        %v9576 = vpack.c.b16 %v9567, %v9566
        %v9577 = vpack.c.b16 %v9569, %v9568
        %9586 = vmatpush.bf16.msra.mxu0 %v9577
        %9587 = vmatpush.bf16.msra.mxu0 %v9576
        %9588 = vmatpush.bf16.msra.mxu0 %v9575
        %9589 = vmatpush.bf16.msra.mxu0 %v9574
        %9590 = vmatpush.bf16.msra.mxu0 %v9573
        %9591 = vmatpush.bf16.msra.mxu0 %v9572
        %9592 = vmatpush.bf16.msra.mxu0 %v9571
        %9593 = vmatpush.bf16.msra.mxu0 %v9570
        %9594 = vmatmul.bf16.gmra.mxu0 %v9506
        %v9595 = vpop.f32.mrf.mxu0
        %v9596 = vadd.f32 0.0, %v9595
        %v9597 = vpop.f32.mrf.mxu0
        %v9598 = vadd.f32 0.0, %v9597
        %9599 = vmatmul.bf16.gmra.mxu0 %v9507
        %v9600 = vpop.f32.mrf.mxu0
        %v9601 = vadd.f32 0.0, %v9600
        %v9602 = vpop.f32.mrf.mxu0
        %v9603 = vadd.f32 0.0, %v9602
        %9604 = vmatmul.bf16.gmra.mxu0 %v9508
        %v9605 = vpop.f32.mrf.mxu0
        %v9606 = vadd.f32 0.0, %v9605
        %v9607 = vpop.f32.mrf.mxu0
        %v9608 = vadd.f32 0.0, %v9607
        %9609 = vmatmul.bf16.gmra.mxu0 %v9509
        %v9610 = vpop.f32.mrf.mxu0
        %v9611 = vadd.f32 0.0, %v9610
        %v9612 = vpop.f32.mrf.mxu0
        %v9613 = vadd.f32 0.0, %v9612
        %9614 = vmatmul.bf16.gmra.mxu0 %v9510
        %v9615 = vpop.f32.mrf.mxu0
        %v9616 = vadd.f32 0.0, %v9615
        %v9617 = vpop.f32.mrf.mxu0
        %v9618 = vadd.f32 0.0, %v9617
        %9619 = vmatmul.bf16.gmra.mxu0 %v9511
        %v9620 = vpop.f32.mrf.mxu0
        %v9621 = vadd.f32 0.0, %v9620
        %v9622 = vpop.f32.mrf.mxu0
        %v9623 = vadd.f32 0.0, %v9622
        %9624 = vmatmul.bf16.gmra.mxu0 %v9512
        %v9625 = vpop.f32.mrf.mxu0
        %v9626 = vadd.f32 0.0, %v9625
        %v9627 = vpop.f32.mrf.mxu0
        %v9628 = vadd.f32 0.0, %v9627
        %9629 = vmatmul.bf16.gmra.mxu0 %v9513
        %v9630 = vpop.f32.mrf.mxu0
        %v9631 = vadd.f32 0.0, %v9630
        %v9632 = vpop.f32.mrf.mxu0
        %v9633 = vadd.f32 0.0, %v9632
        %9634 = vmatmul.bf16.gmra.mxu0 %v9514
        %v9635 = vpop.f32.mrf.mxu0
        %v9636 = vadd.f32 0.0, %v9635
        %v9637 = vpop.f32.mrf.mxu0
        %v9638 = vadd.f32 0.0, %v9637
        %9639 = vmatmul.bf16.gmra.mxu0 %v9515
        %v9640 = vpop.f32.mrf.mxu0
        %v9641 = vadd.f32 0.0, %v9640
        %v9642 = vpop.f32.mrf.mxu0
        %v9643 = vadd.f32 0.0, %v9642
        %9644 = vmatmul.bf16.gmra.mxu0 %v9516
        %v9645 = vpop.f32.mrf.mxu0
        %v9646 = vadd.f32 0.0, %v9645
        %v9647 = vpop.f32.mrf.mxu0
        %v9648 = vadd.f32 0.0, %v9647
        %9649 = vmatmul.bf16.gmra.mxu0 %v9517
        %v9650 = vpop.f32.mrf.mxu0
        %v9651 = vadd.f32 0.0, %v9650
        %v9652 = vpop.f32.mrf.mxu0
        %v9653 = vadd.f32 0.0, %v9652
        %9654 = vmatmul.bf16.gmra.mxu0 %v9518
        %v9655 = vpop.f32.mrf.mxu0
        %v9656 = vadd.f32 0.0, %v9655
        %v9657 = vpop.f32.mrf.mxu0
        %v9658 = vadd.f32 0.0, %v9657
        %9659 = vmatmul.bf16.gmra.mxu0 %v9519
        %v9660 = vpop.f32.mrf.mxu0
        %v9661 = vadd.f32 0.0, %v9660
        %v9662 = vpop.f32.mrf.mxu0
        %v9663 = vadd.f32 0.0, %v9662
        %9664 = vmatmul.bf16.gmra.mxu0 %v9520
        %v9665 = vpop.f32.mrf.mxu0
        %v9666 = vadd.f32 0.0, %v9665
        %v9667 = vpop.f32.mrf.mxu0
        %v9668 = vadd.f32 0.0, %v9667
        %9669 = vmatmul.bf16.gmra.mxu0 %v9521
        %v9670 = vpop.f32.mrf.mxu0
        %v9671 = vadd.f32 0.0, %v9670
        %v9672 = vpop.f32.mrf.mxu0
        %v9673 = vadd.f32 0.0, %v9672
        %9674 = vdwg.mxu0
        %v9675 = vadd.f32 %v9249, %v9596
        %v9676 = vadd.f32 %v9250, %v9598
        %v9677 = vadd.f32 %v9251, %v9601
        %v9678 = vadd.f32 %v9252, %v9603
        %v9679 = vadd.f32 %v9253, %v9606
        %v9680 = vadd.f32 %v9254, %v9608
        %v9681 = vadd.f32 %v9255, %v9611
        %v9682 = vadd.f32 %v9256, %v9613
        %v9683 = vadd.f32 %v9257, %v9616
        %v9684 = vadd.f32 %v9258, %v9618
        %v9685 = vadd.f32 %v9259, %v9621
        %v9686 = vadd.f32 %v9260, %v9623
        %v9687 = vadd.f32 %v9261, %v9626
        %v9688 = vadd.f32 %v9262, %v9628
        %v9689 = vadd.f32 %v9263, %v9631
        %v9690 = vadd.f32 %v9264, %v9633
        %v9691 = vadd.f32 %v9265, %v9636
        %v9692 = vadd.f32 %v9266, %v9638
        %v9693 = vadd.f32 %v9267, %v9641
        %v9694 = vadd.f32 %v9268, %v9643
        %v9695 = vadd.f32 %v9269, %v9646
        %v9696 = vadd.f32 %v9270, %v9648
        %v9697 = vadd.f32 %v9271, %v9651
        %v9698 = vadd.f32 %v9272, %v9653
        %v9699 = vadd.f32 %v9273, %v9656
        %v9700 = vadd.f32 %v9274, %v9658
        %v9701 = vadd.f32 %v9275, %v9661
        %v9702 = vadd.f32 %v9276, %v9663
        %v9703 = vadd.f32 %v9277, %v9666
        %v9704 = vadd.f32 %v9278, %v9668
        %v9705 = vadd.f32 %v9279, %v9671
        %v9706 = vadd.f32 %v9280, %v9673
        %v9707 = vld [vmem:[%s4] sm:$0x1]
        %v9709 = vperm.slane %v9707, 0
        %v9711 = vadd.f32 %v9675, %v9709
        %v9712 = vadd.f32 %v9676, %v9709
        %v9713 = vadd.f32 %v9677, %v9709
        %v9714 = vadd.f32 %v9678, %v9709
        %v9715 = vadd.f32 %v9679, %v9709
        %v9716 = vadd.f32 %v9680, %v9709
        %v9717 = vadd.f32 %v9681, %v9709
        %v9718 = vadd.f32 %v9682, %v9709
        %v9719 = vadd.f32 %v9683, %v9709
        %v9720 = vadd.f32 %v9684, %v9709
        %v9721 = vadd.f32 %v9685, %v9709
        %v9722 = vadd.f32 %v9686, %v9709
        %v9723 = vadd.f32 %v9687, %v9709
        %v9724 = vadd.f32 %v9688, %v9709
        %v9725 = vadd.f32 %v9689, %v9709
        %v9726 = vadd.f32 %v9690, %v9709
        %v9727 = vadd.f32 %v9691, %v9709
        %v9728 = vadd.f32 %v9692, %v9709
        %v9729 = vadd.f32 %v9693, %v9709
        %v9730 = vadd.f32 %v9694, %v9709
        %v9731 = vadd.f32 %v9695, %v9709
        %v9732 = vadd.f32 %v9696, %v9709
        %v9733 = vadd.f32 %v9697, %v9709
        %v9734 = vadd.f32 %v9698, %v9709
        %v9735 = vadd.f32 %v9699, %v9709
        %v9736 = vadd.f32 %v9700, %v9709
        %v9737 = vadd.f32 %v9701, %v9709
        %v9738 = vadd.f32 %v9702, %v9709
        %v9739 = vadd.f32 %v9703, %v9709
        %v9740 = vadd.f32 %v9704, %v9709
        %v9741 = vadd.f32 %v9705, %v9709
        %v9742 = vadd.f32 %v9706, %v9709
        %v9743 = vld [vmem:[%s240] sm:$0xf]
        %v9744 = vld [vmem:[%s240 + $0x4] sm:$0xf]
        %v9745 = vld [vmem:[%s240 + $0x8] sm:$0xf]
        %v9746 = vld [vmem:[%s240 + $0xc] sm:$0xf]
        %v9747 = vld [vmem:[%s240 + $0x10] sm:$0xf]
        %v9748 = vld [vmem:[%s240 + $0x14] sm:$0xf]
        %v9749 = vld [vmem:[%s240 + $0x18] sm:$0xf]
        %v9750 = vld [vmem:[%s240 + $0x1c] sm:$0xf]
        %v9751 = vld [vmem:[%s240 + $0x20] sm:$0xf]
        %v9752 = vld [vmem:[%s240 + $0x24] sm:$0xf]
        %v9753 = vld [vmem:[%s240 + $0x28] sm:$0xf]
        %v9754 = vld [vmem:[%s240 + $0x2c] sm:$0xf]
        %v9755 = vld [vmem:[%s240 + $0x30] sm:$0xf]
        %v9756 = vld [vmem:[%s240 + $0x34] sm:$0xf]
        %v9757 = vld [vmem:[%s240 + $0x38] sm:$0xf]
        %v9758 = vld [vmem:[%s240 + $0x3c] sm:$0xf]
        %v9759 = vld [vmem:[%s240 + $0x40] sm:$0xf]
        %v9760 = vld [vmem:[%s240 + $0x44] sm:$0xf]
        %v9761 = vld [vmem:[%s240 + $0x48] sm:$0xf]
        %v9762 = vld [vmem:[%s240 + $0x4c] sm:$0xf]
        %v9763 = vld [vmem:[%s240 + $0x50] sm:$0xf]
        %v9764 = vld [vmem:[%s240 + $0x54] sm:$0xf]
        %v9765 = vld [vmem:[%s240 + $0x58] sm:$0xf]
        %v9766 = vld [vmem:[%s240 + $0x5c] sm:$0xf]
        %v9767 = vld [vmem:[%s240 + $0x60] sm:$0xf]
        %v9768 = vld [vmem:[%s240 + $0x64] sm:$0xf]
        %v9769 = vld [vmem:[%s240 + $0x68] sm:$0xf]
        %v9770 = vld [vmem:[%s240 + $0x6c] sm:$0xf]
        %v9771 = vld [vmem:[%s240 + $0x70] sm:$0xf]
        %v9772 = vld [vmem:[%s240 + $0x74] sm:$0xf]
        %v9773 = vld [vmem:[%s240 + $0x78] sm:$0xf]
        %v9774 = vld [vmem:[%s240 + $0x7c] sm:$0xf]
        %v9775 = vunpack.c.l.bf16 %v9743
        %v9776 = vunpack.c.l.bf16 %v9744
        %v9777 = vunpack.c.l.bf16 %v9745
        %v9778 = vunpack.c.l.bf16 %v9746
        %v9779 = vunpack.c.l.bf16 %v9747
        %v9780 = vunpack.c.l.bf16 %v9748
        %v9781 = vunpack.c.l.bf16 %v9749
        %v9782 = vunpack.c.l.bf16 %v9750
        %v9783 = vunpack.c.l.bf16 %v9751
        %v9784 = vunpack.c.l.bf16 %v9752
        %v9785 = vunpack.c.l.bf16 %v9753
        %v9786 = vunpack.c.l.bf16 %v9754
        %v9787 = vunpack.c.l.bf16 %v9755
        %v9788 = vunpack.c.l.bf16 %v9756
        %v9789 = vunpack.c.l.bf16 %v9757
        %v9790 = vunpack.c.l.bf16 %v9758
        %v9791 = vunpack.c.l.bf16 %v9759
        %v9792 = vunpack.c.l.bf16 %v9760
        %v9793 = vunpack.c.l.bf16 %v9761
        %v9794 = vunpack.c.l.bf16 %v9762
        %v9795 = vunpack.c.l.bf16 %v9763
        %v9796 = vunpack.c.l.bf16 %v9764
        %v9797 = vunpack.c.l.bf16 %v9765
        %v9798 = vunpack.c.l.bf16 %v9766
        %v9799 = vunpack.c.l.bf16 %v9767
        %v9800 = vunpack.c.l.bf16 %v9768
        %v9801 = vunpack.c.l.bf16 %v9769
        %v9802 = vunpack.c.l.bf16 %v9770
        %v9803 = vunpack.c.l.bf16 %v9771
        %v9804 = vunpack.c.l.bf16 %v9772
        %v9805 = vunpack.c.l.bf16 %v9773
        %v9806 = vunpack.c.l.bf16 %v9774
        %v9807 = vadd.f32 %v9711, %v9775
        %v9808 = vadd.f32 %v9712, %v9776
        %v9809 = vadd.f32 %v9713, %v9777
        %v9810 = vadd.f32 %v9714, %v9778
        %v9811 = vadd.f32 %v9715, %v9779
        %v9812 = vadd.f32 %v9716, %v9780
        %v9813 = vadd.f32 %v9717, %v9781
        %v9814 = vadd.f32 %v9718, %v9782
        %v9815 = vadd.f32 %v9719, %v9783
        %v9816 = vadd.f32 %v9720, %v9784
        %v9817 = vadd.f32 %v9721, %v9785
        %v9818 = vadd.f32 %v9722, %v9786
        %v9819 = vadd.f32 %v9723, %v9787
        %v9820 = vadd.f32 %v9724, %v9788
        %v9821 = vadd.f32 %v9725, %v9789
        %v9822 = vadd.f32 %v9726, %v9790
        %v9823 = vadd.f32 %v9727, %v9791
        %v9824 = vadd.f32 %v9728, %v9792
        %v9825 = vadd.f32 %v9729, %v9793
        %v9826 = vadd.f32 %v9730, %v9794
        %v9827 = vadd.f32 %v9731, %v9795
        %v9828 = vadd.f32 %v9732, %v9796
        %v9829 = vadd.f32 %v9733, %v9797
        %v9830 = vadd.f32 %v9734, %v9798
        %v9831 = vadd.f32 %v9735, %v9799
        %v9832 = vadd.f32 %v9736, %v9800
        %v9833 = vadd.f32 %v9737, %v9801
        %v9834 = vadd.f32 %v9738, %v9802
        %v9835 = vadd.f32 %v9739, %v9803
        %v9836 = vadd.f32 %v9740, %v9804
        %v9837 = vadd.f32 %v9741, %v9805
        %v9838 = vadd.f32 %v9742, %v9806
        %v9839 = vmax.f32 %v9807, 0.0
        %v9840 = vmax.f32 %v9808, 0.0
        %v9841 = vmax.f32 %v9809, 0.0
        %v9842 = vmax.f32 %v9810, 0.0
        %v9843 = vmax.f32 %v9811, 0.0
        %v9844 = vmax.f32 %v9812, 0.0
        %v9845 = vmax.f32 %v9813, 0.0
        %v9846 = vmax.f32 %v9814, 0.0
        %v9847 = vmax.f32 %v9815, 0.0
        %v9848 = vmax.f32 %v9816, 0.0
        %v9849 = vmax.f32 %v9817, 0.0
        %v9850 = vmax.f32 %v9818, 0.0
        %v9851 = vmax.f32 %v9819, 0.0
        %v9852 = vmax.f32 %v9820, 0.0
        %v9853 = vmax.f32 %v9821, 0.0
        %v9854 = vmax.f32 %v9822, 0.0
        %v9855 = vmax.f32 %v9823, 0.0
        %v9856 = vmax.f32 %v9824, 0.0
        %v9857 = vmax.f32 %v9825, 0.0
        %v9858 = vmax.f32 %v9826, 0.0
        %v9859 = vmax.f32 %v9827, 0.0
        %v9860 = vmax.f32 %v9828, 0.0
        %v9861 = vmax.f32 %v9829, 0.0
        %v9862 = vmax.f32 %v9830, 0.0
        %v9863 = vmax.f32 %v9831, 0.0
        %v9864 = vmax.f32 %v9832, 0.0
        %v9865 = vmax.f32 %v9833, 0.0
        %v9866 = vmax.f32 %v9834, 0.0
        %v9867 = vmax.f32 %v9835, 0.0
        %v9868 = vmax.f32 %v9836, 0.0
        %v9869 = vmax.f32 %v9837, 0.0
        %v9870 = vmax.f32 %v9838, 0.0
        %v9871 = vpack.c.bf16 %v9839, %v9839
        %v9872 = vpack.c.bf16 %v9840, %v9840
        %v9873 = vpack.c.bf16 %v9841, %v9841
        %v9874 = vpack.c.bf16 %v9842, %v9842
        %v9875 = vpack.c.bf16 %v9843, %v9843
        %v9876 = vpack.c.bf16 %v9844, %v9844
        %v9877 = vpack.c.bf16 %v9845, %v9845
        %v9878 = vpack.c.bf16 %v9846, %v9846
        %v9879 = vpack.c.bf16 %v9847, %v9847
        %v9880 = vpack.c.bf16 %v9848, %v9848
        %v9881 = vpack.c.bf16 %v9849, %v9849
        %v9882 = vpack.c.bf16 %v9850, %v9850
        %v9883 = vpack.c.bf16 %v9851, %v9851
        %v9884 = vpack.c.bf16 %v9852, %v9852
        %v9885 = vpack.c.bf16 %v9853, %v9853
        %v9886 = vpack.c.bf16 %v9854, %v9854
        %v9887 = vpack.c.bf16 %v9855, %v9855
        %v9888 = vpack.c.bf16 %v9856, %v9856
        %v9889 = vpack.c.bf16 %v9857, %v9857
        %v9890 = vpack.c.bf16 %v9858, %v9858
        %v9891 = vpack.c.bf16 %v9859, %v9859
        %v9892 = vpack.c.bf16 %v9860, %v9860
        %v9893 = vpack.c.bf16 %v9861, %v9861
        %v9894 = vpack.c.bf16 %v9862, %v9862
        %v9895 = vpack.c.bf16 %v9863, %v9863
        %v9896 = vpack.c.bf16 %v9864, %v9864
        %v9897 = vpack.c.bf16 %v9865, %v9865
        %v9898 = vpack.c.bf16 %v9866, %v9866
        %v9899 = vpack.c.bf16 %v9867, %v9867
        %v9900 = vpack.c.bf16 %v9868, %v9868
        %v9901 = vpack.c.bf16 %v9869, %v9869
        %v9902 = vpack.c.bf16 %v9870, %v9870
        %9903 = vst [vmem:[%s277] sm:$0xf] %v9871
        %9904 = vst [vmem:[%s277 + $0x4] sm:$0xf] %v9872
        %9905 = vst [vmem:[%s277 + $0x8] sm:$0xf] %v9873
        %9906 = vst [vmem:[%s277 + $0xc] sm:$0xf] %v9874
        %9907 = vst [vmem:[%s277 + $0x10] sm:$0xf] %v9875
        %9908 = vst [vmem:[%s277 + $0x14] sm:$0xf] %v9876
        %9909 = vst [vmem:[%s277 + $0x18] sm:$0xf] %v9877
        %9910 = vst [vmem:[%s277 + $0x1c] sm:$0xf] %v9878
        %9911 = vst [vmem:[%s277 + $0x20] sm:$0xf] %v9879
        %9912 = vst [vmem:[%s277 + $0x24] sm:$0xf] %v9880
        %9913 = vst [vmem:[%s277 + $0x28] sm:$0xf] %v9881
        %9914 = vst [vmem:[%s277 + $0x2c] sm:$0xf] %v9882
        %9915 = vst [vmem:[%s277 + $0x30] sm:$0xf] %v9883
        %9916 = vst [vmem:[%s277 + $0x34] sm:$0xf] %v9884
        %9917 = vst [vmem:[%s277 + $0x38] sm:$0xf] %v9885
        %9918 = vst [vmem:[%s277 + $0x3c] sm:$0xf] %v9886
        %9919 = vst [vmem:[%s277 + $0x40] sm:$0xf] %v9887
        %9920 = vst [vmem:[%s277 + $0x44] sm:$0xf] %v9888
        %9921 = vst [vmem:[%s277 + $0x48] sm:$0xf] %v9889
        %9922 = vst [vmem:[%s277 + $0x4c] sm:$0xf] %v9890
        %9923 = vst [vmem:[%s277 + $0x50] sm:$0xf] %v9891
        %9924 = vst [vmem:[%s277 + $0x54] sm:$0xf] %v9892
        %9925 = vst [vmem:[%s277 + $0x58] sm:$0xf] %v9893
        %9926 = vst [vmem:[%s277 + $0x5c] sm:$0xf] %v9894
        %9927 = vst [vmem:[%s277 + $0x60] sm:$0xf] %v9895
        %9928 = vst [vmem:[%s277 + $0x64] sm:$0xf] %v9896
        %9929 = vst [vmem:[%s277 + $0x68] sm:$0xf] %v9897
        %9930 = vst [vmem:[%s277 + $0x6c] sm:$0xf] %v9898
        %9931 = vst [vmem:[%s277 + $0x70] sm:$0xf] %v9899
        %9932 = vst [vmem:[%s277 + $0x74] sm:$0xf] %v9900
        %9933 = vst [vmem:[%s277 + $0x78] sm:$0xf] %v9901
        %9934 = vst [vmem:[%s277 + $0x7c] sm:$0xf] %v9902
        %s9935 = sand.u32 %s141, 1
        %s9936 = scalar_lea.sflag [#allocation6], %s9935
        %s9937 = sand.u32 %s141, 1
        %s9938 = smul.addr %s9937, 128
        %s9939 = scalar_lea.vmem [#allocation10], %s9938
        // Predicated region
        $region53: #{tpu_custom_call.1} parent=39 // pred_check
          %p9940 = pneg %p151
        $region54: #{tpu_custom_call.1} parent=39 // pred_check_branch
          %9942 = sbr.rel (%p9940) target = $region56
        $region55: #{tpu_custom_call.1} parent=39 // pred_region
          %9944 = vsyncadd %s9936, 0
          %s9945 = smul.addr %s23, 32
          %s9946 = smul.addr %s9945, 4
          %s9947 = scalar_lea.hbm %s5, %s9946
          %s9948 = sshll.u32 %s9939, 4
          %s9949 = int_to_ptr.vmem [resolvable:$true] %s9948
          %s9950 = sshll.u32 %s9947, 4
          %s9951 = int_to_ptr.hbm [resolvable:$true] %s9950
          %9956 = dma.vmem_to_hbm [thread:$0]  %s9949, 2048, %s9951, %s9936, 64, 64, 4
        $region56: #{tpu_custom_call.1} parent=39 // pred_fallthru
          _
      $region40: #{tpu_custom_call.1} parent=5 // pred_fallthru
        _
      %p9957 = scmp.le.s32.totalorder 2, %s18
      // Predicated region
      $region57: #{tpu_custom_call.1} parent=5 // pred_check
        %p9958 = pneg %p9957
      $region58: #{tpu_custom_call.1} parent=5 // pred_check_branch
        %9960 = sbr.rel (%p9958) target = $region60
      $region59: #{tpu_custom_call.1} parent=5 // pred_region
        %s9961 = ssub.s32 %s18, 2
        // Predicated region
        $region61: #{tpu_custom_call.1} parent=59 // pred_check
          %p9962 = pneg %p157
        $region62: #{tpu_custom_call.1} parent=59 // pred_check_branch
          %9964 = sbr.rel (%p9962) target = $region64
        $region63: #{tpu_custom_call.1} parent=59 // pred_region
          %s9965 = sand.u32 %s142, 1
          %s9966 = scalar_lea.sflag [#allocation6], %s9965
          %s9967 = sand.u32 %s142, 1
          %s9968 = smul.addr %s9967, 128
          %s9969 = scalar_lea.vmem [#allocation10], %s9968
          %9971 = dma.done %s9966, 2048
        $region64: #{tpu_custom_call.1} parent=59 // pred_fallthru
          _
      $region60: #{tpu_custom_call.1} parent=5 // pred_fallthru
        _
    $region6: #{tpu_custom_call.1} parent=1 // loop_footer
      %s22 = sadd.s32 1, %s18
    $region7: #{tpu_custom_call.1} parent=1 // loop_footer_branch
      %17 = sbr.rel target = $region3
    $region8: #{tpu_custom_call.1} parent=1 // loop_exit
      _
    %9972 = vsyncpa [#allocation5], 1
    %s9973 = scalar_lea.sflag [#allocation5], 1
    %9974 = vsyncpa %s9973, 1
    %9975 = vsyncpa [#allocation8], 1
    %9976 = vsyncpa [#allocation6], 1
    %s9977 = scalar_lea.sflag [#allocation6], 1
    %9978 = vsyncpa %s9977, 1

</llo_original>
